<compile_context>
chip_gen: v6e
topology: v6e:2x2x1
jax: 0.10.0
libtpu: 0.0.40
codegen_flags: <defaults>
</compile_context>

<pallas_src>
import math
import functools

import jax
import jax.numpy as jnp
from jax.experimental import pallas as pl
from jax.experimental.pallas import tpu as pltpu

VOCAB_SIZE = 1004
VOCAB_PAD = 1024          # next multiple of 128 -> lane-dense output stores
PAD_IDX = 0
LN_EPS = 1e-5
NEG_INF = -1e9

# config.json stand-in (deterministic, in-script)
CONFIG = dict(d_model=32, nhead=4, dim_feedforward=64, dropout=0.1, num_layers=2)


# ----------------------------- Pallas kernel -------------------------------- #

def _vmem_spec():
    return pl.BlockSpec(memory_space=pltpu.MemorySpace.VMEM)


def _layer_norm(x, g, b):
    """LayerNorm over last dim (biased variance, PyTorch convention)."""
    mu = jnp.mean(x, axis=-1, keepdims=True)
    xc = x - mu
    var = jnp.mean(xc * xc, axis=-1, keepdims=True)
    return xc * jax.lax.rsqrt(var + LN_EPS) * g + b


def _sketchformer_kernel(src_ref, tgt_ref,
                         src_bid_col_ref, tgt_bid_col_ref, tgt_pos_col_ref,
                         src_key_ref, tgt_key_ref,
                         wqkv_ref, bqkv_ref, wo_ref, bo_ref,
                         w1_ref, b1_ref, w2_ref, b2_ref,
                         lng_ref, lnb_ref,
                         outw_ref, outb_ref,
                         o_ref, *, num_layers, nhead, dh):
    f32 = jnp.float32
    hd = nhead * dh

    # Head-selector masks, built once (iota + compares; no value lane-slicing).
    lane = jax.lax.broadcasted_iota(jnp.int32, (1, hd), 1)
    head_masks = [
        jnp.where((lane >= h * dh) & (lane < (h + 1) * dh), 1.0, 0.0).astype(f32)
        for h in range(nhead)
    ]

    # Additive attention masks from tiny per-position metadata.
    sk = src_key_ref[...]                                   # (2, Ms): bid, kpad
    tk = tgt_key_ref[...]                                   # (3, Mt): bid, kpad, pos
    src_bid_row, src_kpad = sk[0:1, :], sk[1:2, :]
    tgt_bid_row, tgt_kpad, tgt_pos_row = tk[0:1, :], tk[1:2, :], tk[2:3, :]
    src_bid_col = src_bid_col_ref[...]                      # (Ms, 1)
    tgt_bid_col = tgt_bid_col_ref[...]                      # (Mt, 1)
    tgt_pos_col = tgt_pos_col_ref[...]                      # (Mt, 1)

    enc_mask = jnp.where(src_bid_col == src_bid_row, 0.0, NEG_INF) + src_kpad
    dec_self_mask = (jnp.where(tgt_bid_col == tgt_bid_row, 0.0, NEG_INF)
                     + jnp.where(tgt_pos_col >= tgt_pos_row, 0.0, NEG_INF)
                     + tgt_kpad)
    # memory_key_padding_mask is None in the reference forward -> batch-block only
    cross_mask = jnp.where(tgt_bid_col == src_bid_row, 0.0, NEG_INF)

    def mha(x_q, x_kv, mask, ai):
        # Fused per-module Q/K/V projections (Q weights pre-scaled by 1/sqrt(dh)).
        q = jnp.dot(x_q, wqkv_ref[ai, 0], preferred_element_type=f32) + bqkv_ref[ai, 0]
        k = jnp.dot(x_kv, wqkv_ref[ai, 1], preferred_element_type=f32) + bqkv_ref[ai, 1]
        v = jnp.dot(x_kv, wqkv_ref[ai, 2], preferred_element_type=f32) + bqkv_ref[ai, 2]
        o = None
        for hm in head_masks:                               # static unroll (H=4)
            # s_h = q_h @ k_h^T via head-masked contraction over the full width.
            s = jax.lax.dot_general(q * hm, k, (((1,), (1,)), ((), ())),
                                    preferred_element_type=f32) + mask
            s = s - jnp.max(s, axis=-1, keepdims=True)
            p = jnp.exp(s)
            p = p / jnp.sum(p, axis=-1, keepdims=True)      # exact softmax
            oh = jnp.dot(p, v * hm, preferred_element_type=f32)   # only head-h cols
            o = oh if o is None else o + oh                 # concatenated heads
        return jnp.dot(o, wo_ref[ai], preferred_element_type=f32) + bo_ref[ai]

    def ffn(x, fi):
        h = jnp.maximum(jnp.dot(x, w1_ref[fi], preferred_element_type=f32)
                        + b1_ref[fi], 0.0)
        return jnp.dot(h, w2_ref[fi], preferred_element_type=f32) + b2_ref[fi]

    def ln(x, li):
        return _layer_norm(x, lng_ref[li], lnb_ref[li])

    # ------------------------------ encoder -------------------------------- #
    x = src_ref[...]                                        # (Ms, d)
    for i in range(num_layers):
        x = ln(x + mha(x, x, enc_mask, i), 2 * i)
        x = ln(x + ffn(x, i), 2 * i + 1)
    memory = x

    # ------------------------------ decoder -------------------------------- #
    y = tgt_ref[...]                                        # (Mt, d)
    base_ln = 2 * num_layers
    for i in range(num_layers):
        sa = num_layers + 2 * i
        ca = num_layers + 2 * i + 1
        y = ln(y + mha(y, y, dec_self_mask, sa), base_ln + 3 * i)
        y = ln(y + mha(y, memory, cross_mask, ca), base_ln + 3 * i + 1)
        y = ln(y + ffn(y, num_layers + i), base_ln + 3 * i + 2)

    # ------------------- lane-dense output projection ---------------------- #
    o_ref[...] = (jnp.dot(y, outw_ref[...], preferred_element_type=f32)
                  + outb_ref[...])


# ------------------------------ forward pass -------------------------------- #

def sketchformer_forward(params, src, tgt, *, d_model, nhead, num_layers):
    """src, tgt: int32 (B, S) / (B, T) token ids -> (T, B, VOCAB_SIZE) logits."""
    B, S = src.shape
    _, T = tgt.shape
    dh = d_model // nhead
    Ms, Mt = S * B, T * B
    f32 = jnp.float32
    sqrt_d = jnp.sqrt(jnp.float32(d_model))
    pe = params['pe']                                       # (max_len, d)

    # Embedding + scale + positional encoding in seq-major layout (row = pos*B + b),
    # matching PyTorch's internal (L, B, d) so the kernel output is already (T, B, V).
    src_sm = src.T                                          # (S, B)
    tgt_sm = tgt.T                                          # (T, B)
    src_x = (jnp.take(params['embedding'], src_sm, axis=0) * sqrt_d
             + pe[:S, None, :]).reshape(Ms, d_model)
    tgt_x = (jnp.take(params['embedding'], tgt_sm, axis=0) * sqrt_d
             + pe[:T, None, :]).reshape(Mt, d_model)

    # Tiny O(B*L) per-position metadata; masks are built inside the kernel.
    src_bid = (jnp.arange(Ms) % B).astype(f32)
    tgt_bid = (jnp.arange(Mt) % B).astype(f32)
    tgt_pos = (jnp.arange(Mt) // B).astype(f32)
    src_kpad = jnp.where(src_sm.reshape(Ms) == PAD_IDX, NEG_INF, 0.0).astype(f32)
    tgt_kpad = jnp.where(tgt_sm.reshape(Mt) == PAD_IDX, NEG_INF, 0.0).astype(f32)
    src_key_meta = jnp.stack([src_bid, src_kpad])           # (2, Ms)
    tgt_key_meta = jnp.stack([tgt_bid, tgt_kpad, tgt_pos])  # (3, Mt)

    kernel = functools.partial(_sketchformer_kernel, num_layers=num_layers,
                               nhead=nhead, dh=dh)
    logits_pad = pl.pallas_call(
        kernel,
        out_shape=jax.ShapeDtypeStruct((Mt, VOCAB_PAD), jnp.float32),
        in_specs=[_vmem_spec()] * 19,
        out_specs=_vmem_spec(),
    )(src_x, tgt_x,
      src_bid[:, None], tgt_bid[:, None], tgt_pos[:, None],
      src_key_meta, tgt_key_meta,
      params['attn_wqkv'], params['attn_bqkv'],
      params['attn_wo'], params['attn_bo'],
      params['ffn_w1'], params['ffn_b1'], params['ffn_w2'], params['ffn_b2'],
      params['ln_g'], params['ln_b'],
      params['out_w'], params['out_b'])

    # Rows are already t-major (row = t*B + b) -> straight reshape, no transpose.
    return logits_pad[:, :VOCAB_SIZE].reshape(T, B, VOCAB_SIZE)


# ------------------------------ parameter init ------------------------------ #

def _positional_encoding(d_model, max_len=64):
    position = jnp.arange(max_len, dtype=jnp.float32)[:, None]
    div_term = jnp.exp(jnp.arange(0, d_model, 2, dtype=jnp.float32)
                       * (-math.log(10000.0) / d_model))
    ang = position * div_term
    pe = jnp.zeros((max_len, d_model), jnp.float32)
    pe = pe.at[:, 0::2].set(jnp.sin(ang)).at[:, 1::2].set(jnp.cos(ang))
    return pe                                               # (max_len, d_model)


def init_params(key, cfg):
    d, ff, nl, H = (cfg['d_model'], cfg['dim_feedforward'],
                    cfg['num_layers'], cfg['nhead'])
    dh = d // H
    hd = H * dh
    n_attn = 3 * nl           # nl enc-self + nl dec-self + nl dec-cross
    n_ffn = 2 * nl            # nl enc + nl dec
    n_ln = 5 * nl             # 2 per enc layer + 3 per dec layer
    s = 0.05
    keys = jax.random.split(key, 7)

    wqkv = jax.random.normal(keys[1], (n_attn, 3, d, hd), jnp.float32) * s
    bqkv = jnp.zeros((n_attn, 3, 1, hd), jnp.float32)
    # Fold the 1/sqrt(dh) attention scale into the Q projection (weights + bias).
    scale = 1.0 / math.sqrt(dh)
    wqkv = wqkv.at[:, 0].multiply(scale)
    bqkv = bqkv.at[:, 0].multiply(scale)

    out_w = jnp.zeros((d, VOCAB_PAD), jnp.float32)
    out_w = out_w.at[:, :VOCAB_SIZE].set(
        jax.random.normal(keys[6], (d, VOCAB_SIZE), jnp.float32) * s)

    return dict(
        embedding=jax.random.normal(keys[0], (VOCAB_SIZE, d), jnp.float32) * s,
        pe=_positional_encoding(d),
        attn_wqkv=wqkv,
        attn_bqkv=bqkv,
        attn_wo=jax.random.normal(keys[2], (n_attn, hd, d), jnp.float32) * s,
        attn_bo=jnp.zeros((n_attn, 1, d), jnp.float32),
        ffn_w1=jax.random.normal(keys[3], (n_ffn, d, ff), jnp.float32) * s,
        ffn_b1=jnp.zeros((n_ffn, 1, ff), jnp.float32),
        ffn_w2=jax.random.normal(keys[4], (n_ffn, ff, d), jnp.float32) * s,
        ffn_b2=jnp.zeros((n_ffn, 1, d), jnp.float32),
        ln_g=jnp.ones((n_ln, 1, d), jnp.float32),
        ln_b=jnp.zeros((n_ln, 1, d), jnp.float32),
        out_w=out_w,                                        # pad cols are zero
        out_b=jnp.zeros((1, VOCAB_PAD), jnp.float32),
    )


# ----------------------------------- main ----------------------------------- #

if __name__ == "__main__":
    cfg = CONFIG
    B, S, T = 2, 8, 8

    key = jax.random.PRNGKey(0)
    kp, ks, kt = jax.random.split(key, 3)
    params = init_params(kp, cfg)

    src = jax.random.randint(ks, (B, S), 1, VOCAB_SIZE, dtype=jnp.int32)
    tgt = jax.random.randint(kt, (B, T), 1, VOCAB_SIZE, dtype=jnp.int32)
    # exercise the PAD_IDX key-padding masks (last position is padding)
    src = src.at[:, -1].set(PAD_IDX)
    tgt = tgt.at[:, -1].set(PAD_IDX)

    fwd = jax.jit(functools.partial(sketchformer_forward,
                                    d_model=cfg['d_model'], nhead=cfg['nhead'],
                                    num_layers=cfg['num_layers']))
    logits = fwd(params, src, tgt)
    jax.block_until_ready(logits)

    assert logits.shape == (T, B, VOCAB_SIZE)
    assert bool(jnp.all(jnp.isfinite(logits)))
    print("KERNEL_OK")
</pallas_src>

<mosaic_0001>
module attributes {stable_mosaic.version = 11 : i64} {
  func.func @_sketchformer_kernel(%arg0: memref<16x32xf32, #tpu.memory_space<vmem>>, %arg1: memref<16x32xf32, #tpu.memory_space<vmem>>, %arg2: memref<16x1xf32, #tpu.memory_space<vmem>>, %arg3: memref<16x1xf32, #tpu.memory_space<vmem>>, %arg4: memref<16x1xf32, #tpu.memory_space<vmem>>, %arg5: memref<2x16xf32, #tpu.memory_space<vmem>>, %arg6: memref<3x16xf32, #tpu.memory_space<vmem>>, %arg7: memref<6x3x32x32xf32, #tpu.memory_space<vmem>>, %arg8: memref<6x3x1x32xf32, #tpu.memory_space<vmem>>, %arg9: memref<6x32x32xf32, #tpu.memory_space<vmem>>, %arg10: memref<6x1x32xf32, #tpu.memory_space<vmem>>, %arg11: memref<4x32x64xf32, #tpu.memory_space<vmem>>, %arg12: memref<4x1x64xf32, #tpu.memory_space<vmem>>, %arg13: memref<4x64x32xf32, #tpu.memory_space<vmem>>, %arg14: memref<4x1x32xf32, #tpu.memory_space<vmem>>, %arg15: memref<10x1x32xf32, #tpu.memory_space<vmem>>, %arg16: memref<10x1x32xf32, #tpu.memory_space<vmem>>, %arg17: memref<32x1024xf32, #tpu.memory_space<vmem>>, %arg18: memref<1x1024xf32, #tpu.memory_space<vmem>>, %arg19: memref<16x1024xf32, #tpu.memory_space<vmem>>) attributes {dimension_semantics = [], scalar_prefetch = 0 : i64, scratch_operands = 0 : i64, tpu.core_type = #tpu.core_type<tc>} {
    %0 = tpu.iota {dimensions = array<i32: 1>} : vector<1x32xi32>
    %c0_i32 = arith.constant 0 : i32
    %1 = vector.broadcast %c0_i32 : i32 to vector<1x32xi32>
    %2 = arith.cmpi sge, %0, %1 : vector<1x32xi32>
    %c8_i32 = arith.constant 8 : i32
    %3 = vector.broadcast %c8_i32 : i32 to vector<1x32xi32>
    %4 = arith.cmpi slt, %0, %3 : vector<1x32xi32>
    %5 = arith.andi %2, %4 : vector<1x32xi1>
    %cst = arith.constant 1.000000e+00 : f32
    %cst_0 = arith.constant 0.000000e+00 : f32
    %6 = vector.broadcast %cst : f32 to vector<1x32xf32>
    %7 = vector.broadcast %cst_0 : f32 to vector<1x32xf32>
    %8 = arith.select %5, %6, %7 : vector<1x32xi1>, vector<1x32xf32>
    %c8_i32_1 = arith.constant 8 : i32
    %9 = vector.broadcast %c8_i32_1 : i32 to vector<1x32xi32>
    %10 = arith.cmpi sge, %0, %9 : vector<1x32xi32>
    %c16_i32 = arith.constant 16 : i32
    %11 = vector.broadcast %c16_i32 : i32 to vector<1x32xi32>
    %12 = arith.cmpi slt, %0, %11 : vector<1x32xi32>
    %13 = arith.andi %10, %12 : vector<1x32xi1>
    %cst_2 = arith.constant 1.000000e+00 : f32
    %cst_3 = arith.constant 0.000000e+00 : f32
    %14 = vector.broadcast %cst_2 : f32 to vector<1x32xf32>
    %15 = vector.broadcast %cst_3 : f32 to vector<1x32xf32>
    %16 = arith.select %13, %14, %15 : vector<1x32xi1>, vector<1x32xf32>
    %c16_i32_4 = arith.constant 16 : i32
    %17 = vector.broadcast %c16_i32_4 : i32 to vector<1x32xi32>
    %18 = arith.cmpi sge, %0, %17 : vector<1x32xi32>
    %c24_i32 = arith.constant 24 : i32
    %19 = vector.broadcast %c24_i32 : i32 to vector<1x32xi32>
    %20 = arith.cmpi slt, %0, %19 : vector<1x32xi32>
    %21 = arith.andi %18, %20 : vector<1x32xi1>
    %cst_5 = arith.constant 1.000000e+00 : f32
    %cst_6 = arith.constant 0.000000e+00 : f32
    %22 = vector.broadcast %cst_5 : f32 to vector<1x32xf32>
    %23 = vector.broadcast %cst_6 : f32 to vector<1x32xf32>
    %24 = arith.select %21, %22, %23 : vector<1x32xi1>, vector<1x32xf32>
    %c24_i32_7 = arith.constant 24 : i32
    %25 = vector.broadcast %c24_i32_7 : i32 to vector<1x32xi32>
    %26 = arith.cmpi sge, %0, %25 : vector<1x32xi32>
    %c32_i32 = arith.constant 32 : i32
    %27 = vector.broadcast %c32_i32 : i32 to vector<1x32xi32>
    %28 = arith.cmpi slt, %0, %27 : vector<1x32xi32>
    %29 = arith.andi %26, %28 : vector<1x32xi1>
    %cst_8 = arith.constant 1.000000e+00 : f32
    %cst_9 = arith.constant 0.000000e+00 : f32
    %30 = vector.broadcast %cst_8 : f32 to vector<1x32xf32>
    %31 = vector.broadcast %cst_9 : f32 to vector<1x32xf32>
    %32 = arith.select %29, %30, %31 : vector<1x32xi1>, vector<1x32xf32>
    %c0 = arith.constant 0 : index
    %c0_10 = arith.constant 0 : index
    %33 = vector.load %arg5[%c0, %c0_10] : memref<2x16xf32, #tpu.memory_space<vmem>>, vector<2x16xf32>
    %c0_11 = arith.constant 0 : index
    %c0_12 = arith.constant 0 : index
    %34 = vector.load %arg6[%c0_11, %c0_12] : memref<3x16xf32, #tpu.memory_space<vmem>>, vector<3x16xf32>
    %35 = vector.extract_strided_slice %33 {offsets = [0, 0], sizes = [1, 16], strides = [1, 1]} : vector<2x16xf32> to vector<1x16xf32>
    %36 = vector.extract_strided_slice %33 {offsets = [1, 0], sizes = [1, 16], strides = [1, 1]} : vector<2x16xf32> to vector<1x16xf32>
    %37 = vector.extract_strided_slice %34 {offsets = [0, 0], sizes = [1, 16], strides = [1, 1]} : vector<3x16xf32> to vector<1x16xf32>
    %38 = vector.extract_strided_slice %34 {offsets = [1, 0], sizes = [1, 16], strides = [1, 1]} : vector<3x16xf32> to vector<1x16xf32>
    %39 = vector.extract_strided_slice %34 {offsets = [2, 0], sizes = [1, 16], strides = [1, 1]} : vector<3x16xf32> to vector<1x16xf32>
    %c0_13 = arith.constant 0 : index
    %c0_14 = arith.constant 0 : index
    %40 = vector.load %arg2[%c0_13, %c0_14] : memref<16x1xf32, #tpu.memory_space<vmem>>, vector<16x1xf32>
    %c0_15 = arith.constant 0 : index
    %c0_16 = arith.constant 0 : index
    %41 = vector.load %arg3[%c0_15, %c0_16] : memref<16x1xf32, #tpu.memory_space<vmem>>, vector<16x1xf32>
    %c0_17 = arith.constant 0 : index
    %c0_18 = arith.constant 0 : index
    %42 = vector.load %arg4[%c0_17, %c0_18] : memref<16x1xf32, #tpu.memory_space<vmem>>, vector<16x1xf32>
    %43 = vector.broadcast %40 : vector<16x1xf32> to vector<16x16xf32>
    %44 = vector.broadcast %35 : vector<1x16xf32> to vector<16x16xf32>
    %45 = arith.cmpf oeq, %43, %44 : vector<16x16xf32>
    %cst_19 = arith.constant 0.000000e+00 : f32
    %cst_20 = arith.constant -1.000000e+09 : f32
    %46 = vector.broadcast %cst_19 : f32 to vector<16x16xf32>
    %47 = vector.broadcast %cst_20 : f32 to vector<16x16xf32>
    %48 = arith.select %45, %46, %47 : vector<16x16xi1>, vector<16x16xf32>
    %49 = vector.broadcast %36 : vector<1x16xf32> to vector<16x16xf32>
    %50 = arith.addf %48, %49 : vector<16x16xf32>
    %51 = vector.broadcast %41 : vector<16x1xf32> to vector<16x16xf32>
    %52 = vector.broadcast %37 : vector<1x16xf32> to vector<16x16xf32>
    %53 = arith.cmpf oeq, %51, %52 : vector<16x16xf32>
    %cst_21 = arith.constant 0.000000e+00 : f32
    %cst_22 = arith.constant -1.000000e+09 : f32
    %54 = vector.broadcast %cst_21 : f32 to vector<16x16xf32>
    %55 = vector.broadcast %cst_22 : f32 to vector<16x16xf32>
    %56 = arith.select %53, %54, %55 : vector<16x16xi1>, vector<16x16xf32>
    %57 = vector.broadcast %42 : vector<16x1xf32> to vector<16x16xf32>
    %58 = vector.broadcast %39 : vector<1x16xf32> to vector<16x16xf32>
    %59 = arith.cmpf oge, %57, %58 : vector<16x16xf32>
    %cst_23 = arith.constant 0.000000e+00 : f32
    %cst_24 = arith.constant -1.000000e+09 : f32
    %60 = vector.broadcast %cst_23 : f32 to vector<16x16xf32>
    %61 = vector.broadcast %cst_24 : f32 to vector<16x16xf32>
    %62 = arith.select %59, %60, %61 : vector<16x16xi1>, vector<16x16xf32>
    %63 = arith.addf %56, %62 : vector<16x16xf32>
    %64 = vector.broadcast %38 : vector<1x16xf32> to vector<16x16xf32>
    %65 = arith.addf %63, %64 : vector<16x16xf32>
    %66 = vector.broadcast %41 : vector<16x1xf32> to vector<16x16xf32>
    %67 = vector.broadcast %35 : vector<1x16xf32> to vector<16x16xf32>
    %68 = arith.cmpf oeq, %66, %67 : vector<16x16xf32>
    %cst_25 = arith.constant 0.000000e+00 : f32
    %cst_26 = arith.constant -1.000000e+09 : f32
    %69 = vector.broadcast %cst_25 : f32 to vector<16x16xf32>
    %70 = vector.broadcast %cst_26 : f32 to vector<16x16xf32>
    %71 = arith.select %68, %69, %70 : vector<16x16xi1>, vector<16x16xf32>
    %c0_27 = arith.constant 0 : index
    %c0_28 = arith.constant 0 : index
    %72 = vector.load %arg0[%c0_27, %c0_28] : memref<16x32xf32, #tpu.memory_space<vmem>>, vector<16x32xf32>
    %c0_29 = arith.constant 0 : index
    %c0_30 = arith.constant 0 : index
    %c0_31 = arith.constant 0 : index
    %c0_32 = arith.constant 0 : index
    %73 = vector.load %arg7[%c0_29, %c0_30, %c0_31, %c0_32] : memref<6x3x32x32xf32, #tpu.memory_space<vmem>>, vector<1x1x32x32xf32>
    %74 = vector.shape_cast %73 : vector<1x1x32x32xf32> to vector<32x32xf32>
    %cst_33 = arith.constant dense<0.000000e+00> : vector<16x32xf32>
    %75 = tpu.matmul %72, %74, %cst_33 {dimension_numbers = #tpu.dot_dimension_numbers<[1], [0], [0], [1], [0, 0, 1, 1], [], []>} : vector<16x32xf32>, vector<32x32xf32>, vector<16x32xf32> -> vector<16x32xf32>
    %c0_34 = arith.constant 0 : index
    %c0_35 = arith.constant 0 : index
    %c0_36 = arith.constant 0 : index
    %c0_37 = arith.constant 0 : index
    %76 = vector.load %arg8[%c0_34, %c0_35, %c0_36, %c0_37] : memref<6x3x1x32xf32, #tpu.memory_space<vmem>>, vector<1x1x1x32xf32>
    %77 = vector.shape_cast %76 : vector<1x1x1x32xf32> to vector<1x32xf32>
    %78 = vector.broadcast %77 : vector<1x32xf32> to vector<16x32xf32>
    %79 = arith.addf %75, %78 : vector<16x32xf32>
    %c0_38 = arith.constant 0 : index
    %c1 = arith.constant 1 : index
    %c0_39 = arith.constant 0 : index
    %c0_40 = arith.constant 0 : index
    %80 = vector.load %arg7[%c0_38, %c1, %c0_39, %c0_40] : memref<6x3x32x32xf32, #tpu.memory_space<vmem>>, vector<1x1x32x32xf32>
    %81 = vector.shape_cast %80 : vector<1x1x32x32xf32> to vector<32x32xf32>
    %cst_41 = arith.constant dense<0.000000e+00> : vector<16x32xf32>
    %82 = tpu.matmul %72, %81, %cst_41 {dimension_numbers = #tpu.dot_dimension_numbers<[1], [0], [0], [1], [0, 0, 1, 1], [], []>} : vector<16x32xf32>, vector<32x32xf32>, vector<16x32xf32> -> vector<16x32xf32>
    %c0_42 = arith.constant 0 : index
    %c1_43 = arith.constant 1 : index
    %c0_44 = arith.constant 0 : index
    %c0_45 = arith.constant 0 : index
    %83 = vector.load %arg8[%c0_42, %c1_43, %c0_44, %c0_45] : memref<6x3x1x32xf32, #tpu.memory_space<vmem>>, vector<1x1x1x32xf32>
    %84 = vector.shape_cast %83 : vector<1x1x1x32xf32> to vector<1x32xf32>
    %85 = vector.broadcast %84 : vector<1x32xf32> to vector<16x32xf32>
    %86 = arith.addf %82, %85 : vector<16x32xf32>
    %c0_46 = arith.constant 0 : index
    %c2 = arith.constant 2 : index
    %c0_47 = arith.constant 0 : index
    %c0_48 = arith.constant 0 : index
    %87 = vector.load %arg7[%c0_46, %c2, %c0_47, %c0_48] : memref<6x3x32x32xf32, #tpu.memory_space<vmem>>, vector<1x1x32x32xf32>
    %88 = vector.shape_cast %87 : vector<1x1x32x32xf32> to vector<32x32xf32>
    %cst_49 = arith.constant dense<0.000000e+00> : vector<16x32xf32>
    %89 = tpu.matmul %72, %88, %cst_49 {dimension_numbers = #tpu.dot_dimension_numbers<[1], [0], [0], [1], [0, 0, 1, 1], [], []>} : vector<16x32xf32>, vector<32x32xf32>, vector<16x32xf32> -> vector<16x32xf32>
    %c0_50 = arith.constant 0 : index
    %c2_51 = arith.constant 2 : index
    %c0_52 = arith.constant 0 : index
    %c0_53 = arith.constant 0 : index
    %90 = vector.load %arg8[%c0_50, %c2_51, %c0_52, %c0_53] : memref<6x3x1x32xf32, #tpu.memory_space<vmem>>, vector<1x1x1x32xf32>
    %91 = vector.shape_cast %90 : vector<1x1x1x32xf32> to vector<1x32xf32>
    %92 = vector.broadcast %91 : vector<1x32xf32> to vector<16x32xf32>
    %93 = arith.addf %89, %92 : vector<16x32xf32>
    %94 = vector.broadcast %8 : vector<1x32xf32> to vector<16x32xf32>
    %95 = arith.mulf %79, %94 : vector<16x32xf32>
    %cst_54 = arith.constant dense<0.000000e+00> : vector<16x16xf32>
    %96 = tpu.matmul %95, %86, %cst_54 {dimension_numbers = #tpu.dot_dimension_numbers<[1], [1], [0], [0], [0, 0, 1, 0], [], []>} : vector<16x32xf32>, vector<16x32xf32>, vector<16x16xf32> -> vector<16x16xf32>
    %97 = arith.addf %96, %50 : vector<16x16xf32>
    %cst_55 = arith.constant dense<0xFF800000> : vector<16xf32>
    %98 = vector.multi_reduction <maximumf>, %97, %cst_55 [1] : vector<16x16xf32> to vector<16xf32>
    %99 = vector.shape_cast %98 : vector<16xf32> to vector<16x1xf32>
    %100 = vector.broadcast %99 : vector<16x1xf32> to vector<16x16xf32>
    %101 = arith.subf %97, %100 : vector<16x16xf32>
    %102 = math.exp %101 : vector<16x16xf32>
    %cst_56 = arith.constant dense<0.000000e+00> : vector<16xf32>
    %103 = vector.multi_reduction <add>, %102, %cst_56 [1] : vector<16x16xf32> to vector<16xf32>
    %104 = vector.shape_cast %103 : vector<16xf32> to vector<16x1xf32>
    %105 = vector.broadcast %104 : vector<16x1xf32> to vector<16x16xf32>
    %106 = arith.divf %102, %105 : vector<16x16xf32>
    %107 = vector.broadcast %8 : vector<1x32xf32> to vector<16x32xf32>
    %108 = arith.mulf %93, %107 : vector<16x32xf32>
    %cst_57 = arith.constant dense<0.000000e+00> : vector<16x32xf32>
    %109 = tpu.matmul %106, %108, %cst_57 {dimension_numbers = #tpu.dot_dimension_numbers<[1], [0], [0], [1], [0, 0, 1, 1], [], []>} : vector<16x16xf32>, vector<16x32xf32>, vector<16x32xf32> -> vector<16x32xf32>
    %110 = vector.broadcast %16 : vector<1x32xf32> to vector<16x32xf32>
    %111 = arith.mulf %79, %110 : vector<16x32xf32>
    %cst_58 = arith.constant dense<0.000000e+00> : vector<16x16xf32>
    %112 = tpu.matmul %111, %86, %cst_58 {dimension_numbers = #tpu.dot_dimension_numbers<[1], [1], [0], [0], [0, 0, 1, 0], [], []>} : vector<16x32xf32>, vector<16x32xf32>, vector<16x16xf32> -> vector<16x16xf32>
    %113 = arith.addf %112, %50 : vector<16x16xf32>
    %cst_59 = arith.constant dense<0xFF800000> : vector<16xf32>
    %114 = vector.multi_reduction <maximumf>, %113, %cst_59 [1] : vector<16x16xf32> to vector<16xf32>
    %115 = vector.shape_cast %114 : vector<16xf32> to vector<16x1xf32>
    %116 = vector.broadcast %115 : vector<16x1xf32> to vector<16x16xf32>
    %117 = arith.subf %113, %116 : vector<16x16xf32>
    %118 = math.exp %117 : vector<16x16xf32>
    %cst_60 = arith.constant dense<0.000000e+00> : vector<16xf32>
    %119 = vector.multi_reduction <add>, %118, %cst_60 [1] : vector<16x16xf32> to vector<16xf32>
    %120 = vector.shape_cast %119 : vector<16xf32> to vector<16x1xf32>
    %121 = vector.broadcast %120 : vector<16x1xf32> to vector<16x16xf32>
    %122 = arith.divf %118, %121 : vector<16x16xf32>
    %123 = vector.broadcast %16 : vector<1x32xf32> to vector<16x32xf32>
    %124 = arith.mulf %93, %123 : vector<16x32xf32>
    %cst_61 = arith.constant dense<0.000000e+00> : vector<16x32xf32>
    %125 = tpu.matmul %122, %124, %cst_61 {dimension_numbers = #tpu.dot_dimension_numbers<[1], [0], [0], [1], [0, 0, 1, 1], [], []>} : vector<16x16xf32>, vector<16x32xf32>, vector<16x32xf32> -> vector<16x32xf32>
    %126 = arith.addf %109, %125 : vector<16x32xf32>
    %127 = vector.broadcast %24 : vector<1x32xf32> to vector<16x32xf32>
    %128 = arith.mulf %79, %127 : vector<16x32xf32>
    %cst_62 = arith.constant dense<0.000000e+00> : vector<16x16xf32>
    %129 = tpu.matmul %128, %86, %cst_62 {dimension_numbers = #tpu.dot_dimension_numbers<[1], [1], [0], [0], [0, 0, 1, 0], [], []>} : vector<16x32xf32>, vector<16x32xf32>, vector<16x16xf32> -> vector<16x16xf32>
    %130 = arith.addf %129, %50 : vector<16x16xf32>
    %cst_63 = arith.constant dense<0xFF800000> : vector<16xf32>
    %131 = vector.multi_reduction <maximumf>, %130, %cst_63 [1] : vector<16x16xf32> to vector<16xf32>
    %132 = vector.shape_cast %131 : vector<16xf32> to vector<16x1xf32>
    %133 = vector.broadcast %132 : vector<16x1xf32> to vector<16x16xf32>
    %134 = arith.subf %130, %133 : vector<16x16xf32>
    %135 = math.exp %134 : vector<16x16xf32>
    %cst_64 = arith.constant dense<0.000000e+00> : vector<16xf32>
    %136 = vector.multi_reduction <add>, %135, %cst_64 [1] : vector<16x16xf32> to vector<16xf32>
    %137 = vector.shape_cast %136 : vector<16xf32> to vector<16x1xf32>
    %138 = vector.broadcast %137 : vector<16x1xf32> to vector<16x16xf32>
    %139 = arith.divf %135, %138 : vector<16x16xf32>
    %140 = vector.broadcast %24 : vector<1x32xf32> to vector<16x32xf32>
    %141 = arith.mulf %93, %140 : vector<16x32xf32>
    %cst_65 = arith.constant dense<0.000000e+00> : vector<16x32xf32>
    %142 = tpu.matmul %139, %141, %cst_65 {dimension_numbers = #tpu.dot_dimension_numbers<[1], [0], [0], [1], [0, 0, 1, 1], [], []>} : vector<16x16xf32>, vector<16x32xf32>, vector<16x32xf32> -> vector<16x32xf32>
    %143 = arith.addf %126, %142 : vector<16x32xf32>
    %144 = vector.broadcast %32 : vector<1x32xf32> to vector<16x32xf32>
    %145 = arith.mulf %79, %144 : vector<16x32xf32>
    %cst_66 = arith.constant dense<0.000000e+00> : vector<16x16xf32>
    %146 = tpu.matmul %145, %86, %cst_66 {dimension_numbers = #tpu.dot_dimension_numbers<[1], [1], [0], [0], [0, 0, 1, 0], [], []>} : vector<16x32xf32>, vector<16x32xf32>, vector<16x16xf32> -> vector<16x16xf32>
    %147 = arith.addf %146, %50 : vector<16x16xf32>
    %cst_67 = arith.constant dense<0xFF800000> : vector<16xf32>
    %148 = vector.multi_reduction <maximumf>, %147, %cst_67 [1] : vector<16x16xf32> to vector<16xf32>
    %149 = vector.shape_cast %148 : vector<16xf32> to vector<16x1xf32>
    %150 = vector.broadcast %149 : vector<16x1xf32> to vector<16x16xf32>
    %151 = arith.subf %147, %150 : vector<16x16xf32>
    %152 = math.exp %151 : vector<16x16xf32>
    %cst_68 = arith.constant dense<0.000000e+00> : vector<16xf32>
    %153 = vector.multi_reduction <add>, %152, %cst_68 [1] : vector<16x16xf32> to vector<16xf32>
    %154 = vector.shape_cast %153 : vector<16xf32> to vector<16x1xf32>
    %155 = vector.broadcast %154 : vector<16x1xf32> to vector<16x16xf32>
    %156 = arith.divf %152, %155 : vector<16x16xf32>
    %157 = vector.broadcast %32 : vector<1x32xf32> to vector<16x32xf32>
    %158 = arith.mulf %93, %157 : vector<16x32xf32>
    %cst_69 = arith.constant dense<0.000000e+00> : vector<16x32xf32>
    %159 = tpu.matmul %156, %158, %cst_69 {dimension_numbers = #tpu.dot_dimension_numbers<[1], [0], [0], [1], [0, 0, 1, 1], [], []>} : vector<16x16xf32>, vector<16x32xf32>, vector<16x32xf32> -> vector<16x32xf32>
    %160 = arith.addf %143, %159 : vector<16x32xf32>
    %c0_70 = arith.constant 0 : index
    %c0_71 = arith.constant 0 : index
    %c0_72 = arith.constant 0 : index
    %161 = vector.load %arg9[%c0_70, %c0_71, %c0_72] : memref<6x32x32xf32, #tpu.memory_space<vmem>>, vector<1x32x32xf32>
    %162 = vector.shape_cast %161 : vector<1x32x32xf32> to vector<32x32xf32>
    %cst_73 = arith.constant dense<0.000000e+00> : vector<16x32xf32>
    %163 = tpu.matmul %160, %162, %cst_73 {dimension_numbers = #tpu.dot_dimension_numbers<[1], [0], [0], [1], [0, 0, 1, 1], [], []>} : vector<16x32xf32>, vector<32x32xf32>, vector<16x32xf32> -> vector<16x32xf32>
    %c0_74 = arith.constant 0 : index
    %c0_75 = arith.constant 0 : index
    %c0_76 = arith.constant 0 : index
    %164 = vector.load %arg10[%c0_74, %c0_75, %c0_76] : memref<6x1x32xf32, #tpu.memory_space<vmem>>, vector<1x1x32xf32>
    %165 = vector.shape_cast %164 : vector<1x1x32xf32> to vector<1x32xf32>
    %166 = vector.broadcast %165 : vector<1x32xf32> to vector<16x32xf32>
    %167 = arith.addf %163, %166 : vector<16x32xf32>
    %168 = arith.addf %72, %167 : vector<16x32xf32>
    %c0_77 = arith.constant 0 : index
    %c0_78 = arith.constant 0 : index
    %c0_79 = arith.constant 0 : index
    %169 = vector.load %arg15[%c0_77, %c0_78, %c0_79] : memref<10x1x32xf32, #tpu.memory_space<vmem>>, vector<1x1x32xf32>
    %170 = vector.shape_cast %169 : vector<1x1x32xf32> to vector<1x32xf32>
    %c0_80 = arith.constant 0 : index
    %c0_81 = arith.constant 0 : index
    %c0_82 = arith.constant 0 : index
    %171 = vector.load %arg16[%c0_80, %c0_81, %c0_82] : memref<10x1x32xf32, #tpu.memory_space<vmem>>, vector<1x1x32xf32>
    %172 = vector.shape_cast %171 : vector<1x1x32xf32> to vector<1x32xf32>
    %cst_83 = arith.constant dense<0.000000e+00> : vector<16xf32>
    %173 = vector.multi_reduction <add>, %168, %cst_83 [1] : vector<16x32xf32> to vector<16xf32>
    %174 = vector.shape_cast %173 : vector<16xf32> to vector<16x1xf32>
    %cst_84 = arith.constant 3.200000e+01 : f32
    %175 = vector.broadcast %cst_84 : f32 to vector<16x1xf32>
    %176 = arith.divf %174, %175 : vector<16x1xf32>
    %177 = vector.broadcast %176 : vector<16x1xf32> to vector<16x32xf32>
    %178 = arith.subf %168, %177 : vector<16x32xf32>
    %179 = arith.mulf %178, %178 : vector<16x32xf32>
    %cst_85 = arith.constant dense<0.000000e+00> : vector<16xf32>
    %180 = vector.multi_reduction <add>, %179, %cst_85 [1] : vector<16x32xf32> to vector<16xf32>
    %181 = vector.shape_cast %180 : vector<16xf32> to vector<16x1xf32>
    %cst_86 = arith.constant 3.200000e+01 : f32
    %182 = vector.broadcast %cst_86 : f32 to vector<16x1xf32>
    %183 = arith.divf %181, %182 : vector<16x1xf32>
    %cst_87 = arith.constant 9.99999974E-6 : f32
    %184 = vector.broadcast %cst_87 : f32 to vector<16x1xf32>
    %185 = arith.addf %183, %184 : vector<16x1xf32>
    %186 = math.rsqrt %185 : vector<16x1xf32>
    %187 = vector.broadcast %186 : vector<16x1xf32> to vector<16x32xf32>
    %188 = arith.mulf %178, %187 : vector<16x32xf32>
    %189 = vector.broadcast %170 : vector<1x32xf32> to vector<16x32xf32>
    %190 = arith.mulf %188, %189 : vector<16x32xf32>
    %191 = vector.broadcast %172 : vector<1x32xf32> to vector<16x32xf32>
    %192 = arith.addf %190, %191 : vector<16x32xf32>
    %c0_88 = arith.constant 0 : index
    %c0_89 = arith.constant 0 : index
    %c0_90 = arith.constant 0 : index
    %193 = vector.load %arg11[%c0_88, %c0_89, %c0_90] : memref<4x32x64xf32, #tpu.memory_space<vmem>>, vector<1x32x64xf32>
    %194 = vector.shape_cast %193 : vector<1x32x64xf32> to vector<32x64xf32>
    %cst_91 = arith.constant dense<0.000000e+00> : vector<16x64xf32>
    %195 = tpu.matmul %192, %194, %cst_91 {dimension_numbers = #tpu.dot_dimension_numbers<[1], [0], [0], [1], [0, 0, 1, 1], [], []>} : vector<16x32xf32>, vector<32x64xf32>, vector<16x64xf32> -> vector<16x64xf32>
    %c0_92 = arith.constant 0 : index
    %c0_93 = arith.constant 0 : index
    %c0_94 = arith.constant 0 : index
    %196 = vector.load %arg12[%c0_92, %c0_93, %c0_94] : memref<4x1x64xf32, #tpu.memory_space<vmem>>, vector<1x1x64xf32>
    %197 = vector.shape_cast %196 : vector<1x1x64xf32> to vector<1x64xf32>
    %198 = vector.broadcast %197 : vector<1x64xf32> to vector<16x64xf32>
    %199 = arith.addf %195, %198 : vector<16x64xf32>
    %cst_95 = arith.constant 0.000000e+00 : f32
    %200 = vector.broadcast %cst_95 : f32 to vector<16x64xf32>
    %201 = arith.maximumf %199, %200 : vector<16x64xf32>
    %c0_96 = arith.constant 0 : index
    %c0_97 = arith.constant 0 : index
    %c0_98 = arith.constant 0 : index
    %202 = vector.load %arg13[%c0_96, %c0_97, %c0_98] : memref<4x64x32xf32, #tpu.memory_space<vmem>>, vector<1x64x32xf32>
    %203 = vector.shape_cast %202 : vector<1x64x32xf32> to vector<64x32xf32>
    %cst_99 = arith.constant dense<0.000000e+00> : vector<16x32xf32>
    %204 = tpu.matmul %201, %203, %cst_99 {dimension_numbers = #tpu.dot_dimension_numbers<[1], [0], [0], [1], [0, 0, 1, 1], [], []>} : vector<16x64xf32>, vector<64x32xf32>, vector<16x32xf32> -> vector<16x32xf32>
    %c0_100 = arith.constant 0 : index
    %c0_101 = arith.constant 0 : index
    %c0_102 = arith.constant 0 : index
    %205 = vector.load %arg14[%c0_100, %c0_101, %c0_102] : memref<4x1x32xf32, #tpu.memory_space<vmem>>, vector<1x1x32xf32>
    %206 = vector.shape_cast %205 : vector<1x1x32xf32> to vector<1x32xf32>
    %207 = vector.broadcast %206 : vector<1x32xf32> to vector<16x32xf32>
    %208 = arith.addf %204, %207 : vector<16x32xf32>
    %209 = arith.addf %192, %208 : vector<16x32xf32>
    %c1_103 = arith.constant 1 : index
    %c0_104 = arith.constant 0 : index
    %c0_105 = arith.constant 0 : index
    %210 = vector.load %arg15[%c1_103, %c0_104, %c0_105] : memref<10x1x32xf32, #tpu.memory_space<vmem>>, vector<1x1x32xf32>
    %211 = vector.shape_cast %210 : vector<1x1x32xf32> to vector<1x32xf32>
    %c1_106 = arith.constant 1 : index
    %c0_107 = arith.constant 0 : index
    %c0_108 = arith.constant 0 : index
    %212 = vector.load %arg16[%c1_106, %c0_107, %c0_108] : memref<10x1x32xf32, #tpu.memory_space<vmem>>, vector<1x1x32xf32>
    %213 = vector.shape_cast %212 : vector<1x1x32xf32> to vector<1x32xf32>
    %cst_109 = arith.constant dense<0.000000e+00> : vector<16xf32>
    %214 = vector.multi_reduction <add>, %209, %cst_109 [1] : vector<16x32xf32> to vector<16xf32>
    %215 = vector.shape_cast %214 : vector<16xf32> to vector<16x1xf32>
    %cst_110 = arith.constant 3.200000e+01 : f32
    %216 = vector.broadcast %cst_110 : f32 to vector<16x1xf32>
    %217 = arith.divf %215, %216 : vector<16x1xf32>
    %218 = vector.broadcast %217 : vector<16x1xf32> to vector<16x32xf32>
    %219 = arith.subf %209, %218 : vector<16x32xf32>
    %220 = arith.mulf %219, %219 : vector<16x32xf32>
    %cst_111 = arith.constant dense<0.000000e+00> : vector<16xf32>
    %221 = vector.multi_reduction <add>, %220, %cst_111 [1] : vector<16x32xf32> to vector<16xf32>
    %222 = vector.shape_cast %221 : vector<16xf32> to vector<16x1xf32>
    %cst_112 = arith.constant 3.200000e+01 : f32
    %223 = vector.broadcast %cst_112 : f32 to vector<16x1xf32>
    %224 = arith.divf %222, %223 : vector<16x1xf32>
    %cst_113 = arith.constant 9.99999974E-6 : f32
    %225 = vector.broadcast %cst_113 : f32 to vector<16x1xf32>
    %226 = arith.addf %224, %225 : vector<16x1xf32>
    %227 = math.rsqrt %226 : vector<16x1xf32>
    %228 = vector.broadcast %227 : vector<16x1xf32> to vector<16x32xf32>
    %229 = arith.mulf %219, %228 : vector<16x32xf32>
    %230 = vector.broadcast %211 : vector<1x32xf32> to vector<16x32xf32>
    %231 = arith.mulf %229, %230 : vector<16x32xf32>
    %232 = vector.broadcast %213 : vector<1x32xf32> to vector<16x32xf32>
    %233 = arith.addf %231, %232 : vector<16x32xf32>
    %c1_114 = arith.constant 1 : index
    %c0_115 = arith.constant 0 : index
    %c0_116 = arith.constant 0 : index
    %c0_117 = arith.constant 0 : index
    %234 = vector.load %arg7[%c1_114, %c0_115, %c0_116, %c0_117] : memref<6x3x32x32xf32, #tpu.memory_space<vmem>>, vector<1x1x32x32xf32>
    %235 = vector.shape_cast %234 : vector<1x1x32x32xf32> to vector<32x32xf32>
    %cst_118 = arith.constant dense<0.000000e+00> : vector<16x32xf32>
    %236 = tpu.matmul %233, %235, %cst_118 {dimension_numbers = #tpu.dot_dimension_numbers<[1], [0], [0], [1], [0, 0, 1, 1], [], []>} : vector<16x32xf32>, vector<32x32xf32>, vector<16x32xf32> -> vector<16x32xf32>
    %c1_119 = arith.constant 1 : index
    %c0_120 = arith.constant 0 : index
    %c0_121 = arith.constant 0 : index
    %c0_122 = arith.constant 0 : index
    %237 = vector.load %arg8[%c1_119, %c0_120, %c0_121, %c0_122] : memref<6x3x1x32xf32, #tpu.memory_space<vmem>>, vector<1x1x1x32xf32>
    %238 = vector.shape_cast %237 : vector<1x1x1x32xf32> to vector<1x32xf32>
    %239 = vector.broadcast %238 : vector<1x32xf32> to vector<16x32xf32>
    %240 = arith.addf %236, %239 : vector<16x32xf32>
    %c1_123 = arith.constant 1 : index
    %c1_124 = arith.constant 1 : index
    %c0_125 = arith.constant 0 : index
    %c0_126 = arith.constant 0 : index
    %241 = vector.load %arg7[%c1_123, %c1_124, %c0_125, %c0_126] : memref<6x3x32x32xf32, #tpu.memory_space<vmem>>, vector<1x1x32x32xf32>
    %242 = vector.shape_cast %241 : vector<1x1x32x32xf32> to vector<32x32xf32>
    %cst_127 = arith.constant dense<0.000000e+00> : vector<16x32xf32>
    %243 = tpu.matmul %233, %242, %cst_127 {dimension_numbers = #tpu.dot_dimension_numbers<[1], [0], [0], [1], [0, 0, 1, 1], [], []>} : vector<16x32xf32>, vector<32x32xf32>, vector<16x32xf32> -> vector<16x32xf32>
    %c1_128 = arith.constant 1 : index
    %c1_129 = arith.constant 1 : index
    %c0_130 = arith.constant 0 : index
    %c0_131 = arith.constant 0 : index
    %244 = vector.load %arg8[%c1_128, %c1_129, %c0_130, %c0_131] : memref<6x3x1x32xf32, #tpu.memory_space<vmem>>, vector<1x1x1x32xf32>
    %245 = vector.shape_cast %244 : vector<1x1x1x32xf32> to vector<1x32xf32>
    %246 = vector.broadcast %245 : vector<1x32xf32> to vector<16x32xf32>
    %247 = arith.addf %243, %246 : vector<16x32xf32>
    %c1_132 = arith.constant 1 : index
    %c2_133 = arith.constant 2 : index
    %c0_134 = arith.constant 0 : index
    %c0_135 = arith.constant 0 : index
    %248 = vector.load %arg7[%c1_132, %c2_133, %c0_134, %c0_135] : memref<6x3x32x32xf32, #tpu.memory_space<vmem>>, vector<1x1x32x32xf32>
    %249 = vector.shape_cast %248 : vector<1x1x32x32xf32> to vector<32x32xf32>
    %cst_136 = arith.constant dense<0.000000e+00> : vector<16x32xf32>
    %250 = tpu.matmul %233, %249, %cst_136 {dimension_numbers = #tpu.dot_dimension_numbers<[1], [0], [0], [1], [0, 0, 1, 1], [], []>} : vector<16x32xf32>, vector<32x32xf32>, vector<16x32xf32> -> vector<16x32xf32>
    %c1_137 = arith.constant 1 : index
    %c2_138 = arith.constant 2 : index
    %c0_139 = arith.constant 0 : index
    %c0_140 = arith.constant 0 : index
    %251 = vector.load %arg8[%c1_137, %c2_138, %c0_139, %c0_140] : memref<6x3x1x32xf32, #tpu.memory_space<vmem>>, vector<1x1x1x32xf32>
    %252 = vector.shape_cast %251 : vector<1x1x1x32xf32> to vector<1x32xf32>
    %253 = vector.broadcast %252 : vector<1x32xf32> to vector<16x32xf32>
    %254 = arith.addf %250, %253 : vector<16x32xf32>
    %255 = vector.broadcast %8 : vector<1x32xf32> to vector<16x32xf32>
    %256 = arith.mulf %240, %255 : vector<16x32xf32>
    %cst_141 = arith.constant dense<0.000000e+00> : vector<16x16xf32>
    %257 = tpu.matmul %256, %247, %cst_141 {dimension_numbers = #tpu.dot_dimension_numbers<[1], [1], [0], [0], [0, 0, 1, 0], [], []>} : vector<16x32xf32>, vector<16x32xf32>, vector<16x16xf32> -> vector<16x16xf32>
    %258 = arith.addf %257, %50 : vector<16x16xf32>
    %cst_142 = arith.constant dense<0xFF800000> : vector<16xf32>
    %259 = vector.multi_reduction <maximumf>, %258, %cst_142 [1] : vector<16x16xf32> to vector<16xf32>
    %260 = vector.shape_cast %259 : vector<16xf32> to vector<16x1xf32>
    %261 = vector.broadcast %260 : vector<16x1xf32> to vector<16x16xf32>
    %262 = arith.subf %258, %261 : vector<16x16xf32>
    %263 = math.exp %262 : vector<16x16xf32>
    %cst_143 = arith.constant dense<0.000000e+00> : vector<16xf32>
    %264 = vector.multi_reduction <add>, %263, %cst_143 [1] : vector<16x16xf32> to vector<16xf32>
    %265 = vector.shape_cast %264 : vector<16xf32> to vector<16x1xf32>
    %266 = vector.broadcast %265 : vector<16x1xf32> to vector<16x16xf32>
    %267 = arith.divf %263, %266 : vector<16x16xf32>
    %268 = vector.broadcast %8 : vector<1x32xf32> to vector<16x32xf32>
    %269 = arith.mulf %254, %268 : vector<16x32xf32>
    %cst_144 = arith.constant dense<0.000000e+00> : vector<16x32xf32>
    %270 = tpu.matmul %267, %269, %cst_144 {dimension_numbers = #tpu.dot_dimension_numbers<[1], [0], [0], [1], [0, 0, 1, 1], [], []>} : vector<16x16xf32>, vector<16x32xf32>, vector<16x32xf32> -> vector<16x32xf32>
    %271 = vector.broadcast %16 : vector<1x32xf32> to vector<16x32xf32>
    %272 = arith.mulf %240, %271 : vector<16x32xf32>
    %cst_145 = arith.constant dense<0.000000e+00> : vector<16x16xf32>
    %273 = tpu.matmul %272, %247, %cst_145 {dimension_numbers = #tpu.dot_dimension_numbers<[1], [1], [0], [0], [0, 0, 1, 0], [], []>} : vector<16x32xf32>, vector<16x32xf32>, vector<16x16xf32> -> vector<16x16xf32>
    %274 = arith.addf %273, %50 : vector<16x16xf32>
    %cst_146 = arith.constant dense<0xFF800000> : vector<16xf32>
    %275 = vector.multi_reduction <maximumf>, %274, %cst_146 [1] : vector<16x16xf32> to vector<16xf32>
    %276 = vector.shape_cast %275 : vector<16xf32> to vector<16x1xf32>
    %277 = vector.broadcast %276 : vector<16x1xf32> to vector<16x16xf32>
    %278 = arith.subf %274, %277 : vector<16x16xf32>
    %279 = math.exp %278 : vector<16x16xf32>
    %cst_147 = arith.constant dense<0.000000e+00> : vector<16xf32>
    %280 = vector.multi_reduction <add>, %279, %cst_147 [1] : vector<16x16xf32> to vector<16xf32>
    %281 = vector.shape_cast %280 : vector<16xf32> to vector<16x1xf32>
    %282 = vector.broadcast %281 : vector<16x1xf32> to vector<16x16xf32>
    %283 = arith.divf %279, %282 : vector<16x16xf32>
    %284 = vector.broadcast %16 : vector<1x32xf32> to vector<16x32xf32>
    %285 = arith.mulf %254, %284 : vector<16x32xf32>
    %cst_148 = arith.constant dense<0.000000e+00> : vector<16x32xf32>
    %286 = tpu.matmul %283, %285, %cst_148 {dimension_numbers = #tpu.dot_dimension_numbers<[1], [0], [0], [1], [0, 0, 1, 1], [], []>} : vector<16x16xf32>, vector<16x32xf32>, vector<16x32xf32> -> vector<16x32xf32>
    %287 = arith.addf %270, %286 : vector<16x32xf32>
    %288 = vector.broadcast %24 : vector<1x32xf32> to vector<16x32xf32>
    %289 = arith.mulf %240, %288 : vector<16x32xf32>
    %cst_149 = arith.constant dense<0.000000e+00> : vector<16x16xf32>
    %290 = tpu.matmul %289, %247, %cst_149 {dimension_numbers = #tpu.dot_dimension_numbers<[1], [1], [0], [0], [0, 0, 1, 0], [], []>} : vector<16x32xf32>, vector<16x32xf32>, vector<16x16xf32> -> vector<16x16xf32>
    %291 = arith.addf %290, %50 : vector<16x16xf32>
    %cst_150 = arith.constant dense<0xFF800000> : vector<16xf32>
    %292 = vector.multi_reduction <maximumf>, %291, %cst_150 [1] : vector<16x16xf32> to vector<16xf32>
    %293 = vector.shape_cast %292 : vector<16xf32> to vector<16x1xf32>
    %294 = vector.broadcast %293 : vector<16x1xf32> to vector<16x16xf32>
    %295 = arith.subf %291, %294 : vector<16x16xf32>
    %296 = math.exp %295 : vector<16x16xf32>
    %cst_151 = arith.constant dense<0.000000e+00> : vector<16xf32>
    %297 = vector.multi_reduction <add>, %296, %cst_151 [1] : vector<16x16xf32> to vector<16xf32>
    %298 = vector.shape_cast %297 : vector<16xf32> to vector<16x1xf32>
    %299 = vector.broadcast %298 : vector<16x1xf32> to vector<16x16xf32>
    %300 = arith.divf %296, %299 : vector<16x16xf32>
    %301 = vector.broadcast %24 : vector<1x32xf32> to vector<16x32xf32>
    %302 = arith.mulf %254, %301 : vector<16x32xf32>
    %cst_152 = arith.constant dense<0.000000e+00> : vector<16x32xf32>
    %303 = tpu.matmul %300, %302, %cst_152 {dimension_numbers = #tpu.dot_dimension_numbers<[1], [0], [0], [1], [0, 0, 1, 1], [], []>} : vector<16x16xf32>, vector<16x32xf32>, vector<16x32xf32> -> vector<16x32xf32>
    %304 = arith.addf %287, %303 : vector<16x32xf32>
    %305 = vector.broadcast %32 : vector<1x32xf32> to vector<16x32xf32>
    %306 = arith.mulf %240, %305 : vector<16x32xf32>
    %cst_153 = arith.constant dense<0.000000e+00> : vector<16x16xf32>
    %307 = tpu.matmul %306, %247, %cst_153 {dimension_numbers = #tpu.dot_dimension_numbers<[1], [1], [0], [0], [0, 0, 1, 0], [], []>} : vector<16x32xf32>, vector<16x32xf32>, vector<16x16xf32> -> vector<16x16xf32>
    %308 = arith.addf %307, %50 : vector<16x16xf32>
    %cst_154 = arith.constant dense<0xFF800000> : vector<16xf32>
    %309 = vector.multi_reduction <maximumf>, %308, %cst_154 [1] : vector<16x16xf32> to vector<16xf32>
    %310 = vector.shape_cast %309 : vector<16xf32> to vector<16x1xf32>
    %311 = vector.broadcast %310 : vector<16x1xf32> to vector<16x16xf32>
    %312 = arith.subf %308, %311 : vector<16x16xf32>
    %313 = math.exp %312 : vector<16x16xf32>
    %cst_155 = arith.constant dense<0.000000e+00> : vector<16xf32>
    %314 = vector.multi_reduction <add>, %313, %cst_155 [1] : vector<16x16xf32> to vector<16xf32>
    %315 = vector.shape_cast %314 : vector<16xf32> to vector<16x1xf32>
    %316 = vector.broadcast %315 : vector<16x1xf32> to vector<16x16xf32>
    %317 = arith.divf %313, %316 : vector<16x16xf32>
    %318 = vector.broadcast %32 : vector<1x32xf32> to vector<16x32xf32>
    %319 = arith.mulf %254, %318 : vector<16x32xf32>
    %cst_156 = arith.constant dense<0.000000e+00> : vector<16x32xf32>
    %320 = tpu.matmul %317, %319, %cst_156 {dimension_numbers = #tpu.dot_dimension_numbers<[1], [0], [0], [1], [0, 0, 1, 1], [], []>} : vector<16x16xf32>, vector<16x32xf32>, vector<16x32xf32> -> vector<16x32xf32>
    %321 = arith.addf %304, %320 : vector<16x32xf32>
    %c1_157 = arith.constant 1 : index
    %c0_158 = arith.constant 0 : index
    %c0_159 = arith.constant 0 : index
    %322 = vector.load %arg9[%c1_157, %c0_158, %c0_159] : memref<6x32x32xf32, #tpu.memory_space<vmem>>, vector<1x32x32xf32>
    %323 = vector.shape_cast %322 : vector<1x32x32xf32> to vector<32x32xf32>
    %cst_160 = arith.constant dense<0.000000e+00> : vector<16x32xf32>
    %324 = tpu.matmul %321, %323, %cst_160 {dimension_numbers = #tpu.dot_dimension_numbers<[1], [0], [0], [1], [0, 0, 1, 1], [], []>} : vector<16x32xf32>, vector<32x32xf32>, vector<16x32xf32> -> vector<16x32xf32>
    %c1_161 = arith.constant 1 : index
    %c0_162 = arith.constant 0 : index
    %c0_163 = arith.constant 0 : index
    %325 = vector.load %arg10[%c1_161, %c0_162, %c0_163] : memref<6x1x32xf32, #tpu.memory_space<vmem>>, vector<1x1x32xf32>
    %326 = vector.shape_cast %325 : vector<1x1x32xf32> to vector<1x32xf32>
    %327 = vector.broadcast %326 : vector<1x32xf32> to vector<16x32xf32>
    %328 = arith.addf %324, %327 : vector<16x32xf32>
    %329 = arith.addf %233, %328 : vector<16x32xf32>
    %c2_164 = arith.constant 2 : index
    %c0_165 = arith.constant 0 : index
    %c0_166 = arith.constant 0 : index
    %330 = vector.load %arg15[%c2_164, %c0_165, %c0_166] : memref<10x1x32xf32, #tpu.memory_space<vmem>>, vector<1x1x32xf32>
    %331 = vector.shape_cast %330 : vector<1x1x32xf32> to vector<1x32xf32>
    %c2_167 = arith.constant 2 : index
    %c0_168 = arith.constant 0 : index
    %c0_169 = arith.constant 0 : index
    %332 = vector.load %arg16[%c2_167, %c0_168, %c0_169] : memref<10x1x32xf32, #tpu.memory_space<vmem>>, vector<1x1x32xf32>
    %333 = vector.shape_cast %332 : vector<1x1x32xf32> to vector<1x32xf32>
    %cst_170 = arith.constant dense<0.000000e+00> : vector<16xf32>
    %334 = vector.multi_reduction <add>, %329, %cst_170 [1] : vector<16x32xf32> to vector<16xf32>
    %335 = vector.shape_cast %334 : vector<16xf32> to vector<16x1xf32>
    %cst_171 = arith.constant 3.200000e+01 : f32
    %336 = vector.broadcast %cst_171 : f32 to vector<16x1xf32>
    %337 = arith.divf %335, %336 : vector<16x1xf32>
    %338 = vector.broadcast %337 : vector<16x1xf32> to vector<16x32xf32>
    %339 = arith.subf %329, %338 : vector<16x32xf32>
    %340 = arith.mulf %339, %339 : vector<16x32xf32>
    %cst_172 = arith.constant dense<0.000000e+00> : vector<16xf32>
    %341 = vector.multi_reduction <add>, %340, %cst_172 [1] : vector<16x32xf32> to vector<16xf32>
    %342 = vector.shape_cast %341 : vector<16xf32> to vector<16x1xf32>
    %cst_173 = arith.constant 3.200000e+01 : f32
    %343 = vector.broadcast %cst_173 : f32 to vector<16x1xf32>
    %344 = arith.divf %342, %343 : vector<16x1xf32>
    %cst_174 = arith.constant 9.99999974E-6 : f32
    %345 = vector.broadcast %cst_174 : f32 to vector<16x1xf32>
    %346 = arith.addf %344, %345 : vector<16x1xf32>
    %347 = math.rsqrt %346 : vector<16x1xf32>
    %348 = vector.broadcast %347 : vector<16x1xf32> to vector<16x32xf32>
    %349 = arith.mulf %339, %348 : vector<16x32xf32>
    %350 = vector.broadcast %331 : vector<1x32xf32> to vector<16x32xf32>
    %351 = arith.mulf %349, %350 : vector<16x32xf32>
    %352 = vector.broadcast %333 : vector<1x32xf32> to vector<16x32xf32>
    %353 = arith.addf %351, %352 : vector<16x32xf32>
    %c1_175 = arith.constant 1 : index
    %c0_176 = arith.constant 0 : index
    %c0_177 = arith.constant 0 : index
    %354 = vector.load %arg11[%c1_175, %c0_176, %c0_177] : memref<4x32x64xf32, #tpu.memory_space<vmem>>, vector<1x32x64xf32>
    %355 = vector.shape_cast %354 : vector<1x32x64xf32> to vector<32x64xf32>
    %cst_178 = arith.constant dense<0.000000e+00> : vector<16x64xf32>
    %356 = tpu.matmul %353, %355, %cst_178 {dimension_numbers = #tpu.dot_dimension_numbers<[1], [0], [0], [1], [0, 0, 1, 1], [], []>} : vector<16x32xf32>, vector<32x64xf32>, vector<16x64xf32> -> vector<16x64xf32>
    %c1_179 = arith.constant 1 : index
    %c0_180 = arith.constant 0 : index
    %c0_181 = arith.constant 0 : index
    %357 = vector.load %arg12[%c1_179, %c0_180, %c0_181] : memref<4x1x64xf32, #tpu.memory_space<vmem>>, vector<1x1x64xf32>
    %358 = vector.shape_cast %357 : vector<1x1x64xf32> to vector<1x64xf32>
    %359 = vector.broadcast %358 : vector<1x64xf32> to vector<16x64xf32>
    %360 = arith.addf %356, %359 : vector<16x64xf32>
    %cst_182 = arith.constant 0.000000e+00 : f32
    %361 = vector.broadcast %cst_182 : f32 to vector<16x64xf32>
    %362 = arith.maximumf %360, %361 : vector<16x64xf32>
    %c1_183 = arith.constant 1 : index
    %c0_184 = arith.constant 0 : index
    %c0_185 = arith.constant 0 : index
    %363 = vector.load %arg13[%c1_183, %c0_184, %c0_185] : memref<4x64x32xf32, #tpu.memory_space<vmem>>, vector<1x64x32xf32>
    %364 = vector.shape_cast %363 : vector<1x64x32xf32> to vector<64x32xf32>
    %cst_186 = arith.constant dense<0.000000e+00> : vector<16x32xf32>
    %365 = tpu.matmul %362, %364, %cst_186 {dimension_numbers = #tpu.dot_dimension_numbers<[1], [0], [0], [1], [0, 0, 1, 1], [], []>} : vector<16x64xf32>, vector<64x32xf32>, vector<16x32xf32> -> vector<16x32xf32>
    %c1_187 = arith.constant 1 : index
    %c0_188 = arith.constant 0 : index
    %c0_189 = arith.constant 0 : index
    %366 = vector.load %arg14[%c1_187, %c0_188, %c0_189] : memref<4x1x32xf32, #tpu.memory_space<vmem>>, vector<1x1x32xf32>
    %367 = vector.shape_cast %366 : vector<1x1x32xf32> to vector<1x32xf32>
    %368 = vector.broadcast %367 : vector<1x32xf32> to vector<16x32xf32>
    %369 = arith.addf %365, %368 : vector<16x32xf32>
    %370 = arith.addf %353, %369 : vector<16x32xf32>
    %c3 = arith.constant 3 : index
    %c0_190 = arith.constant 0 : index
    %c0_191 = arith.constant 0 : index
    %371 = vector.load %arg15[%c3, %c0_190, %c0_191] : memref<10x1x32xf32, #tpu.memory_space<vmem>>, vector<1x1x32xf32>
    %372 = vector.shape_cast %371 : vector<1x1x32xf32> to vector<1x32xf32>
    %c3_192 = arith.constant 3 : index
    %c0_193 = arith.constant 0 : index
    %c0_194 = arith.constant 0 : index
    %373 = vector.load %arg16[%c3_192, %c0_193, %c0_194] : memref<10x1x32xf32, #tpu.memory_space<vmem>>, vector<1x1x32xf32>
    %374 = vector.shape_cast %373 : vector<1x1x32xf32> to vector<1x32xf32>
    %cst_195 = arith.constant dense<0.000000e+00> : vector<16xf32>
    %375 = vector.multi_reduction <add>, %370, %cst_195 [1] : vector<16x32xf32> to vector<16xf32>
    %376 = vector.shape_cast %375 : vector<16xf32> to vector<16x1xf32>
    %cst_196 = arith.constant 3.200000e+01 : f32
    %377 = vector.broadcast %cst_196 : f32 to vector<16x1xf32>
    %378 = arith.divf %376, %377 : vector<16x1xf32>
    %379 = vector.broadcast %378 : vector<16x1xf32> to vector<16x32xf32>
    %380 = arith.subf %370, %379 : vector<16x32xf32>
    %381 = arith.mulf %380, %380 : vector<16x32xf32>
    %cst_197 = arith.constant dense<0.000000e+00> : vector<16xf32>
    %382 = vector.multi_reduction <add>, %381, %cst_197 [1] : vector<16x32xf32> to vector<16xf32>
    %383 = vector.shape_cast %382 : vector<16xf32> to vector<16x1xf32>
    %cst_198 = arith.constant 3.200000e+01 : f32
    %384 = vector.broadcast %cst_198 : f32 to vector<16x1xf32>
    %385 = arith.divf %383, %384 : vector<16x1xf32>
    %cst_199 = arith.constant 9.99999974E-6 : f32
    %386 = vector.broadcast %cst_199 : f32 to vector<16x1xf32>
    %387 = arith.addf %385, %386 : vector<16x1xf32>
    %388 = math.rsqrt %387 : vector<16x1xf32>
    %389 = vector.broadcast %388 : vector<16x1xf32> to vector<16x32xf32>
    %390 = arith.mulf %380, %389 : vector<16x32xf32>
    %391 = vector.broadcast %372 : vector<1x32xf32> to vector<16x32xf32>
    %392 = arith.mulf %390, %391 : vector<16x32xf32>
    %393 = vector.broadcast %374 : vector<1x32xf32> to vector<16x32xf32>
    %394 = arith.addf %392, %393 : vector<16x32xf32>
    %c0_200 = arith.constant 0 : index
    %c0_201 = arith.constant 0 : index
    %395 = vector.load %arg1[%c0_200, %c0_201] : memref<16x32xf32, #tpu.memory_space<vmem>>, vector<16x32xf32>
    %c2_202 = arith.constant 2 : index
    %c0_203 = arith.constant 0 : index
    %c0_204 = arith.constant 0 : index
    %c0_205 = arith.constant 0 : index
    %396 = vector.load %arg7[%c2_202, %c0_203, %c0_204, %c0_205] : memref<6x3x32x32xf32, #tpu.memory_space<vmem>>, vector<1x1x32x32xf32>
    %397 = vector.shape_cast %396 : vector<1x1x32x32xf32> to vector<32x32xf32>
    %cst_206 = arith.constant dense<0.000000e+00> : vector<16x32xf32>
    %398 = tpu.matmul %395, %397, %cst_206 {dimension_numbers = #tpu.dot_dimension_numbers<[1], [0], [0], [1], [0, 0, 1, 1], [], []>} : vector<16x32xf32>, vector<32x32xf32>, vector<16x32xf32> -> vector<16x32xf32>
    %c2_207 = arith.constant 2 : index
    %c0_208 = arith.constant 0 : index
    %c0_209 = arith.constant 0 : index
    %c0_210 = arith.constant 0 : index
    %399 = vector.load %arg8[%c2_207, %c0_208, %c0_209, %c0_210] : memref<6x3x1x32xf32, #tpu.memory_space<vmem>>, vector<1x1x1x32xf32>
    %400 = vector.shape_cast %399 : vector<1x1x1x32xf32> to vector<1x32xf32>
    %401 = vector.broadcast %400 : vector<1x32xf32> to vector<16x32xf32>
    %402 = arith.addf %398, %401 : vector<16x32xf32>
    %c2_211 = arith.constant 2 : index
    %c1_212 = arith.constant 1 : index
    %c0_213 = arith.constant 0 : index
    %c0_214 = arith.constant 0 : index
    %403 = vector.load %arg7[%c2_211, %c1_212, %c0_213, %c0_214] : memref<6x3x32x32xf32, #tpu.memory_space<vmem>>, vector<1x1x32x32xf32>
    %404 = vector.shape_cast %403 : vector<1x1x32x32xf32> to vector<32x32xf32>
    %cst_215 = arith.constant dense<0.000000e+00> : vector<16x32xf32>
    %405 = tpu.matmul %395, %404, %cst_215 {dimension_numbers = #tpu.dot_dimension_numbers<[1], [0], [0], [1], [0, 0, 1, 1], [], []>} : vector<16x32xf32>, vector<32x32xf32>, vector<16x32xf32> -> vector<16x32xf32>
    %c2_216 = arith.constant 2 : index
    %c1_217 = arith.constant 1 : index
    %c0_218 = arith.constant 0 : index
    %c0_219 = arith.constant 0 : index
    %406 = vector.load %arg8[%c2_216, %c1_217, %c0_218, %c0_219] : memref<6x3x1x32xf32, #tpu.memory_space<vmem>>, vector<1x1x1x32xf32>
    %407 = vector.shape_cast %406 : vector<1x1x1x32xf32> to vector<1x32xf32>
    %408 = vector.broadcast %407 : vector<1x32xf32> to vector<16x32xf32>
    %409 = arith.addf %405, %408 : vector<16x32xf32>
    %c2_220 = arith.constant 2 : index
    %c2_221 = arith.constant 2 : index
    %c0_222 = arith.constant 0 : index
    %c0_223 = arith.constant 0 : index
    %410 = vector.load %arg7[%c2_220, %c2_221, %c0_222, %c0_223] : memref<6x3x32x32xf32, #tpu.memory_space<vmem>>, vector<1x1x32x32xf32>
    %411 = vector.shape_cast %410 : vector<1x1x32x32xf32> to vector<32x32xf32>
    %cst_224 = arith.constant dense<0.000000e+00> : vector<16x32xf32>
    %412 = tpu.matmul %395, %411, %cst_224 {dimension_numbers = #tpu.dot_dimension_numbers<[1], [0], [0], [1], [0, 0, 1, 1], [], []>} : vector<16x32xf32>, vector<32x32xf32>, vector<16x32xf32> -> vector<16x32xf32>
    %c2_225 = arith.constant 2 : index
    %c2_226 = arith.constant 2 : index
    %c0_227 = arith.constant 0 : index
    %c0_228 = arith.constant 0 : index
    %413 = vector.load %arg8[%c2_225, %c2_226, %c0_227, %c0_228] : memref<6x3x1x32xf32, #tpu.memory_space<vmem>>, vector<1x1x1x32xf32>
    %414 = vector.shape_cast %413 : vector<1x1x1x32xf32> to vector<1x32xf32>
    %415 = vector.broadcast %414 : vector<1x32xf32> to vector<16x32xf32>
    %416 = arith.addf %412, %415 : vector<16x32xf32>
    %417 = vector.broadcast %8 : vector<1x32xf32> to vector<16x32xf32>
    %418 = arith.mulf %402, %417 : vector<16x32xf32>
    %cst_229 = arith.constant dense<0.000000e+00> : vector<16x16xf32>
    %419 = tpu.matmul %418, %409, %cst_229 {dimension_numbers = #tpu.dot_dimension_numbers<[1], [1], [0], [0], [0, 0, 1, 0], [], []>} : vector<16x32xf32>, vector<16x32xf32>, vector<16x16xf32> -> vector<16x16xf32>
    %420 = arith.addf %419, %65 : vector<16x16xf32>
    %cst_230 = arith.constant dense<0xFF800000> : vector<16xf32>
    %421 = vector.multi_reduction <maximumf>, %420, %cst_230 [1] : vector<16x16xf32> to vector<16xf32>
    %422 = vector.shape_cast %421 : vector<16xf32> to vector<16x1xf32>
    %423 = vector.broadcast %422 : vector<16x1xf32> to vector<16x16xf32>
    %424 = arith.subf %420, %423 : vector<16x16xf32>
    %425 = math.exp %424 : vector<16x16xf32>
    %cst_231 = arith.constant dense<0.000000e+00> : vector<16xf32>
    %426 = vector.multi_reduction <add>, %425, %cst_231 [1] : vector<16x16xf32> to vector<16xf32>
    %427 = vector.shape_cast %426 : vector<16xf32> to vector<16x1xf32>
    %428 = vector.broadcast %427 : vector<16x1xf32> to vector<16x16xf32>
    %429 = arith.divf %425, %428 : vector<16x16xf32>
    %430 = vector.broadcast %8 : vector<1x32xf32> to vector<16x32xf32>
    %431 = arith.mulf %416, %430 : vector<16x32xf32>
    %cst_232 = arith.constant dense<0.000000e+00> : vector<16x32xf32>
    %432 = tpu.matmul %429, %431, %cst_232 {dimension_numbers = #tpu.dot_dimension_numbers<[1], [0], [0], [1], [0, 0, 1, 1], [], []>} : vector<16x16xf32>, vector<16x32xf32>, vector<16x32xf32> -> vector<16x32xf32>
    %433 = vector.broadcast %16 : vector<1x32xf32> to vector<16x32xf32>
    %434 = arith.mulf %402, %433 : vector<16x32xf32>
    %cst_233 = arith.constant dense<0.000000e+00> : vector<16x16xf32>
    %435 = tpu.matmul %434, %409, %cst_233 {dimension_numbers = #tpu.dot_dimension_numbers<[1], [1], [0], [0], [0, 0, 1, 0], [], []>} : vector<16x32xf32>, vector<16x32xf32>, vector<16x16xf32> -> vector<16x16xf32>
    %436 = arith.addf %435, %65 : vector<16x16xf32>
    %cst_234 = arith.constant dense<0xFF800000> : vector<16xf32>
    %437 = vector.multi_reduction <maximumf>, %436, %cst_234 [1] : vector<16x16xf32> to vector<16xf32>
    %438 = vector.shape_cast %437 : vector<16xf32> to vector<16x1xf32>
    %439 = vector.broadcast %438 : vector<16x1xf32> to vector<16x16xf32>
    %440 = arith.subf %436, %439 : vector<16x16xf32>
    %441 = math.exp %440 : vector<16x16xf32>
    %cst_235 = arith.constant dense<0.000000e+00> : vector<16xf32>
    %442 = vector.multi_reduction <add>, %441, %cst_235 [1] : vector<16x16xf32> to vector<16xf32>
    %443 = vector.shape_cast %442 : vector<16xf32> to vector<16x1xf32>
    %444 = vector.broadcast %443 : vector<16x1xf32> to vector<16x16xf32>
    %445 = arith.divf %441, %444 : vector<16x16xf32>
    %446 = vector.broadcast %16 : vector<1x32xf32> to vector<16x32xf32>
    %447 = arith.mulf %416, %446 : vector<16x32xf32>
    %cst_236 = arith.constant dense<0.000000e+00> : vector<16x32xf32>
    %448 = tpu.matmul %445, %447, %cst_236 {dimension_numbers = #tpu.dot_dimension_numbers<[1], [0], [0], [1], [0, 0, 1, 1], [], []>} : vector<16x16xf32>, vector<16x32xf32>, vector<16x32xf32> -> vector<16x32xf32>
    %449 = arith.addf %432, %448 : vector<16x32xf32>
    %450 = vector.broadcast %24 : vector<1x32xf32> to vector<16x32xf32>
    %451 = arith.mulf %402, %450 : vector<16x32xf32>
    %cst_237 = arith.constant dense<0.000000e+00> : vector<16x16xf32>
    %452 = tpu.matmul %451, %409, %cst_237 {dimension_numbers = #tpu.dot_dimension_numbers<[1], [1], [0], [0], [0, 0, 1, 0], [], []>} : vector<16x32xf32>, vector<16x32xf32>, vector<16x16xf32> -> vector<16x16xf32>
    %453 = arith.addf %452, %65 : vector<16x16xf32>
    %cst_238 = arith.constant dense<0xFF800000> : vector<16xf32>
    %454 = vector.multi_reduction <maximumf>, %453, %cst_238 [1] : vector<16x16xf32> to vector<16xf32>
    %455 = vector.shape_cast %454 : vector<16xf32> to vector<16x1xf32>
    %456 = vector.broadcast %455 : vector<16x1xf32> to vector<16x16xf32>
    %457 = arith.subf %453, %456 : vector<16x16xf32>
    %458 = math.exp %457 : vector<16x16xf32>
    %cst_239 = arith.constant dense<0.000000e+00> : vector<16xf32>
    %459 = vector.multi_reduction <add>, %458, %cst_239 [1] : vector<16x16xf32> to vector<16xf32>
    %460 = vector.shape_cast %459 : vector<16xf32> to vector<16x1xf32>
    %461 = vector.broadcast %460 : vector<16x1xf32> to vector<16x16xf32>
    %462 = arith.divf %458, %461 : vector<16x16xf32>
    %463 = vector.broadcast %24 : vector<1x32xf32> to vector<16x32xf32>
    %464 = arith.mulf %416, %463 : vector<16x32xf32>
    %cst_240 = arith.constant dense<0.000000e+00> : vector<16x32xf32>
    %465 = tpu.matmul %462, %464, %cst_240 {dimension_numbers = #tpu.dot_dimension_numbers<[1], [0], [0], [1], [0, 0, 1, 1], [], []>} : vector<16x16xf32>, vector<16x32xf32>, vector<16x32xf32> -> vector<16x32xf32>
    %466 = arith.addf %449, %465 : vector<16x32xf32>
    %467 = vector.broadcast %32 : vector<1x32xf32> to vector<16x32xf32>
    %468 = arith.mulf %402, %467 : vector<16x32xf32>
    %cst_241 = arith.constant dense<0.000000e+00> : vector<16x16xf32>
    %469 = tpu.matmul %468, %409, %cst_241 {dimension_numbers = #tpu.dot_dimension_numbers<[1], [1], [0], [0], [0, 0, 1, 0], [], []>} : vector<16x32xf32>, vector<16x32xf32>, vector<16x16xf32> -> vector<16x16xf32>
    %470 = arith.addf %469, %65 : vector<16x16xf32>
    %cst_242 = arith.constant dense<0xFF800000> : vector<16xf32>
    %471 = vector.multi_reduction <maximumf>, %470, %cst_242 [1] : vector<16x16xf32> to vector<16xf32>
    %472 = vector.shape_cast %471 : vector<16xf32> to vector<16x1xf32>
    %473 = vector.broadcast %472 : vector<16x1xf32> to vector<16x16xf32>
    %474 = arith.subf %470, %473 : vector<16x16xf32>
    %475 = math.exp %474 : vector<16x16xf32>
    %cst_243 = arith.constant dense<0.000000e+00> : vector<16xf32>
    %476 = vector.multi_reduction <add>, %475, %cst_243 [1] : vector<16x16xf32> to vector<16xf32>
    %477 = vector.shape_cast %476 : vector<16xf32> to vector<16x1xf32>
    %478 = vector.broadcast %477 : vector<16x1xf32> to vector<16x16xf32>
    %479 = arith.divf %475, %478 : vector<16x16xf32>
    %480 = vector.broadcast %32 : vector<1x32xf32> to vector<16x32xf32>
    %481 = arith.mulf %416, %480 : vector<16x32xf32>
    %cst_244 = arith.constant dense<0.000000e+00> : vector<16x32xf32>
    %482 = tpu.matmul %479, %481, %cst_244 {dimension_numbers = #tpu.dot_dimension_numbers<[1], [0], [0], [1], [0, 0, 1, 1], [], []>} : vector<16x16xf32>, vector<16x32xf32>, vector<16x32xf32> -> vector<16x32xf32>
    %483 = arith.addf %466, %482 : vector<16x32xf32>
    %c2_245 = arith.constant 2 : index
    %c0_246 = arith.constant 0 : index
    %c0_247 = arith.constant 0 : index
    %484 = vector.load %arg9[%c2_245, %c0_246, %c0_247] : memref<6x32x32xf32, #tpu.memory_space<vmem>>, vector<1x32x32xf32>
    %485 = vector.shape_cast %484 : vector<1x32x32xf32> to vector<32x32xf32>
    %cst_248 = arith.constant dense<0.000000e+00> : vector<16x32xf32>
    %486 = tpu.matmul %483, %485, %cst_248 {dimension_numbers = #tpu.dot_dimension_numbers<[1], [0], [0], [1], [0, 0, 1, 1], [], []>} : vector<16x32xf32>, vector<32x32xf32>, vector<16x32xf32> -> vector<16x32xf32>
    %c2_249 = arith.constant 2 : index
    %c0_250 = arith.constant 0 : index
    %c0_251 = arith.constant 0 : index
    %487 = vector.load %arg10[%c2_249, %c0_250, %c0_251] : memref<6x1x32xf32, #tpu.memory_space<vmem>>, vector<1x1x32xf32>
    %488 = vector.shape_cast %487 : vector<1x1x32xf32> to vector<1x32xf32>
    %489 = vector.broadcast %488 : vector<1x32xf32> to vector<16x32xf32>
    %490 = arith.addf %486, %489 : vector<16x32xf32>
    %491 = arith.addf %395, %490 : vector<16x32xf32>
    %c4 = arith.constant 4 : index
    %c0_252 = arith.constant 0 : index
    %c0_253 = arith.constant 0 : index
    %492 = vector.load %arg15[%c4, %c0_252, %c0_253] : memref<10x1x32xf32, #tpu.memory_space<vmem>>, vector<1x1x32xf32>
    %493 = vector.shape_cast %492 : vector<1x1x32xf32> to vector<1x32xf32>
    %c4_254 = arith.constant 4 : index
    %c0_255 = arith.constant 0 : index
    %c0_256 = arith.constant 0 : index
    %494 = vector.load %arg16[%c4_254, %c0_255, %c0_256] : memref<10x1x32xf32, #tpu.memory_space<vmem>>, vector<1x1x32xf32>
    %495 = vector.shape_cast %494 : vector<1x1x32xf32> to vector<1x32xf32>
    %cst_257 = arith.constant dense<0.000000e+00> : vector<16xf32>
    %496 = vector.multi_reduction <add>, %491, %cst_257 [1] : vector<16x32xf32> to vector<16xf32>
    %497 = vector.shape_cast %496 : vector<16xf32> to vector<16x1xf32>
    %cst_258 = arith.constant 3.200000e+01 : f32
    %498 = vector.broadcast %cst_258 : f32 to vector<16x1xf32>
    %499 = arith.divf %497, %498 : vector<16x1xf32>
    %500 = vector.broadcast %499 : vector<16x1xf32> to vector<16x32xf32>
    %501 = arith.subf %491, %500 : vector<16x32xf32>
    %502 = arith.mulf %501, %501 : vector<16x32xf32>
    %cst_259 = arith.constant dense<0.000000e+00> : vector<16xf32>
    %503 = vector.multi_reduction <add>, %502, %cst_259 [1] : vector<16x32xf32> to vector<16xf32>
    %504 = vector.shape_cast %503 : vector<16xf32> to vector<16x1xf32>
    %cst_260 = arith.constant 3.200000e+01 : f32
    %505 = vector.broadcast %cst_260 : f32 to vector<16x1xf32>
    %506 = arith.divf %504, %505 : vector<16x1xf32>
    %cst_261 = arith.constant 9.99999974E-6 : f32
    %507 = vector.broadcast %cst_261 : f32 to vector<16x1xf32>
    %508 = arith.addf %506, %507 : vector<16x1xf32>
    %509 = math.rsqrt %508 : vector<16x1xf32>
    %510 = vector.broadcast %509 : vector<16x1xf32> to vector<16x32xf32>
    %511 = arith.mulf %501, %510 : vector<16x32xf32>
    %512 = vector.broadcast %493 : vector<1x32xf32> to vector<16x32xf32>
    %513 = arith.mulf %511, %512 : vector<16x32xf32>
    %514 = vector.broadcast %495 : vector<1x32xf32> to vector<16x32xf32>
    %515 = arith.addf %513, %514 : vector<16x32xf32>
    %c3_262 = arith.constant 3 : index
    %c0_263 = arith.constant 0 : index
    %c0_264 = arith.constant 0 : index
    %c0_265 = arith.constant 0 : index
    %516 = vector.load %arg7[%c3_262, %c0_263, %c0_264, %c0_265] : memref<6x3x32x32xf32, #tpu.memory_space<vmem>>, vector<1x1x32x32xf32>
    %517 = vector.shape_cast %516 : vector<1x1x32x32xf32> to vector<32x32xf32>
    %cst_266 = arith.constant dense<0.000000e+00> : vector<16x32xf32>
    %518 = tpu.matmul %515, %517, %cst_266 {dimension_numbers = #tpu.dot_dimension_numbers<[1], [0], [0], [1], [0, 0, 1, 1], [], []>} : vector<16x32xf32>, vector<32x32xf32>, vector<16x32xf32> -> vector<16x32xf32>
    %c3_267 = arith.constant 3 : index
    %c0_268 = arith.constant 0 : index
    %c0_269 = arith.constant 0 : index
    %c0_270 = arith.constant 0 : index
    %519 = vector.load %arg8[%c3_267, %c0_268, %c0_269, %c0_270] : memref<6x3x1x32xf32, #tpu.memory_space<vmem>>, vector<1x1x1x32xf32>
    %520 = vector.shape_cast %519 : vector<1x1x1x32xf32> to vector<1x32xf32>
    %521 = vector.broadcast %520 : vector<1x32xf32> to vector<16x32xf32>
    %522 = arith.addf %518, %521 : vector<16x32xf32>
    %c3_271 = arith.constant 3 : index
    %c1_272 = arith.constant 1 : index
    %c0_273 = arith.constant 0 : index
    %c0_274 = arith.constant 0 : index
    %523 = vector.load %arg7[%c3_271, %c1_272, %c0_273, %c0_274] : memref<6x3x32x32xf32, #tpu.memory_space<vmem>>, vector<1x1x32x32xf32>
    %524 = vector.shape_cast %523 : vector<1x1x32x32xf32> to vector<32x32xf32>
    %cst_275 = arith.constant dense<0.000000e+00> : vector<16x32xf32>
    %525 = tpu.matmul %394, %524, %cst_275 {dimension_numbers = #tpu.dot_dimension_numbers<[1], [0], [0], [1], [0, 0, 1, 1], [], []>} : vector<16x32xf32>, vector<32x32xf32>, vector<16x32xf32> -> vector<16x32xf32>
    %c3_276 = arith.constant 3 : index
    %c1_277 = arith.constant 1 : index
    %c0_278 = arith.constant 0 : index
    %c0_279 = arith.constant 0 : index
    %526 = vector.load %arg8[%c3_276, %c1_277, %c0_278, %c0_279] : memref<6x3x1x32xf32, #tpu.memory_space<vmem>>, vector<1x1x1x32xf32>
    %527 = vector.shape_cast %526 : vector<1x1x1x32xf32> to vector<1x32xf32>
    %528 = vector.broadcast %527 : vector<1x32xf32> to vector<16x32xf32>
    %529 = arith.addf %525, %528 : vector<16x32xf32>
    %c3_280 = arith.constant 3 : index
    %c2_281 = arith.constant 2 : index
    %c0_282 = arith.constant 0 : index
    %c0_283 = arith.constant 0 : index
    %530 = vector.load %arg7[%c3_280, %c2_281, %c0_282, %c0_283] : memref<6x3x32x32xf32, #tpu.memory_space<vmem>>, vector<1x1x32x32xf32>
    %531 = vector.shape_cast %530 : vector<1x1x32x32xf32> to vector<32x32xf32>
    %cst_284 = arith.constant dense<0.000000e+00> : vector<16x32xf32>
    %532 = tpu.matmul %394, %531, %cst_284 {dimension_numbers = #tpu.dot_dimension_numbers<[1], [0], [0], [1], [0, 0, 1, 1], [], []>} : vector<16x32xf32>, vector<32x32xf32>, vector<16x32xf32> -> vector<16x32xf32>
    %c3_285 = arith.constant 3 : index
    %c2_286 = arith.constant 2 : index
    %c0_287 = arith.constant 0 : index
    %c0_288 = arith.constant 0 : index
    %533 = vector.load %arg8[%c3_285, %c2_286, %c0_287, %c0_288] : memref<6x3x1x32xf32, #tpu.memory_space<vmem>>, vector<1x1x1x32xf32>
    %534 = vector.shape_cast %533 : vector<1x1x1x32xf32> to vector<1x32xf32>
    %535 = vector.broadcast %534 : vector<1x32xf32> to vector<16x32xf32>
    %536 = arith.addf %532, %535 : vector<16x32xf32>
    %537 = vector.broadcast %8 : vector<1x32xf32> to vector<16x32xf32>
    %538 = arith.mulf %522, %537 : vector<16x32xf32>
    %cst_289 = arith.constant dense<0.000000e+00> : vector<16x16xf32>
    %539 = tpu.matmul %538, %529, %cst_289 {dimension_numbers = #tpu.dot_dimension_numbers<[1], [1], [0], [0], [0, 0, 1, 0], [], []>} : vector<16x32xf32>, vector<16x32xf32>, vector<16x16xf32> -> vector<16x16xf32>
    %540 = arith.addf %539, %71 : vector<16x16xf32>
    %cst_290 = arith.constant dense<0xFF800000> : vector<16xf32>
    %541 = vector.multi_reduction <maximumf>, %540, %cst_290 [1] : vector<16x16xf32> to vector<16xf32>
    %542 = vector.shape_cast %541 : vector<16xf32> to vector<16x1xf32>
    %543 = vector.broadcast %542 : vector<16x1xf32> to vector<16x16xf32>
    %544 = arith.subf %540, %543 : vector<16x16xf32>
    %545 = math.exp %544 : vector<16x16xf32>
    %cst_291 = arith.constant dense<0.000000e+00> : vector<16xf32>
    %546 = vector.multi_reduction <add>, %545, %cst_291 [1] : vector<16x16xf32> to vector<16xf32>
    %547 = vector.shape_cast %546 : vector<16xf32> to vector<16x1xf32>
    %548 = vector.broadcast %547 : vector<16x1xf32> to vector<16x16xf32>
    %549 = arith.divf %545, %548 : vector<16x16xf32>
    %550 = vector.broadcast %8 : vector<1x32xf32> to vector<16x32xf32>
    %551 = arith.mulf %536, %550 : vector<16x32xf32>
    %cst_292 = arith.constant dense<0.000000e+00> : vector<16x32xf32>
    %552 = tpu.matmul %549, %551, %cst_292 {dimension_numbers = #tpu.dot_dimension_numbers<[1], [0], [0], [1], [0, 0, 1, 1], [], []>} : vector<16x16xf32>, vector<16x32xf32>, vector<16x32xf32> -> vector<16x32xf32>
    %553 = vector.broadcast %16 : vector<1x32xf32> to vector<16x32xf32>
    %554 = arith.mulf %522, %553 : vector<16x32xf32>
    %cst_293 = arith.constant dense<0.000000e+00> : vector<16x16xf32>
    %555 = tpu.matmul %554, %529, %cst_293 {dimension_numbers = #tpu.dot_dimension_numbers<[1], [1], [0], [0], [0, 0, 1, 0], [], []>} : vector<16x32xf32>, vector<16x32xf32>, vector<16x16xf32> -> vector<16x16xf32>
    %556 = arith.addf %555, %71 : vector<16x16xf32>
    %cst_294 = arith.constant dense<0xFF800000> : vector<16xf32>
    %557 = vector.multi_reduction <maximumf>, %556, %cst_294 [1] : vector<16x16xf32> to vector<16xf32>
    %558 = vector.shape_cast %557 : vector<16xf32> to vector<16x1xf32>
    %559 = vector.broadcast %558 : vector<16x1xf32> to vector<16x16xf32>
    %560 = arith.subf %556, %559 : vector<16x16xf32>
    %561 = math.exp %560 : vector<16x16xf32>
    %cst_295 = arith.constant dense<0.000000e+00> : vector<16xf32>
    %562 = vector.multi_reduction <add>, %561, %cst_295 [1] : vector<16x16xf32> to vector<16xf32>
    %563 = vector.shape_cast %562 : vector<16xf32> to vector<16x1xf32>
    %564 = vector.broadcast %563 : vector<16x1xf32> to vector<16x16xf32>
    %565 = arith.divf %561, %564 : vector<16x16xf32>
    %566 = vector.broadcast %16 : vector<1x32xf32> to vector<16x32xf32>
    %567 = arith.mulf %536, %566 : vector<16x32xf32>
    %cst_296 = arith.constant dense<0.000000e+00> : vector<16x32xf32>
    %568 = tpu.matmul %565, %567, %cst_296 {dimension_numbers = #tpu.dot_dimension_numbers<[1], [0], [0], [1], [0, 0, 1, 1], [], []>} : vector<16x16xf32>, vector<16x32xf32>, vector<16x32xf32> -> vector<16x32xf32>
    %569 = arith.addf %552, %568 : vector<16x32xf32>
    %570 = vector.broadcast %24 : vector<1x32xf32> to vector<16x32xf32>
    %571 = arith.mulf %522, %570 : vector<16x32xf32>
    %cst_297 = arith.constant dense<0.000000e+00> : vector<16x16xf32>
    %572 = tpu.matmul %571, %529, %cst_297 {dimension_numbers = #tpu.dot_dimension_numbers<[1], [1], [0], [0], [0, 0, 1, 0], [], []>} : vector<16x32xf32>, vector<16x32xf32>, vector<16x16xf32> -> vector<16x16xf32>
    %573 = arith.addf %572, %71 : vector<16x16xf32>
    %cst_298 = arith.constant dense<0xFF800000> : vector<16xf32>
    %574 = vector.multi_reduction <maximumf>, %573, %cst_298 [1] : vector<16x16xf32> to vector<16xf32>
    %575 = vector.shape_cast %574 : vector<16xf32> to vector<16x1xf32>
    %576 = vector.broadcast %575 : vector<16x1xf32> to vector<16x16xf32>
    %577 = arith.subf %573, %576 : vector<16x16xf32>
    %578 = math.exp %577 : vector<16x16xf32>
    %cst_299 = arith.constant dense<0.000000e+00> : vector<16xf32>
    %579 = vector.multi_reduction <add>, %578, %cst_299 [1] : vector<16x16xf32> to vector<16xf32>
    %580 = vector.shape_cast %579 : vector<16xf32> to vector<16x1xf32>
    %581 = vector.broadcast %580 : vector<16x1xf32> to vector<16x16xf32>
    %582 = arith.divf %578, %581 : vector<16x16xf32>
    %583 = vector.broadcast %24 : vector<1x32xf32> to vector<16x32xf32>
    %584 = arith.mulf %536, %583 : vector<16x32xf32>
    %cst_300 = arith.constant dense<0.000000e+00> : vector<16x32xf32>
    %585 = tpu.matmul %582, %584, %cst_300 {dimension_numbers = #tpu.dot_dimension_numbers<[1], [0], [0], [1], [0, 0, 1, 1], [], []>} : vector<16x16xf32>, vector<16x32xf32>, vector<16x32xf32> -> vector<16x32xf32>
    %586 = arith.addf %569, %585 : vector<16x32xf32>
    %587 = vector.broadcast %32 : vector<1x32xf32> to vector<16x32xf32>
    %588 = arith.mulf %522, %587 : vector<16x32xf32>
    %cst_301 = arith.constant dense<0.000000e+00> : vector<16x16xf32>
    %589 = tpu.matmul %588, %529, %cst_301 {dimension_numbers = #tpu.dot_dimension_numbers<[1], [1], [0], [0], [0, 0, 1, 0], [], []>} : vector<16x32xf32>, vector<16x32xf32>, vector<16x16xf32> -> vector<16x16xf32>
    %590 = arith.addf %589, %71 : vector<16x16xf32>
    %cst_302 = arith.constant dense<0xFF800000> : vector<16xf32>
    %591 = vector.multi_reduction <maximumf>, %590, %cst_302 [1] : vector<16x16xf32> to vector<16xf32>
    %592 = vector.shape_cast %591 : vector<16xf32> to vector<16x1xf32>
    %593 = vector.broadcast %592 : vector<16x1xf32> to vector<16x16xf32>
    %594 = arith.subf %590, %593 : vector<16x16xf32>
    %595 = math.exp %594 : vector<16x16xf32>
    %cst_303 = arith.constant dense<0.000000e+00> : vector<16xf32>
    %596 = vector.multi_reduction <add>, %595, %cst_303 [1] : vector<16x16xf32> to vector<16xf32>
    %597 = vector.shape_cast %596 : vector<16xf32> to vector<16x1xf32>
    %598 = vector.broadcast %597 : vector<16x1xf32> to vector<16x16xf32>
    %599 = arith.divf %595, %598 : vector<16x16xf32>
    %600 = vector.broadcast %32 : vector<1x32xf32> to vector<16x32xf32>
    %601 = arith.mulf %536, %600 : vector<16x32xf32>
    %cst_304 = arith.constant dense<0.000000e+00> : vector<16x32xf32>
    %602 = tpu.matmul %599, %601, %cst_304 {dimension_numbers = #tpu.dot_dimension_numbers<[1], [0], [0], [1], [0, 0, 1, 1], [], []>} : vector<16x16xf32>, vector<16x32xf32>, vector<16x32xf32> -> vector<16x32xf32>
    %603 = arith.addf %586, %602 : vector<16x32xf32>
    %c3_305 = arith.constant 3 : index
    %c0_306 = arith.constant 0 : index
    %c0_307 = arith.constant 0 : index
    %604 = vector.load %arg9[%c3_305, %c0_306, %c0_307] : memref<6x32x32xf32, #tpu.memory_space<vmem>>, vector<1x32x32xf32>
    %605 = vector.shape_cast %604 : vector<1x32x32xf32> to vector<32x32xf32>
    %cst_308 = arith.constant dense<0.000000e+00> : vector<16x32xf32>
    %606 = tpu.matmul %603, %605, %cst_308 {dimension_numbers = #tpu.dot_dimension_numbers<[1], [0], [0], [1], [0, 0, 1, 1], [], []>} : vector<16x32xf32>, vector<32x32xf32>, vector<16x32xf32> -> vector<16x32xf32>
    %c3_309 = arith.constant 3 : index
    %c0_310 = arith.constant 0 : index
    %c0_311 = arith.constant 0 : index
    %607 = vector.load %arg10[%c3_309, %c0_310, %c0_311] : memref<6x1x32xf32, #tpu.memory_space<vmem>>, vector<1x1x32xf32>
    %608 = vector.shape_cast %607 : vector<1x1x32xf32> to vector<1x32xf32>
    %609 = vector.broadcast %608 : vector<1x32xf32> to vector<16x32xf32>
    %610 = arith.addf %606, %609 : vector<16x32xf32>
    %611 = arith.addf %515, %610 : vector<16x32xf32>
    %c5 = arith.constant 5 : index
    %c0_312 = arith.constant 0 : index
    %c0_313 = arith.constant 0 : index
    %612 = vector.load %arg15[%c5, %c0_312, %c0_313] : memref<10x1x32xf32, #tpu.memory_space<vmem>>, vector<1x1x32xf32>
    %613 = vector.shape_cast %612 : vector<1x1x32xf32> to vector<1x32xf32>
    %c5_314 = arith.constant 5 : index
    %c0_315 = arith.constant 0 : index
    %c0_316 = arith.constant 0 : index
    %614 = vector.load %arg16[%c5_314, %c0_315, %c0_316] : memref<10x1x32xf32, #tpu.memory_space<vmem>>, vector<1x1x32xf32>
    %615 = vector.shape_cast %614 : vector<1x1x32xf32> to vector<1x32xf32>
    %cst_317 = arith.constant dense<0.000000e+00> : vector<16xf32>
    %616 = vector.multi_reduction <add>, %611, %cst_317 [1] : vector<16x32xf32> to vector<16xf32>
    %617 = vector.shape_cast %616 : vector<16xf32> to vector<16x1xf32>
    %cst_318 = arith.constant 3.200000e+01 : f32
    %618 = vector.broadcast %cst_318 : f32 to vector<16x1xf32>
    %619 = arith.divf %617, %618 : vector<16x1xf32>
    %620 = vector.broadcast %619 : vector<16x1xf32> to vector<16x32xf32>
    %621 = arith.subf %611, %620 : vector<16x32xf32>
    %622 = arith.mulf %621, %621 : vector<16x32xf32>
    %cst_319 = arith.constant dense<0.000000e+00> : vector<16xf32>
    %623 = vector.multi_reduction <add>, %622, %cst_319 [1] : vector<16x32xf32> to vector<16xf32>
    %624 = vector.shape_cast %623 : vector<16xf32> to vector<16x1xf32>
    %cst_320 = arith.constant 3.200000e+01 : f32
    %625 = vector.broadcast %cst_320 : f32 to vector<16x1xf32>
    %626 = arith.divf %624, %625 : vector<16x1xf32>
    %cst_321 = arith.constant 9.99999974E-6 : f32
    %627 = vector.broadcast %cst_321 : f32 to vector<16x1xf32>
    %628 = arith.addf %626, %627 : vector<16x1xf32>
    %629 = math.rsqrt %628 : vector<16x1xf32>
    %630 = vector.broadcast %629 : vector<16x1xf32> to vector<16x32xf32>
    %631 = arith.mulf %621, %630 : vector<16x32xf32>
    %632 = vector.broadcast %613 : vector<1x32xf32> to vector<16x32xf32>
    %633 = arith.mulf %631, %632 : vector<16x32xf32>
    %634 = vector.broadcast %615 : vector<1x32xf32> to vector<16x32xf32>
    %635 = arith.addf %633, %634 : vector<16x32xf32>
    %c2_322 = arith.constant 2 : index
    %c0_323 = arith.constant 0 : index
    %c0_324 = arith.constant 0 : index
    %636 = vector.load %arg11[%c2_322, %c0_323, %c0_324] : memref<4x32x64xf32, #tpu.memory_space<vmem>>, vector<1x32x64xf32>
    %637 = vector.shape_cast %636 : vector<1x32x64xf32> to vector<32x64xf32>
    %cst_325 = arith.constant dense<0.000000e+00> : vector<16x64xf32>
    %638 = tpu.matmul %635, %637, %cst_325 {dimension_numbers = #tpu.dot_dimension_numbers<[1], [0], [0], [1], [0, 0, 1, 1], [], []>} : vector<16x32xf32>, vector<32x64xf32>, vector<16x64xf32> -> vector<16x64xf32>
    %c2_326 = arith.constant 2 : index
    %c0_327 = arith.constant 0 : index
    %c0_328 = arith.constant 0 : index
    %639 = vector.load %arg12[%c2_326, %c0_327, %c0_328] : memref<4x1x64xf32, #tpu.memory_space<vmem>>, vector<1x1x64xf32>
    %640 = vector.shape_cast %639 : vector<1x1x64xf32> to vector<1x64xf32>
    %641 = vector.broadcast %640 : vector<1x64xf32> to vector<16x64xf32>
    %642 = arith.addf %638, %641 : vector<16x64xf32>
    %cst_329 = arith.constant 0.000000e+00 : f32
    %643 = vector.broadcast %cst_329 : f32 to vector<16x64xf32>
    %644 = arith.maximumf %642, %643 : vector<16x64xf32>
    %c2_330 = arith.constant 2 : index
    %c0_331 = arith.constant 0 : index
    %c0_332 = arith.constant 0 : index
    %645 = vector.load %arg13[%c2_330, %c0_331, %c0_332] : memref<4x64x32xf32, #tpu.memory_space<vmem>>, vector<1x64x32xf32>
    %646 = vector.shape_cast %645 : vector<1x64x32xf32> to vector<64x32xf32>
    %cst_333 = arith.constant dense<0.000000e+00> : vector<16x32xf32>
    %647 = tpu.matmul %644, %646, %cst_333 {dimension_numbers = #tpu.dot_dimension_numbers<[1], [0], [0], [1], [0, 0, 1, 1], [], []>} : vector<16x64xf32>, vector<64x32xf32>, vector<16x32xf32> -> vector<16x32xf32>
    %c2_334 = arith.constant 2 : index
    %c0_335 = arith.constant 0 : index
    %c0_336 = arith.constant 0 : index
    %648 = vector.load %arg14[%c2_334, %c0_335, %c0_336] : memref<4x1x32xf32, #tpu.memory_space<vmem>>, vector<1x1x32xf32>
    %649 = vector.shape_cast %648 : vector<1x1x32xf32> to vector<1x32xf32>
    %650 = vector.broadcast %649 : vector<1x32xf32> to vector<16x32xf32>
    %651 = arith.addf %647, %650 : vector<16x32xf32>
    %652 = arith.addf %635, %651 : vector<16x32xf32>
    %c6 = arith.constant 6 : index
    %c0_337 = arith.constant 0 : index
    %c0_338 = arith.constant 0 : index
    %653 = vector.load %arg15[%c6, %c0_337, %c0_338] : memref<10x1x32xf32, #tpu.memory_space<vmem>>, vector<1x1x32xf32>
    %654 = vector.shape_cast %653 : vector<1x1x32xf32> to vector<1x32xf32>
    %c6_339 = arith.constant 6 : index
    %c0_340 = arith.constant 0 : index
    %c0_341 = arith.constant 0 : index
    %655 = vector.load %arg16[%c6_339, %c0_340, %c0_341] : memref<10x1x32xf32, #tpu.memory_space<vmem>>, vector<1x1x32xf32>
    %656 = vector.shape_cast %655 : vector<1x1x32xf32> to vector<1x32xf32>
    %cst_342 = arith.constant dense<0.000000e+00> : vector<16xf32>
    %657 = vector.multi_reduction <add>, %652, %cst_342 [1] : vector<16x32xf32> to vector<16xf32>
    %658 = vector.shape_cast %657 : vector<16xf32> to vector<16x1xf32>
    %cst_343 = arith.constant 3.200000e+01 : f32
    %659 = vector.broadcast %cst_343 : f32 to vector<16x1xf32>
    %660 = arith.divf %658, %659 : vector<16x1xf32>
    %661 = vector.broadcast %660 : vector<16x1xf32> to vector<16x32xf32>
    %662 = arith.subf %652, %661 : vector<16x32xf32>
    %663 = arith.mulf %662, %662 : vector<16x32xf32>
    %cst_344 = arith.constant dense<0.000000e+00> : vector<16xf32>
    %664 = vector.multi_reduction <add>, %663, %cst_344 [1] : vector<16x32xf32> to vector<16xf32>
    %665 = vector.shape_cast %664 : vector<16xf32> to vector<16x1xf32>
    %cst_345 = arith.constant 3.200000e+01 : f32
    %666 = vector.broadcast %cst_345 : f32 to vector<16x1xf32>
    %667 = arith.divf %665, %666 : vector<16x1xf32>
    %cst_346 = arith.constant 9.99999974E-6 : f32
    %668 = vector.broadcast %cst_346 : f32 to vector<16x1xf32>
    %669 = arith.addf %667, %668 : vector<16x1xf32>
    %670 = math.rsqrt %669 : vector<16x1xf32>
    %671 = vector.broadcast %670 : vector<16x1xf32> to vector<16x32xf32>
    %672 = arith.mulf %662, %671 : vector<16x32xf32>
    %673 = vector.broadcast %654 : vector<1x32xf32> to vector<16x32xf32>
    %674 = arith.mulf %672, %673 : vector<16x32xf32>
    %675 = vector.broadcast %656 : vector<1x32xf32> to vector<16x32xf32>
    %676 = arith.addf %674, %675 : vector<16x32xf32>
    %c4_347 = arith.constant 4 : index
    %c0_348 = arith.constant 0 : index
    %c0_349 = arith.constant 0 : index
    %c0_350 = arith.constant 0 : index
    %677 = vector.load %arg7[%c4_347, %c0_348, %c0_349, %c0_350] : memref<6x3x32x32xf32, #tpu.memory_space<vmem>>, vector<1x1x32x32xf32>
    %678 = vector.shape_cast %677 : vector<1x1x32x32xf32> to vector<32x32xf32>
    %cst_351 = arith.constant dense<0.000000e+00> : vector<16x32xf32>
    %679 = tpu.matmul %676, %678, %cst_351 {dimension_numbers = #tpu.dot_dimension_numbers<[1], [0], [0], [1], [0, 0, 1, 1], [], []>} : vector<16x32xf32>, vector<32x32xf32>, vector<16x32xf32> -> vector<16x32xf32>
    %c4_352 = arith.constant 4 : index
    %c0_353 = arith.constant 0 : index
    %c0_354 = arith.constant 0 : index
    %c0_355 = arith.constant 0 : index
    %680 = vector.load %arg8[%c4_352, %c0_353, %c0_354, %c0_355] : memref<6x3x1x32xf32, #tpu.memory_space<vmem>>, vector<1x1x1x32xf32>
    %681 = vector.shape_cast %680 : vector<1x1x1x32xf32> to vector<1x32xf32>
    %682 = vector.broadcast %681 : vector<1x32xf32> to vector<16x32xf32>
    %683 = arith.addf %679, %682 : vector<16x32xf32>
    %c4_356 = arith.constant 4 : index
    %c1_357 = arith.constant 1 : index
    %c0_358 = arith.constant 0 : index
    %c0_359 = arith.constant 0 : index
    %684 = vector.load %arg7[%c4_356, %c1_357, %c0_358, %c0_359] : memref<6x3x32x32xf32, #tpu.memory_space<vmem>>, vector<1x1x32x32xf32>
    %685 = vector.shape_cast %684 : vector<1x1x32x32xf32> to vector<32x32xf32>
    %cst_360 = arith.constant dense<0.000000e+00> : vector<16x32xf32>
    %686 = tpu.matmul %676, %685, %cst_360 {dimension_numbers = #tpu.dot_dimension_numbers<[1], [0], [0], [1], [0, 0, 1, 1], [], []>} : vector<16x32xf32>, vector<32x32xf32>, vector<16x32xf32> -> vector<16x32xf32>
    %c4_361 = arith.constant 4 : index
    %c1_362 = arith.constant 1 : index
    %c0_363 = arith.constant 0 : index
    %c0_364 = arith.constant 0 : index
    %687 = vector.load %arg8[%c4_361, %c1_362, %c0_363, %c0_364] : memref<6x3x1x32xf32, #tpu.memory_space<vmem>>, vector<1x1x1x32xf32>
    %688 = vector.shape_cast %687 : vector<1x1x1x32xf32> to vector<1x32xf32>
    %689 = vector.broadcast %688 : vector<1x32xf32> to vector<16x32xf32>
    %690 = arith.addf %686, %689 : vector<16x32xf32>
    %c4_365 = arith.constant 4 : index
    %c2_366 = arith.constant 2 : index
    %c0_367 = arith.constant 0 : index
    %c0_368 = arith.constant 0 : index
    %691 = vector.load %arg7[%c4_365, %c2_366, %c0_367, %c0_368] : memref<6x3x32x32xf32, #tpu.memory_space<vmem>>, vector<1x1x32x32xf32>
    %692 = vector.shape_cast %691 : vector<1x1x32x32xf32> to vector<32x32xf32>
    %cst_369 = arith.constant dense<0.000000e+00> : vector<16x32xf32>
    %693 = tpu.matmul %676, %692, %cst_369 {dimension_numbers = #tpu.dot_dimension_numbers<[1], [0], [0], [1], [0, 0, 1, 1], [], []>} : vector<16x32xf32>, vector<32x32xf32>, vector<16x32xf32> -> vector<16x32xf32>
    %c4_370 = arith.constant 4 : index
    %c2_371 = arith.constant 2 : index
    %c0_372 = arith.constant 0 : index
    %c0_373 = arith.constant 0 : index
    %694 = vector.load %arg8[%c4_370, %c2_371, %c0_372, %c0_373] : memref<6x3x1x32xf32, #tpu.memory_space<vmem>>, vector<1x1x1x32xf32>
    %695 = vector.shape_cast %694 : vector<1x1x1x32xf32> to vector<1x32xf32>
    %696 = vector.broadcast %695 : vector<1x32xf32> to vector<16x32xf32>
    %697 = arith.addf %693, %696 : vector<16x32xf32>
    %698 = vector.broadcast %8 : vector<1x32xf32> to vector<16x32xf32>
    %699 = arith.mulf %683, %698 : vector<16x32xf32>
    %cst_374 = arith.constant dense<0.000000e+00> : vector<16x16xf32>
    %700 = tpu.matmul %699, %690, %cst_374 {dimension_numbers = #tpu.dot_dimension_numbers<[1], [1], [0], [0], [0, 0, 1, 0], [], []>} : vector<16x32xf32>, vector<16x32xf32>, vector<16x16xf32> -> vector<16x16xf32>
    %701 = arith.addf %700, %65 : vector<16x16xf32>
    %cst_375 = arith.constant dense<0xFF800000> : vector<16xf32>
    %702 = vector.multi_reduction <maximumf>, %701, %cst_375 [1] : vector<16x16xf32> to vector<16xf32>
    %703 = vector.shape_cast %702 : vector<16xf32> to vector<16x1xf32>
    %704 = vector.broadcast %703 : vector<16x1xf32> to vector<16x16xf32>
    %705 = arith.subf %701, %704 : vector<16x16xf32>
    %706 = math.exp %705 : vector<16x16xf32>
    %cst_376 = arith.constant dense<0.000000e+00> : vector<16xf32>
    %707 = vector.multi_reduction <add>, %706, %cst_376 [1] : vector<16x16xf32> to vector<16xf32>
    %708 = vector.shape_cast %707 : vector<16xf32> to vector<16x1xf32>
    %709 = vector.broadcast %708 : vector<16x1xf32> to vector<16x16xf32>
    %710 = arith.divf %706, %709 : vector<16x16xf32>
    %711 = vector.broadcast %8 : vector<1x32xf32> to vector<16x32xf32>
    %712 = arith.mulf %697, %711 : vector<16x32xf32>
    %cst_377 = arith.constant dense<0.000000e+00> : vector<16x32xf32>
    %713 = tpu.matmul %710, %712, %cst_377 {dimension_numbers = #tpu.dot_dimension_numbers<[1], [0], [0], [1], [0, 0, 1, 1], [], []>} : vector<16x16xf32>, vector<16x32xf32>, vector<16x32xf32> -> vector<16x32xf32>
    %714 = vector.broadcast %16 : vector<1x32xf32> to vector<16x32xf32>
    %715 = arith.mulf %683, %714 : vector<16x32xf32>
    %cst_378 = arith.constant dense<0.000000e+00> : vector<16x16xf32>
    %716 = tpu.matmul %715, %690, %cst_378 {dimension_numbers = #tpu.dot_dimension_numbers<[1], [1], [0], [0], [0, 0, 1, 0], [], []>} : vector<16x32xf32>, vector<16x32xf32>, vector<16x16xf32> -> vector<16x16xf32>
    %717 = arith.addf %716, %65 : vector<16x16xf32>
    %cst_379 = arith.constant dense<0xFF800000> : vector<16xf32>
    %718 = vector.multi_reduction <maximumf>, %717, %cst_379 [1] : vector<16x16xf32> to vector<16xf32>
    %719 = vector.shape_cast %718 : vector<16xf32> to vector<16x1xf32>
    %720 = vector.broadcast %719 : vector<16x1xf32> to vector<16x16xf32>
    %721 = arith.subf %717, %720 : vector<16x16xf32>
    %722 = math.exp %721 : vector<16x16xf32>
    %cst_380 = arith.constant dense<0.000000e+00> : vector<16xf32>
    %723 = vector.multi_reduction <add>, %722, %cst_380 [1] : vector<16x16xf32> to vector<16xf32>
    %724 = vector.shape_cast %723 : vector<16xf32> to vector<16x1xf32>
    %725 = vector.broadcast %724 : vector<16x1xf32> to vector<16x16xf32>
    %726 = arith.divf %722, %725 : vector<16x16xf32>
    %727 = vector.broadcast %16 : vector<1x32xf32> to vector<16x32xf32>
    %728 = arith.mulf %697, %727 : vector<16x32xf32>
    %cst_381 = arith.constant dense<0.000000e+00> : vector<16x32xf32>
    %729 = tpu.matmul %726, %728, %cst_381 {dimension_numbers = #tpu.dot_dimension_numbers<[1], [0], [0], [1], [0, 0, 1, 1], [], []>} : vector<16x16xf32>, vector<16x32xf32>, vector<16x32xf32> -> vector<16x32xf32>
    %730 = arith.addf %713, %729 : vector<16x32xf32>
    %731 = vector.broadcast %24 : vector<1x32xf32> to vector<16x32xf32>
    %732 = arith.mulf %683, %731 : vector<16x32xf32>
    %cst_382 = arith.constant dense<0.000000e+00> : vector<16x16xf32>
    %733 = tpu.matmul %732, %690, %cst_382 {dimension_numbers = #tpu.dot_dimension_numbers<[1], [1], [0], [0], [0, 0, 1, 0], [], []>} : vector<16x32xf32>, vector<16x32xf32>, vector<16x16xf32> -> vector<16x16xf32>
    %734 = arith.addf %733, %65 : vector<16x16xf32>
    %cst_383 = arith.constant dense<0xFF800000> : vector<16xf32>
    %735 = vector.multi_reduction <maximumf>, %734, %cst_383 [1] : vector<16x16xf32> to vector<16xf32>
    %736 = vector.shape_cast %735 : vector<16xf32> to vector<16x1xf32>
    %737 = vector.broadcast %736 : vector<16x1xf32> to vector<16x16xf32>
    %738 = arith.subf %734, %737 : vector<16x16xf32>
    %739 = math.exp %738 : vector<16x16xf32>
    %cst_384 = arith.constant dense<0.000000e+00> : vector<16xf32>
    %740 = vector.multi_reduction <add>, %739, %cst_384 [1] : vector<16x16xf32> to vector<16xf32>
    %741 = vector.shape_cast %740 : vector<16xf32> to vector<16x1xf32>
    %742 = vector.broadcast %741 : vector<16x1xf32> to vector<16x16xf32>
    %743 = arith.divf %739, %742 : vector<16x16xf32>
    %744 = vector.broadcast %24 : vector<1x32xf32> to vector<16x32xf32>
    %745 = arith.mulf %697, %744 : vector<16x32xf32>
    %cst_385 = arith.constant dense<0.000000e+00> : vector<16x32xf32>
    %746 = tpu.matmul %743, %745, %cst_385 {dimension_numbers = #tpu.dot_dimension_numbers<[1], [0], [0], [1], [0, 0, 1, 1], [], []>} : vector<16x16xf32>, vector<16x32xf32>, vector<16x32xf32> -> vector<16x32xf32>
    %747 = arith.addf %730, %746 : vector<16x32xf32>
    %748 = vector.broadcast %32 : vector<1x32xf32> to vector<16x32xf32>
    %749 = arith.mulf %683, %748 : vector<16x32xf32>
    %cst_386 = arith.constant dense<0.000000e+00> : vector<16x16xf32>
    %750 = tpu.matmul %749, %690, %cst_386 {dimension_numbers = #tpu.dot_dimension_numbers<[1], [1], [0], [0], [0, 0, 1, 0], [], []>} : vector<16x32xf32>, vector<16x32xf32>, vector<16x16xf32> -> vector<16x16xf32>
    %751 = arith.addf %750, %65 : vector<16x16xf32>
    %cst_387 = arith.constant dense<0xFF800000> : vector<16xf32>
    %752 = vector.multi_reduction <maximumf>, %751, %cst_387 [1] : vector<16x16xf32> to vector<16xf32>
    %753 = vector.shape_cast %752 : vector<16xf32> to vector<16x1xf32>
    %754 = vector.broadcast %753 : vector<16x1xf32> to vector<16x16xf32>
    %755 = arith.subf %751, %754 : vector<16x16xf32>
    %756 = math.exp %755 : vector<16x16xf32>
    %cst_388 = arith.constant dense<0.000000e+00> : vector<16xf32>
    %757 = vector.multi_reduction <add>, %756, %cst_388 [1] : vector<16x16xf32> to vector<16xf32>
    %758 = vector.shape_cast %757 : vector<16xf32> to vector<16x1xf32>
    %759 = vector.broadcast %758 : vector<16x1xf32> to vector<16x16xf32>
    %760 = arith.divf %756, %759 : vector<16x16xf32>
    %761 = vector.broadcast %32 : vector<1x32xf32> to vector<16x32xf32>
    %762 = arith.mulf %697, %761 : vector<16x32xf32>
    %cst_389 = arith.constant dense<0.000000e+00> : vector<16x32xf32>
    %763 = tpu.matmul %760, %762, %cst_389 {dimension_numbers = #tpu.dot_dimension_numbers<[1], [0], [0], [1], [0, 0, 1, 1], [], []>} : vector<16x16xf32>, vector<16x32xf32>, vector<16x32xf32> -> vector<16x32xf32>
    %764 = arith.addf %747, %763 : vector<16x32xf32>
    %c4_390 = arith.constant 4 : index
    %c0_391 = arith.constant 0 : index
    %c0_392 = arith.constant 0 : index
    %765 = vector.load %arg9[%c4_390, %c0_391, %c0_392] : memref<6x32x32xf32, #tpu.memory_space<vmem>>, vector<1x32x32xf32>
    %766 = vector.shape_cast %765 : vector<1x32x32xf32> to vector<32x32xf32>
    %cst_393 = arith.constant dense<0.000000e+00> : vector<16x32xf32>
    %767 = tpu.matmul %764, %766, %cst_393 {dimension_numbers = #tpu.dot_dimension_numbers<[1], [0], [0], [1], [0, 0, 1, 1], [], []>} : vector<16x32xf32>, vector<32x32xf32>, vector<16x32xf32> -> vector<16x32xf32>
    %c4_394 = arith.constant 4 : index
    %c0_395 = arith.constant 0 : index
    %c0_396 = arith.constant 0 : index
    %768 = vector.load %arg10[%c4_394, %c0_395, %c0_396] : memref<6x1x32xf32, #tpu.memory_space<vmem>>, vector<1x1x32xf32>
    %769 = vector.shape_cast %768 : vector<1x1x32xf32> to vector<1x32xf32>
    %770 = vector.broadcast %769 : vector<1x32xf32> to vector<16x32xf32>
    %771 = arith.addf %767, %770 : vector<16x32xf32>
    %772 = arith.addf %676, %771 : vector<16x32xf32>
    %c7 = arith.constant 7 : index
    %c0_397 = arith.constant 0 : index
    %c0_398 = arith.constant 0 : index
    %773 = vector.load %arg15[%c7, %c0_397, %c0_398] : memref<10x1x32xf32, #tpu.memory_space<vmem>>, vector<1x1x32xf32>
    %774 = vector.shape_cast %773 : vector<1x1x32xf32> to vector<1x32xf32>
    %c7_399 = arith.constant 7 : index
    %c0_400 = arith.constant 0 : index
    %c0_401 = arith.constant 0 : index
    %775 = vector.load %arg16[%c7_399, %c0_400, %c0_401] : memref<10x1x32xf32, #tpu.memory_space<vmem>>, vector<1x1x32xf32>
    %776 = vector.shape_cast %775 : vector<1x1x32xf32> to vector<1x32xf32>
    %cst_402 = arith.constant dense<0.000000e+00> : vector<16xf32>
    %777 = vector.multi_reduction <add>, %772, %cst_402 [1] : vector<16x32xf32> to vector<16xf32>
    %778 = vector.shape_cast %777 : vector<16xf32> to vector<16x1xf32>
    %cst_403 = arith.constant 3.200000e+01 : f32
    %779 = vector.broadcast %cst_403 : f32 to vector<16x1xf32>
    %780 = arith.divf %778, %779 : vector<16x1xf32>
    %781 = vector.broadcast %780 : vector<16x1xf32> to vector<16x32xf32>
    %782 = arith.subf %772, %781 : vector<16x32xf32>
    %783 = arith.mulf %782, %782 : vector<16x32xf32>
    %cst_404 = arith.constant dense<0.000000e+00> : vector<16xf32>
    %784 = vector.multi_reduction <add>, %783, %cst_404 [1] : vector<16x32xf32> to vector<16xf32>
    %785 = vector.shape_cast %784 : vector<16xf32> to vector<16x1xf32>
    %cst_405 = arith.constant 3.200000e+01 : f32
    %786 = vector.broadcast %cst_405 : f32 to vector<16x1xf32>
    %787 = arith.divf %785, %786 : vector<16x1xf32>
    %cst_406 = arith.constant 9.99999974E-6 : f32
    %788 = vector.broadcast %cst_406 : f32 to vector<16x1xf32>
    %789 = arith.addf %787, %788 : vector<16x1xf32>
    %790 = math.rsqrt %789 : vector<16x1xf32>
    %791 = vector.broadcast %790 : vector<16x1xf32> to vector<16x32xf32>
    %792 = arith.mulf %782, %791 : vector<16x32xf32>
    %793 = vector.broadcast %774 : vector<1x32xf32> to vector<16x32xf32>
    %794 = arith.mulf %792, %793 : vector<16x32xf32>
    %795 = vector.broadcast %776 : vector<1x32xf32> to vector<16x32xf32>
    %796 = arith.addf %794, %795 : vector<16x32xf32>
    %c5_407 = arith.constant 5 : index
    %c0_408 = arith.constant 0 : index
    %c0_409 = arith.constant 0 : index
    %c0_410 = arith.constant 0 : index
    %797 = vector.load %arg7[%c5_407, %c0_408, %c0_409, %c0_410] : memref<6x3x32x32xf32, #tpu.memory_space<vmem>>, vector<1x1x32x32xf32>
    %798 = vector.shape_cast %797 : vector<1x1x32x32xf32> to vector<32x32xf32>
    %cst_411 = arith.constant dense<0.000000e+00> : vector<16x32xf32>
    %799 = tpu.matmul %796, %798, %cst_411 {dimension_numbers = #tpu.dot_dimension_numbers<[1], [0], [0], [1], [0, 0, 1, 1], [], []>} : vector<16x32xf32>, vector<32x32xf32>, vector<16x32xf32> -> vector<16x32xf32>
    %c5_412 = arith.constant 5 : index
    %c0_413 = arith.constant 0 : index
    %c0_414 = arith.constant 0 : index
    %c0_415 = arith.constant 0 : index
    %800 = vector.load %arg8[%c5_412, %c0_413, %c0_414, %c0_415] : memref<6x3x1x32xf32, #tpu.memory_space<vmem>>, vector<1x1x1x32xf32>
    %801 = vector.shape_cast %800 : vector<1x1x1x32xf32> to vector<1x32xf32>
    %802 = vector.broadcast %801 : vector<1x32xf32> to vector<16x32xf32>
    %803 = arith.addf %799, %802 : vector<16x32xf32>
    %c5_416 = arith.constant 5 : index
    %c1_417 = arith.constant 1 : index
    %c0_418 = arith.constant 0 : index
    %c0_419 = arith.constant 0 : index
    %804 = vector.load %arg7[%c5_416, %c1_417, %c0_418, %c0_419] : memref<6x3x32x32xf32, #tpu.memory_space<vmem>>, vector<1x1x32x32xf32>
    %805 = vector.shape_cast %804 : vector<1x1x32x32xf32> to vector<32x32xf32>
    %cst_420 = arith.constant dense<0.000000e+00> : vector<16x32xf32>
    %806 = tpu.matmul %394, %805, %cst_420 {dimension_numbers = #tpu.dot_dimension_numbers<[1], [0], [0], [1], [0, 0, 1, 1], [], []>} : vector<16x32xf32>, vector<32x32xf32>, vector<16x32xf32> -> vector<16x32xf32>
    %c5_421 = arith.constant 5 : index
    %c1_422 = arith.constant 1 : index
    %c0_423 = arith.constant 0 : index
    %c0_424 = arith.constant 0 : index
    %807 = vector.load %arg8[%c5_421, %c1_422, %c0_423, %c0_424] : memref<6x3x1x32xf32, #tpu.memory_space<vmem>>, vector<1x1x1x32xf32>
    %808 = vector.shape_cast %807 : vector<1x1x1x32xf32> to vector<1x32xf32>
    %809 = vector.broadcast %808 : vector<1x32xf32> to vector<16x32xf32>
    %810 = arith.addf %806, %809 : vector<16x32xf32>
    %c5_425 = arith.constant 5 : index
    %c2_426 = arith.constant 2 : index
    %c0_427 = arith.constant 0 : index
    %c0_428 = arith.constant 0 : index
    %811 = vector.load %arg7[%c5_425, %c2_426, %c0_427, %c0_428] : memref<6x3x32x32xf32, #tpu.memory_space<vmem>>, vector<1x1x32x32xf32>
    %812 = vector.shape_cast %811 : vector<1x1x32x32xf32> to vector<32x32xf32>
    %cst_429 = arith.constant dense<0.000000e+00> : vector<16x32xf32>
    %813 = tpu.matmul %394, %812, %cst_429 {dimension_numbers = #tpu.dot_dimension_numbers<[1], [0], [0], [1], [0, 0, 1, 1], [], []>} : vector<16x32xf32>, vector<32x32xf32>, vector<16x32xf32> -> vector<16x32xf32>
    %c5_430 = arith.constant 5 : index
    %c2_431 = arith.constant 2 : index
    %c0_432 = arith.constant 0 : index
    %c0_433 = arith.constant 0 : index
    %814 = vector.load %arg8[%c5_430, %c2_431, %c0_432, %c0_433] : memref<6x3x1x32xf32, #tpu.memory_space<vmem>>, vector<1x1x1x32xf32>
    %815 = vector.shape_cast %814 : vector<1x1x1x32xf32> to vector<1x32xf32>
    %816 = vector.broadcast %815 : vector<1x32xf32> to vector<16x32xf32>
    %817 = arith.addf %813, %816 : vector<16x32xf32>
    %818 = vector.broadcast %8 : vector<1x32xf32> to vector<16x32xf32>
    %819 = arith.mulf %803, %818 : vector<16x32xf32>
    %cst_434 = arith.constant dense<0.000000e+00> : vector<16x16xf32>
    %820 = tpu.matmul %819, %810, %cst_434 {dimension_numbers = #tpu.dot_dimension_numbers<[1], [1], [0], [0], [0, 0, 1, 0], [], []>} : vector<16x32xf32>, vector<16x32xf32>, vector<16x16xf32> -> vector<16x16xf32>
    %821 = arith.addf %820, %71 : vector<16x16xf32>
    %cst_435 = arith.constant dense<0xFF800000> : vector<16xf32>
    %822 = vector.multi_reduction <maximumf>, %821, %cst_435 [1] : vector<16x16xf32> to vector<16xf32>
    %823 = vector.shape_cast %822 : vector<16xf32> to vector<16x1xf32>
    %824 = vector.broadcast %823 : vector<16x1xf32> to vector<16x16xf32>
    %825 = arith.subf %821, %824 : vector<16x16xf32>
    %826 = math.exp %825 : vector<16x16xf32>
    %cst_436 = arith.constant dense<0.000000e+00> : vector<16xf32>
    %827 = vector.multi_reduction <add>, %826, %cst_436 [1] : vector<16x16xf32> to vector<16xf32>
    %828 = vector.shape_cast %827 : vector<16xf32> to vector<16x1xf32>
    %829 = vector.broadcast %828 : vector<16x1xf32> to vector<16x16xf32>
    %830 = arith.divf %826, %829 : vector<16x16xf32>
    %831 = vector.broadcast %8 : vector<1x32xf32> to vector<16x32xf32>
    %832 = arith.mulf %817, %831 : vector<16x32xf32>
    %cst_437 = arith.constant dense<0.000000e+00> : vector<16x32xf32>
    %833 = tpu.matmul %830, %832, %cst_437 {dimension_numbers = #tpu.dot_dimension_numbers<[1], [0], [0], [1], [0, 0, 1, 1], [], []>} : vector<16x16xf32>, vector<16x32xf32>, vector<16x32xf32> -> vector<16x32xf32>
    %834 = vector.broadcast %16 : vector<1x32xf32> to vector<16x32xf32>
    %835 = arith.mulf %803, %834 : vector<16x32xf32>
    %cst_438 = arith.constant dense<0.000000e+00> : vector<16x16xf32>
    %836 = tpu.matmul %835, %810, %cst_438 {dimension_numbers = #tpu.dot_dimension_numbers<[1], [1], [0], [0], [0, 0, 1, 0], [], []>} : vector<16x32xf32>, vector<16x32xf32>, vector<16x16xf32> -> vector<16x16xf32>
    %837 = arith.addf %836, %71 : vector<16x16xf32>
    %cst_439 = arith.constant dense<0xFF800000> : vector<16xf32>
    %838 = vector.multi_reduction <maximumf>, %837, %cst_439 [1] : vector<16x16xf32> to vector<16xf32>
    %839 = vector.shape_cast %838 : vector<16xf32> to vector<16x1xf32>
    %840 = vector.broadcast %839 : vector<16x1xf32> to vector<16x16xf32>
    %841 = arith.subf %837, %840 : vector<16x16xf32>
    %842 = math.exp %841 : vector<16x16xf32>
    %cst_440 = arith.constant dense<0.000000e+00> : vector<16xf32>
    %843 = vector.multi_reduction <add>, %842, %cst_440 [1] : vector<16x16xf32> to vector<16xf32>
    %844 = vector.shape_cast %843 : vector<16xf32> to vector<16x1xf32>
    %845 = vector.broadcast %844 : vector<16x1xf32> to vector<16x16xf32>
    %846 = arith.divf %842, %845 : vector<16x16xf32>
    %847 = vector.broadcast %16 : vector<1x32xf32> to vector<16x32xf32>
    %848 = arith.mulf %817, %847 : vector<16x32xf32>
    %cst_441 = arith.constant dense<0.000000e+00> : vector<16x32xf32>
    %849 = tpu.matmul %846, %848, %cst_441 {dimension_numbers = #tpu.dot_dimension_numbers<[1], [0], [0], [1], [0, 0, 1, 1], [], []>} : vector<16x16xf32>, vector<16x32xf32>, vector<16x32xf32> -> vector<16x32xf32>
    %850 = arith.addf %833, %849 : vector<16x32xf32>
    %851 = vector.broadcast %24 : vector<1x32xf32> to vector<16x32xf32>
    %852 = arith.mulf %803, %851 : vector<16x32xf32>
    %cst_442 = arith.constant dense<0.000000e+00> : vector<16x16xf32>
    %853 = tpu.matmul %852, %810, %cst_442 {dimension_numbers = #tpu.dot_dimension_numbers<[1], [1], [0], [0], [0, 0, 1, 0], [], []>} : vector<16x32xf32>, vector<16x32xf32>, vector<16x16xf32> -> vector<16x16xf32>
    %854 = arith.addf %853, %71 : vector<16x16xf32>
    %cst_443 = arith.constant dense<0xFF800000> : vector<16xf32>
    %855 = vector.multi_reduction <maximumf>, %854, %cst_443 [1] : vector<16x16xf32> to vector<16xf32>
    %856 = vector.shape_cast %855 : vector<16xf32> to vector<16x1xf32>
    %857 = vector.broadcast %856 : vector<16x1xf32> to vector<16x16xf32>
    %858 = arith.subf %854, %857 : vector<16x16xf32>
    %859 = math.exp %858 : vector<16x16xf32>
    %cst_444 = arith.constant dense<0.000000e+00> : vector<16xf32>
    %860 = vector.multi_reduction <add>, %859, %cst_444 [1] : vector<16x16xf32> to vector<16xf32>
    %861 = vector.shape_cast %860 : vector<16xf32> to vector<16x1xf32>
    %862 = vector.broadcast %861 : vector<16x1xf32> to vector<16x16xf32>
    %863 = arith.divf %859, %862 : vector<16x16xf32>
    %864 = vector.broadcast %24 : vector<1x32xf32> to vector<16x32xf32>
    %865 = arith.mulf %817, %864 : vector<16x32xf32>
    %cst_445 = arith.constant dense<0.000000e+00> : vector<16x32xf32>
    %866 = tpu.matmul %863, %865, %cst_445 {dimension_numbers = #tpu.dot_dimension_numbers<[1], [0], [0], [1], [0, 0, 1, 1], [], []>} : vector<16x16xf32>, vector<16x32xf32>, vector<16x32xf32> -> vector<16x32xf32>
    %867 = arith.addf %850, %866 : vector<16x32xf32>
    %868 = vector.broadcast %32 : vector<1x32xf32> to vector<16x32xf32>
    %869 = arith.mulf %803, %868 : vector<16x32xf32>
    %cst_446 = arith.constant dense<0.000000e+00> : vector<16x16xf32>
    %870 = tpu.matmul %869, %810, %cst_446 {dimension_numbers = #tpu.dot_dimension_numbers<[1], [1], [0], [0], [0, 0, 1, 0], [], []>} : vector<16x32xf32>, vector<16x32xf32>, vector<16x16xf32> -> vector<16x16xf32>
    %871 = arith.addf %870, %71 : vector<16x16xf32>
    %cst_447 = arith.constant dense<0xFF800000> : vector<16xf32>
    %872 = vector.multi_reduction <maximumf>, %871, %cst_447 [1] : vector<16x16xf32> to vector<16xf32>
    %873 = vector.shape_cast %872 : vector<16xf32> to vector<16x1xf32>
    %874 = vector.broadcast %873 : vector<16x1xf32> to vector<16x16xf32>
    %875 = arith.subf %871, %874 : vector<16x16xf32>
    %876 = math.exp %875 : vector<16x16xf32>
    %cst_448 = arith.constant dense<0.000000e+00> : vector<16xf32>
    %877 = vector.multi_reduction <add>, %876, %cst_448 [1] : vector<16x16xf32> to vector<16xf32>
    %878 = vector.shape_cast %877 : vector<16xf32> to vector<16x1xf32>
    %879 = vector.broadcast %878 : vector<16x1xf32> to vector<16x16xf32>
    %880 = arith.divf %876, %879 : vector<16x16xf32>
    %881 = vector.broadcast %32 : vector<1x32xf32> to vector<16x32xf32>
    %882 = arith.mulf %817, %881 : vector<16x32xf32>
    %cst_449 = arith.constant dense<0.000000e+00> : vector<16x32xf32>
    %883 = tpu.matmul %880, %882, %cst_449 {dimension_numbers = #tpu.dot_dimension_numbers<[1], [0], [0], [1], [0, 0, 1, 1], [], []>} : vector<16x16xf32>, vector<16x32xf32>, vector<16x32xf32> -> vector<16x32xf32>
    %884 = arith.addf %867, %883 : vector<16x32xf32>
    %c5_450 = arith.constant 5 : index
    %c0_451 = arith.constant 0 : index
    %c0_452 = arith.constant 0 : index
    %885 = vector.load %arg9[%c5_450, %c0_451, %c0_452] : memref<6x32x32xf32, #tpu.memory_space<vmem>>, vector<1x32x32xf32>
    %886 = vector.shape_cast %885 : vector<1x32x32xf32> to vector<32x32xf32>
    %cst_453 = arith.constant dense<0.000000e+00> : vector<16x32xf32>
    %887 = tpu.matmul %884, %886, %cst_453 {dimension_numbers = #tpu.dot_dimension_numbers<[1], [0], [0], [1], [0, 0, 1, 1], [], []>} : vector<16x32xf32>, vector<32x32xf32>, vector<16x32xf32> -> vector<16x32xf32>
    %c5_454 = arith.constant 5 : index
    %c0_455 = arith.constant 0 : index
    %c0_456 = arith.constant 0 : index
    %888 = vector.load %arg10[%c5_454, %c0_455, %c0_456] : memref<6x1x32xf32, #tpu.memory_space<vmem>>, vector<1x1x32xf32>
    %889 = vector.shape_cast %888 : vector<1x1x32xf32> to vector<1x32xf32>
    %890 = vector.broadcast %889 : vector<1x32xf32> to vector<16x32xf32>
    %891 = arith.addf %887, %890 : vector<16x32xf32>
    %892 = arith.addf %796, %891 : vector<16x32xf32>
    %c8 = arith.constant 8 : index
    %c0_457 = arith.constant 0 : index
    %c0_458 = arith.constant 0 : index
    %893 = vector.load %arg15[%c8, %c0_457, %c0_458] : memref<10x1x32xf32, #tpu.memory_space<vmem>>, vector<1x1x32xf32>
    %894 = vector.shape_cast %893 : vector<1x1x32xf32> to vector<1x32xf32>
    %c8_459 = arith.constant 8 : index
    %c0_460 = arith.constant 0 : index
    %c0_461 = arith.constant 0 : index
    %895 = vector.load %arg16[%c8_459, %c0_460, %c0_461] : memref<10x1x32xf32, #tpu.memory_space<vmem>>, vector<1x1x32xf32>
    %896 = vector.shape_cast %895 : vector<1x1x32xf32> to vector<1x32xf32>
    %cst_462 = arith.constant dense<0.000000e+00> : vector<16xf32>
    %897 = vector.multi_reduction <add>, %892, %cst_462 [1] : vector<16x32xf32> to vector<16xf32>
    %898 = vector.shape_cast %897 : vector<16xf32> to vector<16x1xf32>
    %cst_463 = arith.constant 3.200000e+01 : f32
    %899 = vector.broadcast %cst_463 : f32 to vector<16x1xf32>
    %900 = arith.divf %898, %899 : vector<16x1xf32>
    %901 = vector.broadcast %900 : vector<16x1xf32> to vector<16x32xf32>
    %902 = arith.subf %892, %901 : vector<16x32xf32>
    %903 = arith.mulf %902, %902 : vector<16x32xf32>
    %cst_464 = arith.constant dense<0.000000e+00> : vector<16xf32>
    %904 = vector.multi_reduction <add>, %903, %cst_464 [1] : vector<16x32xf32> to vector<16xf32>
    %905 = vector.shape_cast %904 : vector<16xf32> to vector<16x1xf32>
    %cst_465 = arith.constant 3.200000e+01 : f32
    %906 = vector.broadcast %cst_465 : f32 to vector<16x1xf32>
    %907 = arith.divf %905, %906 : vector<16x1xf32>
    %cst_466 = arith.constant 9.99999974E-6 : f32
    %908 = vector.broadcast %cst_466 : f32 to vector<16x1xf32>
    %909 = arith.addf %907, %908 : vector<16x1xf32>
    %910 = math.rsqrt %909 : vector<16x1xf32>
    %911 = vector.broadcast %910 : vector<16x1xf32> to vector<16x32xf32>
    %912 = arith.mulf %902, %911 : vector<16x32xf32>
    %913 = vector.broadcast %894 : vector<1x32xf32> to vector<16x32xf32>
    %914 = arith.mulf %912, %913 : vector<16x32xf32>
    %915 = vector.broadcast %896 : vector<1x32xf32> to vector<16x32xf32>
    %916 = arith.addf %914, %915 : vector<16x32xf32>
    %c3_467 = arith.constant 3 : index
    %c0_468 = arith.constant 0 : index
    %c0_469 = arith.constant 0 : index
    %917 = vector.load %arg11[%c3_467, %c0_468, %c0_469] : memref<4x32x64xf32, #tpu.memory_space<vmem>>, vector<1x32x64xf32>
    %918 = vector.shape_cast %917 : vector<1x32x64xf32> to vector<32x64xf32>
    %cst_470 = arith.constant dense<0.000000e+00> : vector<16x64xf32>
    %919 = tpu.matmul %916, %918, %cst_470 {dimension_numbers = #tpu.dot_dimension_numbers<[1], [0], [0], [1], [0, 0, 1, 1], [], []>} : vector<16x32xf32>, vector<32x64xf32>, vector<16x64xf32> -> vector<16x64xf32>
    %c3_471 = arith.constant 3 : index
    %c0_472 = arith.constant 0 : index
    %c0_473 = arith.constant 0 : index
    %920 = vector.load %arg12[%c3_471, %c0_472, %c0_473] : memref<4x1x64xf32, #tpu.memory_space<vmem>>, vector<1x1x64xf32>
    %921 = vector.shape_cast %920 : vector<1x1x64xf32> to vector<1x64xf32>
    %922 = vector.broadcast %921 : vector<1x64xf32> to vector<16x64xf32>
    %923 = arith.addf %919, %922 : vector<16x64xf32>
    %cst_474 = arith.constant 0.000000e+00 : f32
    %924 = vector.broadcast %cst_474 : f32 to vector<16x64xf32>
    %925 = arith.maximumf %923, %924 : vector<16x64xf32>
    %c3_475 = arith.constant 3 : index
    %c0_476 = arith.constant 0 : index
    %c0_477 = arith.constant 0 : index
    %926 = vector.load %arg13[%c3_475, %c0_476, %c0_477] : memref<4x64x32xf32, #tpu.memory_space<vmem>>, vector<1x64x32xf32>
    %927 = vector.shape_cast %926 : vector<1x64x32xf32> to vector<64x32xf32>
    %cst_478 = arith.constant dense<0.000000e+00> : vector<16x32xf32>
    %928 = tpu.matmul %925, %927, %cst_478 {dimension_numbers = #tpu.dot_dimension_numbers<[1], [0], [0], [1], [0, 0, 1, 1], [], []>} : vector<16x64xf32>, vector<64x32xf32>, vector<16x32xf32> -> vector<16x32xf32>
    %c3_479 = arith.constant 3 : index
    %c0_480 = arith.constant 0 : index
    %c0_481 = arith.constant 0 : index
    %929 = vector.load %arg14[%c3_479, %c0_480, %c0_481] : memref<4x1x32xf32, #tpu.memory_space<vmem>>, vector<1x1x32xf32>
    %930 = vector.shape_cast %929 : vector<1x1x32xf32> to vector<1x32xf32>
    %931 = vector.broadcast %930 : vector<1x32xf32> to vector<16x32xf32>
    %932 = arith.addf %928, %931 : vector<16x32xf32>
    %933 = arith.addf %916, %932 : vector<16x32xf32>
    %c9 = arith.constant 9 : index
    %c0_482 = arith.constant 0 : index
    %c0_483 = arith.constant 0 : index
    %934 = vector.load %arg15[%c9, %c0_482, %c0_483] : memref<10x1x32xf32, #tpu.memory_space<vmem>>, vector<1x1x32xf32>
    %935 = vector.shape_cast %934 : vector<1x1x32xf32> to vector<1x32xf32>
    %c9_484 = arith.constant 9 : index
    %c0_485 = arith.constant 0 : index
    %c0_486 = arith.constant 0 : index
    %936 = vector.load %arg16[%c9_484, %c0_485, %c0_486] : memref<10x1x32xf32, #tpu.memory_space<vmem>>, vector<1x1x32xf32>
    %937 = vector.shape_cast %936 : vector<1x1x32xf32> to vector<1x32xf32>
    %cst_487 = arith.constant dense<0.000000e+00> : vector<16xf32>
    %938 = vector.multi_reduction <add>, %933, %cst_487 [1] : vector<16x32xf32> to vector<16xf32>
    %939 = vector.shape_cast %938 : vector<16xf32> to vector<16x1xf32>
    %cst_488 = arith.constant 3.200000e+01 : f32
    %940 = vector.broadcast %cst_488 : f32 to vector<16x1xf32>
    %941 = arith.divf %939, %940 : vector<16x1xf32>
    %942 = vector.broadcast %941 : vector<16x1xf32> to vector<16x32xf32>
    %943 = arith.subf %933, %942 : vector<16x32xf32>
    %944 = arith.mulf %943, %943 : vector<16x32xf32>
    %cst_489 = arith.constant dense<0.000000e+00> : vector<16xf32>
    %945 = vector.multi_reduction <add>, %944, %cst_489 [1] : vector<16x32xf32> to vector<16xf32>
    %946 = vector.shape_cast %945 : vector<16xf32> to vector<16x1xf32>
    %cst_490 = arith.constant 3.200000e+01 : f32
    %947 = vector.broadcast %cst_490 : f32 to vector<16x1xf32>
    %948 = arith.divf %946, %947 : vector<16x1xf32>
    %cst_491 = arith.constant 9.99999974E-6 : f32
    %949 = vector.broadcast %cst_491 : f32 to vector<16x1xf32>
    %950 = arith.addf %948, %949 : vector<16x1xf32>
    %951 = math.rsqrt %950 : vector<16x1xf32>
    %952 = vector.broadcast %951 : vector<16x1xf32> to vector<16x32xf32>
    %953 = arith.mulf %943, %952 : vector<16x32xf32>
    %954 = vector.broadcast %935 : vector<1x32xf32> to vector<16x32xf32>
    %955 = arith.mulf %953, %954 : vector<16x32xf32>
    %956 = vector.broadcast %937 : vector<1x32xf32> to vector<16x32xf32>
    %957 = arith.addf %955, %956 : vector<16x32xf32>
    %c0_492 = arith.constant 0 : index
    %c0_493 = arith.constant 0 : index
    %958 = vector.load %arg17[%c0_492, %c0_493] : memref<32x1024xf32, #tpu.memory_space<vmem>>, vector<32x1024xf32>
    %cst_494 = arith.constant dense<0.000000e+00> : vector<16x1024xf32>
    %959 = tpu.matmul %957, %958, %cst_494 {dimension_numbers = #tpu.dot_dimension_numbers<[1], [0], [0], [1], [0, 0, 1, 1], [], []>} : vector<16x32xf32>, vector<32x1024xf32>, vector<16x1024xf32> -> vector<16x1024xf32>
    %c0_495 = arith.constant 0 : index
    %c0_496 = arith.constant 0 : index
    %960 = vector.load %arg18[%c0_495, %c0_496] : memref<1x1024xf32, #tpu.memory_space<vmem>>, vector<1x1024xf32>
    %961 = vector.broadcast %960 : vector<1x1024xf32> to vector<16x1024xf32>
    %962 = arith.addf %959, %961 : vector<16x1024xf32>
    %c0_497 = arith.constant 0 : index
    %c0_498 = arith.constant 0 : index
    %963 = vector.load %arg19[%c0_497, %c0_498] : memref<16x1024xf32, #tpu.memory_space<vmem>>, vector<16x1024xf32>
    tpu.vector_store %arg19[%c0_497, %c0_498], %962 {strides = array<i32>} : memref<16x1024xf32, #tpu.memory_space<vmem>>, vector<16x1024xf32>,
    return
  }
}

</mosaic_0001>

<llo_original>
// kernel: sketchformer_forward.1
$region0: #{sketchformer_forward.1}
  #allocation0 [shape = 'u32[]', space=smem, size = 0x4, offset = 0x4, fixed_abs, tag = 'smem constant byte address 0x4 - core index']
  #allocation1 [shape = 'u32[144,128]{1,0:T(1,128)}', space=vmem, size = 0x12000, scoped, tag = 'internal scratch']
  %s0 = inlined_call_operand.vmem [shape: f32[16,32], index: 0, kind: input, shape index: {}]
  %s1 = inlined_call_operand.vmem [shape: f32[16,32], index: 1, kind: input, shape index: {}]
  %s2 = inlined_call_operand.vmem [shape: f32[16,1], index: 2, kind: input, shape index: {}, may-alias: {2,3}]
  %s3 = inlined_call_operand.vmem [shape: f32[16,1], index: 3, kind: input, shape index: {}, may-alias: {2,3}]
  %s4 = inlined_call_operand.vmem [shape: f32[16,1], index: 4, kind: input, shape index: {}]
  %s5 = inlined_call_operand.vmem [shape: f32[2,16], index: 5, kind: input, shape index: {}]
  %s6 = inlined_call_operand.vmem [shape: f32[3,16], index: 6, kind: input, shape index: {}]
  %s7 = inlined_call_operand.vmem [shape: f32[6,3,32,32], index: 7, kind: input, shape index: {}]
  %s8 = inlined_call_operand.vmem [shape: f32[6,3,1,32], index: 8, kind: input, shape index: {}]
  %s9 = inlined_call_operand.vmem [shape: f32[6,32,32], index: 9, kind: input, shape index: {}]
  %s10 = inlined_call_operand.vmem [shape: f32[6,1,32], index: 10, kind: input, shape index: {}]
  %s11 = inlined_call_operand.vmem [shape: f32[4,32,64], index: 11, kind: input, shape index: {}]
  %s12 = inlined_call_operand.vmem [shape: f32[4,1,64], index: 12, kind: input, shape index: {}]
  %s13 = inlined_call_operand.vmem [shape: f32[4,64,32], index: 13, kind: input, shape index: {}]
  %s14 = inlined_call_operand.vmem [shape: f32[4,1,32], index: 14, kind: input, shape index: {}]
  %s15 = inlined_call_operand.vmem [shape: f32[10,1,32], index: 15, kind: input, shape index: {}]
  %s16 = inlined_call_operand.vmem [shape: f32[10,1,32], index: 16, kind: input, shape index: {}]
  %s17 = inlined_call_operand.vmem [shape: f32[32,1024], index: 17, kind: input, shape index: {}]
  %s18 = inlined_call_operand.vmem [shape: f32[1,1024], index: 18, kind: input, shape index: {}]
  %s19 = inlined_call_operand.vmem [shape: f32[16,1024], index: 19, kind: output, shape index: {}]
  %s20 = sld [smem:[#allocation0]]
  $region86: #{sketchformer_forward.1} parent=0
    _
  %s22 = ssub.s32 1, %s20
  %s23 = scalar_select 0, %s22, %s20
  // Predicated region
  $region2: #{sketchformer_forward.1} parent=0 // pred_check
    _
  $region3: #{sketchformer_forward.1} parent=0 // pred_check_branch
    %25 = sbr.rel (0) target = $region5
  $region4: #{sketchformer_forward.1} parent=0 // pred_region
    _
  $region5: #{sketchformer_forward.1} parent=0 // pred_fallthru
    _
  // Predicated region
  $region6: #{sketchformer_forward.1} parent=0 // pred_check
    _
  $region7: #{sketchformer_forward.1} parent=0 // pred_check_branch
    %27 = sbr.rel (0) target = $region9
  $region8: #{sketchformer_forward.1} parent=0 // pred_region
    _
  $region9: #{sketchformer_forward.1} parent=0 // pred_fallthru
    _
  // Predicated region
  $region10: #{sketchformer_forward.1} parent=0 // pred_check
    _
  $region11: #{sketchformer_forward.1} parent=0 // pred_check_branch
    %29 = sbr.rel (0) target = $region13
  $region12: #{sketchformer_forward.1} parent=0 // pred_region
    _
  $region13: #{sketchformer_forward.1} parent=0 // pred_fallthru
    _
  // Predicated region
  $region14: #{sketchformer_forward.1} parent=0 // pred_check
    _
  $region15: #{sketchformer_forward.1} parent=0 // pred_check_branch
    %31 = sbr.rel (0) target = $region17
  $region16: #{sketchformer_forward.1} parent=0 // pred_region
    _
  $region17: #{sketchformer_forward.1} parent=0 // pred_fallthru
    _
  // Predicated region
  $region18: #{sketchformer_forward.1} parent=0 // pred_check
    _
  $region19: #{sketchformer_forward.1} parent=0 // pred_check_branch
    %33 = sbr.rel (0) target = $region21
  $region20: #{sketchformer_forward.1} parent=0 // pred_region
    _
  $region21: #{sketchformer_forward.1} parent=0 // pred_fallthru
    _
  // Predicated region
  $region22: #{sketchformer_forward.1} parent=0 // pred_check
    _
  $region23: #{sketchformer_forward.1} parent=0 // pred_check_branch
    %35 = sbr.rel (0) target = $region25
  $region24: #{sketchformer_forward.1} parent=0 // pred_region
    _
  $region25: #{sketchformer_forward.1} parent=0 // pred_fallthru
    _
  // Predicated region
  $region26: #{sketchformer_forward.1} parent=0 // pred_check
    _
  $region27: #{sketchformer_forward.1} parent=0 // pred_check_branch
    %37 = sbr.rel (0) target = $region29
  $region28: #{sketchformer_forward.1} parent=0 // pred_region
    _
  $region29: #{sketchformer_forward.1} parent=0 // pred_fallthru
    _
  // Predicated region
  $region30: #{sketchformer_forward.1} parent=0 // pred_check
    _
  $region31: #{sketchformer_forward.1} parent=0 // pred_check_branch
    %39 = sbr.rel (0) target = $region33
  $region32: #{sketchformer_forward.1} parent=0 // pred_region
    _
  $region33: #{sketchformer_forward.1} parent=0 // pred_fallthru
    _
  // Predicated region
  $region34: #{sketchformer_forward.1} parent=0 // pred_check
    _
  $region35: #{sketchformer_forward.1} parent=0 // pred_check_branch
    %41 = sbr.rel (0) target = $region37
  $region36: #{sketchformer_forward.1} parent=0 // pred_region
    _
  $region37: #{sketchformer_forward.1} parent=0 // pred_fallthru
    _
  // Predicated region
  $region38: #{sketchformer_forward.1} parent=0 // pred_check
    _
  $region39: #{sketchformer_forward.1} parent=0 // pred_check_branch
    %43 = sbr.rel (0) target = $region41
  $region40: #{sketchformer_forward.1} parent=0 // pred_region
    _
  $region41: #{sketchformer_forward.1} parent=0 // pred_fallthru
    _
  // Predicated region
  $region42: #{sketchformer_forward.1} parent=0 // pred_check
    _
  $region43: #{sketchformer_forward.1} parent=0 // pred_check_branch
    %45 = sbr.rel (0) target = $region45
  $region44: #{sketchformer_forward.1} parent=0 // pred_region
    _
  $region45: #{sketchformer_forward.1} parent=0 // pred_fallthru
    _
  // Predicated region
  $region46: #{sketchformer_forward.1} parent=0 // pred_check
    _
  $region47: #{sketchformer_forward.1} parent=0 // pred_check_branch
    %47 = sbr.rel (0) target = $region49
  $region48: #{sketchformer_forward.1} parent=0 // pred_region
    _
  $region49: #{sketchformer_forward.1} parent=0 // pred_fallthru
    _
  // Predicated region
  $region50: #{sketchformer_forward.1} parent=0 // pred_check
    _
  $region51: #{sketchformer_forward.1} parent=0 // pred_check_branch
    %49 = sbr.rel (0) target = $region53
  $region52: #{sketchformer_forward.1} parent=0 // pred_region
    _
  $region53: #{sketchformer_forward.1} parent=0 // pred_fallthru
    _
  // Predicated region
  $region54: #{sketchformer_forward.1} parent=0 // pred_check
    _
  $region55: #{sketchformer_forward.1} parent=0 // pred_check_branch
    %51 = sbr.rel (0) target = $region57
  $region56: #{sketchformer_forward.1} parent=0 // pred_region
    _
  $region57: #{sketchformer_forward.1} parent=0 // pred_fallthru
    _
  // Predicated region
  $region58: #{sketchformer_forward.1} parent=0 // pred_check
    _
  $region59: #{sketchformer_forward.1} parent=0 // pred_check_branch
    %53 = sbr.rel (0) target = $region61
  $region60: #{sketchformer_forward.1} parent=0 // pred_region
    _
  $region61: #{sketchformer_forward.1} parent=0 // pred_fallthru
    _
  // Predicated region
  $region62: #{sketchformer_forward.1} parent=0 // pred_check
    _
  $region63: #{sketchformer_forward.1} parent=0 // pred_check_branch
    %55 = sbr.rel (0) target = $region65
  $region64: #{sketchformer_forward.1} parent=0 // pred_region
    _
  $region65: #{sketchformer_forward.1} parent=0 // pred_fallthru
    _
  // Predicated region
  $region66: #{sketchformer_forward.1} parent=0 // pred_check
    _
  $region67: #{sketchformer_forward.1} parent=0 // pred_check_branch
    %57 = sbr.rel (0) target = $region69
  $region68: #{sketchformer_forward.1} parent=0 // pred_region
    _
  $region69: #{sketchformer_forward.1} parent=0 // pred_fallthru
    _
  // Predicated region
  $region70: #{sketchformer_forward.1} parent=0 // pred_check
    _
  $region71: #{sketchformer_forward.1} parent=0 // pred_check_branch
    %59 = sbr.rel (0) target = $region73
  $region72: #{sketchformer_forward.1} parent=0 // pred_region
    _
  $region73: #{sketchformer_forward.1} parent=0 // pred_fallthru
    _
  // Predicated region
  $region74: #{sketchformer_forward.1} parent=0 // pred_check
    _
  $region75: #{sketchformer_forward.1} parent=0 // pred_check_branch
    %61 = sbr.rel (0) target = $region77
  $region76: #{sketchformer_forward.1} parent=0 // pred_region
    _
  $region77: #{sketchformer_forward.1} parent=0 // pred_fallthru
    _
  %v62 = vlaneseq
  %v63 = vand.u32 %v62, 127
  %vm64 = vcmp.ge.s32.totalorder %v63, 0
  %vm65 = vcmp.lt.s32.totalorder %v63, 8
  %vm66 = vmand %vm64, %vm65
  %v67 = vsel %vm66, 1.0, 0.0
  %vm68 = vcmp.ge.s32.totalorder %v63, 8
  %vm69 = vcmp.lt.s32.totalorder %v63, 16
  %vm70 = vmand %vm68, %vm69
  %v71 = vsel %vm70, 1.0, 0.0
  %vm72 = vcmp.ge.s32.totalorder %v63, 16
  %vm73 = vcmp.lt.s32.totalorder %v63, 24
  %vm74 = vmand %vm72, %vm73
  %v75 = vsel %vm74, 1.0, 0.0
  %vm76 = vcmp.ge.s32.totalorder %v63, 24
  %vm77 = vcmp.lt.s32.totalorder %v63, 32
  %vm78 = vmand %vm76, %vm77
  %v79 = vsel %vm78, 1.0, 0.0
  %v80 = vld [vmem:[%s5] sm:$0x3]
  %v81 = vld [vmem:[%s6] sm:$0x7]
  %v82 = vld [vmem:[%s2] sm:$0xff]
  %v83 = vld [vmem:[%s2 + $0x8] sm:$0xff]
  %v84 = vld [vmem:[%s3] sm:$0xff]
  %v85 = vld [vmem:[%s3 + $0x8] sm:$0xff]
  %v86 = vld [vmem:[%s4] sm:$0xff]
  %v87 = vld [vmem:[%s4 + $0x8] sm:$0xff]
  %89 = vset.pattern.permute.xlu0 0
  %90 = vperm.xlu0 %89, %v82
  %v91 = vpop.permute.xlu0 %90
  %94 = vset.pattern.permute.xlu0 0
  %95 = vperm.xlu0 %94, %v83
  %v96 = vpop.permute.xlu0 %95
  %v98 = vlaneseq
  %v99 = vshrl.u32 %v98, 7
  %v100 = vsub.s32 0, %v99
  %v101 = vrot.slane %v80, %v100
  %vm102 = vcmp.eq.f32.partialorder %v91, %v101
  %vm103 = vcmp.eq.f32.partialorder %v96, %v101
  %v104 = vsel %vm102, 0.0, -1e+09
  %v105 = vsel %vm103, 0.0, -1e+09
  %v106 = vlaneseq
  %v107 = vshrl.u32 %v106, 7
  %v108 = vsub.s32 1, %v107
  %v109 = vrot.slane %v80, %v108
  %v110 = vadd.f32 %v104, %v109
  %v111 = vadd.f32 %v105, %v109
  %113 = vset.pattern.permute.xlu0 0
  %114 = vperm.xlu0 %113, %v84
  %v115 = vpop.permute.xlu0 %114
  %118 = vset.pattern.permute.xlu0 0
  %119 = vperm.xlu0 %118, %v85
  %v120 = vpop.permute.xlu0 %119
  %v122 = vlaneseq
  %v123 = vshrl.u32 %v122, 7
  %v124 = vsub.s32 0, %v123
  %v125 = vrot.slane %v81, %v124
  %vm126 = vcmp.eq.f32.partialorder %v115, %v125
  %vm127 = vcmp.eq.f32.partialorder %v120, %v125
  %v128 = vsel %vm126, 0.0, -1e+09
  %v129 = vsel %vm127, 0.0, -1e+09
  %131 = vset.pattern.permute.xlu0 0
  %132 = vperm.xlu0 %131, %v86
  %v133 = vpop.permute.xlu0 %132
  %136 = vset.pattern.permute.xlu0 0
  %137 = vperm.xlu0 %136, %v87
  %v138 = vpop.permute.xlu0 %137
  %v140 = vlaneseq
  %v141 = vshrl.u32 %v140, 7
  %v142 = vsub.s32 2, %v141
  %v143 = vrot.slane %v81, %v142
  %vm144 = vcmp.ge.f32.partialorder %v133, %v143
  %vm145 = vcmp.ge.f32.partialorder %v138, %v143
  %v146 = vsel %vm144, 0.0, -1e+09
  %v147 = vsel %vm145, 0.0, -1e+09
  %v148 = vadd.f32 %v128, %v146
  %v149 = vadd.f32 %v129, %v147
  %v150 = vlaneseq
  %v151 = vshrl.u32 %v150, 7
  %v152 = vsub.s32 1, %v151
  %v153 = vrot.slane %v81, %v152
  %v154 = vadd.f32 %v148, %v153
  %v155 = vadd.f32 %v149, %v153
  %vm156 = vcmp.eq.f32.partialorder %v115, %v101
  %vm157 = vcmp.eq.f32.partialorder %v120, %v101
  %v158 = vsel %vm156, 0.0, -1e+09
  %v159 = vsel %vm157, 0.0, -1e+09
  %v160 = vld [vmem:[%s0] sm:$0xff]
  %v161 = vld [vmem:[%s0 + $0x8] sm:$0xff]
  %v162 = vld [vmem:[%s7] sm:$0xff]
  %v163 = vld [vmem:[%s7 + $0x8] sm:$0xff]
  %v164 = vld [vmem:[%s7 + $0x10] sm:$0xff]
  %v165 = vld [vmem:[%s7 + $0x18] sm:$0xff]
  %v166 = vld [vmem:[%s8] sm:$0x1]
  %v168 = vlaneseq
  %v169 = vshrl.u32 %v168, 7
  %v170 = vsub.s32 0, %v169
  %v171 = vrot.slane %v166, %v170
  %vm173 = vcmask 261120
  %v175 = vsel %vm173, %v160, 0
  %v178 = vsel %vm173, %v161, 0
  %180 = vmatprep.subr.mxu0 0.0
  %181 = vmatpush1.msra.mxu0 0.0
  %182 = vmatprep.subr.mxu0 0.0
  %183 = vmatpush1.msra.mxu0 0.0
  %184 = vmatprep.subr.mxu0 0.0
  %185 = vmatpush1.msra.mxu0 0.0
  %186 = vmatprep.subr.mxu0 0.0
  %187 = vmatpush1.msra.mxu0 0.0
  %188 = vmatprep.subr.mxu0 0.0
  %189 = vmatpush1.msra.mxu0 0.0
  %190 = vmatprep.subr.mxu0 0.0
  %191 = vmatpush1.msra.mxu0 0.0
  %192 = vmatprep.subr.mxu0 0.0
  %193 = vmatpush1.msra.mxu0 0.0
  %194 = vmatprep.subr.mxu0 0.0
  %195 = vmatpush1.msra.mxu0 0.0
  %196 = vmatprep.subr.mxu0 0.0
  %197 = vmatpush1.msra.mxu0 0.0
  %198 = vmatprep.subr.mxu0 0.0
  %199 = vmatpush1.msra.mxu0 0.0
  %200 = vmatprep.subr.mxu0 0.0
  %201 = vmatpush1.msra.mxu0 0.0
  %202 = vmatprep.subr.mxu0 0.0
  %203 = vmatpush1.msra.mxu0 0.0
  %204 = vmatprep.subr.mxu0 0.0
  %205 = vmatpush1.msra.mxu0 %v165
  %206 = vmatprep.subr.mxu0 0.0
  %207 = vmatpush1.msra.mxu0 %v164
  %208 = vmatprep.subr.mxu0 0.0
  %209 = vmatpush1.msra.mxu0 %v163
  %210 = vmatprep.subr.mxu0 0.0
  %211 = vmatpush1.msra.mxu0 %v162
  %212 = vmatprep.subr.mxu0 0.0
  %213 = vmatpush2.msra.mxu0 0.0
  %214 = vmatprep.subr.mxu0 0.0
  %215 = vmatpush2.msra.mxu0 0.0
  %216 = vmatprep.subr.mxu0 0.0
  %217 = vmatpush2.msra.mxu0 0.0
  %218 = vmatprep.subr.mxu0 0.0
  %219 = vmatpush2.msra.mxu0 0.0
  %220 = vmatprep.subr.mxu0 0.0
  %221 = vmatpush2.msra.mxu0 0.0
  %222 = vmatprep.subr.mxu0 0.0
  %223 = vmatpush2.msra.mxu0 0.0
  %224 = vmatprep.subr.mxu0 0.0
  %225 = vmatpush2.msra.mxu0 0.0
  %226 = vmatprep.subr.mxu0 0.0
  %227 = vmatpush2.msra.mxu0 0.0
  %228 = vmatprep.subr.mxu0 0.0
  %229 = vmatpush2.msra.mxu0 0.0
  %230 = vmatprep.subr.mxu0 0.0
  %231 = vmatpush2.msra.mxu0 0.0
  %232 = vmatprep.subr.mxu0 0.0
  %233 = vmatpush2.msra.mxu0 0.0
  %234 = vmatprep.subr.mxu0 0.0
  %235 = vmatpush2.msra.mxu0 0.0
  %236 = vmatprep.subr.mxu0 0.0
  %237 = vmatpush2.msra.mxu0 0.0
  %238 = vmatprep.subr.mxu0 0.0
  %239 = vmatpush2.msra.mxu0 0.0
  %240 = vmatprep.subr.mxu0 0.0
  %241 = vmatpush2.msra.mxu0 0.0
  %242 = vmatprep.subr.mxu0 0.0
  %243 = vmatpush2.msra.mxu0 0.0
  %244 = vmatprep.mubr.f32.mxu0 0.0
  %245 = vmatmul.mubr.f32.gmra.mxu0 %v175
  %v246 = vpop.f32.mrf.mxu0
  %v247 = vadd.f32 %v171, %v246
  %v248 = vpop.f32.mrf.mxu0
  %249 = vmatprep.mubr.f32.mxu0 0.0
  %250 = vmatmul.mubr.f32.gmra.mxu0 %v178
  %v251 = vpop.f32.mrf.mxu0
  %v252 = vadd.f32 %v171, %v251
  %v253 = vpop.f32.mrf.mxu0
  %254 = vdwg.mxu0
  %s255 = scalar_lea.vmem %s7, 32
  %v256 = vld [vmem:[%s255] sm:$0xff]
  %v257 = vld [vmem:[%s255 + $0x8] sm:$0xff]
  %v258 = vld [vmem:[%s255 + $0x10] sm:$0xff]
  %v259 = vld [vmem:[%s255 + $0x18] sm:$0xff]
  %s260 = scalar_lea.vmem %s8, 1
  %v261 = vld [vmem:[%s260] sm:$0x1]
  %v263 = vlaneseq
  %v264 = vshrl.u32 %v263, 7
  %v265 = vsub.s32 0, %v264
  %v266 = vrot.slane %v261, %v265
  %268 = vmatprep.subr.mxu0 0.0
  %269 = vmatpush1.msra.mxu0 0.0
  %270 = vmatprep.subr.mxu0 0.0
  %271 = vmatpush1.msra.mxu0 0.0
  %272 = vmatprep.subr.mxu0 0.0
  %273 = vmatpush1.msra.mxu0 0.0
  %274 = vmatprep.subr.mxu0 0.0
  %275 = vmatpush1.msra.mxu0 0.0
  %276 = vmatprep.subr.mxu0 0.0
  %277 = vmatpush1.msra.mxu0 0.0
  %278 = vmatprep.subr.mxu0 0.0
  %279 = vmatpush1.msra.mxu0 0.0
  %280 = vmatprep.subr.mxu0 0.0
  %281 = vmatpush1.msra.mxu0 0.0
  %282 = vmatprep.subr.mxu0 0.0
  %283 = vmatpush1.msra.mxu0 0.0
  %284 = vmatprep.subr.mxu0 0.0
  %285 = vmatpush1.msra.mxu0 0.0
  %286 = vmatprep.subr.mxu0 0.0
  %287 = vmatpush1.msra.mxu0 0.0
  %288 = vmatprep.subr.mxu0 0.0
  %289 = vmatpush1.msra.mxu0 0.0
  %290 = vmatprep.subr.mxu0 0.0
  %291 = vmatpush1.msra.mxu0 0.0
  %292 = vmatprep.subr.mxu0 0.0
  %293 = vmatpush1.msra.mxu0 %v259
  %294 = vmatprep.subr.mxu0 0.0
  %295 = vmatpush1.msra.mxu0 %v258
  %296 = vmatprep.subr.mxu0 0.0
  %297 = vmatpush1.msra.mxu0 %v257
  %298 = vmatprep.subr.mxu0 0.0
  %299 = vmatpush1.msra.mxu0 %v256
  %300 = vmatprep.subr.mxu0 0.0
  %301 = vmatpush2.msra.mxu0 0.0
  %302 = vmatprep.subr.mxu0 0.0
  %303 = vmatpush2.msra.mxu0 0.0
  %304 = vmatprep.subr.mxu0 0.0
  %305 = vmatpush2.msra.mxu0 0.0
  %306 = vmatprep.subr.mxu0 0.0
  %307 = vmatpush2.msra.mxu0 0.0
  %308 = vmatprep.subr.mxu0 0.0
  %309 = vmatpush2.msra.mxu0 0.0
  %310 = vmatprep.subr.mxu0 0.0
  %311 = vmatpush2.msra.mxu0 0.0
  %312 = vmatprep.subr.mxu0 0.0
  %313 = vmatpush2.msra.mxu0 0.0
  %314 = vmatprep.subr.mxu0 0.0
  %315 = vmatpush2.msra.mxu0 0.0
  %316 = vmatprep.subr.mxu0 0.0
  %317 = vmatpush2.msra.mxu0 0.0
  %318 = vmatprep.subr.mxu0 0.0
  %319 = vmatpush2.msra.mxu0 0.0
  %320 = vmatprep.subr.mxu0 0.0
  %321 = vmatpush2.msra.mxu0 0.0
  %322 = vmatprep.subr.mxu0 0.0
  %323 = vmatpush2.msra.mxu0 0.0
  %324 = vmatprep.subr.mxu0 0.0
  %325 = vmatpush2.msra.mxu0 0.0
  %326 = vmatprep.subr.mxu0 0.0
  %327 = vmatpush2.msra.mxu0 0.0
  %328 = vmatprep.subr.mxu0 0.0
  %329 = vmatpush2.msra.mxu0 0.0
  %330 = vmatprep.subr.mxu0 0.0
  %331 = vmatpush2.msra.mxu0 0.0
  %332 = vmatprep.mubr.f32.mxu0 0.0
  %333 = vmatmul.mubr.f32.gmra.mxu0 %v175
  %v334 = vpop.f32.mrf.mxu0
  %v335 = vadd.f32 %v266, %v334
  %v336 = vpop.f32.mrf.mxu0
  %337 = vmatprep.mubr.f32.mxu0 0.0
  %338 = vmatmul.mubr.f32.gmra.mxu0 %v178
  %v339 = vpop.f32.mrf.mxu0
  %v340 = vadd.f32 %v266, %v339
  %v341 = vpop.f32.mrf.mxu0
  %342 = vdwg.mxu0
  %s343 = scalar_lea.vmem %s7, 64
  %v344 = vld [vmem:[%s343] sm:$0xff]
  %v345 = vld [vmem:[%s343 + $0x8] sm:$0xff]
  %v346 = vld [vmem:[%s343 + $0x10] sm:$0xff]
  %v347 = vld [vmem:[%s343 + $0x18] sm:$0xff]
  %s348 = scalar_lea.vmem %s8, 2
  %v349 = vld [vmem:[%s348] sm:$0x1]
  %v351 = vlaneseq
  %v352 = vshrl.u32 %v351, 7
  %v353 = vsub.s32 0, %v352
  %v354 = vrot.slane %v349, %v353
  %356 = vmatprep.subr.mxu0 0.0
  %357 = vmatpush1.msra.mxu0 0.0
  %358 = vmatprep.subr.mxu0 0.0
  %359 = vmatpush1.msra.mxu0 0.0
  %360 = vmatprep.subr.mxu0 0.0
  %361 = vmatpush1.msra.mxu0 0.0
  %362 = vmatprep.subr.mxu0 0.0
  %363 = vmatpush1.msra.mxu0 0.0
  %364 = vmatprep.subr.mxu0 0.0
  %365 = vmatpush1.msra.mxu0 0.0
  %366 = vmatprep.subr.mxu0 0.0
  %367 = vmatpush1.msra.mxu0 0.0
  %368 = vmatprep.subr.mxu0 0.0
  %369 = vmatpush1.msra.mxu0 0.0
  %370 = vmatprep.subr.mxu0 0.0
  %371 = vmatpush1.msra.mxu0 0.0
  %372 = vmatprep.subr.mxu0 0.0
  %373 = vmatpush1.msra.mxu0 0.0
  %374 = vmatprep.subr.mxu0 0.0
  %375 = vmatpush1.msra.mxu0 0.0
  %376 = vmatprep.subr.mxu0 0.0
  %377 = vmatpush1.msra.mxu0 0.0
  %378 = vmatprep.subr.mxu0 0.0
  %379 = vmatpush1.msra.mxu0 0.0
  %380 = vmatprep.subr.mxu0 0.0
  %381 = vmatpush1.msra.mxu0 %v347
  %382 = vmatprep.subr.mxu0 0.0
  %383 = vmatpush1.msra.mxu0 %v346
  %384 = vmatprep.subr.mxu0 0.0
  %385 = vmatpush1.msra.mxu0 %v345
  %386 = vmatprep.subr.mxu0 0.0
  %387 = vmatpush1.msra.mxu0 %v344
  %388 = vmatprep.subr.mxu0 0.0
  %389 = vmatpush2.msra.mxu0 0.0
  %390 = vmatprep.subr.mxu0 0.0
  %391 = vmatpush2.msra.mxu0 0.0
  %392 = vmatprep.subr.mxu0 0.0
  %393 = vmatpush2.msra.mxu0 0.0
  %394 = vmatprep.subr.mxu0 0.0
  %395 = vmatpush2.msra.mxu0 0.0
  %396 = vmatprep.subr.mxu0 0.0
  %397 = vmatpush2.msra.mxu0 0.0
  %398 = vmatprep.subr.mxu0 0.0
  %399 = vmatpush2.msra.mxu0 0.0
  %400 = vmatprep.subr.mxu0 0.0
  %401 = vmatpush2.msra.mxu0 0.0
  %402 = vmatprep.subr.mxu0 0.0
  %403 = vmatpush2.msra.mxu0 0.0
  %404 = vmatprep.subr.mxu0 0.0
  %405 = vmatpush2.msra.mxu0 0.0
  %406 = vmatprep.subr.mxu0 0.0
  %407 = vmatpush2.msra.mxu0 0.0
  %408 = vmatprep.subr.mxu0 0.0
  %409 = vmatpush2.msra.mxu0 0.0
  %410 = vmatprep.subr.mxu0 0.0
  %411 = vmatpush2.msra.mxu0 0.0
  %412 = vmatprep.subr.mxu0 0.0
  %413 = vmatpush2.msra.mxu0 0.0
  %414 = vmatprep.subr.mxu0 0.0
  %415 = vmatpush2.msra.mxu0 0.0
  %416 = vmatprep.subr.mxu0 0.0
  %417 = vmatpush2.msra.mxu0 0.0
  %418 = vmatprep.subr.mxu0 0.0
  %419 = vmatpush2.msra.mxu0 0.0
  %420 = vmatprep.mubr.f32.mxu0 0.0
  %421 = vmatmul.mubr.f32.gmra.mxu0 %v175
  %v422 = vpop.f32.mrf.mxu0
  %v423 = vadd.f32 %v354, %v422
  %v424 = vpop.f32.mrf.mxu0
  %425 = vmatprep.mubr.f32.mxu0 0.0
  %426 = vmatmul.mubr.f32.gmra.mxu0 %v178
  %v427 = vpop.f32.mrf.mxu0
  %v428 = vadd.f32 %v354, %v427
  %v429 = vpop.f32.mrf.mxu0
  %430 = vdwg.mxu0
  %v431 = vmul.f32 %v247, %v67
  %v432 = vmul.f32 %v252, %v67
  %v434 = vsel %vm173, %v431, 0
  %v437 = vsel %vm173, %v432, 0
  %v440 = vsel %vm173, %v335, 0
  %v443 = vsel %vm173, %v340, 0
  %445 = vmatprep.subr.mxu0 0.0
  %446 = vmatpush1.xpose.msra.mxu0 0.0
  %447 = vmatprep.subr.mxu0 0.0
  %448 = vmatpush1.xpose.msra.mxu0 0.0
  %449 = vmatprep.subr.mxu0 0.0
  %450 = vmatpush1.xpose.msra.mxu0 0.0
  %451 = vmatprep.subr.mxu0 0.0
  %452 = vmatpush1.xpose.msra.mxu0 0.0
  %453 = vmatprep.subr.mxu0 0.0
  %454 = vmatpush1.xpose.msra.mxu0 0.0
  %455 = vmatprep.subr.mxu0 0.0
  %456 = vmatpush1.xpose.msra.mxu0 0.0
  %457 = vmatprep.subr.mxu0 0.0
  %458 = vmatpush1.xpose.msra.mxu0 0.0
  %459 = vmatprep.subr.mxu0 0.0
  %460 = vmatpush1.xpose.msra.mxu0 0.0
  %461 = vmatprep.subr.mxu0 0.0
  %462 = vmatpush1.xpose.msra.mxu0 0.0
  %463 = vmatprep.subr.mxu0 0.0
  %464 = vmatpush1.xpose.msra.mxu0 0.0
  %465 = vmatprep.subr.mxu0 0.0
  %466 = vmatpush1.xpose.msra.mxu0 0.0
  %467 = vmatprep.subr.mxu0 0.0
  %468 = vmatpush1.xpose.msra.mxu0 0.0
  %469 = vmatprep.subr.mxu0 0.0
  %470 = vmatpush1.xpose.msra.mxu0 0.0
  %471 = vmatprep.subr.mxu0 0.0
  %472 = vmatpush1.xpose.msra.mxu0 0.0
  %473 = vmatprep.subr.mxu0 0.0
  %474 = vmatpush1.xpose.msra.mxu0 %v443
  %475 = vmatprep.subr.mxu0 0.0
  %476 = vmatpush1.xpose.msra.mxu0 %v440
  %477 = vmatprep.subr.mxu0 0.0
  %478 = vmatpush2.xpose.msra.mxu0 0.0
  %479 = vmatprep.subr.mxu0 0.0
  %480 = vmatpush2.xpose.msra.mxu0 0.0
  %481 = vmatprep.subr.mxu0 0.0
  %482 = vmatpush2.xpose.msra.mxu0 0.0
  %483 = vmatprep.subr.mxu0 0.0
  %484 = vmatpush2.xpose.msra.mxu0 0.0
  %485 = vmatprep.subr.mxu0 0.0
  %486 = vmatpush2.xpose.msra.mxu0 0.0
  %487 = vmatprep.subr.mxu0 0.0
  %488 = vmatpush2.xpose.msra.mxu0 0.0
  %489 = vmatprep.subr.mxu0 0.0
  %490 = vmatpush2.xpose.msra.mxu0 0.0
  %491 = vmatprep.subr.mxu0 0.0
  %492 = vmatpush2.xpose.msra.mxu0 0.0
  %493 = vmatprep.subr.mxu0 0.0
  %494 = vmatpush2.xpose.msra.mxu0 0.0
  %495 = vmatprep.subr.mxu0 0.0
  %496 = vmatpush2.xpose.msra.mxu0 0.0
  %497 = vmatprep.subr.mxu0 0.0
  %498 = vmatpush2.xpose.msra.mxu0 0.0
  %499 = vmatprep.subr.mxu0 0.0
  %500 = vmatpush2.xpose.msra.mxu0 0.0
  %501 = vmatprep.subr.mxu0 0.0
  %502 = vmatpush2.xpose.msra.mxu0 0.0
  %503 = vmatprep.subr.mxu0 0.0
  %504 = vmatpush2.xpose.msra.mxu0 0.0
  %505 = vmatprep.subr.mxu0 0.0
  %506 = vmatpush2.xpose.msra.mxu0 0.0
  %507 = vmatprep.subr.mxu0 0.0
  %508 = vmatpush2.xpose.msra.mxu0 0.0
  %509 = vmatprep.mubr.f32.mxu0 0.0
  %510 = vmatmul.mubr.f32.gmra.mxu0 %v434
  %v511 = vpop.f32.mrf.mxu0
  %v512 = vadd.f32 %v110, %v511
  %v513 = vpop.f32.mrf.mxu0
  %514 = vmatprep.mubr.f32.mxu0 0.0
  %515 = vmatmul.mubr.f32.gmra.mxu0 %v437
  %v516 = vpop.f32.mrf.mxu0
  %v517 = vadd.f32 %v111, %v516
  %v518 = vpop.f32.mrf.mxu0
  %519 = vdwg.mxu0
  %vm520 = vcmask 130048
  %v521 = vsel %vm520, %v512, -inf
  %522 = vmax.xlane.f32.xlu0 %v521
  %v523 = vpop.xlane.xlu0 %522
  %v524 = vsel %vm520, %v517, -inf
  %525 = vmax.xlane.f32.xlu0 %v524
  %v526 = vpop.xlane.xlu0 %525
  %v527 = vsub.f32 %v512, %v523
  %v528 = vsub.f32 %v517, %v526
  %v529 = vmul.f32 %v527, 1.442695
  %v530 = vpow.pop %v529
  %v531 = vmul.f32 %v528, 1.442695
  %v532 = vpow.pop %v531
  %v533 = vsel %vm520, %v530, 0.0
  %534 = vadd.xlane.f32.xlu0 %v533
  %v535 = vpop.xlane.xlu0 %534
  %v536 = vsel %vm520, %v532, 0.0
  %537 = vadd.xlane.f32.xlu0 %v536
  %v538 = vpop.xlane.xlu0 %537
  %v539 = vrcp.pop %v535
  %v540 = vmul.f32 %v530, %v539
  %v541 = vrcp.pop %v538
  %v542 = vmul.f32 %v532, %v541
  %v543 = vmul.f32 %v423, %v67
  %v544 = vmul.f32 %v428, %v67
  %v545 = vmul.f32 %v247, %v71
  %v546 = vmul.f32 %v252, %v71
  %v548 = vsel %vm173, %v545, 0
  %v551 = vsel %vm173, %v546, 0
  %553 = vmatprep.subr.mxu0 0.0
  %554 = vmatpush1.xpose.msra.mxu0 0.0
  %555 = vmatprep.subr.mxu0 0.0
  %556 = vmatpush1.xpose.msra.mxu0 0.0
  %557 = vmatprep.subr.mxu0 0.0
  %558 = vmatpush1.xpose.msra.mxu0 0.0
  %559 = vmatprep.subr.mxu0 0.0
  %560 = vmatpush1.xpose.msra.mxu0 0.0
  %561 = vmatprep.subr.mxu0 0.0
  %562 = vmatpush1.xpose.msra.mxu0 0.0
  %563 = vmatprep.subr.mxu0 0.0
  %564 = vmatpush1.xpose.msra.mxu0 0.0
  %565 = vmatprep.subr.mxu0 0.0
  %566 = vmatpush1.xpose.msra.mxu0 0.0
  %567 = vmatprep.subr.mxu0 0.0
  %568 = vmatpush1.xpose.msra.mxu0 0.0
  %569 = vmatprep.subr.mxu0 0.0
  %570 = vmatpush1.xpose.msra.mxu0 0.0
  %571 = vmatprep.subr.mxu0 0.0
  %572 = vmatpush1.xpose.msra.mxu0 0.0
  %573 = vmatprep.subr.mxu0 0.0
  %574 = vmatpush1.xpose.msra.mxu0 0.0
  %575 = vmatprep.subr.mxu0 0.0
  %576 = vmatpush1.xpose.msra.mxu0 0.0
  %577 = vmatprep.subr.mxu0 0.0
  %578 = vmatpush1.xpose.msra.mxu0 0.0
  %579 = vmatprep.subr.mxu0 0.0
  %580 = vmatpush1.xpose.msra.mxu0 0.0
  %581 = vmatprep.subr.mxu0 0.0
  %582 = vmatpush1.xpose.msra.mxu0 %v443
  %583 = vmatprep.subr.mxu0 0.0
  %584 = vmatpush1.xpose.msra.mxu0 %v440
  %585 = vmatprep.subr.mxu0 0.0
  %586 = vmatpush2.xpose.msra.mxu0 0.0
  %587 = vmatprep.subr.mxu0 0.0
  %588 = vmatpush2.xpose.msra.mxu0 0.0
  %589 = vmatprep.subr.mxu0 0.0
  %590 = vmatpush2.xpose.msra.mxu0 0.0
  %591 = vmatprep.subr.mxu0 0.0
  %592 = vmatpush2.xpose.msra.mxu0 0.0
  %593 = vmatprep.subr.mxu0 0.0
  %594 = vmatpush2.xpose.msra.mxu0 0.0
  %595 = vmatprep.subr.mxu0 0.0
  %596 = vmatpush2.xpose.msra.mxu0 0.0
  %597 = vmatprep.subr.mxu0 0.0
  %598 = vmatpush2.xpose.msra.mxu0 0.0
  %599 = vmatprep.subr.mxu0 0.0
  %600 = vmatpush2.xpose.msra.mxu0 0.0
  %601 = vmatprep.subr.mxu0 0.0
  %602 = vmatpush2.xpose.msra.mxu0 0.0
  %603 = vmatprep.subr.mxu0 0.0
  %604 = vmatpush2.xpose.msra.mxu0 0.0
  %605 = vmatprep.subr.mxu0 0.0
  %606 = vmatpush2.xpose.msra.mxu0 0.0
  %607 = vmatprep.subr.mxu0 0.0
  %608 = vmatpush2.xpose.msra.mxu0 0.0
  %609 = vmatprep.subr.mxu0 0.0
  %610 = vmatpush2.xpose.msra.mxu0 0.0
  %611 = vmatprep.subr.mxu0 0.0
  %612 = vmatpush2.xpose.msra.mxu0 0.0
  %613 = vmatprep.subr.mxu0 0.0
  %614 = vmatpush2.xpose.msra.mxu0 0.0
  %615 = vmatprep.subr.mxu0 0.0
  %616 = vmatpush2.xpose.msra.mxu0 0.0
  %617 = vmatprep.mubr.f32.mxu0 0.0
  %618 = vmatmul.mubr.f32.gmra.mxu0 %v548
  %v619 = vpop.f32.mrf.mxu0
  %v620 = vadd.f32 %v110, %v619
  %v621 = vpop.f32.mrf.mxu0
  %622 = vmatprep.mubr.f32.mxu0 0.0
  %623 = vmatmul.mubr.f32.gmra.mxu0 %v551
  %v624 = vpop.f32.mrf.mxu0
  %v625 = vadd.f32 %v111, %v624
  %v626 = vpop.f32.mrf.mxu0
  %627 = vdwg.mxu0
  %v628 = vsel %vm520, %v620, -inf
  %629 = vmax.xlane.f32.xlu0 %v628
  %v630 = vpop.xlane.xlu0 %629
  %v631 = vsel %vm520, %v625, -inf
  %632 = vmax.xlane.f32.xlu0 %v631
  %v633 = vpop.xlane.xlu0 %632
  %v634 = vsub.f32 %v620, %v630
  %v635 = vsub.f32 %v625, %v633
  %v636 = vmul.f32 %v634, 1.442695
  %v637 = vpow.pop %v636
  %v638 = vmul.f32 %v635, 1.442695
  %v639 = vpow.pop %v638
  %v640 = vsel %vm520, %v637, 0.0
  %641 = vadd.xlane.f32.xlu0 %v640
  %v642 = vpop.xlane.xlu0 %641
  %v643 = vsel %vm520, %v639, 0.0
  %644 = vadd.xlane.f32.xlu0 %v643
  %v645 = vpop.xlane.xlu0 %644
  %v646 = vrcp.pop %v642
  %v647 = vmul.f32 %v637, %v646
  %v648 = vrcp.pop %v645
  %v649 = vmul.f32 %v639, %v648
  %v650 = vmul.f32 %v423, %v71
  %v651 = vmul.f32 %v428, %v71
  %v653 = vsel %vm520, %v647, 0
  %v656 = vsel %vm520, %v649, 0
  %658 = vmatprep.subr.mxu0 0.0
  %659 = vmatpush1.msra.mxu0 0.0
  %660 = vmatprep.subr.mxu0 0.0
  %661 = vmatpush1.msra.mxu0 0.0
  %662 = vmatprep.subr.mxu0 0.0
  %663 = vmatpush1.msra.mxu0 0.0
  %664 = vmatprep.subr.mxu0 0.0
  %665 = vmatpush1.msra.mxu0 0.0
  %666 = vmatprep.subr.mxu0 0.0
  %667 = vmatpush1.msra.mxu0 0.0
  %668 = vmatprep.subr.mxu0 0.0
  %669 = vmatpush1.msra.mxu0 0.0
  %670 = vmatprep.subr.mxu0 0.0
  %671 = vmatpush1.msra.mxu0 0.0
  %672 = vmatprep.subr.mxu0 0.0
  %673 = vmatpush1.msra.mxu0 0.0
  %674 = vmatprep.subr.mxu0 0.0
  %675 = vmatpush1.msra.mxu0 0.0
  %676 = vmatprep.subr.mxu0 0.0
  %677 = vmatpush1.msra.mxu0 0.0
  %678 = vmatprep.subr.mxu0 0.0
  %679 = vmatpush1.msra.mxu0 0.0
  %680 = vmatprep.subr.mxu0 0.0
  %681 = vmatpush1.msra.mxu0 0.0
  %682 = vmatprep.subr.mxu0 0.0
  %683 = vmatpush1.msra.mxu0 0.0
  %684 = vmatprep.subr.mxu0 0.0
  %685 = vmatpush1.msra.mxu0 0.0
  %686 = vmatprep.subr.mxu0 0.0
  %687 = vmatpush1.msra.mxu0 %v651
  %688 = vmatprep.subr.mxu0 0.0
  %689 = vmatpush1.msra.mxu0 %v650
  %690 = vmatprep.subr.mxu0 0.0
  %691 = vmatpush2.msra.mxu0 0.0
  %692 = vmatprep.subr.mxu0 0.0
  %693 = vmatpush2.msra.mxu0 0.0
  %694 = vmatprep.subr.mxu0 0.0
  %695 = vmatpush2.msra.mxu0 0.0
  %696 = vmatprep.subr.mxu0 0.0
  %697 = vmatpush2.msra.mxu0 0.0
  %698 = vmatprep.subr.mxu0 0.0
  %699 = vmatpush2.msra.mxu0 0.0
  %700 = vmatprep.subr.mxu0 0.0
  %701 = vmatpush2.msra.mxu0 0.0
  %702 = vmatprep.subr.mxu0 0.0
  %703 = vmatpush2.msra.mxu0 0.0
  %704 = vmatprep.subr.mxu0 0.0
  %705 = vmatpush2.msra.mxu0 0.0
  %706 = vmatprep.subr.mxu0 0.0
  %707 = vmatpush2.msra.mxu0 0.0
  %708 = vmatprep.subr.mxu0 0.0
  %709 = vmatpush2.msra.mxu0 0.0
  %710 = vmatprep.subr.mxu0 0.0
  %711 = vmatpush2.msra.mxu0 0.0
  %712 = vmatprep.subr.mxu0 0.0
  %713 = vmatpush2.msra.mxu0 0.0
  %714 = vmatprep.subr.mxu0 0.0
  %715 = vmatpush2.msra.mxu0 0.0
  %716 = vmatprep.subr.mxu0 0.0
  %717 = vmatpush2.msra.mxu0 0.0
  %718 = vmatprep.subr.mxu0 0.0
  %719 = vmatpush2.msra.mxu0 0.0
  %720 = vmatprep.subr.mxu0 0.0
  %721 = vmatpush2.msra.mxu0 0.0
  %722 = vmatprep.mubr.f32.mxu0 0.0
  %723 = vmatmul.mubr.f32.gmra.mxu0 %v653
  %v724 = vpop.f32.mrf.mxu0
  %v725 = vadd.f32 0.0, %v724
  %v726 = vpop.f32.mrf.mxu0
  %727 = vmatprep.mubr.f32.mxu0 0.0
  %728 = vmatmul.mubr.f32.gmra.mxu0 %v656
  %v729 = vpop.f32.mrf.mxu0
  %v730 = vadd.f32 0.0, %v729
  %v731 = vpop.f32.mrf.mxu0
  %732 = vdwg.mxu0
  %v734 = vsel %vm520, %v540, 0
  %v737 = vsel %vm520, %v542, 0
  %739 = vmatprep.subr.mxu0 0.0
  %740 = vmatpush1.msra.mxu0 0.0
  %741 = vmatprep.subr.mxu0 0.0
  %742 = vmatpush1.msra.mxu0 0.0
  %743 = vmatprep.subr.mxu0 0.0
  %744 = vmatpush1.msra.mxu0 0.0
  %745 = vmatprep.subr.mxu0 0.0
  %746 = vmatpush1.msra.mxu0 0.0
  %747 = vmatprep.subr.mxu0 0.0
  %748 = vmatpush1.msra.mxu0 0.0
  %749 = vmatprep.subr.mxu0 0.0
  %750 = vmatpush1.msra.mxu0 0.0
  %751 = vmatprep.subr.mxu0 0.0
  %752 = vmatpush1.msra.mxu0 0.0
  %753 = vmatprep.subr.mxu0 0.0
  %754 = vmatpush1.msra.mxu0 0.0
  %755 = vmatprep.subr.mxu0 0.0
  %756 = vmatpush1.msra.mxu0 0.0
  %757 = vmatprep.subr.mxu0 0.0
  %758 = vmatpush1.msra.mxu0 0.0
  %759 = vmatprep.subr.mxu0 0.0
  %760 = vmatpush1.msra.mxu0 0.0
  %761 = vmatprep.subr.mxu0 0.0
  %762 = vmatpush1.msra.mxu0 0.0
  %763 = vmatprep.subr.mxu0 0.0
  %764 = vmatpush1.msra.mxu0 0.0
  %765 = vmatprep.subr.mxu0 0.0
  %766 = vmatpush1.msra.mxu0 0.0
  %767 = vmatprep.subr.mxu0 0.0
  %768 = vmatpush1.msra.mxu0 %v544
  %769 = vmatprep.subr.mxu0 0.0
  %770 = vmatpush1.msra.mxu0 %v543
  %771 = vmatprep.subr.mxu0 0.0
  %772 = vmatpush2.msra.mxu0 0.0
  %773 = vmatprep.subr.mxu0 0.0
  %774 = vmatpush2.msra.mxu0 0.0
  %775 = vmatprep.subr.mxu0 0.0
  %776 = vmatpush2.msra.mxu0 0.0
  %777 = vmatprep.subr.mxu0 0.0
  %778 = vmatpush2.msra.mxu0 0.0
  %779 = vmatprep.subr.mxu0 0.0
  %780 = vmatpush2.msra.mxu0 0.0
  %781 = vmatprep.subr.mxu0 0.0
  %782 = vmatpush2.msra.mxu0 0.0
  %783 = vmatprep.subr.mxu0 0.0
  %784 = vmatpush2.msra.mxu0 0.0
  %785 = vmatprep.subr.mxu0 0.0
  %786 = vmatpush2.msra.mxu0 0.0
  %787 = vmatprep.subr.mxu0 0.0
  %788 = vmatpush2.msra.mxu0 0.0
  %789 = vmatprep.subr.mxu0 0.0
  %790 = vmatpush2.msra.mxu0 0.0
  %791 = vmatprep.subr.mxu0 0.0
  %792 = vmatpush2.msra.mxu0 0.0
  %793 = vmatprep.subr.mxu0 0.0
  %794 = vmatpush2.msra.mxu0 0.0
  %795 = vmatprep.subr.mxu0 0.0
  %796 = vmatpush2.msra.mxu0 0.0
  %797 = vmatprep.subr.mxu0 0.0
  %798 = vmatpush2.msra.mxu0 0.0
  %799 = vmatprep.subr.mxu0 0.0
  %800 = vmatpush2.msra.mxu0 0.0
  %801 = vmatprep.subr.mxu0 0.0
  %802 = vmatpush2.msra.mxu0 0.0
  %803 = vmatprep.mubr.f32.mxu0 0.0
  %804 = vmatmul.mubr.f32.gmra.mxu0 %v734
  %v805 = vpop.f32.mrf.mxu0
  %v806 = vadd.f32 %v725, %v805
  %v807 = vpop.f32.mrf.mxu0
  %808 = vmatprep.mubr.f32.mxu0 0.0
  %809 = vmatmul.mubr.f32.gmra.mxu0 %v737
  %v810 = vpop.f32.mrf.mxu0
  %v811 = vadd.f32 %v730, %v810
  %v812 = vpop.f32.mrf.mxu0
  %813 = vdwg.mxu0
  %v814 = vmul.f32 %v247, %v75
  %v815 = vmul.f32 %v252, %v75
  %v817 = vsel %vm173, %v814, 0
  %v820 = vsel %vm173, %v815, 0
  %822 = vmatprep.subr.mxu0 0.0
  %823 = vmatpush1.xpose.msra.mxu0 0.0
  %824 = vmatprep.subr.mxu0 0.0
  %825 = vmatpush1.xpose.msra.mxu0 0.0
  %826 = vmatprep.subr.mxu0 0.0
  %827 = vmatpush1.xpose.msra.mxu0 0.0
  %828 = vmatprep.subr.mxu0 0.0
  %829 = vmatpush1.xpose.msra.mxu0 0.0
  %830 = vmatprep.subr.mxu0 0.0
  %831 = vmatpush1.xpose.msra.mxu0 0.0
  %832 = vmatprep.subr.mxu0 0.0
  %833 = vmatpush1.xpose.msra.mxu0 0.0
  %834 = vmatprep.subr.mxu0 0.0
  %835 = vmatpush1.xpose.msra.mxu0 0.0
  %836 = vmatprep.subr.mxu0 0.0
  %837 = vmatpush1.xpose.msra.mxu0 0.0
  %838 = vmatprep.subr.mxu0 0.0
  %839 = vmatpush1.xpose.msra.mxu0 0.0
  %840 = vmatprep.subr.mxu0 0.0
  %841 = vmatpush1.xpose.msra.mxu0 0.0
  %842 = vmatprep.subr.mxu0 0.0
  %843 = vmatpush1.xpose.msra.mxu0 0.0
  %844 = vmatprep.subr.mxu0 0.0
  %845 = vmatpush1.xpose.msra.mxu0 0.0
  %846 = vmatprep.subr.mxu0 0.0
  %847 = vmatpush1.xpose.msra.mxu0 0.0
  %848 = vmatprep.subr.mxu0 0.0
  %849 = vmatpush1.xpose.msra.mxu0 0.0
  %850 = vmatprep.subr.mxu0 0.0
  %851 = vmatpush1.xpose.msra.mxu0 %v443
  %852 = vmatprep.subr.mxu0 0.0
  %853 = vmatpush1.xpose.msra.mxu0 %v440
  %854 = vmatprep.subr.mxu0 0.0
  %855 = vmatpush2.xpose.msra.mxu0 0.0
  %856 = vmatprep.subr.mxu0 0.0
  %857 = vmatpush2.xpose.msra.mxu0 0.0
  %858 = vmatprep.subr.mxu0 0.0
  %859 = vmatpush2.xpose.msra.mxu0 0.0
  %860 = vmatprep.subr.mxu0 0.0
  %861 = vmatpush2.xpose.msra.mxu0 0.0
  %862 = vmatprep.subr.mxu0 0.0
  %863 = vmatpush2.xpose.msra.mxu0 0.0
  %864 = vmatprep.subr.mxu0 0.0
  %865 = vmatpush2.xpose.msra.mxu0 0.0
  %866 = vmatprep.subr.mxu0 0.0
  %867 = vmatpush2.xpose.msra.mxu0 0.0
  %868 = vmatprep.subr.mxu0 0.0
  %869 = vmatpush2.xpose.msra.mxu0 0.0
  %870 = vmatprep.subr.mxu0 0.0
  %871 = vmatpush2.xpose.msra.mxu0 0.0
  %872 = vmatprep.subr.mxu0 0.0
  %873 = vmatpush2.xpose.msra.mxu0 0.0
  %874 = vmatprep.subr.mxu0 0.0
  %875 = vmatpush2.xpose.msra.mxu0 0.0
  %876 = vmatprep.subr.mxu0 0.0
  %877 = vmatpush2.xpose.msra.mxu0 0.0
  %878 = vmatprep.subr.mxu0 0.0
  %879 = vmatpush2.xpose.msra.mxu0 0.0
  %880 = vmatprep.subr.mxu0 0.0
  %881 = vmatpush2.xpose.msra.mxu0 0.0
  %882 = vmatprep.subr.mxu0 0.0
  %883 = vmatpush2.xpose.msra.mxu0 0.0
  %884 = vmatprep.subr.mxu0 0.0
  %885 = vmatpush2.xpose.msra.mxu0 0.0
  %886 = vmatprep.mubr.f32.mxu0 0.0
  %887 = vmatmul.mubr.f32.gmra.mxu0 %v817
  %v888 = vpop.f32.mrf.mxu0
  %v889 = vadd.f32 %v110, %v888
  %v890 = vpop.f32.mrf.mxu0
  %891 = vmatprep.mubr.f32.mxu0 0.0
  %892 = vmatmul.mubr.f32.gmra.mxu0 %v820
  %v893 = vpop.f32.mrf.mxu0
  %v894 = vadd.f32 %v111, %v893
  %v895 = vpop.f32.mrf.mxu0
  %896 = vdwg.mxu0
  %v897 = vsel %vm520, %v889, -inf
  %898 = vmax.xlane.f32.xlu0 %v897
  %v899 = vpop.xlane.xlu0 %898
  %v900 = vsel %vm520, %v894, -inf
  %901 = vmax.xlane.f32.xlu0 %v900
  %v902 = vpop.xlane.xlu0 %901
  %v903 = vsub.f32 %v889, %v899
  %v904 = vsub.f32 %v894, %v902
  %v905 = vmul.f32 %v903, 1.442695
  %v906 = vpow.pop %v905
  %v907 = vmul.f32 %v904, 1.442695
  %v908 = vpow.pop %v907
  %v909 = vsel %vm520, %v906, 0.0
  %910 = vadd.xlane.f32.xlu0 %v909
  %v911 = vpop.xlane.xlu0 %910
  %v912 = vsel %vm520, %v908, 0.0
  %913 = vadd.xlane.f32.xlu0 %v912
  %v914 = vpop.xlane.xlu0 %913
  %v915 = vrcp.pop %v911
  %v916 = vmul.f32 %v906, %v915
  %v917 = vrcp.pop %v914
  %v918 = vmul.f32 %v908, %v917
  %v919 = vmul.f32 %v423, %v75
  %v920 = vmul.f32 %v428, %v75
  %v922 = vsel %vm520, %v916, 0
  %v925 = vsel %vm520, %v918, 0
  %927 = vmatprep.subr.mxu0 0.0
  %928 = vmatpush1.msra.mxu0 0.0
  %929 = vmatprep.subr.mxu0 0.0
  %930 = vmatpush1.msra.mxu0 0.0
  %931 = vmatprep.subr.mxu0 0.0
  %932 = vmatpush1.msra.mxu0 0.0
  %933 = vmatprep.subr.mxu0 0.0
  %934 = vmatpush1.msra.mxu0 0.0
  %935 = vmatprep.subr.mxu0 0.0
  %936 = vmatpush1.msra.mxu0 0.0
  %937 = vmatprep.subr.mxu0 0.0
  %938 = vmatpush1.msra.mxu0 0.0
  %939 = vmatprep.subr.mxu0 0.0
  %940 = vmatpush1.msra.mxu0 0.0
  %941 = vmatprep.subr.mxu0 0.0
  %942 = vmatpush1.msra.mxu0 0.0
  %943 = vmatprep.subr.mxu0 0.0
  %944 = vmatpush1.msra.mxu0 0.0
  %945 = vmatprep.subr.mxu0 0.0
  %946 = vmatpush1.msra.mxu0 0.0
  %947 = vmatprep.subr.mxu0 0.0
  %948 = vmatpush1.msra.mxu0 0.0
  %949 = vmatprep.subr.mxu0 0.0
  %950 = vmatpush1.msra.mxu0 0.0
  %951 = vmatprep.subr.mxu0 0.0
  %952 = vmatpush1.msra.mxu0 0.0
  %953 = vmatprep.subr.mxu0 0.0
  %954 = vmatpush1.msra.mxu0 0.0
  %955 = vmatprep.subr.mxu0 0.0
  %956 = vmatpush1.msra.mxu0 %v920
  %957 = vmatprep.subr.mxu0 0.0
  %958 = vmatpush1.msra.mxu0 %v919
  %959 = vmatprep.subr.mxu0 0.0
  %960 = vmatpush2.msra.mxu0 0.0
  %961 = vmatprep.subr.mxu0 0.0
  %962 = vmatpush2.msra.mxu0 0.0
  %963 = vmatprep.subr.mxu0 0.0
  %964 = vmatpush2.msra.mxu0 0.0
  %965 = vmatprep.subr.mxu0 0.0
  %966 = vmatpush2.msra.mxu0 0.0
  %967 = vmatprep.subr.mxu0 0.0
  %968 = vmatpush2.msra.mxu0 0.0
  %969 = vmatprep.subr.mxu0 0.0
  %970 = vmatpush2.msra.mxu0 0.0
  %971 = vmatprep.subr.mxu0 0.0
  %972 = vmatpush2.msra.mxu0 0.0
  %973 = vmatprep.subr.mxu0 0.0
  %974 = vmatpush2.msra.mxu0 0.0
  %975 = vmatprep.subr.mxu0 0.0
  %976 = vmatpush2.msra.mxu0 0.0
  %977 = vmatprep.subr.mxu0 0.0
  %978 = vmatpush2.msra.mxu0 0.0
  %979 = vmatprep.subr.mxu0 0.0
  %980 = vmatpush2.msra.mxu0 0.0
  %981 = vmatprep.subr.mxu0 0.0
  %982 = vmatpush2.msra.mxu0 0.0
  %983 = vmatprep.subr.mxu0 0.0
  %984 = vmatpush2.msra.mxu0 0.0
  %985 = vmatprep.subr.mxu0 0.0
  %986 = vmatpush2.msra.mxu0 0.0
  %987 = vmatprep.subr.mxu0 0.0
  %988 = vmatpush2.msra.mxu0 0.0
  %989 = vmatprep.subr.mxu0 0.0
  %990 = vmatpush2.msra.mxu0 0.0
  %991 = vmatprep.mubr.f32.mxu0 0.0
  %992 = vmatmul.mubr.f32.gmra.mxu0 %v922
  %v993 = vpop.f32.mrf.mxu0
  %v994 = vadd.f32 0.0, %v993
  %v995 = vpop.f32.mrf.mxu0
  %996 = vmatprep.mubr.f32.mxu0 0.0
  %997 = vmatmul.mubr.f32.gmra.mxu0 %v925
  %v998 = vpop.f32.mrf.mxu0
  %v999 = vadd.f32 0.0, %v998
  %v1000 = vpop.f32.mrf.mxu0
  %1001 = vdwg.mxu0
  %v1002 = vadd.f32 %v806, %v994
  %v1003 = vadd.f32 %v811, %v999
  %v1004 = vmul.f32 %v247, %v79
  %v1005 = vmul.f32 %v252, %v79
  %v1007 = vsel %vm173, %v1004, 0
  %v1010 = vsel %vm173, %v1005, 0
  %1012 = vmatprep.subr.mxu0 0.0
  %1013 = vmatpush1.xpose.msra.mxu0 0.0
  %1014 = vmatprep.subr.mxu0 0.0
  %1015 = vmatpush1.xpose.msra.mxu0 0.0
  %1016 = vmatprep.subr.mxu0 0.0
  %1017 = vmatpush1.xpose.msra.mxu0 0.0
  %1018 = vmatprep.subr.mxu0 0.0
  %1019 = vmatpush1.xpose.msra.mxu0 0.0
  %1020 = vmatprep.subr.mxu0 0.0
  %1021 = vmatpush1.xpose.msra.mxu0 0.0
  %1022 = vmatprep.subr.mxu0 0.0
  %1023 = vmatpush1.xpose.msra.mxu0 0.0
  %1024 = vmatprep.subr.mxu0 0.0
  %1025 = vmatpush1.xpose.msra.mxu0 0.0
  %1026 = vmatprep.subr.mxu0 0.0
  %1027 = vmatpush1.xpose.msra.mxu0 0.0
  %1028 = vmatprep.subr.mxu0 0.0
  %1029 = vmatpush1.xpose.msra.mxu0 0.0
  %1030 = vmatprep.subr.mxu0 0.0
  %1031 = vmatpush1.xpose.msra.mxu0 0.0
  %1032 = vmatprep.subr.mxu0 0.0
  %1033 = vmatpush1.xpose.msra.mxu0 0.0
  %1034 = vmatprep.subr.mxu0 0.0
  %1035 = vmatpush1.xpose.msra.mxu0 0.0
  %1036 = vmatprep.subr.mxu0 0.0
  %1037 = vmatpush1.xpose.msra.mxu0 0.0
  %1038 = vmatprep.subr.mxu0 0.0
  %1039 = vmatpush1.xpose.msra.mxu0 0.0
  %1040 = vmatprep.subr.mxu0 0.0
  %1041 = vmatpush1.xpose.msra.mxu0 %v443
  %1042 = vmatprep.subr.mxu0 0.0
  %1043 = vmatpush1.xpose.msra.mxu0 %v440
  %1044 = vmatprep.subr.mxu0 0.0
  %1045 = vmatpush2.xpose.msra.mxu0 0.0
  %1046 = vmatprep.subr.mxu0 0.0
  %1047 = vmatpush2.xpose.msra.mxu0 0.0
  %1048 = vmatprep.subr.mxu0 0.0
  %1049 = vmatpush2.xpose.msra.mxu0 0.0
  %1050 = vmatprep.subr.mxu0 0.0
  %1051 = vmatpush2.xpose.msra.mxu0 0.0
  %1052 = vmatprep.subr.mxu0 0.0
  %1053 = vmatpush2.xpose.msra.mxu0 0.0
  %1054 = vmatprep.subr.mxu0 0.0
  %1055 = vmatpush2.xpose.msra.mxu0 0.0
  %1056 = vmatprep.subr.mxu0 0.0
  %1057 = vmatpush2.xpose.msra.mxu0 0.0
  %1058 = vmatprep.subr.mxu0 0.0
  %1059 = vmatpush2.xpose.msra.mxu0 0.0
  %1060 = vmatprep.subr.mxu0 0.0
  %1061 = vmatpush2.xpose.msra.mxu0 0.0
  %1062 = vmatprep.subr.mxu0 0.0
  %1063 = vmatpush2.xpose.msra.mxu0 0.0
  %1064 = vmatprep.subr.mxu0 0.0
  %1065 = vmatpush2.xpose.msra.mxu0 0.0
  %1066 = vmatprep.subr.mxu0 0.0
  %1067 = vmatpush2.xpose.msra.mxu0 0.0
  %1068 = vmatprep.subr.mxu0 0.0
  %1069 = vmatpush2.xpose.msra.mxu0 0.0
  %1070 = vmatprep.subr.mxu0 0.0
  %1071 = vmatpush2.xpose.msra.mxu0 0.0
  %1072 = vmatprep.subr.mxu0 0.0
  %1073 = vmatpush2.xpose.msra.mxu0 0.0
  %1074 = vmatprep.subr.mxu0 0.0
  %1075 = vmatpush2.xpose.msra.mxu0 0.0
  %1076 = vmatprep.mubr.f32.mxu0 0.0
  %1077 = vmatmul.mubr.f32.gmra.mxu0 %v1007
  %v1078 = vpop.f32.mrf.mxu0
  %v1079 = vadd.f32 %v110, %v1078
  %v1080 = vpop.f32.mrf.mxu0
  %1081 = vmatprep.mubr.f32.mxu0 0.0
  %1082 = vmatmul.mubr.f32.gmra.mxu0 %v1010
  %v1083 = vpop.f32.mrf.mxu0
  %v1084 = vadd.f32 %v111, %v1083
  %v1085 = vpop.f32.mrf.mxu0
  %1086 = vdwg.mxu0
  %v1087 = vsel %vm520, %v1079, -inf
  %1088 = vmax.xlane.f32.xlu0 %v1087
  %v1089 = vpop.xlane.xlu0 %1088
  %v1090 = vsel %vm520, %v1084, -inf
  %1091 = vmax.xlane.f32.xlu0 %v1090
  %v1092 = vpop.xlane.xlu0 %1091
  %v1093 = vsub.f32 %v1079, %v1089
  %v1094 = vsub.f32 %v1084, %v1092
  %v1095 = vmul.f32 %v1093, 1.442695
  %v1096 = vpow.pop %v1095
  %v1097 = vmul.f32 %v1094, 1.442695
  %v1098 = vpow.pop %v1097
  %v1099 = vsel %vm520, %v1096, 0.0
  %1100 = vadd.xlane.f32.xlu0 %v1099
  %v1101 = vpop.xlane.xlu0 %1100
  %v1102 = vsel %vm520, %v1098, 0.0
  %1103 = vadd.xlane.f32.xlu0 %v1102
  %v1104 = vpop.xlane.xlu0 %1103
  %v1105 = vrcp.pop %v1101
  %v1106 = vmul.f32 %v1096, %v1105
  %v1107 = vrcp.pop %v1104
  %v1108 = vmul.f32 %v1098, %v1107
  %v1109 = vmul.f32 %v423, %v79
  %v1110 = vmul.f32 %v428, %v79
  %v1112 = vsel %vm520, %v1106, 0
  %v1115 = vsel %vm520, %v1108, 0
  %1117 = vmatprep.subr.mxu0 0.0
  %1118 = vmatpush1.msra.mxu0 0.0
  %1119 = vmatprep.subr.mxu0 0.0
  %1120 = vmatpush1.msra.mxu0 0.0
  %1121 = vmatprep.subr.mxu0 0.0
  %1122 = vmatpush1.msra.mxu0 0.0
  %1123 = vmatprep.subr.mxu0 0.0
  %1124 = vmatpush1.msra.mxu0 0.0
  %1125 = vmatprep.subr.mxu0 0.0
  %1126 = vmatpush1.msra.mxu0 0.0
  %1127 = vmatprep.subr.mxu0 0.0
  %1128 = vmatpush1.msra.mxu0 0.0
  %1129 = vmatprep.subr.mxu0 0.0
  %1130 = vmatpush1.msra.mxu0 0.0
  %1131 = vmatprep.subr.mxu0 0.0
  %1132 = vmatpush1.msra.mxu0 0.0
  %1133 = vmatprep.subr.mxu0 0.0
  %1134 = vmatpush1.msra.mxu0 0.0
  %1135 = vmatprep.subr.mxu0 0.0
  %1136 = vmatpush1.msra.mxu0 0.0
  %1137 = vmatprep.subr.mxu0 0.0
  %1138 = vmatpush1.msra.mxu0 0.0
  %1139 = vmatprep.subr.mxu0 0.0
  %1140 = vmatpush1.msra.mxu0 0.0
  %1141 = vmatprep.subr.mxu0 0.0
  %1142 = vmatpush1.msra.mxu0 0.0
  %1143 = vmatprep.subr.mxu0 0.0
  %1144 = vmatpush1.msra.mxu0 0.0
  %1145 = vmatprep.subr.mxu0 0.0
  %1146 = vmatpush1.msra.mxu0 %v1110
  %1147 = vmatprep.subr.mxu0 0.0
  %1148 = vmatpush1.msra.mxu0 %v1109
  %1149 = vmatprep.subr.mxu0 0.0
  %1150 = vmatpush2.msra.mxu0 0.0
  %1151 = vmatprep.subr.mxu0 0.0
  %1152 = vmatpush2.msra.mxu0 0.0
  %1153 = vmatprep.subr.mxu0 0.0
  %1154 = vmatpush2.msra.mxu0 0.0
  %1155 = vmatprep.subr.mxu0 0.0
  %1156 = vmatpush2.msra.mxu0 0.0
  %1157 = vmatprep.subr.mxu0 0.0
  %1158 = vmatpush2.msra.mxu0 0.0
  %1159 = vmatprep.subr.mxu0 0.0
  %1160 = vmatpush2.msra.mxu0 0.0
  %1161 = vmatprep.subr.mxu0 0.0
  %1162 = vmatpush2.msra.mxu0 0.0
  %1163 = vmatprep.subr.mxu0 0.0
  %1164 = vmatpush2.msra.mxu0 0.0
  %1165 = vmatprep.subr.mxu0 0.0
  %1166 = vmatpush2.msra.mxu0 0.0
  %1167 = vmatprep.subr.mxu0 0.0
  %1168 = vmatpush2.msra.mxu0 0.0
  %1169 = vmatprep.subr.mxu0 0.0
  %1170 = vmatpush2.msra.mxu0 0.0
  %1171 = vmatprep.subr.mxu0 0.0
  %1172 = vmatpush2.msra.mxu0 0.0
  %1173 = vmatprep.subr.mxu0 0.0
  %1174 = vmatpush2.msra.mxu0 0.0
  %1175 = vmatprep.subr.mxu0 0.0
  %1176 = vmatpush2.msra.mxu0 0.0
  %1177 = vmatprep.subr.mxu0 0.0
  %1178 = vmatpush2.msra.mxu0 0.0
  %1179 = vmatprep.subr.mxu0 0.0
  %1180 = vmatpush2.msra.mxu0 0.0
  %1181 = vmatprep.mubr.f32.mxu0 0.0
  %1182 = vmatmul.mubr.f32.gmra.mxu0 %v1112
  %v1183 = vpop.f32.mrf.mxu0
  %v1184 = vadd.f32 0.0, %v1183
  %v1185 = vpop.f32.mrf.mxu0
  %1186 = vmatprep.mubr.f32.mxu0 0.0
  %1187 = vmatmul.mubr.f32.gmra.mxu0 %v1115
  %v1188 = vpop.f32.mrf.mxu0
  %v1189 = vadd.f32 0.0, %v1188
  %v1190 = vpop.f32.mrf.mxu0
  %1191 = vdwg.mxu0
  %v1192 = vadd.f32 %v1002, %v1184
  %v1193 = vadd.f32 %v1003, %v1189
  %v1194 = vld [vmem:[%s9] sm:$0xff]
  %v1195 = vld [vmem:[%s9 + $0x8] sm:$0xff]
  %v1196 = vld [vmem:[%s9 + $0x10] sm:$0xff]
  %v1197 = vld [vmem:[%s9 + $0x18] sm:$0xff]
  %v1198 = vld [vmem:[%s10] sm:$0x1]
  %v1200 = vlaneseq
  %v1201 = vshrl.u32 %v1200, 7
  %v1202 = vsub.s32 0, %v1201
  %v1203 = vrot.slane %v1198, %v1202
  %v1206 = vsel %vm173, %v1192, 0
  %v1209 = vsel %vm173, %v1193, 0
  %1211 = vmatprep.subr.mxu0 0.0
  %1212 = vmatpush1.msra.mxu0 0.0
  %1213 = vmatprep.subr.mxu0 0.0
  %1214 = vmatpush1.msra.mxu0 0.0
  %1215 = vmatprep.subr.mxu0 0.0
  %1216 = vmatpush1.msra.mxu0 0.0
  %1217 = vmatprep.subr.mxu0 0.0
  %1218 = vmatpush1.msra.mxu0 0.0
  %1219 = vmatprep.subr.mxu0 0.0
  %1220 = vmatpush1.msra.mxu0 0.0
  %1221 = vmatprep.subr.mxu0 0.0
  %1222 = vmatpush1.msra.mxu0 0.0
  %1223 = vmatprep.subr.mxu0 0.0
  %1224 = vmatpush1.msra.mxu0 0.0
  %1225 = vmatprep.subr.mxu0 0.0
  %1226 = vmatpush1.msra.mxu0 0.0
  %1227 = vmatprep.subr.mxu0 0.0
  %1228 = vmatpush1.msra.mxu0 0.0
  %1229 = vmatprep.subr.mxu0 0.0
  %1230 = vmatpush1.msra.mxu0 0.0
  %1231 = vmatprep.subr.mxu0 0.0
  %1232 = vmatpush1.msra.mxu0 0.0
  %1233 = vmatprep.subr.mxu0 0.0
  %1234 = vmatpush1.msra.mxu0 0.0
  %1235 = vmatprep.subr.mxu0 0.0
  %1236 = vmatpush1.msra.mxu0 %v1197
  %1237 = vmatprep.subr.mxu0 0.0
  %1238 = vmatpush1.msra.mxu0 %v1196
  %1239 = vmatprep.subr.mxu0 0.0
  %1240 = vmatpush1.msra.mxu0 %v1195
  %1241 = vmatprep.subr.mxu0 0.0
  %1242 = vmatpush1.msra.mxu0 %v1194
  %1243 = vmatprep.subr.mxu0 0.0
  %1244 = vmatpush2.msra.mxu0 0.0
  %1245 = vmatprep.subr.mxu0 0.0
  %1246 = vmatpush2.msra.mxu0 0.0
  %1247 = vmatprep.subr.mxu0 0.0
  %1248 = vmatpush2.msra.mxu0 0.0
  %1249 = vmatprep.subr.mxu0 0.0
  %1250 = vmatpush2.msra.mxu0 0.0
  %1251 = vmatprep.subr.mxu0 0.0
  %1252 = vmatpush2.msra.mxu0 0.0
  %1253 = vmatprep.subr.mxu0 0.0
  %1254 = vmatpush2.msra.mxu0 0.0
  %1255 = vmatprep.subr.mxu0 0.0
  %1256 = vmatpush2.msra.mxu0 0.0
  %1257 = vmatprep.subr.mxu0 0.0
  %1258 = vmatpush2.msra.mxu0 0.0
  %1259 = vmatprep.subr.mxu0 0.0
  %1260 = vmatpush2.msra.mxu0 0.0
  %1261 = vmatprep.subr.mxu0 0.0
  %1262 = vmatpush2.msra.mxu0 0.0
  %1263 = vmatprep.subr.mxu0 0.0
  %1264 = vmatpush2.msra.mxu0 0.0
  %1265 = vmatprep.subr.mxu0 0.0
  %1266 = vmatpush2.msra.mxu0 0.0
  %1267 = vmatprep.subr.mxu0 0.0
  %1268 = vmatpush2.msra.mxu0 0.0
  %1269 = vmatprep.subr.mxu0 0.0
  %1270 = vmatpush2.msra.mxu0 0.0
  %1271 = vmatprep.subr.mxu0 0.0
  %1272 = vmatpush2.msra.mxu0 0.0
  %1273 = vmatprep.subr.mxu0 0.0
  %1274 = vmatpush2.msra.mxu0 0.0
  %1275 = vmatprep.mubr.f32.mxu0 0.0
  %1276 = vmatmul.mubr.f32.gmra.mxu0 %v1206
  %v1277 = vpop.f32.mrf.mxu0
  %v1278 = vadd.f32 %v1203, %v1277
  %v1279 = vpop.f32.mrf.mxu0
  %1280 = vmatprep.mubr.f32.mxu0 0.0
  %1281 = vmatmul.mubr.f32.gmra.mxu0 %v1209
  %v1282 = vpop.f32.mrf.mxu0
  %v1283 = vadd.f32 %v1203, %v1282
  %v1284 = vpop.f32.mrf.mxu0
  %1285 = vdwg.mxu0
  %v1286 = vadd.f32 %v160, %v1278
  %v1287 = vadd.f32 %v161, %v1283
  %v1288 = vld [vmem:[%s15] sm:$0x1]
  %v1289 = vld [vmem:[%s16] sm:$0x1]
  %v1290 = vsel %vm173, %v1286, 0.0
  %1291 = vadd.xlane.f32.xlu0 %v1290
  %v1292 = vpop.xlane.xlu0 %1291
  %v1293 = vsel %vm173, %v1287, 0.0
  %1294 = vadd.xlane.f32.xlu0 %v1293
  %v1295 = vpop.xlane.xlu0 %1294
  %v1296 = vrcp.pop 32.0
  %v1297 = vmul.f32 %v1292, %v1296
  %v1298 = vmul.f32 %v1295, %v1296
  %v1299 = vsub.f32 %v1286, %v1297
  %v1300 = vsub.f32 %v1287, %v1298
  %v1301 = vmul.f32 %v1299, %v1299
  %v1302 = vmul.f32 %v1300, %v1300
  %v1303 = vsel %vm173, %v1301, 0.0
  %1304 = vadd.xlane.f32.xlu0 %v1303
  %v1305 = vpop.xlane.xlu0 %1304
  %v1306 = vsel %vm173, %v1302, 0.0
  %1307 = vadd.xlane.f32.xlu0 %v1306
  %v1308 = vpop.xlane.xlu0 %1307
  %v1309 = vmul.f32 %v1305, %v1296
  %v1310 = vmul.f32 %v1308, %v1296
  %v1311 = vadd.f32 %v1309, 1e-05
  %v1312 = vadd.f32 %v1310, 1e-05
  %v1313 = vrsqrt.pop %v1311
  %v1314 = vrsqrt.pop %v1312
  %v1315 = vmul.f32 %v1299, %v1313
  %v1316 = vmul.f32 %v1300, %v1314
  %v1318 = vlaneseq
  %v1319 = vshrl.u32 %v1318, 7
  %v1320 = vsub.s32 0, %v1319
  %v1321 = vrot.slane %v1288, %v1320
  %v1323 = vmul.f32 %v1315, %v1321
  %v1324 = vmul.f32 %v1316, %v1321
  %v1326 = vlaneseq
  %v1327 = vshrl.u32 %v1326, 7
  %v1328 = vsub.s32 0, %v1327
  %v1329 = vrot.slane %v1289, %v1328
  %v1331 = vadd.f32 %v1323, %v1329
  %v1332 = vadd.f32 %v1324, %v1329
  %v1333 = vld [vmem:[%s11] sm:$0xff]
  %v1334 = vld [vmem:[%s11 + $0x8] sm:$0xff]
  %v1335 = vld [vmem:[%s11 + $0x10] sm:$0xff]
  %v1336 = vld [vmem:[%s11 + $0x18] sm:$0xff]
  %v1337 = vld [vmem:[%s12] sm:$0x1]
  %v1339 = vlaneseq
  %v1340 = vshrl.u32 %v1339, 7
  %v1341 = vsub.s32 0, %v1340
  %v1342 = vrot.slane %v1337, %v1341
  %v1345 = vsel %vm173, %v1331, 0
  %v1348 = vsel %vm173, %v1332, 0
  %1350 = vmatprep.subr.mxu0 0.0
  %1351 = vmatpush1.msra.mxu0 0.0
  %1352 = vmatprep.subr.mxu0 0.0
  %1353 = vmatpush1.msra.mxu0 0.0
  %1354 = vmatprep.subr.mxu0 0.0
  %1355 = vmatpush1.msra.mxu0 0.0
  %1356 = vmatprep.subr.mxu0 0.0
  %1357 = vmatpush1.msra.mxu0 0.0
  %1358 = vmatprep.subr.mxu0 0.0
  %1359 = vmatpush1.msra.mxu0 0.0
  %1360 = vmatprep.subr.mxu0 0.0
  %1361 = vmatpush1.msra.mxu0 0.0
  %1362 = vmatprep.subr.mxu0 0.0
  %1363 = vmatpush1.msra.mxu0 0.0
  %1364 = vmatprep.subr.mxu0 0.0
  %1365 = vmatpush1.msra.mxu0 0.0
  %1366 = vmatprep.subr.mxu0 0.0
  %1367 = vmatpush1.msra.mxu0 0.0
  %1368 = vmatprep.subr.mxu0 0.0
  %1369 = vmatpush1.msra.mxu0 0.0
  %1370 = vmatprep.subr.mxu0 0.0
  %1371 = vmatpush1.msra.mxu0 0.0
  %1372 = vmatprep.subr.mxu0 0.0
  %1373 = vmatpush1.msra.mxu0 0.0
  %1374 = vmatprep.subr.mxu0 0.0
  %1375 = vmatpush1.msra.mxu0 %v1336
  %1376 = vmatprep.subr.mxu0 0.0
  %1377 = vmatpush1.msra.mxu0 %v1335
  %1378 = vmatprep.subr.mxu0 0.0
  %1379 = vmatpush1.msra.mxu0 %v1334
  %1380 = vmatprep.subr.mxu0 0.0
  %1381 = vmatpush1.msra.mxu0 %v1333
  %1382 = vmatprep.subr.mxu0 0.0
  %1383 = vmatpush2.msra.mxu0 0.0
  %1384 = vmatprep.subr.mxu0 0.0
  %1385 = vmatpush2.msra.mxu0 0.0
  %1386 = vmatprep.subr.mxu0 0.0
  %1387 = vmatpush2.msra.mxu0 0.0
  %1388 = vmatprep.subr.mxu0 0.0
  %1389 = vmatpush2.msra.mxu0 0.0
  %1390 = vmatprep.subr.mxu0 0.0
  %1391 = vmatpush2.msra.mxu0 0.0
  %1392 = vmatprep.subr.mxu0 0.0
  %1393 = vmatpush2.msra.mxu0 0.0
  %1394 = vmatprep.subr.mxu0 0.0
  %1395 = vmatpush2.msra.mxu0 0.0
  %1396 = vmatprep.subr.mxu0 0.0
  %1397 = vmatpush2.msra.mxu0 0.0
  %1398 = vmatprep.subr.mxu0 0.0
  %1399 = vmatpush2.msra.mxu0 0.0
  %1400 = vmatprep.subr.mxu0 0.0
  %1401 = vmatpush2.msra.mxu0 0.0
  %1402 = vmatprep.subr.mxu0 0.0
  %1403 = vmatpush2.msra.mxu0 0.0
  %1404 = vmatprep.subr.mxu0 0.0
  %1405 = vmatpush2.msra.mxu0 0.0
  %1406 = vmatprep.subr.mxu0 0.0
  %1407 = vmatpush2.msra.mxu0 0.0
  %1408 = vmatprep.subr.mxu0 0.0
  %1409 = vmatpush2.msra.mxu0 0.0
  %1410 = vmatprep.subr.mxu0 0.0
  %1411 = vmatpush2.msra.mxu0 0.0
  %1412 = vmatprep.subr.mxu0 0.0
  %1413 = vmatpush2.msra.mxu0 0.0
  %1414 = vmatprep.mubr.f32.mxu0 0.0
  %1415 = vmatmul.mubr.f32.gmra.mxu0 %v1345
  %v1416 = vpop.f32.mrf.mxu0
  %v1417 = vadd.f32 %v1342, %v1416
  %v1418 = vpop.f32.mrf.mxu0
  %1419 = vmatprep.mubr.f32.mxu0 0.0
  %1420 = vmatmul.mubr.f32.gmra.mxu0 %v1348
  %v1421 = vpop.f32.mrf.mxu0
  %v1422 = vadd.f32 %v1342, %v1421
  %v1423 = vpop.f32.mrf.mxu0
  %1424 = vdwg.mxu0
  %v1425 = vmax.f32 %v1417, 0.0
  %v1426 = vmax.f32 %v1422, 0.0
  %v1427 = vld [vmem:[%s13] sm:$0xff]
  %v1428 = vld [vmem:[%s13 + $0x8] sm:$0xff]
  %v1429 = vld [vmem:[%s13 + $0x10] sm:$0xff]
  %v1430 = vld [vmem:[%s13 + $0x18] sm:$0xff]
  %v1431 = vld [vmem:[%s13 + $0x20] sm:$0xff]
  %v1432 = vld [vmem:[%s13 + $0x28] sm:$0xff]
  %v1433 = vld [vmem:[%s13 + $0x30] sm:$0xff]
  %v1434 = vld [vmem:[%s13 + $0x38] sm:$0xff]
  %v1435 = vld [vmem:[%s14] sm:$0x1]
  %v1437 = vlaneseq
  %v1438 = vshrl.u32 %v1437, 7
  %v1439 = vsub.s32 0, %v1438
  %v1440 = vrot.slane %v1435, %v1439
  %vm1442 = vcmask 523264
  %v1444 = vsel %vm1442, %v1425, 0
  %v1447 = vsel %vm1442, %v1426, 0
  %1449 = vmatprep.subr.mxu0 0.0
  %1450 = vmatpush1.msra.mxu0 0.0
  %1451 = vmatprep.subr.mxu0 0.0
  %1452 = vmatpush1.msra.mxu0 0.0
  %1453 = vmatprep.subr.mxu0 0.0
  %1454 = vmatpush1.msra.mxu0 0.0
  %1455 = vmatprep.subr.mxu0 0.0
  %1456 = vmatpush1.msra.mxu0 0.0
  %1457 = vmatprep.subr.mxu0 0.0
  %1458 = vmatpush1.msra.mxu0 0.0
  %1459 = vmatprep.subr.mxu0 0.0
  %1460 = vmatpush1.msra.mxu0 0.0
  %1461 = vmatprep.subr.mxu0 0.0
  %1462 = vmatpush1.msra.mxu0 0.0
  %1463 = vmatprep.subr.mxu0 0.0
  %1464 = vmatpush1.msra.mxu0 0.0
  %1465 = vmatprep.subr.mxu0 0.0
  %1466 = vmatpush1.msra.mxu0 %v1434
  %1467 = vmatprep.subr.mxu0 0.0
  %1468 = vmatpush1.msra.mxu0 %v1433
  %1469 = vmatprep.subr.mxu0 0.0
  %1470 = vmatpush1.msra.mxu0 %v1432
  %1471 = vmatprep.subr.mxu0 0.0
  %1472 = vmatpush1.msra.mxu0 %v1431
  %1473 = vmatprep.subr.mxu0 0.0
  %1474 = vmatpush1.msra.mxu0 %v1430
  %1475 = vmatprep.subr.mxu0 0.0
  %1476 = vmatpush1.msra.mxu0 %v1429
  %1477 = vmatprep.subr.mxu0 0.0
  %1478 = vmatpush1.msra.mxu0 %v1428
  %1479 = vmatprep.subr.mxu0 0.0
  %1480 = vmatpush1.msra.mxu0 %v1427
  %1481 = vmatprep.subr.mxu0 0.0
  %1482 = vmatpush2.msra.mxu0 0.0
  %1483 = vmatprep.subr.mxu0 0.0
  %1484 = vmatpush2.msra.mxu0 0.0
  %1485 = vmatprep.subr.mxu0 0.0
  %1486 = vmatpush2.msra.mxu0 0.0
  %1487 = vmatprep.subr.mxu0 0.0
  %1488 = vmatpush2.msra.mxu0 0.0
  %1489 = vmatprep.subr.mxu0 0.0
  %1490 = vmatpush2.msra.mxu0 0.0
  %1491 = vmatprep.subr.mxu0 0.0
  %1492 = vmatpush2.msra.mxu0 0.0
  %1493 = vmatprep.subr.mxu0 0.0
  %1494 = vmatpush2.msra.mxu0 0.0
  %1495 = vmatprep.subr.mxu0 0.0
  %1496 = vmatpush2.msra.mxu0 0.0
  %1497 = vmatprep.subr.mxu0 0.0
  %1498 = vmatpush2.msra.mxu0 0.0
  %1499 = vmatprep.subr.mxu0 0.0
  %1500 = vmatpush2.msra.mxu0 0.0
  %1501 = vmatprep.subr.mxu0 0.0
  %1502 = vmatpush2.msra.mxu0 0.0
  %1503 = vmatprep.subr.mxu0 0.0
  %1504 = vmatpush2.msra.mxu0 0.0
  %1505 = vmatprep.subr.mxu0 0.0
  %1506 = vmatpush2.msra.mxu0 0.0
  %1507 = vmatprep.subr.mxu0 0.0
  %1508 = vmatpush2.msra.mxu0 0.0
  %1509 = vmatprep.subr.mxu0 0.0
  %1510 = vmatpush2.msra.mxu0 0.0
  %1511 = vmatprep.subr.mxu0 0.0
  %1512 = vmatpush2.msra.mxu0 0.0
  %1513 = vmatprep.mubr.f32.mxu0 0.0
  %1514 = vmatmul.mubr.f32.gmra.mxu0 %v1444
  %v1515 = vpop.f32.mrf.mxu0
  %v1516 = vadd.f32 %v1440, %v1515
  %v1517 = vpop.f32.mrf.mxu0
  %1518 = vmatprep.mubr.f32.mxu0 0.0
  %1519 = vmatmul.mubr.f32.gmra.mxu0 %v1447
  %v1520 = vpop.f32.mrf.mxu0
  %v1521 = vadd.f32 %v1440, %v1520
  %v1522 = vpop.f32.mrf.mxu0
  %1523 = vdwg.mxu0
  %v1524 = vadd.f32 %v1331, %v1516
  %v1525 = vadd.f32 %v1332, %v1521
  %s1526 = scalar_lea.vmem %s15, 1
  %v1527 = vld [vmem:[%s1526] sm:$0x1]
  %s1528 = scalar_lea.vmem %s16, 1
  %v1529 = vld [vmem:[%s1528] sm:$0x1]
  %v1530 = vsel %vm173, %v1524, 0.0
  %1531 = vadd.xlane.f32.xlu0 %v1530
  %v1532 = vpop.xlane.xlu0 %1531
  %v1533 = vsel %vm173, %v1525, 0.0
  %1534 = vadd.xlane.f32.xlu0 %v1533
  %v1535 = vpop.xlane.xlu0 %1534
  %v1536 = vmul.f32 %v1532, %v1296
  %v1537 = vmul.f32 %v1535, %v1296
  %v1538 = vsub.f32 %v1524, %v1536
  %v1539 = vsub.f32 %v1525, %v1537
  %v1540 = vmul.f32 %v1538, %v1538
  %v1541 = vmul.f32 %v1539, %v1539
  %v1542 = vsel %vm173, %v1540, 0.0
  %1543 = vadd.xlane.f32.xlu0 %v1542
  %v1544 = vpop.xlane.xlu0 %1543
  %v1545 = vsel %vm173, %v1541, 0.0
  %1546 = vadd.xlane.f32.xlu0 %v1545
  %v1547 = vpop.xlane.xlu0 %1546
  %v1548 = vmul.f32 %v1544, %v1296
  %v1549 = vmul.f32 %v1547, %v1296
  %v1550 = vadd.f32 %v1548, 1e-05
  %v1551 = vadd.f32 %v1549, 1e-05
  %v1552 = vrsqrt.pop %v1550
  %v1553 = vrsqrt.pop %v1551
  %v1554 = vmul.f32 %v1538, %v1552
  %v1555 = vmul.f32 %v1539, %v1553
  %v1557 = vlaneseq
  %v1558 = vshrl.u32 %v1557, 7
  %v1559 = vsub.s32 0, %v1558
  %v1560 = vrot.slane %v1527, %v1559
  %v1562 = vmul.f32 %v1554, %v1560
  %v1563 = vmul.f32 %v1555, %v1560
  %v1565 = vlaneseq
  %v1566 = vshrl.u32 %v1565, 7
  %v1567 = vsub.s32 0, %v1566
  %v1568 = vrot.slane %v1529, %v1567
  %v1570 = vadd.f32 %v1562, %v1568
  %v1571 = vadd.f32 %v1563, %v1568
  %s1572 = scalar_lea.vmem %s7, 96
  %v1573 = vld [vmem:[%s1572] sm:$0xff]
  %v1574 = vld [vmem:[%s1572 + $0x8] sm:$0xff]
  %v1575 = vld [vmem:[%s1572 + $0x10] sm:$0xff]
  %v1576 = vld [vmem:[%s1572 + $0x18] sm:$0xff]
  %s1577 = scalar_lea.vmem %s8, 3
  %v1578 = vld [vmem:[%s1577] sm:$0x1]
  %v1580 = vlaneseq
  %v1581 = vshrl.u32 %v1580, 7
  %v1582 = vsub.s32 0, %v1581
  %v1583 = vrot.slane %v1578, %v1582
  %v1586 = vsel %vm173, %v1570, 0
  %v1589 = vsel %vm173, %v1571, 0
  %1591 = vmatprep.subr.mxu0 0.0
  %1592 = vmatpush1.msra.mxu0 0.0
  %1593 = vmatprep.subr.mxu0 0.0
  %1594 = vmatpush1.msra.mxu0 0.0
  %1595 = vmatprep.subr.mxu0 0.0
  %1596 = vmatpush1.msra.mxu0 0.0
  %1597 = vmatprep.subr.mxu0 0.0
  %1598 = vmatpush1.msra.mxu0 0.0
  %1599 = vmatprep.subr.mxu0 0.0
  %1600 = vmatpush1.msra.mxu0 0.0
  %1601 = vmatprep.subr.mxu0 0.0
  %1602 = vmatpush1.msra.mxu0 0.0
  %1603 = vmatprep.subr.mxu0 0.0
  %1604 = vmatpush1.msra.mxu0 0.0
  %1605 = vmatprep.subr.mxu0 0.0
  %1606 = vmatpush1.msra.mxu0 0.0
  %1607 = vmatprep.subr.mxu0 0.0
  %1608 = vmatpush1.msra.mxu0 0.0
  %1609 = vmatprep.subr.mxu0 0.0
  %1610 = vmatpush1.msra.mxu0 0.0
  %1611 = vmatprep.subr.mxu0 0.0
  %1612 = vmatpush1.msra.mxu0 0.0
  %1613 = vmatprep.subr.mxu0 0.0
  %1614 = vmatpush1.msra.mxu0 0.0
  %1615 = vmatprep.subr.mxu0 0.0
  %1616 = vmatpush1.msra.mxu0 %v1576
  %1617 = vmatprep.subr.mxu0 0.0
  %1618 = vmatpush1.msra.mxu0 %v1575
  %1619 = vmatprep.subr.mxu0 0.0
  %1620 = vmatpush1.msra.mxu0 %v1574
  %1621 = vmatprep.subr.mxu0 0.0
  %1622 = vmatpush1.msra.mxu0 %v1573
  %1623 = vmatprep.subr.mxu0 0.0
  %1624 = vmatpush2.msra.mxu0 0.0
  %1625 = vmatprep.subr.mxu0 0.0
  %1626 = vmatpush2.msra.mxu0 0.0
  %1627 = vmatprep.subr.mxu0 0.0
  %1628 = vmatpush2.msra.mxu0 0.0
  %1629 = vmatprep.subr.mxu0 0.0
  %1630 = vmatpush2.msra.mxu0 0.0
  %1631 = vmatprep.subr.mxu0 0.0
  %1632 = vmatpush2.msra.mxu0 0.0
  %1633 = vmatprep.subr.mxu0 0.0
  %1634 = vmatpush2.msra.mxu0 0.0
  %1635 = vmatprep.subr.mxu0 0.0
  %1636 = vmatpush2.msra.mxu0 0.0
  %1637 = vmatprep.subr.mxu0 0.0
  %1638 = vmatpush2.msra.mxu0 0.0
  %1639 = vmatprep.subr.mxu0 0.0
  %1640 = vmatpush2.msra.mxu0 0.0
  %1641 = vmatprep.subr.mxu0 0.0
  %1642 = vmatpush2.msra.mxu0 0.0
  %1643 = vmatprep.subr.mxu0 0.0
  %1644 = vmatpush2.msra.mxu0 0.0
  %1645 = vmatprep.subr.mxu0 0.0
  %1646 = vmatpush2.msra.mxu0 0.0
  %1647 = vmatprep.subr.mxu0 0.0
  %1648 = vmatpush2.msra.mxu0 0.0
  %1649 = vmatprep.subr.mxu0 0.0
  %1650 = vmatpush2.msra.mxu0 0.0
  %1651 = vmatprep.subr.mxu0 0.0
  %1652 = vmatpush2.msra.mxu0 0.0
  %1653 = vmatprep.subr.mxu0 0.0
  %1654 = vmatpush2.msra.mxu0 0.0
  %1655 = vmatprep.mubr.f32.mxu0 0.0
  %1656 = vmatmul.mubr.f32.gmra.mxu0 %v1586
  %v1657 = vpop.f32.mrf.mxu0
  %v1658 = vadd.f32 %v1583, %v1657
  %v1659 = vpop.f32.mrf.mxu0
  %1660 = vmatprep.mubr.f32.mxu0 0.0
  %1661 = vmatmul.mubr.f32.gmra.mxu0 %v1589
  %v1662 = vpop.f32.mrf.mxu0
  %v1663 = vadd.f32 %v1583, %v1662
  %v1664 = vpop.f32.mrf.mxu0
  %1665 = vdwg.mxu0
  %s1666 = scalar_lea.vmem %s7, 128
  %v1667 = vld [vmem:[%s1666] sm:$0xff]
  %v1668 = vld [vmem:[%s1666 + $0x8] sm:$0xff]
  %v1669 = vld [vmem:[%s1666 + $0x10] sm:$0xff]
  %v1670 = vld [vmem:[%s1666 + $0x18] sm:$0xff]
  %s1671 = scalar_lea.vmem %s8, 4
  %v1672 = vld [vmem:[%s1671] sm:$0x1]
  %v1674 = vlaneseq
  %v1675 = vshrl.u32 %v1674, 7
  %v1676 = vsub.s32 0, %v1675
  %v1677 = vrot.slane %v1672, %v1676
  %1679 = vmatprep.subr.mxu0 0.0
  %1680 = vmatpush1.msra.mxu0 0.0
  %1681 = vmatprep.subr.mxu0 0.0
  %1682 = vmatpush1.msra.mxu0 0.0
  %1683 = vmatprep.subr.mxu0 0.0
  %1684 = vmatpush1.msra.mxu0 0.0
  %1685 = vmatprep.subr.mxu0 0.0
  %1686 = vmatpush1.msra.mxu0 0.0
  %1687 = vmatprep.subr.mxu0 0.0
  %1688 = vmatpush1.msra.mxu0 0.0
  %1689 = vmatprep.subr.mxu0 0.0
  %1690 = vmatpush1.msra.mxu0 0.0
  %1691 = vmatprep.subr.mxu0 0.0
  %1692 = vmatpush1.msra.mxu0 0.0
  %1693 = vmatprep.subr.mxu0 0.0
  %1694 = vmatpush1.msra.mxu0 0.0
  %1695 = vmatprep.subr.mxu0 0.0
  %1696 = vmatpush1.msra.mxu0 0.0
  %1697 = vmatprep.subr.mxu0 0.0
  %1698 = vmatpush1.msra.mxu0 0.0
  %1699 = vmatprep.subr.mxu0 0.0
  %1700 = vmatpush1.msra.mxu0 0.0
  %1701 = vmatprep.subr.mxu0 0.0
  %1702 = vmatpush1.msra.mxu0 0.0
  %1703 = vmatprep.subr.mxu0 0.0
  %1704 = vmatpush1.msra.mxu0 %v1670
  %1705 = vmatprep.subr.mxu0 0.0
  %1706 = vmatpush1.msra.mxu0 %v1669
  %1707 = vmatprep.subr.mxu0 0.0
  %1708 = vmatpush1.msra.mxu0 %v1668
  %1709 = vmatprep.subr.mxu0 0.0
  %1710 = vmatpush1.msra.mxu0 %v1667
  %1711 = vmatprep.subr.mxu0 0.0
  %1712 = vmatpush2.msra.mxu0 0.0
  %1713 = vmatprep.subr.mxu0 0.0
  %1714 = vmatpush2.msra.mxu0 0.0
  %1715 = vmatprep.subr.mxu0 0.0
  %1716 = vmatpush2.msra.mxu0 0.0
  %1717 = vmatprep.subr.mxu0 0.0
  %1718 = vmatpush2.msra.mxu0 0.0
  %1719 = vmatprep.subr.mxu0 0.0
  %1720 = vmatpush2.msra.mxu0 0.0
  %1721 = vmatprep.subr.mxu0 0.0
  %1722 = vmatpush2.msra.mxu0 0.0
  %1723 = vmatprep.subr.mxu0 0.0
  %1724 = vmatpush2.msra.mxu0 0.0
  %1725 = vmatprep.subr.mxu0 0.0
  %1726 = vmatpush2.msra.mxu0 0.0
  %1727 = vmatprep.subr.mxu0 0.0
  %1728 = vmatpush2.msra.mxu0 0.0
  %1729 = vmatprep.subr.mxu0 0.0
  %1730 = vmatpush2.msra.mxu0 0.0
  %1731 = vmatprep.subr.mxu0 0.0
  %1732 = vmatpush2.msra.mxu0 0.0
  %1733 = vmatprep.subr.mxu0 0.0
  %1734 = vmatpush2.msra.mxu0 0.0
  %1735 = vmatprep.subr.mxu0 0.0
  %1736 = vmatpush2.msra.mxu0 0.0
  %1737 = vmatprep.subr.mxu0 0.0
  %1738 = vmatpush2.msra.mxu0 0.0
  %1739 = vmatprep.subr.mxu0 0.0
  %1740 = vmatpush2.msra.mxu0 0.0
  %1741 = vmatprep.subr.mxu0 0.0
  %1742 = vmatpush2.msra.mxu0 0.0
  %1743 = vmatprep.mubr.f32.mxu0 0.0
  %1744 = vmatmul.mubr.f32.gmra.mxu0 %v1586
  %v1745 = vpop.f32.mrf.mxu0
  %v1746 = vadd.f32 %v1677, %v1745
  %v1747 = vpop.f32.mrf.mxu0
  %1748 = vmatprep.mubr.f32.mxu0 0.0
  %1749 = vmatmul.mubr.f32.gmra.mxu0 %v1589
  %v1750 = vpop.f32.mrf.mxu0
  %v1751 = vadd.f32 %v1677, %v1750
  %v1752 = vpop.f32.mrf.mxu0
  %1753 = vdwg.mxu0
  %s1754 = scalar_lea.vmem %s7, 160
  %v1755 = vld [vmem:[%s1754] sm:$0xff]
  %v1756 = vld [vmem:[%s1754 + $0x8] sm:$0xff]
  %v1757 = vld [vmem:[%s1754 + $0x10] sm:$0xff]
  %v1758 = vld [vmem:[%s1754 + $0x18] sm:$0xff]
  %s1759 = scalar_lea.vmem %s8, 5
  %v1760 = vld [vmem:[%s1759] sm:$0x1]
  %v1762 = vlaneseq
  %v1763 = vshrl.u32 %v1762, 7
  %v1764 = vsub.s32 0, %v1763
  %v1765 = vrot.slane %v1760, %v1764
  %1767 = vmatprep.subr.mxu0 0.0
  %1768 = vmatpush1.msra.mxu0 0.0
  %1769 = vmatprep.subr.mxu0 0.0
  %1770 = vmatpush1.msra.mxu0 0.0
  %1771 = vmatprep.subr.mxu0 0.0
  %1772 = vmatpush1.msra.mxu0 0.0
  %1773 = vmatprep.subr.mxu0 0.0
  %1774 = vmatpush1.msra.mxu0 0.0
  %1775 = vmatprep.subr.mxu0 0.0
  %1776 = vmatpush1.msra.mxu0 0.0
  %1777 = vmatprep.subr.mxu0 0.0
  %1778 = vmatpush1.msra.mxu0 0.0
  %1779 = vmatprep.subr.mxu0 0.0
  %1780 = vmatpush1.msra.mxu0 0.0
  %1781 = vmatprep.subr.mxu0 0.0
  %1782 = vmatpush1.msra.mxu0 0.0
  %1783 = vmatprep.subr.mxu0 0.0
  %1784 = vmatpush1.msra.mxu0 0.0
  %1785 = vmatprep.subr.mxu0 0.0
  %1786 = vmatpush1.msra.mxu0 0.0
  %1787 = vmatprep.subr.mxu0 0.0
  %1788 = vmatpush1.msra.mxu0 0.0
  %1789 = vmatprep.subr.mxu0 0.0
  %1790 = vmatpush1.msra.mxu0 0.0
  %1791 = vmatprep.subr.mxu0 0.0
  %1792 = vmatpush1.msra.mxu0 %v1758
  %1793 = vmatprep.subr.mxu0 0.0
  %1794 = vmatpush1.msra.mxu0 %v1757
  %1795 = vmatprep.subr.mxu0 0.0
  %1796 = vmatpush1.msra.mxu0 %v1756
  %1797 = vmatprep.subr.mxu0 0.0
  %1798 = vmatpush1.msra.mxu0 %v1755
  %1799 = vmatprep.subr.mxu0 0.0
  %1800 = vmatpush2.msra.mxu0 0.0
  %1801 = vmatprep.subr.mxu0 0.0
  %1802 = vmatpush2.msra.mxu0 0.0
  %1803 = vmatprep.subr.mxu0 0.0
  %1804 = vmatpush2.msra.mxu0 0.0
  %1805 = vmatprep.subr.mxu0 0.0
  %1806 = vmatpush2.msra.mxu0 0.0
  %1807 = vmatprep.subr.mxu0 0.0
  %1808 = vmatpush2.msra.mxu0 0.0
  %1809 = vmatprep.subr.mxu0 0.0
  %1810 = vmatpush2.msra.mxu0 0.0
  %1811 = vmatprep.subr.mxu0 0.0
  %1812 = vmatpush2.msra.mxu0 0.0
  %1813 = vmatprep.subr.mxu0 0.0
  %1814 = vmatpush2.msra.mxu0 0.0
  %1815 = vmatprep.subr.mxu0 0.0
  %1816 = vmatpush2.msra.mxu0 0.0
  %1817 = vmatprep.subr.mxu0 0.0
  %1818 = vmatpush2.msra.mxu0 0.0
  %1819 = vmatprep.subr.mxu0 0.0
  %1820 = vmatpush2.msra.mxu0 0.0
  %1821 = vmatprep.subr.mxu0 0.0
  %1822 = vmatpush2.msra.mxu0 0.0
  %1823 = vmatprep.subr.mxu0 0.0
  %1824 = vmatpush2.msra.mxu0 0.0
  %1825 = vmatprep.subr.mxu0 0.0
  %1826 = vmatpush2.msra.mxu0 0.0
  %1827 = vmatprep.subr.mxu0 0.0
  %1828 = vmatpush2.msra.mxu0 0.0
  %1829 = vmatprep.subr.mxu0 0.0
  %1830 = vmatpush2.msra.mxu0 0.0
  %1831 = vmatprep.mubr.f32.mxu0 0.0
  %1832 = vmatmul.mubr.f32.gmra.mxu0 %v1586
  %v1833 = vpop.f32.mrf.mxu0
  %v1834 = vadd.f32 %v1765, %v1833
  %v1835 = vpop.f32.mrf.mxu0
  %1836 = vmatprep.mubr.f32.mxu0 0.0
  %1837 = vmatmul.mubr.f32.gmra.mxu0 %v1589
  %v1838 = vpop.f32.mrf.mxu0
  %v1839 = vadd.f32 %v1765, %v1838
  %v1840 = vpop.f32.mrf.mxu0
  %1841 = vdwg.mxu0
  %v1842 = vmul.f32 %v1658, %v67
  %v1843 = vmul.f32 %v1663, %v67
  %v1845 = vsel %vm173, %v1842, 0
  %v1848 = vsel %vm173, %v1843, 0
  %v1851 = vsel %vm173, %v1746, 0
  %v1854 = vsel %vm173, %v1751, 0
  %1856 = vmatprep.subr.mxu0 0.0
  %1857 = vmatpush1.xpose.msra.mxu0 0.0
  %1858 = vmatprep.subr.mxu0 0.0
  %1859 = vmatpush1.xpose.msra.mxu0 0.0
  %1860 = vmatprep.subr.mxu0 0.0
  %1861 = vmatpush1.xpose.msra.mxu0 0.0
  %1862 = vmatprep.subr.mxu0 0.0
  %1863 = vmatpush1.xpose.msra.mxu0 0.0
  %1864 = vmatprep.subr.mxu0 0.0
  %1865 = vmatpush1.xpose.msra.mxu0 0.0
  %1866 = vmatprep.subr.mxu0 0.0
  %1867 = vmatpush1.xpose.msra.mxu0 0.0
  %1868 = vmatprep.subr.mxu0 0.0
  %1869 = vmatpush1.xpose.msra.mxu0 0.0
  %1870 = vmatprep.subr.mxu0 0.0
  %1871 = vmatpush1.xpose.msra.mxu0 0.0
  %1872 = vmatprep.subr.mxu0 0.0
  %1873 = vmatpush1.xpose.msra.mxu0 0.0
  %1874 = vmatprep.subr.mxu0 0.0
  %1875 = vmatpush1.xpose.msra.mxu0 0.0
  %1876 = vmatprep.subr.mxu0 0.0
  %1877 = vmatpush1.xpose.msra.mxu0 0.0
  %1878 = vmatprep.subr.mxu0 0.0
  %1879 = vmatpush1.xpose.msra.mxu0 0.0
  %1880 = vmatprep.subr.mxu0 0.0
  %1881 = vmatpush1.xpose.msra.mxu0 0.0
  %1882 = vmatprep.subr.mxu0 0.0
  %1883 = vmatpush1.xpose.msra.mxu0 0.0
  %1884 = vmatprep.subr.mxu0 0.0
  %1885 = vmatpush1.xpose.msra.mxu0 %v1854
  %1886 = vmatprep.subr.mxu0 0.0
  %1887 = vmatpush1.xpose.msra.mxu0 %v1851
  %1888 = vmatprep.subr.mxu0 0.0
  %1889 = vmatpush2.xpose.msra.mxu0 0.0
  %1890 = vmatprep.subr.mxu0 0.0
  %1891 = vmatpush2.xpose.msra.mxu0 0.0
  %1892 = vmatprep.subr.mxu0 0.0
  %1893 = vmatpush2.xpose.msra.mxu0 0.0
  %1894 = vmatprep.subr.mxu0 0.0
  %1895 = vmatpush2.xpose.msra.mxu0 0.0
  %1896 = vmatprep.subr.mxu0 0.0
  %1897 = vmatpush2.xpose.msra.mxu0 0.0
  %1898 = vmatprep.subr.mxu0 0.0
  %1899 = vmatpush2.xpose.msra.mxu0 0.0
  %1900 = vmatprep.subr.mxu0 0.0
  %1901 = vmatpush2.xpose.msra.mxu0 0.0
  %1902 = vmatprep.subr.mxu0 0.0
  %1903 = vmatpush2.xpose.msra.mxu0 0.0
  %1904 = vmatprep.subr.mxu0 0.0
  %1905 = vmatpush2.xpose.msra.mxu0 0.0
  %1906 = vmatprep.subr.mxu0 0.0
  %1907 = vmatpush2.xpose.msra.mxu0 0.0
  %1908 = vmatprep.subr.mxu0 0.0
  %1909 = vmatpush2.xpose.msra.mxu0 0.0
  %1910 = vmatprep.subr.mxu0 0.0
  %1911 = vmatpush2.xpose.msra.mxu0 0.0
  %1912 = vmatprep.subr.mxu0 0.0
  %1913 = vmatpush2.xpose.msra.mxu0 0.0
  %1914 = vmatprep.subr.mxu0 0.0
  %1915 = vmatpush2.xpose.msra.mxu0 0.0
  %1916 = vmatprep.subr.mxu0 0.0
  %1917 = vmatpush2.xpose.msra.mxu0 0.0
  %1918 = vmatprep.subr.mxu0 0.0
  %1919 = vmatpush2.xpose.msra.mxu0 0.0
  %1920 = vmatprep.mubr.f32.mxu0 0.0
  %1921 = vmatmul.mubr.f32.gmra.mxu0 %v1845
  %v1922 = vpop.f32.mrf.mxu0
  %v1923 = vadd.f32 %v110, %v1922
  %v1924 = vpop.f32.mrf.mxu0
  %1925 = vmatprep.mubr.f32.mxu0 0.0
  %1926 = vmatmul.mubr.f32.gmra.mxu0 %v1848
  %v1927 = vpop.f32.mrf.mxu0
  %v1928 = vadd.f32 %v111, %v1927
  %v1929 = vpop.f32.mrf.mxu0
  %1930 = vdwg.mxu0
  %v1931 = vsel %vm520, %v1923, -inf
  %1932 = vmax.xlane.f32.xlu0 %v1931
  %v1933 = vpop.xlane.xlu0 %1932
  %v1934 = vsel %vm520, %v1928, -inf
  %1935 = vmax.xlane.f32.xlu0 %v1934
  %v1936 = vpop.xlane.xlu0 %1935
  %v1937 = vsub.f32 %v1923, %v1933
  %v1938 = vsub.f32 %v1928, %v1936
  %v1939 = vmul.f32 %v1937, 1.442695
  %v1940 = vpow.pop %v1939
  %v1941 = vmul.f32 %v1938, 1.442695
  %v1942 = vpow.pop %v1941
  %v1943 = vsel %vm520, %v1940, 0.0
  %1944 = vadd.xlane.f32.xlu0 %v1943
  %v1945 = vpop.xlane.xlu0 %1944
  %v1946 = vsel %vm520, %v1942, 0.0
  %1947 = vadd.xlane.f32.xlu0 %v1946
  %v1948 = vpop.xlane.xlu0 %1947
  %v1949 = vrcp.pop %v1945
  %v1950 = vmul.f32 %v1940, %v1949
  %v1951 = vrcp.pop %v1948
  %v1952 = vmul.f32 %v1942, %v1951
  %v1953 = vmul.f32 %v1834, %v67
  %v1954 = vmul.f32 %v1839, %v67
  %v1955 = vmul.f32 %v1658, %v71
  %v1956 = vmul.f32 %v1663, %v71
  %v1958 = vsel %vm173, %v1955, 0
  %v1961 = vsel %vm173, %v1956, 0
  %1963 = vmatprep.subr.mxu0 0.0
  %1964 = vmatpush1.xpose.msra.mxu0 0.0
  %1965 = vmatprep.subr.mxu0 0.0
  %1966 = vmatpush1.xpose.msra.mxu0 0.0
  %1967 = vmatprep.subr.mxu0 0.0
  %1968 = vmatpush1.xpose.msra.mxu0 0.0
  %1969 = vmatprep.subr.mxu0 0.0
  %1970 = vmatpush1.xpose.msra.mxu0 0.0
  %1971 = vmatprep.subr.mxu0 0.0
  %1972 = vmatpush1.xpose.msra.mxu0 0.0
  %1973 = vmatprep.subr.mxu0 0.0
  %1974 = vmatpush1.xpose.msra.mxu0 0.0
  %1975 = vmatprep.subr.mxu0 0.0
  %1976 = vmatpush1.xpose.msra.mxu0 0.0
  %1977 = vmatprep.subr.mxu0 0.0
  %1978 = vmatpush1.xpose.msra.mxu0 0.0
  %1979 = vmatprep.subr.mxu0 0.0
  %1980 = vmatpush1.xpose.msra.mxu0 0.0
  %1981 = vmatprep.subr.mxu0 0.0
  %1982 = vmatpush1.xpose.msra.mxu0 0.0
  %1983 = vmatprep.subr.mxu0 0.0
  %1984 = vmatpush1.xpose.msra.mxu0 0.0
  %1985 = vmatprep.subr.mxu0 0.0
  %1986 = vmatpush1.xpose.msra.mxu0 0.0
  %1987 = vmatprep.subr.mxu0 0.0
  %1988 = vmatpush1.xpose.msra.mxu0 0.0
  %1989 = vmatprep.subr.mxu0 0.0
  %1990 = vmatpush1.xpose.msra.mxu0 0.0
  %1991 = vmatprep.subr.mxu0 0.0
  %1992 = vmatpush1.xpose.msra.mxu0 %v1854
  %1993 = vmatprep.subr.mxu0 0.0
  %1994 = vmatpush1.xpose.msra.mxu0 %v1851
  %1995 = vmatprep.subr.mxu0 0.0
  %1996 = vmatpush2.xpose.msra.mxu0 0.0
  %1997 = vmatprep.subr.mxu0 0.0
  %1998 = vmatpush2.xpose.msra.mxu0 0.0
  %1999 = vmatprep.subr.mxu0 0.0
  %2000 = vmatpush2.xpose.msra.mxu0 0.0
  %2001 = vmatprep.subr.mxu0 0.0
  %2002 = vmatpush2.xpose.msra.mxu0 0.0
  %2003 = vmatprep.subr.mxu0 0.0
  %2004 = vmatpush2.xpose.msra.mxu0 0.0
  %2005 = vmatprep.subr.mxu0 0.0
  %2006 = vmatpush2.xpose.msra.mxu0 0.0
  %2007 = vmatprep.subr.mxu0 0.0
  %2008 = vmatpush2.xpose.msra.mxu0 0.0
  %2009 = vmatprep.subr.mxu0 0.0
  %2010 = vmatpush2.xpose.msra.mxu0 0.0
  %2011 = vmatprep.subr.mxu0 0.0
  %2012 = vmatpush2.xpose.msra.mxu0 0.0
  %2013 = vmatprep.subr.mxu0 0.0
  %2014 = vmatpush2.xpose.msra.mxu0 0.0
  %2015 = vmatprep.subr.mxu0 0.0
  %2016 = vmatpush2.xpose.msra.mxu0 0.0
  %2017 = vmatprep.subr.mxu0 0.0
  %2018 = vmatpush2.xpose.msra.mxu0 0.0
  %2019 = vmatprep.subr.mxu0 0.0
  %2020 = vmatpush2.xpose.msra.mxu0 0.0
  %2021 = vmatprep.subr.mxu0 0.0
  %2022 = vmatpush2.xpose.msra.mxu0 0.0
  %2023 = vmatprep.subr.mxu0 0.0
  %2024 = vmatpush2.xpose.msra.mxu0 0.0
  %2025 = vmatprep.subr.mxu0 0.0
  %2026 = vmatpush2.xpose.msra.mxu0 0.0
  %2027 = vmatprep.mubr.f32.mxu0 0.0
  %2028 = vmatmul.mubr.f32.gmra.mxu0 %v1958
  %v2029 = vpop.f32.mrf.mxu0
  %v2030 = vadd.f32 %v110, %v2029
  %v2031 = vpop.f32.mrf.mxu0
  %2032 = vmatprep.mubr.f32.mxu0 0.0
  %2033 = vmatmul.mubr.f32.gmra.mxu0 %v1961
  %v2034 = vpop.f32.mrf.mxu0
  %v2035 = vadd.f32 %v111, %v2034
  %v2036 = vpop.f32.mrf.mxu0
  %2037 = vdwg.mxu0
  %v2038 = vsel %vm520, %v2030, -inf
  %2039 = vmax.xlane.f32.xlu0 %v2038
  %v2040 = vpop.xlane.xlu0 %2039
  %v2041 = vsel %vm520, %v2035, -inf
  %2042 = vmax.xlane.f32.xlu0 %v2041
  %v2043 = vpop.xlane.xlu0 %2042
  %v2044 = vsub.f32 %v2030, %v2040
  %v2045 = vsub.f32 %v2035, %v2043
  %v2046 = vmul.f32 %v2044, 1.442695
  %v2047 = vpow.pop %v2046
  %v2048 = vmul.f32 %v2045, 1.442695
  %v2049 = vpow.pop %v2048
  %v2050 = vsel %vm520, %v2047, 0.0
  %2051 = vadd.xlane.f32.xlu0 %v2050
  %v2052 = vpop.xlane.xlu0 %2051
  %v2053 = vsel %vm520, %v2049, 0.0
  %2054 = vadd.xlane.f32.xlu0 %v2053
  %v2055 = vpop.xlane.xlu0 %2054
  %v2056 = vrcp.pop %v2052
  %v2057 = vmul.f32 %v2047, %v2056
  %v2058 = vrcp.pop %v2055
  %v2059 = vmul.f32 %v2049, %v2058
  %v2060 = vmul.f32 %v1834, %v71
  %v2061 = vmul.f32 %v1839, %v71
  %v2063 = vsel %vm520, %v2057, 0
  %v2066 = vsel %vm520, %v2059, 0
  %2068 = vmatprep.subr.mxu0 0.0
  %2069 = vmatpush1.msra.mxu0 0.0
  %2070 = vmatprep.subr.mxu0 0.0
  %2071 = vmatpush1.msra.mxu0 0.0
  %2072 = vmatprep.subr.mxu0 0.0
  %2073 = vmatpush1.msra.mxu0 0.0
  %2074 = vmatprep.subr.mxu0 0.0
  %2075 = vmatpush1.msra.mxu0 0.0
  %2076 = vmatprep.subr.mxu0 0.0
  %2077 = vmatpush1.msra.mxu0 0.0
  %2078 = vmatprep.subr.mxu0 0.0
  %2079 = vmatpush1.msra.mxu0 0.0
  %2080 = vmatprep.subr.mxu0 0.0
  %2081 = vmatpush1.msra.mxu0 0.0
  %2082 = vmatprep.subr.mxu0 0.0
  %2083 = vmatpush1.msra.mxu0 0.0
  %2084 = vmatprep.subr.mxu0 0.0
  %2085 = vmatpush1.msra.mxu0 0.0
  %2086 = vmatprep.subr.mxu0 0.0
  %2087 = vmatpush1.msra.mxu0 0.0
  %2088 = vmatprep.subr.mxu0 0.0
  %2089 = vmatpush1.msra.mxu0 0.0
  %2090 = vmatprep.subr.mxu0 0.0
  %2091 = vmatpush1.msra.mxu0 0.0
  %2092 = vmatprep.subr.mxu0 0.0
  %2093 = vmatpush1.msra.mxu0 0.0
  %2094 = vmatprep.subr.mxu0 0.0
  %2095 = vmatpush1.msra.mxu0 0.0
  %2096 = vmatprep.subr.mxu0 0.0
  %2097 = vmatpush1.msra.mxu0 %v2061
  %2098 = vmatprep.subr.mxu0 0.0
  %2099 = vmatpush1.msra.mxu0 %v2060
  %2100 = vmatprep.subr.mxu0 0.0
  %2101 = vmatpush2.msra.mxu0 0.0
  %2102 = vmatprep.subr.mxu0 0.0
  %2103 = vmatpush2.msra.mxu0 0.0
  %2104 = vmatprep.subr.mxu0 0.0
  %2105 = vmatpush2.msra.mxu0 0.0
  %2106 = vmatprep.subr.mxu0 0.0
  %2107 = vmatpush2.msra.mxu0 0.0
  %2108 = vmatprep.subr.mxu0 0.0
  %2109 = vmatpush2.msra.mxu0 0.0
  %2110 = vmatprep.subr.mxu0 0.0
  %2111 = vmatpush2.msra.mxu0 0.0
  %2112 = vmatprep.subr.mxu0 0.0
  %2113 = vmatpush2.msra.mxu0 0.0
  %2114 = vmatprep.subr.mxu0 0.0
  %2115 = vmatpush2.msra.mxu0 0.0
  %2116 = vmatprep.subr.mxu0 0.0
  %2117 = vmatpush2.msra.mxu0 0.0
  %2118 = vmatprep.subr.mxu0 0.0
  %2119 = vmatpush2.msra.mxu0 0.0
  %2120 = vmatprep.subr.mxu0 0.0
  %2121 = vmatpush2.msra.mxu0 0.0
  %2122 = vmatprep.subr.mxu0 0.0
  %2123 = vmatpush2.msra.mxu0 0.0
  %2124 = vmatprep.subr.mxu0 0.0
  %2125 = vmatpush2.msra.mxu0 0.0
  %2126 = vmatprep.subr.mxu0 0.0
  %2127 = vmatpush2.msra.mxu0 0.0
  %2128 = vmatprep.subr.mxu0 0.0
  %2129 = vmatpush2.msra.mxu0 0.0
  %2130 = vmatprep.subr.mxu0 0.0
  %2131 = vmatpush2.msra.mxu0 0.0
  %2132 = vmatprep.mubr.f32.mxu0 0.0
  %2133 = vmatmul.mubr.f32.gmra.mxu0 %v2063
  %v2134 = vpop.f32.mrf.mxu0
  %v2135 = vadd.f32 0.0, %v2134
  %v2136 = vpop.f32.mrf.mxu0
  %2137 = vmatprep.mubr.f32.mxu0 0.0
  %2138 = vmatmul.mubr.f32.gmra.mxu0 %v2066
  %v2139 = vpop.f32.mrf.mxu0
  %v2140 = vadd.f32 0.0, %v2139
  %v2141 = vpop.f32.mrf.mxu0
  %2142 = vdwg.mxu0
  %v2144 = vsel %vm520, %v1950, 0
  %v2147 = vsel %vm520, %v1952, 0
  %2149 = vmatprep.subr.mxu0 0.0
  %2150 = vmatpush1.msra.mxu0 0.0
  %2151 = vmatprep.subr.mxu0 0.0
  %2152 = vmatpush1.msra.mxu0 0.0
  %2153 = vmatprep.subr.mxu0 0.0
  %2154 = vmatpush1.msra.mxu0 0.0
  %2155 = vmatprep.subr.mxu0 0.0
  %2156 = vmatpush1.msra.mxu0 0.0
  %2157 = vmatprep.subr.mxu0 0.0
  %2158 = vmatpush1.msra.mxu0 0.0
  %2159 = vmatprep.subr.mxu0 0.0
  %2160 = vmatpush1.msra.mxu0 0.0
  %2161 = vmatprep.subr.mxu0 0.0
  %2162 = vmatpush1.msra.mxu0 0.0
  %2163 = vmatprep.subr.mxu0 0.0
  %2164 = vmatpush1.msra.mxu0 0.0
  %2165 = vmatprep.subr.mxu0 0.0
  %2166 = vmatpush1.msra.mxu0 0.0
  %2167 = vmatprep.subr.mxu0 0.0
  %2168 = vmatpush1.msra.mxu0 0.0
  %2169 = vmatprep.subr.mxu0 0.0
  %2170 = vmatpush1.msra.mxu0 0.0
  %2171 = vmatprep.subr.mxu0 0.0
  %2172 = vmatpush1.msra.mxu0 0.0
  %2173 = vmatprep.subr.mxu0 0.0
  %2174 = vmatpush1.msra.mxu0 0.0
  %2175 = vmatprep.subr.mxu0 0.0
  %2176 = vmatpush1.msra.mxu0 0.0
  %2177 = vmatprep.subr.mxu0 0.0
  %2178 = vmatpush1.msra.mxu0 %v1954
  %2179 = vmatprep.subr.mxu0 0.0
  %2180 = vmatpush1.msra.mxu0 %v1953
  %2181 = vmatprep.subr.mxu0 0.0
  %2182 = vmatpush2.msra.mxu0 0.0
  %2183 = vmatprep.subr.mxu0 0.0
  %2184 = vmatpush2.msra.mxu0 0.0
  %2185 = vmatprep.subr.mxu0 0.0
  %2186 = vmatpush2.msra.mxu0 0.0
  %2187 = vmatprep.subr.mxu0 0.0
  %2188 = vmatpush2.msra.mxu0 0.0
  %2189 = vmatprep.subr.mxu0 0.0
  %2190 = vmatpush2.msra.mxu0 0.0
  %2191 = vmatprep.subr.mxu0 0.0
  %2192 = vmatpush2.msra.mxu0 0.0
  %2193 = vmatprep.subr.mxu0 0.0
  %2194 = vmatpush2.msra.mxu0 0.0
  %2195 = vmatprep.subr.mxu0 0.0
  %2196 = vmatpush2.msra.mxu0 0.0
  %2197 = vmatprep.subr.mxu0 0.0
  %2198 = vmatpush2.msra.mxu0 0.0
  %2199 = vmatprep.subr.mxu0 0.0
  %2200 = vmatpush2.msra.mxu0 0.0
  %2201 = vmatprep.subr.mxu0 0.0
  %2202 = vmatpush2.msra.mxu0 0.0
  %2203 = vmatprep.subr.mxu0 0.0
  %2204 = vmatpush2.msra.mxu0 0.0
  %2205 = vmatprep.subr.mxu0 0.0
  %2206 = vmatpush2.msra.mxu0 0.0
  %2207 = vmatprep.subr.mxu0 0.0
  %2208 = vmatpush2.msra.mxu0 0.0
  %2209 = vmatprep.subr.mxu0 0.0
  %2210 = vmatpush2.msra.mxu0 0.0
  %2211 = vmatprep.subr.mxu0 0.0
  %2212 = vmatpush2.msra.mxu0 0.0
  %2213 = vmatprep.mubr.f32.mxu0 0.0
  %2214 = vmatmul.mubr.f32.gmra.mxu0 %v2144
  %v2215 = vpop.f32.mrf.mxu0
  %v2216 = vadd.f32 %v2135, %v2215
  %v2217 = vpop.f32.mrf.mxu0
  %2218 = vmatprep.mubr.f32.mxu0 0.0
  %2219 = vmatmul.mubr.f32.gmra.mxu0 %v2147
  %v2220 = vpop.f32.mrf.mxu0
  %v2221 = vadd.f32 %v2140, %v2220
  %v2222 = vpop.f32.mrf.mxu0
  %2223 = vdwg.mxu0
  %v2224 = vmul.f32 %v1658, %v75
  %v2225 = vmul.f32 %v1663, %v75
  %v2227 = vsel %vm173, %v2224, 0
  %v2230 = vsel %vm173, %v2225, 0
  %2232 = vmatprep.subr.mxu0 0.0
  %2233 = vmatpush1.xpose.msra.mxu0 0.0
  %2234 = vmatprep.subr.mxu0 0.0
  %2235 = vmatpush1.xpose.msra.mxu0 0.0
  %2236 = vmatprep.subr.mxu0 0.0
  %2237 = vmatpush1.xpose.msra.mxu0 0.0
  %2238 = vmatprep.subr.mxu0 0.0
  %2239 = vmatpush1.xpose.msra.mxu0 0.0
  %2240 = vmatprep.subr.mxu0 0.0
  %2241 = vmatpush1.xpose.msra.mxu0 0.0
  %2242 = vmatprep.subr.mxu0 0.0
  %2243 = vmatpush1.xpose.msra.mxu0 0.0
  %2244 = vmatprep.subr.mxu0 0.0
  %2245 = vmatpush1.xpose.msra.mxu0 0.0
  %2246 = vmatprep.subr.mxu0 0.0
  %2247 = vmatpush1.xpose.msra.mxu0 0.0
  %2248 = vmatprep.subr.mxu0 0.0
  %2249 = vmatpush1.xpose.msra.mxu0 0.0
  %2250 = vmatprep.subr.mxu0 0.0
  %2251 = vmatpush1.xpose.msra.mxu0 0.0
  %2252 = vmatprep.subr.mxu0 0.0
  %2253 = vmatpush1.xpose.msra.mxu0 0.0
  %2254 = vmatprep.subr.mxu0 0.0
  %2255 = vmatpush1.xpose.msra.mxu0 0.0
  %2256 = vmatprep.subr.mxu0 0.0
  %2257 = vmatpush1.xpose.msra.mxu0 0.0
  %2258 = vmatprep.subr.mxu0 0.0
  %2259 = vmatpush1.xpose.msra.mxu0 0.0
  %2260 = vmatprep.subr.mxu0 0.0
  %2261 = vmatpush1.xpose.msra.mxu0 %v1854
  %2262 = vmatprep.subr.mxu0 0.0
  %2263 = vmatpush1.xpose.msra.mxu0 %v1851
  %2264 = vmatprep.subr.mxu0 0.0
  %2265 = vmatpush2.xpose.msra.mxu0 0.0
  %2266 = vmatprep.subr.mxu0 0.0
  %2267 = vmatpush2.xpose.msra.mxu0 0.0
  %2268 = vmatprep.subr.mxu0 0.0
  %2269 = vmatpush2.xpose.msra.mxu0 0.0
  %2270 = vmatprep.subr.mxu0 0.0
  %2271 = vmatpush2.xpose.msra.mxu0 0.0
  %2272 = vmatprep.subr.mxu0 0.0
  %2273 = vmatpush2.xpose.msra.mxu0 0.0
  %2274 = vmatprep.subr.mxu0 0.0
  %2275 = vmatpush2.xpose.msra.mxu0 0.0
  %2276 = vmatprep.subr.mxu0 0.0
  %2277 = vmatpush2.xpose.msra.mxu0 0.0
  %2278 = vmatprep.subr.mxu0 0.0
  %2279 = vmatpush2.xpose.msra.mxu0 0.0
  %2280 = vmatprep.subr.mxu0 0.0
  %2281 = vmatpush2.xpose.msra.mxu0 0.0
  %2282 = vmatprep.subr.mxu0 0.0
  %2283 = vmatpush2.xpose.msra.mxu0 0.0
  %2284 = vmatprep.subr.mxu0 0.0
  %2285 = vmatpush2.xpose.msra.mxu0 0.0
  %2286 = vmatprep.subr.mxu0 0.0
  %2287 = vmatpush2.xpose.msra.mxu0 0.0
  %2288 = vmatprep.subr.mxu0 0.0
  %2289 = vmatpush2.xpose.msra.mxu0 0.0
  %2290 = vmatprep.subr.mxu0 0.0
  %2291 = vmatpush2.xpose.msra.mxu0 0.0
  %2292 = vmatprep.subr.mxu0 0.0
  %2293 = vmatpush2.xpose.msra.mxu0 0.0
  %2294 = vmatprep.subr.mxu0 0.0
  %2295 = vmatpush2.xpose.msra.mxu0 0.0
  %2296 = vmatprep.mubr.f32.mxu0 0.0
  %2297 = vmatmul.mubr.f32.gmra.mxu0 %v2227
  %v2298 = vpop.f32.mrf.mxu0
  %v2299 = vadd.f32 %v110, %v2298
  %v2300 = vpop.f32.mrf.mxu0
  %2301 = vmatprep.mubr.f32.mxu0 0.0
  %2302 = vmatmul.mubr.f32.gmra.mxu0 %v2230
  %v2303 = vpop.f32.mrf.mxu0
  %v2304 = vadd.f32 %v111, %v2303
  %v2305 = vpop.f32.mrf.mxu0
  %2306 = vdwg.mxu0
  %v2307 = vsel %vm520, %v2299, -inf
  %2308 = vmax.xlane.f32.xlu0 %v2307
  %v2309 = vpop.xlane.xlu0 %2308
  %v2310 = vsel %vm520, %v2304, -inf
  %2311 = vmax.xlane.f32.xlu0 %v2310
  %v2312 = vpop.xlane.xlu0 %2311
  %v2313 = vsub.f32 %v2299, %v2309
  %v2314 = vsub.f32 %v2304, %v2312
  %v2315 = vmul.f32 %v2313, 1.442695
  %v2316 = vpow.pop %v2315
  %v2317 = vmul.f32 %v2314, 1.442695
  %v2318 = vpow.pop %v2317
  %v2319 = vsel %vm520, %v2316, 0.0
  %2320 = vadd.xlane.f32.xlu0 %v2319
  %v2321 = vpop.xlane.xlu0 %2320
  %v2322 = vsel %vm520, %v2318, 0.0
  %2323 = vadd.xlane.f32.xlu0 %v2322
  %v2324 = vpop.xlane.xlu0 %2323
  %v2325 = vrcp.pop %v2321
  %v2326 = vmul.f32 %v2316, %v2325
  %v2327 = vrcp.pop %v2324
  %v2328 = vmul.f32 %v2318, %v2327
  %v2329 = vmul.f32 %v1834, %v75
  %v2330 = vmul.f32 %v1839, %v75
  %v2332 = vsel %vm520, %v2326, 0
  %v2335 = vsel %vm520, %v2328, 0
  %2337 = vmatprep.subr.mxu0 0.0
  %2338 = vmatpush1.msra.mxu0 0.0
  %2339 = vmatprep.subr.mxu0 0.0
  %2340 = vmatpush1.msra.mxu0 0.0
  %2341 = vmatprep.subr.mxu0 0.0
  %2342 = vmatpush1.msra.mxu0 0.0
  %2343 = vmatprep.subr.mxu0 0.0
  %2344 = vmatpush1.msra.mxu0 0.0
  %2345 = vmatprep.subr.mxu0 0.0
  %2346 = vmatpush1.msra.mxu0 0.0
  %2347 = vmatprep.subr.mxu0 0.0
  %2348 = vmatpush1.msra.mxu0 0.0
  %2349 = vmatprep.subr.mxu0 0.0
  %2350 = vmatpush1.msra.mxu0 0.0
  %2351 = vmatprep.subr.mxu0 0.0
  %2352 = vmatpush1.msra.mxu0 0.0
  %2353 = vmatprep.subr.mxu0 0.0
  %2354 = vmatpush1.msra.mxu0 0.0
  %2355 = vmatprep.subr.mxu0 0.0
  %2356 = vmatpush1.msra.mxu0 0.0
  %2357 = vmatprep.subr.mxu0 0.0
  %2358 = vmatpush1.msra.mxu0 0.0
  %2359 = vmatprep.subr.mxu0 0.0
  %2360 = vmatpush1.msra.mxu0 0.0
  %2361 = vmatprep.subr.mxu0 0.0
  %2362 = vmatpush1.msra.mxu0 0.0
  %2363 = vmatprep.subr.mxu0 0.0
  %2364 = vmatpush1.msra.mxu0 0.0
  %2365 = vmatprep.subr.mxu0 0.0
  %2366 = vmatpush1.msra.mxu0 %v2330
  %2367 = vmatprep.subr.mxu0 0.0
  %2368 = vmatpush1.msra.mxu0 %v2329
  %2369 = vmatprep.subr.mxu0 0.0
  %2370 = vmatpush2.msra.mxu0 0.0
  %2371 = vmatprep.subr.mxu0 0.0
  %2372 = vmatpush2.msra.mxu0 0.0
  %2373 = vmatprep.subr.mxu0 0.0
  %2374 = vmatpush2.msra.mxu0 0.0
  %2375 = vmatprep.subr.mxu0 0.0
  %2376 = vmatpush2.msra.mxu0 0.0
  %2377 = vmatprep.subr.mxu0 0.0
  %2378 = vmatpush2.msra.mxu0 0.0
  %2379 = vmatprep.subr.mxu0 0.0
  %2380 = vmatpush2.msra.mxu0 0.0
  %2381 = vmatprep.subr.mxu0 0.0
  %2382 = vmatpush2.msra.mxu0 0.0
  %2383 = vmatprep.subr.mxu0 0.0
  %2384 = vmatpush2.msra.mxu0 0.0
  %2385 = vmatprep.subr.mxu0 0.0
  %2386 = vmatpush2.msra.mxu0 0.0
  %2387 = vmatprep.subr.mxu0 0.0
  %2388 = vmatpush2.msra.mxu0 0.0
  %2389 = vmatprep.subr.mxu0 0.0
  %2390 = vmatpush2.msra.mxu0 0.0
  %2391 = vmatprep.subr.mxu0 0.0
  %2392 = vmatpush2.msra.mxu0 0.0
  %2393 = vmatprep.subr.mxu0 0.0
  %2394 = vmatpush2.msra.mxu0 0.0
  %2395 = vmatprep.subr.mxu0 0.0
  %2396 = vmatpush2.msra.mxu0 0.0
  %2397 = vmatprep.subr.mxu0 0.0
  %2398 = vmatpush2.msra.mxu0 0.0
  %2399 = vmatprep.subr.mxu0 0.0
  %2400 = vmatpush2.msra.mxu0 0.0
  %2401 = vmatprep.mubr.f32.mxu0 0.0
  %2402 = vmatmul.mubr.f32.gmra.mxu0 %v2332
  %v2403 = vpop.f32.mrf.mxu0
  %v2404 = vadd.f32 0.0, %v2403
  %v2405 = vpop.f32.mrf.mxu0
  %2406 = vmatprep.mubr.f32.mxu0 0.0
  %2407 = vmatmul.mubr.f32.gmra.mxu0 %v2335
  %v2408 = vpop.f32.mrf.mxu0
  %v2409 = vadd.f32 0.0, %v2408
  %v2410 = vpop.f32.mrf.mxu0
  %2411 = vdwg.mxu0
  %v2412 = vadd.f32 %v2216, %v2404
  %v2413 = vadd.f32 %v2221, %v2409
  %v2414 = vmul.f32 %v1658, %v79
  %v2415 = vmul.f32 %v1663, %v79
  %v2417 = vsel %vm173, %v2414, 0
  %v2420 = vsel %vm173, %v2415, 0
  %2422 = vmatprep.subr.mxu0 0.0
  %2423 = vmatpush1.xpose.msra.mxu0 0.0
  %2424 = vmatprep.subr.mxu0 0.0
  %2425 = vmatpush1.xpose.msra.mxu0 0.0
  %2426 = vmatprep.subr.mxu0 0.0
  %2427 = vmatpush1.xpose.msra.mxu0 0.0
  %2428 = vmatprep.subr.mxu0 0.0
  %2429 = vmatpush1.xpose.msra.mxu0 0.0
  %2430 = vmatprep.subr.mxu0 0.0
  %2431 = vmatpush1.xpose.msra.mxu0 0.0
  %2432 = vmatprep.subr.mxu0 0.0
  %2433 = vmatpush1.xpose.msra.mxu0 0.0
  %2434 = vmatprep.subr.mxu0 0.0
  %2435 = vmatpush1.xpose.msra.mxu0 0.0
  %2436 = vmatprep.subr.mxu0 0.0
  %2437 = vmatpush1.xpose.msra.mxu0 0.0
  %2438 = vmatprep.subr.mxu0 0.0
  %2439 = vmatpush1.xpose.msra.mxu0 0.0
  %2440 = vmatprep.subr.mxu0 0.0
  %2441 = vmatpush1.xpose.msra.mxu0 0.0
  %2442 = vmatprep.subr.mxu0 0.0
  %2443 = vmatpush1.xpose.msra.mxu0 0.0
  %2444 = vmatprep.subr.mxu0 0.0
  %2445 = vmatpush1.xpose.msra.mxu0 0.0
  %2446 = vmatprep.subr.mxu0 0.0
  %2447 = vmatpush1.xpose.msra.mxu0 0.0
  %2448 = vmatprep.subr.mxu0 0.0
  %2449 = vmatpush1.xpose.msra.mxu0 0.0
  %2450 = vmatprep.subr.mxu0 0.0
  %2451 = vmatpush1.xpose.msra.mxu0 %v1854
  %2452 = vmatprep.subr.mxu0 0.0
  %2453 = vmatpush1.xpose.msra.mxu0 %v1851
  %2454 = vmatprep.subr.mxu0 0.0
  %2455 = vmatpush2.xpose.msra.mxu0 0.0
  %2456 = vmatprep.subr.mxu0 0.0
  %2457 = vmatpush2.xpose.msra.mxu0 0.0
  %2458 = vmatprep.subr.mxu0 0.0
  %2459 = vmatpush2.xpose.msra.mxu0 0.0
  %2460 = vmatprep.subr.mxu0 0.0
  %2461 = vmatpush2.xpose.msra.mxu0 0.0
  %2462 = vmatprep.subr.mxu0 0.0
  %2463 = vmatpush2.xpose.msra.mxu0 0.0
  %2464 = vmatprep.subr.mxu0 0.0
  %2465 = vmatpush2.xpose.msra.mxu0 0.0
  %2466 = vmatprep.subr.mxu0 0.0
  %2467 = vmatpush2.xpose.msra.mxu0 0.0
  %2468 = vmatprep.subr.mxu0 0.0
  %2469 = vmatpush2.xpose.msra.mxu0 0.0
  %2470 = vmatprep.subr.mxu0 0.0
  %2471 = vmatpush2.xpose.msra.mxu0 0.0
  %2472 = vmatprep.subr.mxu0 0.0
  %2473 = vmatpush2.xpose.msra.mxu0 0.0
  %2474 = vmatprep.subr.mxu0 0.0
  %2475 = vmatpush2.xpose.msra.mxu0 0.0
  %2476 = vmatprep.subr.mxu0 0.0
  %2477 = vmatpush2.xpose.msra.mxu0 0.0
  %2478 = vmatprep.subr.mxu0 0.0
  %2479 = vmatpush2.xpose.msra.mxu0 0.0
  %2480 = vmatprep.subr.mxu0 0.0
  %2481 = vmatpush2.xpose.msra.mxu0 0.0
  %2482 = vmatprep.subr.mxu0 0.0
  %2483 = vmatpush2.xpose.msra.mxu0 0.0
  %2484 = vmatprep.subr.mxu0 0.0
  %2485 = vmatpush2.xpose.msra.mxu0 0.0
  %2486 = vmatprep.mubr.f32.mxu0 0.0
  %2487 = vmatmul.mubr.f32.gmra.mxu0 %v2417
  %v2488 = vpop.f32.mrf.mxu0
  %v2489 = vadd.f32 %v110, %v2488
  %v2490 = vpop.f32.mrf.mxu0
  %2491 = vmatprep.mubr.f32.mxu0 0.0
  %2492 = vmatmul.mubr.f32.gmra.mxu0 %v2420
  %v2493 = vpop.f32.mrf.mxu0
  %v2494 = vadd.f32 %v111, %v2493
  %v2495 = vpop.f32.mrf.mxu0
  %2496 = vdwg.mxu0
  %v2497 = vsel %vm520, %v2489, -inf
  %2498 = vmax.xlane.f32.xlu0 %v2497
  %v2499 = vpop.xlane.xlu0 %2498
  %v2500 = vsel %vm520, %v2494, -inf
  %2501 = vmax.xlane.f32.xlu0 %v2500
  %v2502 = vpop.xlane.xlu0 %2501
  %v2503 = vsub.f32 %v2489, %v2499
  %v2504 = vsub.f32 %v2494, %v2502
  %v2505 = vmul.f32 %v2503, 1.442695
  %v2506 = vpow.pop %v2505
  %v2507 = vmul.f32 %v2504, 1.442695
  %v2508 = vpow.pop %v2507
  %v2509 = vsel %vm520, %v2506, 0.0
  %2510 = vadd.xlane.f32.xlu0 %v2509
  %v2511 = vpop.xlane.xlu0 %2510
  %v2512 = vsel %vm520, %v2508, 0.0
  %2513 = vadd.xlane.f32.xlu0 %v2512
  %v2514 = vpop.xlane.xlu0 %2513
  %v2515 = vrcp.pop %v2511
  %v2516 = vmul.f32 %v2506, %v2515
  %v2517 = vrcp.pop %v2514
  %v2518 = vmul.f32 %v2508, %v2517
  %v2519 = vmul.f32 %v1834, %v79
  %v2520 = vmul.f32 %v1839, %v79
  %v2522 = vsel %vm520, %v2516, 0
  %v2525 = vsel %vm520, %v2518, 0
  %2527 = vmatprep.subr.mxu0 0.0
  %2528 = vmatpush1.msra.mxu0 0.0
  %2529 = vmatprep.subr.mxu0 0.0
  %2530 = vmatpush1.msra.mxu0 0.0
  %2531 = vmatprep.subr.mxu0 0.0
  %2532 = vmatpush1.msra.mxu0 0.0
  %2533 = vmatprep.subr.mxu0 0.0
  %2534 = vmatpush1.msra.mxu0 0.0
  %2535 = vmatprep.subr.mxu0 0.0
  %2536 = vmatpush1.msra.mxu0 0.0
  %2537 = vmatprep.subr.mxu0 0.0
  %2538 = vmatpush1.msra.mxu0 0.0
  %2539 = vmatprep.subr.mxu0 0.0
  %2540 = vmatpush1.msra.mxu0 0.0
  %2541 = vmatprep.subr.mxu0 0.0
  %2542 = vmatpush1.msra.mxu0 0.0
  %2543 = vmatprep.subr.mxu0 0.0
  %2544 = vmatpush1.msra.mxu0 0.0
  %2545 = vmatprep.subr.mxu0 0.0
  %2546 = vmatpush1.msra.mxu0 0.0
  %2547 = vmatprep.subr.mxu0 0.0
  %2548 = vmatpush1.msra.mxu0 0.0
  %2549 = vmatprep.subr.mxu0 0.0
  %2550 = vmatpush1.msra.mxu0 0.0
  %2551 = vmatprep.subr.mxu0 0.0
  %2552 = vmatpush1.msra.mxu0 0.0
  %2553 = vmatprep.subr.mxu0 0.0
  %2554 = vmatpush1.msra.mxu0 0.0
  %2555 = vmatprep.subr.mxu0 0.0
  %2556 = vmatpush1.msra.mxu0 %v2520
  %2557 = vmatprep.subr.mxu0 0.0
  %2558 = vmatpush1.msra.mxu0 %v2519
  %2559 = vmatprep.subr.mxu0 0.0
  %2560 = vmatpush2.msra.mxu0 0.0
  %2561 = vmatprep.subr.mxu0 0.0
  %2562 = vmatpush2.msra.mxu0 0.0
  %2563 = vmatprep.subr.mxu0 0.0
  %2564 = vmatpush2.msra.mxu0 0.0
  %2565 = vmatprep.subr.mxu0 0.0
  %2566 = vmatpush2.msra.mxu0 0.0
  %2567 = vmatprep.subr.mxu0 0.0
  %2568 = vmatpush2.msra.mxu0 0.0
  %2569 = vmatprep.subr.mxu0 0.0
  %2570 = vmatpush2.msra.mxu0 0.0
  %2571 = vmatprep.subr.mxu0 0.0
  %2572 = vmatpush2.msra.mxu0 0.0
  %2573 = vmatprep.subr.mxu0 0.0
  %2574 = vmatpush2.msra.mxu0 0.0
  %2575 = vmatprep.subr.mxu0 0.0
  %2576 = vmatpush2.msra.mxu0 0.0
  %2577 = vmatprep.subr.mxu0 0.0
  %2578 = vmatpush2.msra.mxu0 0.0
  %2579 = vmatprep.subr.mxu0 0.0
  %2580 = vmatpush2.msra.mxu0 0.0
  %2581 = vmatprep.subr.mxu0 0.0
  %2582 = vmatpush2.msra.mxu0 0.0
  %2583 = vmatprep.subr.mxu0 0.0
  %2584 = vmatpush2.msra.mxu0 0.0
  %2585 = vmatprep.subr.mxu0 0.0
  %2586 = vmatpush2.msra.mxu0 0.0
  %2587 = vmatprep.subr.mxu0 0.0
  %2588 = vmatpush2.msra.mxu0 0.0
  %2589 = vmatprep.subr.mxu0 0.0
  %2590 = vmatpush2.msra.mxu0 0.0
  %2591 = vmatprep.mubr.f32.mxu0 0.0
  %2592 = vmatmul.mubr.f32.gmra.mxu0 %v2522
  %v2593 = vpop.f32.mrf.mxu0
  %v2594 = vadd.f32 0.0, %v2593
  %v2595 = vpop.f32.mrf.mxu0
  %2596 = vmatprep.mubr.f32.mxu0 0.0
  %2597 = vmatmul.mubr.f32.gmra.mxu0 %v2525
  %v2598 = vpop.f32.mrf.mxu0
  %v2599 = vadd.f32 0.0, %v2598
  %v2600 = vpop.f32.mrf.mxu0
  %2601 = vdwg.mxu0
  %v2602 = vadd.f32 %v2412, %v2594
  %v2603 = vadd.f32 %v2413, %v2599
  %s2604 = scalar_lea.vmem %s9, 32
  %v2605 = vld [vmem:[%s2604] sm:$0xff]
  %v2606 = vld [vmem:[%s2604 + $0x8] sm:$0xff]
  %v2607 = vld [vmem:[%s2604 + $0x10] sm:$0xff]
  %v2608 = vld [vmem:[%s2604 + $0x18] sm:$0xff]
  %s2609 = scalar_lea.vmem %s10, 1
  %v2610 = vld [vmem:[%s2609] sm:$0x1]
  %v2612 = vlaneseq
  %v2613 = vshrl.u32 %v2612, 7
  %v2614 = vsub.s32 0, %v2613
  %v2615 = vrot.slane %v2610, %v2614
  %v2618 = vsel %vm173, %v2602, 0
  %v2621 = vsel %vm173, %v2603, 0
  %2623 = vmatprep.subr.mxu0 0.0
  %2624 = vmatpush1.msra.mxu0 0.0
  %2625 = vmatprep.subr.mxu0 0.0
  %2626 = vmatpush1.msra.mxu0 0.0
  %2627 = vmatprep.subr.mxu0 0.0
  %2628 = vmatpush1.msra.mxu0 0.0
  %2629 = vmatprep.subr.mxu0 0.0
  %2630 = vmatpush1.msra.mxu0 0.0
  %2631 = vmatprep.subr.mxu0 0.0
  %2632 = vmatpush1.msra.mxu0 0.0
  %2633 = vmatprep.subr.mxu0 0.0
  %2634 = vmatpush1.msra.mxu0 0.0
  %2635 = vmatprep.subr.mxu0 0.0
  %2636 = vmatpush1.msra.mxu0 0.0
  %2637 = vmatprep.subr.mxu0 0.0
  %2638 = vmatpush1.msra.mxu0 0.0
  %2639 = vmatprep.subr.mxu0 0.0
  %2640 = vmatpush1.msra.mxu0 0.0
  %2641 = vmatprep.subr.mxu0 0.0
  %2642 = vmatpush1.msra.mxu0 0.0
  %2643 = vmatprep.subr.mxu0 0.0
  %2644 = vmatpush1.msra.mxu0 0.0
  %2645 = vmatprep.subr.mxu0 0.0
  %2646 = vmatpush1.msra.mxu0 0.0
  %2647 = vmatprep.subr.mxu0 0.0
  %2648 = vmatpush1.msra.mxu0 %v2608
  %2649 = vmatprep.subr.mxu0 0.0
  %2650 = vmatpush1.msra.mxu0 %v2607
  %2651 = vmatprep.subr.mxu0 0.0
  %2652 = vmatpush1.msra.mxu0 %v2606
  %2653 = vmatprep.subr.mxu0 0.0
  %2654 = vmatpush1.msra.mxu0 %v2605
  %2655 = vmatprep.subr.mxu0 0.0
  %2656 = vmatpush2.msra.mxu0 0.0
  %2657 = vmatprep.subr.mxu0 0.0
  %2658 = vmatpush2.msra.mxu0 0.0
  %2659 = vmatprep.subr.mxu0 0.0
  %2660 = vmatpush2.msra.mxu0 0.0
  %2661 = vmatprep.subr.mxu0 0.0
  %2662 = vmatpush2.msra.mxu0 0.0
  %2663 = vmatprep.subr.mxu0 0.0
  %2664 = vmatpush2.msra.mxu0 0.0
  %2665 = vmatprep.subr.mxu0 0.0
  %2666 = vmatpush2.msra.mxu0 0.0
  %2667 = vmatprep.subr.mxu0 0.0
  %2668 = vmatpush2.msra.mxu0 0.0
  %2669 = vmatprep.subr.mxu0 0.0
  %2670 = vmatpush2.msra.mxu0 0.0
  %2671 = vmatprep.subr.mxu0 0.0
  %2672 = vmatpush2.msra.mxu0 0.0
  %2673 = vmatprep.subr.mxu0 0.0
  %2674 = vmatpush2.msra.mxu0 0.0
  %2675 = vmatprep.subr.mxu0 0.0
  %2676 = vmatpush2.msra.mxu0 0.0
  %2677 = vmatprep.subr.mxu0 0.0
  %2678 = vmatpush2.msra.mxu0 0.0
  %2679 = vmatprep.subr.mxu0 0.0
  %2680 = vmatpush2.msra.mxu0 0.0
  %2681 = vmatprep.subr.mxu0 0.0
  %2682 = vmatpush2.msra.mxu0 0.0
  %2683 = vmatprep.subr.mxu0 0.0
  %2684 = vmatpush2.msra.mxu0 0.0
  %2685 = vmatprep.subr.mxu0 0.0
  %2686 = vmatpush2.msra.mxu0 0.0
  %2687 = vmatprep.mubr.f32.mxu0 0.0
  %2688 = vmatmul.mubr.f32.gmra.mxu0 %v2618
  %v2689 = vpop.f32.mrf.mxu0
  %v2690 = vadd.f32 %v2615, %v2689
  %v2691 = vpop.f32.mrf.mxu0
  %2692 = vmatprep.mubr.f32.mxu0 0.0
  %2693 = vmatmul.mubr.f32.gmra.mxu0 %v2621
  %v2694 = vpop.f32.mrf.mxu0
  %v2695 = vadd.f32 %v2615, %v2694
  %v2696 = vpop.f32.mrf.mxu0
  %2697 = vdwg.mxu0
  %v2698 = vadd.f32 %v1570, %v2690
  %v2699 = vadd.f32 %v1571, %v2695
  %s2700 = scalar_lea.vmem %s15, 2
  %v2701 = vld [vmem:[%s2700] sm:$0x1]
  %s2702 = scalar_lea.vmem %s16, 2
  %v2703 = vld [vmem:[%s2702] sm:$0x1]
  %v2704 = vsel %vm173, %v2698, 0.0
  %2705 = vadd.xlane.f32.xlu0 %v2704
  %v2706 = vpop.xlane.xlu0 %2705
  %v2707 = vsel %vm173, %v2699, 0.0
  %2708 = vadd.xlane.f32.xlu0 %v2707
  %v2709 = vpop.xlane.xlu0 %2708
  %v2710 = vmul.f32 %v2706, %v1296
  %v2711 = vmul.f32 %v2709, %v1296
  %v2712 = vsub.f32 %v2698, %v2710
  %v2713 = vsub.f32 %v2699, %v2711
  %v2714 = vmul.f32 %v2712, %v2712
  %v2715 = vmul.f32 %v2713, %v2713
  %v2716 = vsel %vm173, %v2714, 0.0
  %2717 = vadd.xlane.f32.xlu0 %v2716
  %v2718 = vpop.xlane.xlu0 %2717
  %v2719 = vsel %vm173, %v2715, 0.0
  %2720 = vadd.xlane.f32.xlu0 %v2719
  %v2721 = vpop.xlane.xlu0 %2720
  %v2722 = vmul.f32 %v2718, %v1296
  %v2723 = vmul.f32 %v2721, %v1296
  %v2724 = vadd.f32 %v2722, 1e-05
  %v2725 = vadd.f32 %v2723, 1e-05
  %v2726 = vrsqrt.pop %v2724
  %v2727 = vrsqrt.pop %v2725
  %v2728 = vmul.f32 %v2712, %v2726
  %v2729 = vmul.f32 %v2713, %v2727
  %v2731 = vlaneseq
  %v2732 = vshrl.u32 %v2731, 7
  %v2733 = vsub.s32 0, %v2732
  %v2734 = vrot.slane %v2701, %v2733
  %v2736 = vmul.f32 %v2728, %v2734
  %v2737 = vmul.f32 %v2729, %v2734
  %v2739 = vlaneseq
  %v2740 = vshrl.u32 %v2739, 7
  %v2741 = vsub.s32 0, %v2740
  %v2742 = vrot.slane %v2703, %v2741
  %v2744 = vadd.f32 %v2736, %v2742
  %v2745 = vadd.f32 %v2737, %v2742
  %s2746 = scalar_lea.vmem %s11, 32
  %v2747 = vld [vmem:[%s2746] sm:$0xff]
  %v2748 = vld [vmem:[%s2746 + $0x8] sm:$0xff]
  %v2749 = vld [vmem:[%s2746 + $0x10] sm:$0xff]
  %v2750 = vld [vmem:[%s2746 + $0x18] sm:$0xff]
  %s2751 = scalar_lea.vmem %s12, 1
  %v2752 = vld [vmem:[%s2751] sm:$0x1]
  %v2754 = vlaneseq
  %v2755 = vshrl.u32 %v2754, 7
  %v2756 = vsub.s32 0, %v2755
  %v2757 = vrot.slane %v2752, %v2756
  %v2760 = vsel %vm173, %v2744, 0
  %v2763 = vsel %vm173, %v2745, 0
  %2765 = vmatprep.subr.mxu0 0.0
  %2766 = vmatpush1.msra.mxu0 0.0
  %2767 = vmatprep.subr.mxu0 0.0
  %2768 = vmatpush1.msra.mxu0 0.0
  %2769 = vmatprep.subr.mxu0 0.0
  %2770 = vmatpush1.msra.mxu0 0.0
  %2771 = vmatprep.subr.mxu0 0.0
  %2772 = vmatpush1.msra.mxu0 0.0
  %2773 = vmatprep.subr.mxu0 0.0
  %2774 = vmatpush1.msra.mxu0 0.0
  %2775 = vmatprep.subr.mxu0 0.0
  %2776 = vmatpush1.msra.mxu0 0.0
  %2777 = vmatprep.subr.mxu0 0.0
  %2778 = vmatpush1.msra.mxu0 0.0
  %2779 = vmatprep.subr.mxu0 0.0
  %2780 = vmatpush1.msra.mxu0 0.0
  %2781 = vmatprep.subr.mxu0 0.0
  %2782 = vmatpush1.msra.mxu0 0.0
  %2783 = vmatprep.subr.mxu0 0.0
  %2784 = vmatpush1.msra.mxu0 0.0
  %2785 = vmatprep.subr.mxu0 0.0
  %2786 = vmatpush1.msra.mxu0 0.0
  %2787 = vmatprep.subr.mxu0 0.0
  %2788 = vmatpush1.msra.mxu0 0.0
  %2789 = vmatprep.subr.mxu0 0.0
  %2790 = vmatpush1.msra.mxu0 %v2750
  %2791 = vmatprep.subr.mxu0 0.0
  %2792 = vmatpush1.msra.mxu0 %v2749
  %2793 = vmatprep.subr.mxu0 0.0
  %2794 = vmatpush1.msra.mxu0 %v2748
  %2795 = vmatprep.subr.mxu0 0.0
  %2796 = vmatpush1.msra.mxu0 %v2747
  %2797 = vmatprep.subr.mxu0 0.0
  %2798 = vmatpush2.msra.mxu0 0.0
  %2799 = vmatprep.subr.mxu0 0.0
  %2800 = vmatpush2.msra.mxu0 0.0
  %2801 = vmatprep.subr.mxu0 0.0
  %2802 = vmatpush2.msra.mxu0 0.0
  %2803 = vmatprep.subr.mxu0 0.0
  %2804 = vmatpush2.msra.mxu0 0.0
  %2805 = vmatprep.subr.mxu0 0.0
  %2806 = vmatpush2.msra.mxu0 0.0
  %2807 = vmatprep.subr.mxu0 0.0
  %2808 = vmatpush2.msra.mxu0 0.0
  %2809 = vmatprep.subr.mxu0 0.0
  %2810 = vmatpush2.msra.mxu0 0.0
  %2811 = vmatprep.subr.mxu0 0.0
  %2812 = vmatpush2.msra.mxu0 0.0
  %2813 = vmatprep.subr.mxu0 0.0
  %2814 = vmatpush2.msra.mxu0 0.0
  %2815 = vmatprep.subr.mxu0 0.0
  %2816 = vmatpush2.msra.mxu0 0.0
  %2817 = vmatprep.subr.mxu0 0.0
  %2818 = vmatpush2.msra.mxu0 0.0
  %2819 = vmatprep.subr.mxu0 0.0
  %2820 = vmatpush2.msra.mxu0 0.0
  %2821 = vmatprep.subr.mxu0 0.0
  %2822 = vmatpush2.msra.mxu0 0.0
  %2823 = vmatprep.subr.mxu0 0.0
  %2824 = vmatpush2.msra.mxu0 0.0
  %2825 = vmatprep.subr.mxu0 0.0
  %2826 = vmatpush2.msra.mxu0 0.0
  %2827 = vmatprep.subr.mxu0 0.0
  %2828 = vmatpush2.msra.mxu0 0.0
  %2829 = vmatprep.mubr.f32.mxu0 0.0
  %2830 = vmatmul.mubr.f32.gmra.mxu0 %v2760
  %v2831 = vpop.f32.mrf.mxu0
  %v2832 = vadd.f32 %v2757, %v2831
  %v2833 = vpop.f32.mrf.mxu0
  %2834 = vmatprep.mubr.f32.mxu0 0.0
  %2835 = vmatmul.mubr.f32.gmra.mxu0 %v2763
  %v2836 = vpop.f32.mrf.mxu0
  %v2837 = vadd.f32 %v2757, %v2836
  %v2838 = vpop.f32.mrf.mxu0
  %2839 = vdwg.mxu0
  %v2840 = vmax.f32 %v2832, 0.0
  %v2841 = vmax.f32 %v2837, 0.0
  %s2842 = scalar_lea.vmem %s13, 64
  %v2843 = vld [vmem:[%s2842] sm:$0xff]
  %v2844 = vld [vmem:[%s2842 + $0x8] sm:$0xff]
  %v2845 = vld [vmem:[%s2842 + $0x10] sm:$0xff]
  %v2846 = vld [vmem:[%s2842 + $0x18] sm:$0xff]
  %v2847 = vld [vmem:[%s2842 + $0x20] sm:$0xff]
  %v2848 = vld [vmem:[%s2842 + $0x28] sm:$0xff]
  %v2849 = vld [vmem:[%s2842 + $0x30] sm:$0xff]
  %v2850 = vld [vmem:[%s2842 + $0x38] sm:$0xff]
  %s2851 = scalar_lea.vmem %s14, 1
  %v2852 = vld [vmem:[%s2851] sm:$0x1]
  %v2854 = vlaneseq
  %v2855 = vshrl.u32 %v2854, 7
  %v2856 = vsub.s32 0, %v2855
  %v2857 = vrot.slane %v2852, %v2856
  %v2860 = vsel %vm1442, %v2840, 0
  %v2863 = vsel %vm1442, %v2841, 0
  %2865 = vmatprep.subr.mxu0 0.0
  %2866 = vmatpush1.msra.mxu0 0.0
  %2867 = vmatprep.subr.mxu0 0.0
  %2868 = vmatpush1.msra.mxu0 0.0
  %2869 = vmatprep.subr.mxu0 0.0
  %2870 = vmatpush1.msra.mxu0 0.0
  %2871 = vmatprep.subr.mxu0 0.0
  %2872 = vmatpush1.msra.mxu0 0.0
  %2873 = vmatprep.subr.mxu0 0.0
  %2874 = vmatpush1.msra.mxu0 0.0
  %2875 = vmatprep.subr.mxu0 0.0
  %2876 = vmatpush1.msra.mxu0 0.0
  %2877 = vmatprep.subr.mxu0 0.0
  %2878 = vmatpush1.msra.mxu0 0.0
  %2879 = vmatprep.subr.mxu0 0.0
  %2880 = vmatpush1.msra.mxu0 0.0
  %2881 = vmatprep.subr.mxu0 0.0
  %2882 = vmatpush1.msra.mxu0 %v2850
  %2883 = vmatprep.subr.mxu0 0.0
  %2884 = vmatpush1.msra.mxu0 %v2849
  %2885 = vmatprep.subr.mxu0 0.0
  %2886 = vmatpush1.msra.mxu0 %v2848
  %2887 = vmatprep.subr.mxu0 0.0
  %2888 = vmatpush1.msra.mxu0 %v2847
  %2889 = vmatprep.subr.mxu0 0.0
  %2890 = vmatpush1.msra.mxu0 %v2846
  %2891 = vmatprep.subr.mxu0 0.0
  %2892 = vmatpush1.msra.mxu0 %v2845
  %2893 = vmatprep.subr.mxu0 0.0
  %2894 = vmatpush1.msra.mxu0 %v2844
  %2895 = vmatprep.subr.mxu0 0.0
  %2896 = vmatpush1.msra.mxu0 %v2843
  %2897 = vmatprep.subr.mxu0 0.0
  %2898 = vmatpush2.msra.mxu0 0.0
  %2899 = vmatprep.subr.mxu0 0.0
  %2900 = vmatpush2.msra.mxu0 0.0
  %2901 = vmatprep.subr.mxu0 0.0
  %2902 = vmatpush2.msra.mxu0 0.0
  %2903 = vmatprep.subr.mxu0 0.0
  %2904 = vmatpush2.msra.mxu0 0.0
  %2905 = vmatprep.subr.mxu0 0.0
  %2906 = vmatpush2.msra.mxu0 0.0
  %2907 = vmatprep.subr.mxu0 0.0
  %2908 = vmatpush2.msra.mxu0 0.0
  %2909 = vmatprep.subr.mxu0 0.0
  %2910 = vmatpush2.msra.mxu0 0.0
  %2911 = vmatprep.subr.mxu0 0.0
  %2912 = vmatpush2.msra.mxu0 0.0
  %2913 = vmatprep.subr.mxu0 0.0
  %2914 = vmatpush2.msra.mxu0 0.0
  %2915 = vmatprep.subr.mxu0 0.0
  %2916 = vmatpush2.msra.mxu0 0.0
  %2917 = vmatprep.subr.mxu0 0.0
  %2918 = vmatpush2.msra.mxu0 0.0
  %2919 = vmatprep.subr.mxu0 0.0
  %2920 = vmatpush2.msra.mxu0 0.0
  %2921 = vmatprep.subr.mxu0 0.0
  %2922 = vmatpush2.msra.mxu0 0.0
  %2923 = vmatprep.subr.mxu0 0.0
  %2924 = vmatpush2.msra.mxu0 0.0
  %2925 = vmatprep.subr.mxu0 0.0
  %2926 = vmatpush2.msra.mxu0 0.0
  %2927 = vmatprep.subr.mxu0 0.0
  %2928 = vmatpush2.msra.mxu0 0.0
  %2929 = vmatprep.mubr.f32.mxu0 0.0
  %2930 = vmatmul.mubr.f32.gmra.mxu0 %v2860
  %v2931 = vpop.f32.mrf.mxu0
  %v2932 = vadd.f32 %v2857, %v2931
  %v2933 = vpop.f32.mrf.mxu0
  %2934 = vmatprep.mubr.f32.mxu0 0.0
  %2935 = vmatmul.mubr.f32.gmra.mxu0 %v2863
  %v2936 = vpop.f32.mrf.mxu0
  %v2937 = vadd.f32 %v2857, %v2936
  %v2938 = vpop.f32.mrf.mxu0
  %2939 = vdwg.mxu0
  %v2940 = vadd.f32 %v2744, %v2932
  %v2941 = vadd.f32 %v2745, %v2937
  %s2942 = scalar_lea.vmem %s15, 3
  %v2943 = vld [vmem:[%s2942] sm:$0x1]
  %s2944 = scalar_lea.vmem %s16, 3
  %v2945 = vld [vmem:[%s2944] sm:$0x1]
  %v2946 = vsel %vm173, %v2940, 0.0
  %2947 = vadd.xlane.f32.xlu0 %v2946
  %v2948 = vpop.xlane.xlu0 %2947
  %v2949 = vsel %vm173, %v2941, 0.0
  %2950 = vadd.xlane.f32.xlu0 %v2949
  %v2951 = vpop.xlane.xlu0 %2950
  %v2952 = vmul.f32 %v2948, %v1296
  %v2953 = vmul.f32 %v2951, %v1296
  %v2954 = vsub.f32 %v2940, %v2952
  %v2955 = vsub.f32 %v2941, %v2953
  %v2956 = vmul.f32 %v2954, %v2954
  %v2957 = vmul.f32 %v2955, %v2955
  %v2958 = vsel %vm173, %v2956, 0.0
  %2959 = vadd.xlane.f32.xlu0 %v2958
  %v2960 = vpop.xlane.xlu0 %2959
  %v2961 = vsel %vm173, %v2957, 0.0
  %2962 = vadd.xlane.f32.xlu0 %v2961
  %v2963 = vpop.xlane.xlu0 %2962
  %v2964 = vmul.f32 %v2960, %v1296
  %v2965 = vmul.f32 %v2963, %v1296
  %v2966 = vadd.f32 %v2964, 1e-05
  %v2967 = vadd.f32 %v2965, 1e-05
  %v2968 = vrsqrt.pop %v2966
  %v2969 = vrsqrt.pop %v2967
  %v2970 = vmul.f32 %v2954, %v2968
  %v2971 = vmul.f32 %v2955, %v2969
  %v2973 = vlaneseq
  %v2974 = vshrl.u32 %v2973, 7
  %v2975 = vsub.s32 0, %v2974
  %v2976 = vrot.slane %v2943, %v2975
  %v2978 = vmul.f32 %v2970, %v2976
  %v2979 = vmul.f32 %v2971, %v2976
  %v2981 = vlaneseq
  %v2982 = vshrl.u32 %v2981, 7
  %v2983 = vsub.s32 0, %v2982
  %v2984 = vrot.slane %v2945, %v2983
  %v2986 = vadd.f32 %v2978, %v2984
  %v2987 = vadd.f32 %v2979, %v2984
  %v2988 = vld [vmem:[%s1] sm:$0xff]
  %v2989 = vld [vmem:[%s1 + $0x8] sm:$0xff]
  %s2990 = scalar_lea.vmem %s7, 192
  %v2991 = vld [vmem:[%s2990] sm:$0xff]
  %v2992 = vld [vmem:[%s2990 + $0x8] sm:$0xff]
  %v2993 = vld [vmem:[%s2990 + $0x10] sm:$0xff]
  %v2994 = vld [vmem:[%s2990 + $0x18] sm:$0xff]
  %s2995 = scalar_lea.vmem %s8, 6
  %v2996 = vld [vmem:[%s2995] sm:$0x1]
  %v2998 = vlaneseq
  %v2999 = vshrl.u32 %v2998, 7
  %v3000 = vsub.s32 0, %v2999
  %v3001 = vrot.slane %v2996, %v3000
  %v3004 = vsel %vm173, %v2988, 0
  %v3007 = vsel %vm173, %v2989, 0
  %3009 = vmatprep.subr.mxu0 0.0
  %3010 = vmatpush1.msra.mxu0 0.0
  %3011 = vmatprep.subr.mxu0 0.0
  %3012 = vmatpush1.msra.mxu0 0.0
  %3013 = vmatprep.subr.mxu0 0.0
  %3014 = vmatpush1.msra.mxu0 0.0
  %3015 = vmatprep.subr.mxu0 0.0
  %3016 = vmatpush1.msra.mxu0 0.0
  %3017 = vmatprep.subr.mxu0 0.0
  %3018 = vmatpush1.msra.mxu0 0.0
  %3019 = vmatprep.subr.mxu0 0.0
  %3020 = vmatpush1.msra.mxu0 0.0
  %3021 = vmatprep.subr.mxu0 0.0
  %3022 = vmatpush1.msra.mxu0 0.0
  %3023 = vmatprep.subr.mxu0 0.0
  %3024 = vmatpush1.msra.mxu0 0.0
  %3025 = vmatprep.subr.mxu0 0.0
  %3026 = vmatpush1.msra.mxu0 0.0
  %3027 = vmatprep.subr.mxu0 0.0
  %3028 = vmatpush1.msra.mxu0 0.0
  %3029 = vmatprep.subr.mxu0 0.0
  %3030 = vmatpush1.msra.mxu0 0.0
  %3031 = vmatprep.subr.mxu0 0.0
  %3032 = vmatpush1.msra.mxu0 0.0
  %3033 = vmatprep.subr.mxu0 0.0
  %3034 = vmatpush1.msra.mxu0 %v2994
  %3035 = vmatprep.subr.mxu0 0.0
  %3036 = vmatpush1.msra.mxu0 %v2993
  %3037 = vmatprep.subr.mxu0 0.0
  %3038 = vmatpush1.msra.mxu0 %v2992
  %3039 = vmatprep.subr.mxu0 0.0
  %3040 = vmatpush1.msra.mxu0 %v2991
  %3041 = vmatprep.subr.mxu0 0.0
  %3042 = vmatpush2.msra.mxu0 0.0
  %3043 = vmatprep.subr.mxu0 0.0
  %3044 = vmatpush2.msra.mxu0 0.0
  %3045 = vmatprep.subr.mxu0 0.0
  %3046 = vmatpush2.msra.mxu0 0.0
  %3047 = vmatprep.subr.mxu0 0.0
  %3048 = vmatpush2.msra.mxu0 0.0
  %3049 = vmatprep.subr.mxu0 0.0
  %3050 = vmatpush2.msra.mxu0 0.0
  %3051 = vmatprep.subr.mxu0 0.0
  %3052 = vmatpush2.msra.mxu0 0.0
  %3053 = vmatprep.subr.mxu0 0.0
  %3054 = vmatpush2.msra.mxu0 0.0
  %3055 = vmatprep.subr.mxu0 0.0
  %3056 = vmatpush2.msra.mxu0 0.0
  %3057 = vmatprep.subr.mxu0 0.0
  %3058 = vmatpush2.msra.mxu0 0.0
  %3059 = vmatprep.subr.mxu0 0.0
  %3060 = vmatpush2.msra.mxu0 0.0
  %3061 = vmatprep.subr.mxu0 0.0
  %3062 = vmatpush2.msra.mxu0 0.0
  %3063 = vmatprep.subr.mxu0 0.0
  %3064 = vmatpush2.msra.mxu0 0.0
  %3065 = vmatprep.subr.mxu0 0.0
  %3066 = vmatpush2.msra.mxu0 0.0
  %3067 = vmatprep.subr.mxu0 0.0
  %3068 = vmatpush2.msra.mxu0 0.0
  %3069 = vmatprep.subr.mxu0 0.0
  %3070 = vmatpush2.msra.mxu0 0.0
  %3071 = vmatprep.subr.mxu0 0.0
  %3072 = vmatpush2.msra.mxu0 0.0
  %3073 = vmatprep.mubr.f32.mxu0 0.0
  %3074 = vmatmul.mubr.f32.gmra.mxu0 %v3004
  %v3075 = vpop.f32.mrf.mxu0
  %v3076 = vadd.f32 %v3001, %v3075
  %v3077 = vpop.f32.mrf.mxu0
  %3078 = vmatprep.mubr.f32.mxu0 0.0
  %3079 = vmatmul.mubr.f32.gmra.mxu0 %v3007
  %v3080 = vpop.f32.mrf.mxu0
  %v3081 = vadd.f32 %v3001, %v3080
  %v3082 = vpop.f32.mrf.mxu0
  %3083 = vdwg.mxu0
  %s3084 = scalar_lea.vmem %s7, 224
  %v3085 = vld [vmem:[%s3084] sm:$0xff]
  %v3086 = vld [vmem:[%s3084 + $0x8] sm:$0xff]
  %v3087 = vld [vmem:[%s3084 + $0x10] sm:$0xff]
  %v3088 = vld [vmem:[%s3084 + $0x18] sm:$0xff]
  %s3089 = scalar_lea.vmem %s8, 7
  %v3090 = vld [vmem:[%s3089] sm:$0x1]
  %v3092 = vlaneseq
  %v3093 = vshrl.u32 %v3092, 7
  %v3094 = vsub.s32 0, %v3093
  %v3095 = vrot.slane %v3090, %v3094
  %3097 = vmatprep.subr.mxu0 0.0
  %3098 = vmatpush1.msra.mxu0 0.0
  %3099 = vmatprep.subr.mxu0 0.0
  %3100 = vmatpush1.msra.mxu0 0.0
  %3101 = vmatprep.subr.mxu0 0.0
  %3102 = vmatpush1.msra.mxu0 0.0
  %3103 = vmatprep.subr.mxu0 0.0
  %3104 = vmatpush1.msra.mxu0 0.0
  %3105 = vmatprep.subr.mxu0 0.0
  %3106 = vmatpush1.msra.mxu0 0.0
  %3107 = vmatprep.subr.mxu0 0.0
  %3108 = vmatpush1.msra.mxu0 0.0
  %3109 = vmatprep.subr.mxu0 0.0
  %3110 = vmatpush1.msra.mxu0 0.0
  %3111 = vmatprep.subr.mxu0 0.0
  %3112 = vmatpush1.msra.mxu0 0.0
  %3113 = vmatprep.subr.mxu0 0.0
  %3114 = vmatpush1.msra.mxu0 0.0
  %3115 = vmatprep.subr.mxu0 0.0
  %3116 = vmatpush1.msra.mxu0 0.0
  %3117 = vmatprep.subr.mxu0 0.0
  %3118 = vmatpush1.msra.mxu0 0.0
  %3119 = vmatprep.subr.mxu0 0.0
  %3120 = vmatpush1.msra.mxu0 0.0
  %3121 = vmatprep.subr.mxu0 0.0
  %3122 = vmatpush1.msra.mxu0 %v3088
  %3123 = vmatprep.subr.mxu0 0.0
  %3124 = vmatpush1.msra.mxu0 %v3087
  %3125 = vmatprep.subr.mxu0 0.0
  %3126 = vmatpush1.msra.mxu0 %v3086
  %3127 = vmatprep.subr.mxu0 0.0
  %3128 = vmatpush1.msra.mxu0 %v3085
  %3129 = vmatprep.subr.mxu0 0.0
  %3130 = vmatpush2.msra.mxu0 0.0
  %3131 = vmatprep.subr.mxu0 0.0
  %3132 = vmatpush2.msra.mxu0 0.0
  %3133 = vmatprep.subr.mxu0 0.0
  %3134 = vmatpush2.msra.mxu0 0.0
  %3135 = vmatprep.subr.mxu0 0.0
  %3136 = vmatpush2.msra.mxu0 0.0
  %3137 = vmatprep.subr.mxu0 0.0
  %3138 = vmatpush2.msra.mxu0 0.0
  %3139 = vmatprep.subr.mxu0 0.0
  %3140 = vmatpush2.msra.mxu0 0.0
  %3141 = vmatprep.subr.mxu0 0.0
  %3142 = vmatpush2.msra.mxu0 0.0
  %3143 = vmatprep.subr.mxu0 0.0
  %3144 = vmatpush2.msra.mxu0 0.0
  %3145 = vmatprep.subr.mxu0 0.0
  %3146 = vmatpush2.msra.mxu0 0.0
  %3147 = vmatprep.subr.mxu0 0.0
  %3148 = vmatpush2.msra.mxu0 0.0
  %3149 = vmatprep.subr.mxu0 0.0
  %3150 = vmatpush2.msra.mxu0 0.0
  %3151 = vmatprep.subr.mxu0 0.0
  %3152 = vmatpush2.msra.mxu0 0.0
  %3153 = vmatprep.subr.mxu0 0.0
  %3154 = vmatpush2.msra.mxu0 0.0
  %3155 = vmatprep.subr.mxu0 0.0
  %3156 = vmatpush2.msra.mxu0 0.0
  %3157 = vmatprep.subr.mxu0 0.0
  %3158 = vmatpush2.msra.mxu0 0.0
  %3159 = vmatprep.subr.mxu0 0.0
  %3160 = vmatpush2.msra.mxu0 0.0
  %3161 = vmatprep.mubr.f32.mxu0 0.0
  %3162 = vmatmul.mubr.f32.gmra.mxu0 %v3004
  %v3163 = vpop.f32.mrf.mxu0
  %v3164 = vadd.f32 %v3095, %v3163
  %v3165 = vpop.f32.mrf.mxu0
  %3166 = vmatprep.mubr.f32.mxu0 0.0
  %3167 = vmatmul.mubr.f32.gmra.mxu0 %v3007
  %v3168 = vpop.f32.mrf.mxu0
  %v3169 = vadd.f32 %v3095, %v3168
  %v3170 = vpop.f32.mrf.mxu0
  %3171 = vdwg.mxu0
  %s3172 = scalar_lea.vmem %s7, 256
  %v3173 = vld [vmem:[%s3172] sm:$0xff]
  %v3174 = vld [vmem:[%s3172 + $0x8] sm:$0xff]
  %v3175 = vld [vmem:[%s3172 + $0x10] sm:$0xff]
  %v3176 = vld [vmem:[%s3172 + $0x18] sm:$0xff]
  %s3177 = scalar_lea.vmem %s8, 8
  %v3178 = vld [vmem:[%s3177] sm:$0x1]
  %v3180 = vlaneseq
  %v3181 = vshrl.u32 %v3180, 7
  %v3182 = vsub.s32 0, %v3181
  %v3183 = vrot.slane %v3178, %v3182
  %3185 = vmatprep.subr.mxu0 0.0
  %3186 = vmatpush1.msra.mxu0 0.0
  %3187 = vmatprep.subr.mxu0 0.0
  %3188 = vmatpush1.msra.mxu0 0.0
  %3189 = vmatprep.subr.mxu0 0.0
  %3190 = vmatpush1.msra.mxu0 0.0
  %3191 = vmatprep.subr.mxu0 0.0
  %3192 = vmatpush1.msra.mxu0 0.0
  %3193 = vmatprep.subr.mxu0 0.0
  %3194 = vmatpush1.msra.mxu0 0.0
  %3195 = vmatprep.subr.mxu0 0.0
  %3196 = vmatpush1.msra.mxu0 0.0
  %3197 = vmatprep.subr.mxu0 0.0
  %3198 = vmatpush1.msra.mxu0 0.0
  %3199 = vmatprep.subr.mxu0 0.0
  %3200 = vmatpush1.msra.mxu0 0.0
  %3201 = vmatprep.subr.mxu0 0.0
  %3202 = vmatpush1.msra.mxu0 0.0
  %3203 = vmatprep.subr.mxu0 0.0
  %3204 = vmatpush1.msra.mxu0 0.0
  %3205 = vmatprep.subr.mxu0 0.0
  %3206 = vmatpush1.msra.mxu0 0.0
  %3207 = vmatprep.subr.mxu0 0.0
  %3208 = vmatpush1.msra.mxu0 0.0
  %3209 = vmatprep.subr.mxu0 0.0
  %3210 = vmatpush1.msra.mxu0 %v3176
  %3211 = vmatprep.subr.mxu0 0.0
  %3212 = vmatpush1.msra.mxu0 %v3175
  %3213 = vmatprep.subr.mxu0 0.0
  %3214 = vmatpush1.msra.mxu0 %v3174
  %3215 = vmatprep.subr.mxu0 0.0
  %3216 = vmatpush1.msra.mxu0 %v3173
  %3217 = vmatprep.subr.mxu0 0.0
  %3218 = vmatpush2.msra.mxu0 0.0
  %3219 = vmatprep.subr.mxu0 0.0
  %3220 = vmatpush2.msra.mxu0 0.0
  %3221 = vmatprep.subr.mxu0 0.0
  %3222 = vmatpush2.msra.mxu0 0.0
  %3223 = vmatprep.subr.mxu0 0.0
  %3224 = vmatpush2.msra.mxu0 0.0
  %3225 = vmatprep.subr.mxu0 0.0
  %3226 = vmatpush2.msra.mxu0 0.0
  %3227 = vmatprep.subr.mxu0 0.0
  %3228 = vmatpush2.msra.mxu0 0.0
  %3229 = vmatprep.subr.mxu0 0.0
  %3230 = vmatpush2.msra.mxu0 0.0
  %3231 = vmatprep.subr.mxu0 0.0
  %3232 = vmatpush2.msra.mxu0 0.0
  %3233 = vmatprep.subr.mxu0 0.0
  %3234 = vmatpush2.msra.mxu0 0.0
  %3235 = vmatprep.subr.mxu0 0.0
  %3236 = vmatpush2.msra.mxu0 0.0
  %3237 = vmatprep.subr.mxu0 0.0
  %3238 = vmatpush2.msra.mxu0 0.0
  %3239 = vmatprep.subr.mxu0 0.0
  %3240 = vmatpush2.msra.mxu0 0.0
  %3241 = vmatprep.subr.mxu0 0.0
  %3242 = vmatpush2.msra.mxu0 0.0
  %3243 = vmatprep.subr.mxu0 0.0
  %3244 = vmatpush2.msra.mxu0 0.0
  %3245 = vmatprep.subr.mxu0 0.0
  %3246 = vmatpush2.msra.mxu0 0.0
  %3247 = vmatprep.subr.mxu0 0.0
  %3248 = vmatpush2.msra.mxu0 0.0
  %3249 = vmatprep.mubr.f32.mxu0 0.0
  %3250 = vmatmul.mubr.f32.gmra.mxu0 %v3004
  %v3251 = vpop.f32.mrf.mxu0
  %v3252 = vadd.f32 %v3183, %v3251
  %v3253 = vpop.f32.mrf.mxu0
  %3254 = vmatprep.mubr.f32.mxu0 0.0
  %3255 = vmatmul.mubr.f32.gmra.mxu0 %v3007
  %v3256 = vpop.f32.mrf.mxu0
  %v3257 = vadd.f32 %v3183, %v3256
  %v3258 = vpop.f32.mrf.mxu0
  %3259 = vdwg.mxu0
  %v3260 = vmul.f32 %v3076, %v67
  %v3261 = vmul.f32 %v3081, %v67
  %v3263 = vsel %vm173, %v3260, 0
  %v3266 = vsel %vm173, %v3261, 0
  %v3269 = vsel %vm173, %v3164, 0
  %v3272 = vsel %vm173, %v3169, 0
  %3274 = vmatprep.subr.mxu0 0.0
  %3275 = vmatpush1.xpose.msra.mxu0 0.0
  %3276 = vmatprep.subr.mxu0 0.0
  %3277 = vmatpush1.xpose.msra.mxu0 0.0
  %3278 = vmatprep.subr.mxu0 0.0
  %3279 = vmatpush1.xpose.msra.mxu0 0.0
  %3280 = vmatprep.subr.mxu0 0.0
  %3281 = vmatpush1.xpose.msra.mxu0 0.0
  %3282 = vmatprep.subr.mxu0 0.0
  %3283 = vmatpush1.xpose.msra.mxu0 0.0
  %3284 = vmatprep.subr.mxu0 0.0
  %3285 = vmatpush1.xpose.msra.mxu0 0.0
  %3286 = vmatprep.subr.mxu0 0.0
  %3287 = vmatpush1.xpose.msra.mxu0 0.0
  %3288 = vmatprep.subr.mxu0 0.0
  %3289 = vmatpush1.xpose.msra.mxu0 0.0
  %3290 = vmatprep.subr.mxu0 0.0
  %3291 = vmatpush1.xpose.msra.mxu0 0.0
  %3292 = vmatprep.subr.mxu0 0.0
  %3293 = vmatpush1.xpose.msra.mxu0 0.0
  %3294 = vmatprep.subr.mxu0 0.0
  %3295 = vmatpush1.xpose.msra.mxu0 0.0
  %3296 = vmatprep.subr.mxu0 0.0
  %3297 = vmatpush1.xpose.msra.mxu0 0.0
  %3298 = vmatprep.subr.mxu0 0.0
  %3299 = vmatpush1.xpose.msra.mxu0 0.0
  %3300 = vmatprep.subr.mxu0 0.0
  %3301 = vmatpush1.xpose.msra.mxu0 0.0
  %3302 = vmatprep.subr.mxu0 0.0
  %3303 = vmatpush1.xpose.msra.mxu0 %v3272
  %3304 = vmatprep.subr.mxu0 0.0
  %3305 = vmatpush1.xpose.msra.mxu0 %v3269
  %3306 = vmatprep.subr.mxu0 0.0
  %3307 = vmatpush2.xpose.msra.mxu0 0.0
  %3308 = vmatprep.subr.mxu0 0.0
  %3309 = vmatpush2.xpose.msra.mxu0 0.0
  %3310 = vmatprep.subr.mxu0 0.0
  %3311 = vmatpush2.xpose.msra.mxu0 0.0
  %3312 = vmatprep.subr.mxu0 0.0
  %3313 = vmatpush2.xpose.msra.mxu0 0.0
  %3314 = vmatprep.subr.mxu0 0.0
  %3315 = vmatpush2.xpose.msra.mxu0 0.0
  %3316 = vmatprep.subr.mxu0 0.0
  %3317 = vmatpush2.xpose.msra.mxu0 0.0
  %3318 = vmatprep.subr.mxu0 0.0
  %3319 = vmatpush2.xpose.msra.mxu0 0.0
  %3320 = vmatprep.subr.mxu0 0.0
  %3321 = vmatpush2.xpose.msra.mxu0 0.0
  %3322 = vmatprep.subr.mxu0 0.0
  %3323 = vmatpush2.xpose.msra.mxu0 0.0
  %3324 = vmatprep.subr.mxu0 0.0
  %3325 = vmatpush2.xpose.msra.mxu0 0.0
  %3326 = vmatprep.subr.mxu0 0.0
  %3327 = vmatpush2.xpose.msra.mxu0 0.0
  %3328 = vmatprep.subr.mxu0 0.0
  %3329 = vmatpush2.xpose.msra.mxu0 0.0
  %3330 = vmatprep.subr.mxu0 0.0
  %3331 = vmatpush2.xpose.msra.mxu0 0.0
  %3332 = vmatprep.subr.mxu0 0.0
  %3333 = vmatpush2.xpose.msra.mxu0 0.0
  %3334 = vmatprep.subr.mxu0 0.0
  %3335 = vmatpush2.xpose.msra.mxu0 0.0
  %3336 = vmatprep.subr.mxu0 0.0
  %3337 = vmatpush2.xpose.msra.mxu0 0.0
  %3338 = vmatprep.mubr.f32.mxu0 0.0
  %3339 = vmatmul.mubr.f32.gmra.mxu0 %v3263
  %v3340 = vpop.f32.mrf.mxu0
  %v3341 = vadd.f32 %v154, %v3340
  %v3342 = vpop.f32.mrf.mxu0
  %3343 = vmatprep.mubr.f32.mxu0 0.0
  %3344 = vmatmul.mubr.f32.gmra.mxu0 %v3266
  %v3345 = vpop.f32.mrf.mxu0
  %v3346 = vadd.f32 %v155, %v3345
  %v3347 = vpop.f32.mrf.mxu0
  %3348 = vdwg.mxu0
  %v3349 = vsel %vm520, %v3341, -inf
  %3350 = vmax.xlane.f32.xlu0 %v3349
  %v3351 = vpop.xlane.xlu0 %3350
  %v3352 = vsel %vm520, %v3346, -inf
  %3353 = vmax.xlane.f32.xlu0 %v3352
  %v3354 = vpop.xlane.xlu0 %3353
  %v3355 = vsub.f32 %v3341, %v3351
  %v3356 = vsub.f32 %v3346, %v3354
  %v3357 = vmul.f32 %v3355, 1.442695
  %v3358 = vpow.pop %v3357
  %v3359 = vmul.f32 %v3356, 1.442695
  %v3360 = vpow.pop %v3359
  %v3361 = vsel %vm520, %v3358, 0.0
  %3362 = vadd.xlane.f32.xlu0 %v3361
  %v3363 = vpop.xlane.xlu0 %3362
  %v3364 = vsel %vm520, %v3360, 0.0
  %3365 = vadd.xlane.f32.xlu0 %v3364
  %v3366 = vpop.xlane.xlu0 %3365
  %v3367 = vrcp.pop %v3363
  %v3368 = vmul.f32 %v3358, %v3367
  %v3369 = vrcp.pop %v3366
  %v3370 = vmul.f32 %v3360, %v3369
  %v3371 = vmul.f32 %v3252, %v67
  %v3372 = vmul.f32 %v3257, %v67
  %v3373 = vmul.f32 %v3076, %v71
  %v3374 = vmul.f32 %v3081, %v71
  %v3376 = vsel %vm173, %v3373, 0
  %v3379 = vsel %vm173, %v3374, 0
  %3381 = vmatprep.subr.mxu0 0.0
  %3382 = vmatpush1.xpose.msra.mxu0 0.0
  %3383 = vmatprep.subr.mxu0 0.0
  %3384 = vmatpush1.xpose.msra.mxu0 0.0
  %3385 = vmatprep.subr.mxu0 0.0
  %3386 = vmatpush1.xpose.msra.mxu0 0.0
  %3387 = vmatprep.subr.mxu0 0.0
  %3388 = vmatpush1.xpose.msra.mxu0 0.0
  %3389 = vmatprep.subr.mxu0 0.0
  %3390 = vmatpush1.xpose.msra.mxu0 0.0
  %3391 = vmatprep.subr.mxu0 0.0
  %3392 = vmatpush1.xpose.msra.mxu0 0.0
  %3393 = vmatprep.subr.mxu0 0.0
  %3394 = vmatpush1.xpose.msra.mxu0 0.0
  %3395 = vmatprep.subr.mxu0 0.0
  %3396 = vmatpush1.xpose.msra.mxu0 0.0
  %3397 = vmatprep.subr.mxu0 0.0
  %3398 = vmatpush1.xpose.msra.mxu0 0.0
  %3399 = vmatprep.subr.mxu0 0.0
  %3400 = vmatpush1.xpose.msra.mxu0 0.0
  %3401 = vmatprep.subr.mxu0 0.0
  %3402 = vmatpush1.xpose.msra.mxu0 0.0
  %3403 = vmatprep.subr.mxu0 0.0
  %3404 = vmatpush1.xpose.msra.mxu0 0.0
  %3405 = vmatprep.subr.mxu0 0.0
  %3406 = vmatpush1.xpose.msra.mxu0 0.0
  %3407 = vmatprep.subr.mxu0 0.0
  %3408 = vmatpush1.xpose.msra.mxu0 0.0
  %3409 = vmatprep.subr.mxu0 0.0
  %3410 = vmatpush1.xpose.msra.mxu0 %v3272
  %3411 = vmatprep.subr.mxu0 0.0
  %3412 = vmatpush1.xpose.msra.mxu0 %v3269
  %3413 = vmatprep.subr.mxu0 0.0
  %3414 = vmatpush2.xpose.msra.mxu0 0.0
  %3415 = vmatprep.subr.mxu0 0.0
  %3416 = vmatpush2.xpose.msra.mxu0 0.0
  %3417 = vmatprep.subr.mxu0 0.0
  %3418 = vmatpush2.xpose.msra.mxu0 0.0
  %3419 = vmatprep.subr.mxu0 0.0
  %3420 = vmatpush2.xpose.msra.mxu0 0.0
  %3421 = vmatprep.subr.mxu0 0.0
  %3422 = vmatpush2.xpose.msra.mxu0 0.0
  %3423 = vmatprep.subr.mxu0 0.0
  %3424 = vmatpush2.xpose.msra.mxu0 0.0
  %3425 = vmatprep.subr.mxu0 0.0
  %3426 = vmatpush2.xpose.msra.mxu0 0.0
  %3427 = vmatprep.subr.mxu0 0.0
  %3428 = vmatpush2.xpose.msra.mxu0 0.0
  %3429 = vmatprep.subr.mxu0 0.0
  %3430 = vmatpush2.xpose.msra.mxu0 0.0
  %3431 = vmatprep.subr.mxu0 0.0
  %3432 = vmatpush2.xpose.msra.mxu0 0.0
  %3433 = vmatprep.subr.mxu0 0.0
  %3434 = vmatpush2.xpose.msra.mxu0 0.0
  %3435 = vmatprep.subr.mxu0 0.0
  %3436 = vmatpush2.xpose.msra.mxu0 0.0
  %3437 = vmatprep.subr.mxu0 0.0
  %3438 = vmatpush2.xpose.msra.mxu0 0.0
  %3439 = vmatprep.subr.mxu0 0.0
  %3440 = vmatpush2.xpose.msra.mxu0 0.0
  %3441 = vmatprep.subr.mxu0 0.0
  %3442 = vmatpush2.xpose.msra.mxu0 0.0
  %3443 = vmatprep.subr.mxu0 0.0
  %3444 = vmatpush2.xpose.msra.mxu0 0.0
  %3445 = vmatprep.mubr.f32.mxu0 0.0
  %3446 = vmatmul.mubr.f32.gmra.mxu0 %v3376
  %v3447 = vpop.f32.mrf.mxu0
  %v3448 = vadd.f32 %v154, %v3447
  %v3449 = vpop.f32.mrf.mxu0
  %3450 = vmatprep.mubr.f32.mxu0 0.0
  %3451 = vmatmul.mubr.f32.gmra.mxu0 %v3379
  %v3452 = vpop.f32.mrf.mxu0
  %v3453 = vadd.f32 %v155, %v3452
  %v3454 = vpop.f32.mrf.mxu0
  %3455 = vdwg.mxu0
  %v3456 = vsel %vm520, %v3448, -inf
  %3457 = vmax.xlane.f32.xlu0 %v3456
  %v3458 = vpop.xlane.xlu0 %3457
  %v3459 = vsel %vm520, %v3453, -inf
  %3460 = vmax.xlane.f32.xlu0 %v3459
  %v3461 = vpop.xlane.xlu0 %3460
  %v3462 = vsub.f32 %v3448, %v3458
  %v3463 = vsub.f32 %v3453, %v3461
  %v3464 = vmul.f32 %v3462, 1.442695
  %v3465 = vpow.pop %v3464
  %v3466 = vmul.f32 %v3463, 1.442695
  %v3467 = vpow.pop %v3466
  %v3468 = vsel %vm520, %v3465, 0.0
  %3469 = vadd.xlane.f32.xlu0 %v3468
  %v3470 = vpop.xlane.xlu0 %3469
  %v3471 = vsel %vm520, %v3467, 0.0
  %3472 = vadd.xlane.f32.xlu0 %v3471
  %v3473 = vpop.xlane.xlu0 %3472
  %v3474 = vrcp.pop %v3470
  %v3475 = vmul.f32 %v3465, %v3474
  %v3476 = vrcp.pop %v3473
  %v3477 = vmul.f32 %v3467, %v3476
  %v3478 = vmul.f32 %v3252, %v71
  %v3479 = vmul.f32 %v3257, %v71
  %v3481 = vsel %vm520, %v3475, 0
  %v3484 = vsel %vm520, %v3477, 0
  %3486 = vmatprep.subr.mxu0 0.0
  %3487 = vmatpush1.msra.mxu0 0.0
  %3488 = vmatprep.subr.mxu0 0.0
  %3489 = vmatpush1.msra.mxu0 0.0
  %3490 = vmatprep.subr.mxu0 0.0
  %3491 = vmatpush1.msra.mxu0 0.0
  %3492 = vmatprep.subr.mxu0 0.0
  %3493 = vmatpush1.msra.mxu0 0.0
  %3494 = vmatprep.subr.mxu0 0.0
  %3495 = vmatpush1.msra.mxu0 0.0
  %3496 = vmatprep.subr.mxu0 0.0
  %3497 = vmatpush1.msra.mxu0 0.0
  %3498 = vmatprep.subr.mxu0 0.0
  %3499 = vmatpush1.msra.mxu0 0.0
  %3500 = vmatprep.subr.mxu0 0.0
  %3501 = vmatpush1.msra.mxu0 0.0
  %3502 = vmatprep.subr.mxu0 0.0
  %3503 = vmatpush1.msra.mxu0 0.0
  %3504 = vmatprep.subr.mxu0 0.0
  %3505 = vmatpush1.msra.mxu0 0.0
  %3506 = vmatprep.subr.mxu0 0.0
  %3507 = vmatpush1.msra.mxu0 0.0
  %3508 = vmatprep.subr.mxu0 0.0
  %3509 = vmatpush1.msra.mxu0 0.0
  %3510 = vmatprep.subr.mxu0 0.0
  %3511 = vmatpush1.msra.mxu0 0.0
  %3512 = vmatprep.subr.mxu0 0.0
  %3513 = vmatpush1.msra.mxu0 0.0
  %3514 = vmatprep.subr.mxu0 0.0
  %3515 = vmatpush1.msra.mxu0 %v3479
  %3516 = vmatprep.subr.mxu0 0.0
  %3517 = vmatpush1.msra.mxu0 %v3478
  %3518 = vmatprep.subr.mxu0 0.0
  %3519 = vmatpush2.msra.mxu0 0.0
  %3520 = vmatprep.subr.mxu0 0.0
  %3521 = vmatpush2.msra.mxu0 0.0
  %3522 = vmatprep.subr.mxu0 0.0
  %3523 = vmatpush2.msra.mxu0 0.0
  %3524 = vmatprep.subr.mxu0 0.0
  %3525 = vmatpush2.msra.mxu0 0.0
  %3526 = vmatprep.subr.mxu0 0.0
  %3527 = vmatpush2.msra.mxu0 0.0
  %3528 = vmatprep.subr.mxu0 0.0
  %3529 = vmatpush2.msra.mxu0 0.0
  %3530 = vmatprep.subr.mxu0 0.0
  %3531 = vmatpush2.msra.mxu0 0.0
  %3532 = vmatprep.subr.mxu0 0.0
  %3533 = vmatpush2.msra.mxu0 0.0
  %3534 = vmatprep.subr.mxu0 0.0
  %3535 = vmatpush2.msra.mxu0 0.0
  %3536 = vmatprep.subr.mxu0 0.0
  %3537 = vmatpush2.msra.mxu0 0.0
  %3538 = vmatprep.subr.mxu0 0.0
  %3539 = vmatpush2.msra.mxu0 0.0
  %3540 = vmatprep.subr.mxu0 0.0
  %3541 = vmatpush2.msra.mxu0 0.0
  %3542 = vmatprep.subr.mxu0 0.0
  %3543 = vmatpush2.msra.mxu0 0.0
  %3544 = vmatprep.subr.mxu0 0.0
  %3545 = vmatpush2.msra.mxu0 0.0
  %3546 = vmatprep.subr.mxu0 0.0
  %3547 = vmatpush2.msra.mxu0 0.0
  %3548 = vmatprep.subr.mxu0 0.0
  %3549 = vmatpush2.msra.mxu0 0.0
  %3550 = vmatprep.mubr.f32.mxu0 0.0
  %3551 = vmatmul.mubr.f32.gmra.mxu0 %v3481
  %v3552 = vpop.f32.mrf.mxu0
  %v3553 = vadd.f32 0.0, %v3552
  %v3554 = vpop.f32.mrf.mxu0
  %3555 = vmatprep.mubr.f32.mxu0 0.0
  %3556 = vmatmul.mubr.f32.gmra.mxu0 %v3484
  %v3557 = vpop.f32.mrf.mxu0
  %v3558 = vadd.f32 0.0, %v3557
  %v3559 = vpop.f32.mrf.mxu0
  %3560 = vdwg.mxu0
  %v3562 = vsel %vm520, %v3368, 0
  %v3565 = vsel %vm520, %v3370, 0
  %3567 = vmatprep.subr.mxu0 0.0
  %3568 = vmatpush1.msra.mxu0 0.0
  %3569 = vmatprep.subr.mxu0 0.0
  %3570 = vmatpush1.msra.mxu0 0.0
  %3571 = vmatprep.subr.mxu0 0.0
  %3572 = vmatpush1.msra.mxu0 0.0
  %3573 = vmatprep.subr.mxu0 0.0
  %3574 = vmatpush1.msra.mxu0 0.0
  %3575 = vmatprep.subr.mxu0 0.0
  %3576 = vmatpush1.msra.mxu0 0.0
  %3577 = vmatprep.subr.mxu0 0.0
  %3578 = vmatpush1.msra.mxu0 0.0
  %3579 = vmatprep.subr.mxu0 0.0
  %3580 = vmatpush1.msra.mxu0 0.0
  %3581 = vmatprep.subr.mxu0 0.0
  %3582 = vmatpush1.msra.mxu0 0.0
  %3583 = vmatprep.subr.mxu0 0.0
  %3584 = vmatpush1.msra.mxu0 0.0
  %3585 = vmatprep.subr.mxu0 0.0
  %3586 = vmatpush1.msra.mxu0 0.0
  %3587 = vmatprep.subr.mxu0 0.0
  %3588 = vmatpush1.msra.mxu0 0.0
  %3589 = vmatprep.subr.mxu0 0.0
  %3590 = vmatpush1.msra.mxu0 0.0
  %3591 = vmatprep.subr.mxu0 0.0
  %3592 = vmatpush1.msra.mxu0 0.0
  %3593 = vmatprep.subr.mxu0 0.0
  %3594 = vmatpush1.msra.mxu0 0.0
  %3595 = vmatprep.subr.mxu0 0.0
  %3596 = vmatpush1.msra.mxu0 %v3372
  %3597 = vmatprep.subr.mxu0 0.0
  %3598 = vmatpush1.msra.mxu0 %v3371
  %3599 = vmatprep.subr.mxu0 0.0
  %3600 = vmatpush2.msra.mxu0 0.0
  %3601 = vmatprep.subr.mxu0 0.0
  %3602 = vmatpush2.msra.mxu0 0.0
  %3603 = vmatprep.subr.mxu0 0.0
  %3604 = vmatpush2.msra.mxu0 0.0
  %3605 = vmatprep.subr.mxu0 0.0
  %3606 = vmatpush2.msra.mxu0 0.0
  %3607 = vmatprep.subr.mxu0 0.0
  %3608 = vmatpush2.msra.mxu0 0.0
  %3609 = vmatprep.subr.mxu0 0.0
  %3610 = vmatpush2.msra.mxu0 0.0
  %3611 = vmatprep.subr.mxu0 0.0
  %3612 = vmatpush2.msra.mxu0 0.0
  %3613 = vmatprep.subr.mxu0 0.0
  %3614 = vmatpush2.msra.mxu0 0.0
  %3615 = vmatprep.subr.mxu0 0.0
  %3616 = vmatpush2.msra.mxu0 0.0
  %3617 = vmatprep.subr.mxu0 0.0
  %3618 = vmatpush2.msra.mxu0 0.0
  %3619 = vmatprep.subr.mxu0 0.0
  %3620 = vmatpush2.msra.mxu0 0.0
  %3621 = vmatprep.subr.mxu0 0.0
  %3622 = vmatpush2.msra.mxu0 0.0
  %3623 = vmatprep.subr.mxu0 0.0
  %3624 = vmatpush2.msra.mxu0 0.0
  %3625 = vmatprep.subr.mxu0 0.0
  %3626 = vmatpush2.msra.mxu0 0.0
  %3627 = vmatprep.subr.mxu0 0.0
  %3628 = vmatpush2.msra.mxu0 0.0
  %3629 = vmatprep.subr.mxu0 0.0
  %3630 = vmatpush2.msra.mxu0 0.0
  %3631 = vmatprep.mubr.f32.mxu0 0.0
  %3632 = vmatmul.mubr.f32.gmra.mxu0 %v3562
  %v3633 = vpop.f32.mrf.mxu0
  %v3634 = vadd.f32 %v3553, %v3633
  %v3635 = vpop.f32.mrf.mxu0
  %3636 = vmatprep.mubr.f32.mxu0 0.0
  %3637 = vmatmul.mubr.f32.gmra.mxu0 %v3565
  %v3638 = vpop.f32.mrf.mxu0
  %v3639 = vadd.f32 %v3558, %v3638
  %v3640 = vpop.f32.mrf.mxu0
  %3641 = vdwg.mxu0
  %v3642 = vmul.f32 %v3076, %v75
  %v3643 = vmul.f32 %v3081, %v75
  %v3645 = vsel %vm173, %v3642, 0
  %v3648 = vsel %vm173, %v3643, 0
  %3650 = vmatprep.subr.mxu0 0.0
  %3651 = vmatpush1.xpose.msra.mxu0 0.0
  %3652 = vmatprep.subr.mxu0 0.0
  %3653 = vmatpush1.xpose.msra.mxu0 0.0
  %3654 = vmatprep.subr.mxu0 0.0
  %3655 = vmatpush1.xpose.msra.mxu0 0.0
  %3656 = vmatprep.subr.mxu0 0.0
  %3657 = vmatpush1.xpose.msra.mxu0 0.0
  %3658 = vmatprep.subr.mxu0 0.0
  %3659 = vmatpush1.xpose.msra.mxu0 0.0
  %3660 = vmatprep.subr.mxu0 0.0
  %3661 = vmatpush1.xpose.msra.mxu0 0.0
  %3662 = vmatprep.subr.mxu0 0.0
  %3663 = vmatpush1.xpose.msra.mxu0 0.0
  %3664 = vmatprep.subr.mxu0 0.0
  %3665 = vmatpush1.xpose.msra.mxu0 0.0
  %3666 = vmatprep.subr.mxu0 0.0
  %3667 = vmatpush1.xpose.msra.mxu0 0.0
  %3668 = vmatprep.subr.mxu0 0.0
  %3669 = vmatpush1.xpose.msra.mxu0 0.0
  %3670 = vmatprep.subr.mxu0 0.0
  %3671 = vmatpush1.xpose.msra.mxu0 0.0
  %3672 = vmatprep.subr.mxu0 0.0
  %3673 = vmatpush1.xpose.msra.mxu0 0.0
  %3674 = vmatprep.subr.mxu0 0.0
  %3675 = vmatpush1.xpose.msra.mxu0 0.0
  %3676 = vmatprep.subr.mxu0 0.0
  %3677 = vmatpush1.xpose.msra.mxu0 0.0
  %3678 = vmatprep.subr.mxu0 0.0
  %3679 = vmatpush1.xpose.msra.mxu0 %v3272
  %3680 = vmatprep.subr.mxu0 0.0
  %3681 = vmatpush1.xpose.msra.mxu0 %v3269
  %3682 = vmatprep.subr.mxu0 0.0
  %3683 = vmatpush2.xpose.msra.mxu0 0.0
  %3684 = vmatprep.subr.mxu0 0.0
  %3685 = vmatpush2.xpose.msra.mxu0 0.0
  %3686 = vmatprep.subr.mxu0 0.0
  %3687 = vmatpush2.xpose.msra.mxu0 0.0
  %3688 = vmatprep.subr.mxu0 0.0
  %3689 = vmatpush2.xpose.msra.mxu0 0.0
  %3690 = vmatprep.subr.mxu0 0.0
  %3691 = vmatpush2.xpose.msra.mxu0 0.0
  %3692 = vmatprep.subr.mxu0 0.0
  %3693 = vmatpush2.xpose.msra.mxu0 0.0
  %3694 = vmatprep.subr.mxu0 0.0
  %3695 = vmatpush2.xpose.msra.mxu0 0.0
  %3696 = vmatprep.subr.mxu0 0.0
  %3697 = vmatpush2.xpose.msra.mxu0 0.0
  %3698 = vmatprep.subr.mxu0 0.0
  %3699 = vmatpush2.xpose.msra.mxu0 0.0
  %3700 = vmatprep.subr.mxu0 0.0
  %3701 = vmatpush2.xpose.msra.mxu0 0.0
  %3702 = vmatprep.subr.mxu0 0.0
  %3703 = vmatpush2.xpose.msra.mxu0 0.0
  %3704 = vmatprep.subr.mxu0 0.0
  %3705 = vmatpush2.xpose.msra.mxu0 0.0
  %3706 = vmatprep.subr.mxu0 0.0
  %3707 = vmatpush2.xpose.msra.mxu0 0.0
  %3708 = vmatprep.subr.mxu0 0.0
  %3709 = vmatpush2.xpose.msra.mxu0 0.0
  %3710 = vmatprep.subr.mxu0 0.0
  %3711 = vmatpush2.xpose.msra.mxu0 0.0
  %3712 = vmatprep.subr.mxu0 0.0
  %3713 = vmatpush2.xpose.msra.mxu0 0.0
  %3714 = vmatprep.mubr.f32.mxu0 0.0
  %3715 = vmatmul.mubr.f32.gmra.mxu0 %v3645
  %v3716 = vpop.f32.mrf.mxu0
  %v3717 = vadd.f32 %v154, %v3716
  %v3718 = vpop.f32.mrf.mxu0
  %3719 = vmatprep.mubr.f32.mxu0 0.0
  %3720 = vmatmul.mubr.f32.gmra.mxu0 %v3648
  %v3721 = vpop.f32.mrf.mxu0
  %v3722 = vadd.f32 %v155, %v3721
  %v3723 = vpop.f32.mrf.mxu0
  %3724 = vdwg.mxu0
  %v3725 = vsel %vm520, %v3717, -inf
  %3726 = vmax.xlane.f32.xlu0 %v3725
  %v3727 = vpop.xlane.xlu0 %3726
  %v3728 = vsel %vm520, %v3722, -inf
  %3729 = vmax.xlane.f32.xlu0 %v3728
  %v3730 = vpop.xlane.xlu0 %3729
  %v3731 = vsub.f32 %v3717, %v3727
  %v3732 = vsub.f32 %v3722, %v3730
  %v3733 = vmul.f32 %v3731, 1.442695
  %v3734 = vpow.pop %v3733
  %v3735 = vmul.f32 %v3732, 1.442695
  %v3736 = vpow.pop %v3735
  %v3737 = vsel %vm520, %v3734, 0.0
  %3738 = vadd.xlane.f32.xlu0 %v3737
  %v3739 = vpop.xlane.xlu0 %3738
  %v3740 = vsel %vm520, %v3736, 0.0
  %3741 = vadd.xlane.f32.xlu0 %v3740
  %v3742 = vpop.xlane.xlu0 %3741
  %v3743 = vrcp.pop %v3739
  %v3744 = vmul.f32 %v3734, %v3743
  %v3745 = vrcp.pop %v3742
  %v3746 = vmul.f32 %v3736, %v3745
  %v3747 = vmul.f32 %v3252, %v75
  %v3748 = vmul.f32 %v3257, %v75
  %v3750 = vsel %vm520, %v3744, 0
  %v3753 = vsel %vm520, %v3746, 0
  %3755 = vmatprep.subr.mxu0 0.0
  %3756 = vmatpush1.msra.mxu0 0.0
  %3757 = vmatprep.subr.mxu0 0.0
  %3758 = vmatpush1.msra.mxu0 0.0
  %3759 = vmatprep.subr.mxu0 0.0
  %3760 = vmatpush1.msra.mxu0 0.0
  %3761 = vmatprep.subr.mxu0 0.0
  %3762 = vmatpush1.msra.mxu0 0.0
  %3763 = vmatprep.subr.mxu0 0.0
  %3764 = vmatpush1.msra.mxu0 0.0
  %3765 = vmatprep.subr.mxu0 0.0
  %3766 = vmatpush1.msra.mxu0 0.0
  %3767 = vmatprep.subr.mxu0 0.0
  %3768 = vmatpush1.msra.mxu0 0.0
  %3769 = vmatprep.subr.mxu0 0.0
  %3770 = vmatpush1.msra.mxu0 0.0
  %3771 = vmatprep.subr.mxu0 0.0
  %3772 = vmatpush1.msra.mxu0 0.0
  %3773 = vmatprep.subr.mxu0 0.0
  %3774 = vmatpush1.msra.mxu0 0.0
  %3775 = vmatprep.subr.mxu0 0.0
  %3776 = vmatpush1.msra.mxu0 0.0
  %3777 = vmatprep.subr.mxu0 0.0
  %3778 = vmatpush1.msra.mxu0 0.0
  %3779 = vmatprep.subr.mxu0 0.0
  %3780 = vmatpush1.msra.mxu0 0.0
  %3781 = vmatprep.subr.mxu0 0.0
  %3782 = vmatpush1.msra.mxu0 0.0
  %3783 = vmatprep.subr.mxu0 0.0
  %3784 = vmatpush1.msra.mxu0 %v3748
  %3785 = vmatprep.subr.mxu0 0.0
  %3786 = vmatpush1.msra.mxu0 %v3747
  %3787 = vmatprep.subr.mxu0 0.0
  %3788 = vmatpush2.msra.mxu0 0.0
  %3789 = vmatprep.subr.mxu0 0.0
  %3790 = vmatpush2.msra.mxu0 0.0
  %3791 = vmatprep.subr.mxu0 0.0
  %3792 = vmatpush2.msra.mxu0 0.0
  %3793 = vmatprep.subr.mxu0 0.0
  %3794 = vmatpush2.msra.mxu0 0.0
  %3795 = vmatprep.subr.mxu0 0.0
  %3796 = vmatpush2.msra.mxu0 0.0
  %3797 = vmatprep.subr.mxu0 0.0
  %3798 = vmatpush2.msra.mxu0 0.0
  %3799 = vmatprep.subr.mxu0 0.0
  %3800 = vmatpush2.msra.mxu0 0.0
  %3801 = vmatprep.subr.mxu0 0.0
  %3802 = vmatpush2.msra.mxu0 0.0
  %3803 = vmatprep.subr.mxu0 0.0
  %3804 = vmatpush2.msra.mxu0 0.0
  %3805 = vmatprep.subr.mxu0 0.0
  %3806 = vmatpush2.msra.mxu0 0.0
  %3807 = vmatprep.subr.mxu0 0.0
  %3808 = vmatpush2.msra.mxu0 0.0
  %3809 = vmatprep.subr.mxu0 0.0
  %3810 = vmatpush2.msra.mxu0 0.0
  %3811 = vmatprep.subr.mxu0 0.0
  %3812 = vmatpush2.msra.mxu0 0.0
  %3813 = vmatprep.subr.mxu0 0.0
  %3814 = vmatpush2.msra.mxu0 0.0
  %3815 = vmatprep.subr.mxu0 0.0
  %3816 = vmatpush2.msra.mxu0 0.0
  %3817 = vmatprep.subr.mxu0 0.0
  %3818 = vmatpush2.msra.mxu0 0.0
  %3819 = vmatprep.mubr.f32.mxu0 0.0
  %3820 = vmatmul.mubr.f32.gmra.mxu0 %v3750
  %v3821 = vpop.f32.mrf.mxu0
  %v3822 = vadd.f32 0.0, %v3821
  %v3823 = vpop.f32.mrf.mxu0
  %3824 = vmatprep.mubr.f32.mxu0 0.0
  %3825 = vmatmul.mubr.f32.gmra.mxu0 %v3753
  %v3826 = vpop.f32.mrf.mxu0
  %v3827 = vadd.f32 0.0, %v3826
  %v3828 = vpop.f32.mrf.mxu0
  %3829 = vdwg.mxu0
  %v3830 = vadd.f32 %v3634, %v3822
  %v3831 = vadd.f32 %v3639, %v3827
  %v3832 = vmul.f32 %v3076, %v79
  %v3833 = vmul.f32 %v3081, %v79
  %v3835 = vsel %vm173, %v3832, 0
  %v3838 = vsel %vm173, %v3833, 0
  %3840 = vmatprep.subr.mxu0 0.0
  %3841 = vmatpush1.xpose.msra.mxu0 0.0
  %3842 = vmatprep.subr.mxu0 0.0
  %3843 = vmatpush1.xpose.msra.mxu0 0.0
  %3844 = vmatprep.subr.mxu0 0.0
  %3845 = vmatpush1.xpose.msra.mxu0 0.0
  %3846 = vmatprep.subr.mxu0 0.0
  %3847 = vmatpush1.xpose.msra.mxu0 0.0
  %3848 = vmatprep.subr.mxu0 0.0
  %3849 = vmatpush1.xpose.msra.mxu0 0.0
  %3850 = vmatprep.subr.mxu0 0.0
  %3851 = vmatpush1.xpose.msra.mxu0 0.0
  %3852 = vmatprep.subr.mxu0 0.0
  %3853 = vmatpush1.xpose.msra.mxu0 0.0
  %3854 = vmatprep.subr.mxu0 0.0
  %3855 = vmatpush1.xpose.msra.mxu0 0.0
  %3856 = vmatprep.subr.mxu0 0.0
  %3857 = vmatpush1.xpose.msra.mxu0 0.0
  %3858 = vmatprep.subr.mxu0 0.0
  %3859 = vmatpush1.xpose.msra.mxu0 0.0
  %3860 = vmatprep.subr.mxu0 0.0
  %3861 = vmatpush1.xpose.msra.mxu0 0.0
  %3862 = vmatprep.subr.mxu0 0.0
  %3863 = vmatpush1.xpose.msra.mxu0 0.0
  %3864 = vmatprep.subr.mxu0 0.0
  %3865 = vmatpush1.xpose.msra.mxu0 0.0
  %3866 = vmatprep.subr.mxu0 0.0
  %3867 = vmatpush1.xpose.msra.mxu0 0.0
  %3868 = vmatprep.subr.mxu0 0.0
  %3869 = vmatpush1.xpose.msra.mxu0 %v3272
  %3870 = vmatprep.subr.mxu0 0.0
  %3871 = vmatpush1.xpose.msra.mxu0 %v3269
  %3872 = vmatprep.subr.mxu0 0.0
  %3873 = vmatpush2.xpose.msra.mxu0 0.0
  %3874 = vmatprep.subr.mxu0 0.0
  %3875 = vmatpush2.xpose.msra.mxu0 0.0
  %3876 = vmatprep.subr.mxu0 0.0
  %3877 = vmatpush2.xpose.msra.mxu0 0.0
  %3878 = vmatprep.subr.mxu0 0.0
  %3879 = vmatpush2.xpose.msra.mxu0 0.0
  %3880 = vmatprep.subr.mxu0 0.0
  %3881 = vmatpush2.xpose.msra.mxu0 0.0
  %3882 = vmatprep.subr.mxu0 0.0
  %3883 = vmatpush2.xpose.msra.mxu0 0.0
  %3884 = vmatprep.subr.mxu0 0.0
  %3885 = vmatpush2.xpose.msra.mxu0 0.0
  %3886 = vmatprep.subr.mxu0 0.0
  %3887 = vmatpush2.xpose.msra.mxu0 0.0
  %3888 = vmatprep.subr.mxu0 0.0
  %3889 = vmatpush2.xpose.msra.mxu0 0.0
  %3890 = vmatprep.subr.mxu0 0.0
  %3891 = vmatpush2.xpose.msra.mxu0 0.0
  %3892 = vmatprep.subr.mxu0 0.0
  %3893 = vmatpush2.xpose.msra.mxu0 0.0
  %3894 = vmatprep.subr.mxu0 0.0
  %3895 = vmatpush2.xpose.msra.mxu0 0.0
  %3896 = vmatprep.subr.mxu0 0.0
  %3897 = vmatpush2.xpose.msra.mxu0 0.0
  %3898 = vmatprep.subr.mxu0 0.0
  %3899 = vmatpush2.xpose.msra.mxu0 0.0
  %3900 = vmatprep.subr.mxu0 0.0
  %3901 = vmatpush2.xpose.msra.mxu0 0.0
  %3902 = vmatprep.subr.mxu0 0.0
  %3903 = vmatpush2.xpose.msra.mxu0 0.0
  %3904 = vmatprep.mubr.f32.mxu0 0.0
  %3905 = vmatmul.mubr.f32.gmra.mxu0 %v3835
  %v3906 = vpop.f32.mrf.mxu0
  %v3907 = vadd.f32 %v154, %v3906
  %v3908 = vpop.f32.mrf.mxu0
  %3909 = vmatprep.mubr.f32.mxu0 0.0
  %3910 = vmatmul.mubr.f32.gmra.mxu0 %v3838
  %v3911 = vpop.f32.mrf.mxu0
  %v3912 = vadd.f32 %v155, %v3911
  %v3913 = vpop.f32.mrf.mxu0
  %3914 = vdwg.mxu0
  %v3915 = vsel %vm520, %v3907, -inf
  %3916 = vmax.xlane.f32.xlu0 %v3915
  %v3917 = vpop.xlane.xlu0 %3916
  %v3918 = vsel %vm520, %v3912, -inf
  %3919 = vmax.xlane.f32.xlu0 %v3918
  %v3920 = vpop.xlane.xlu0 %3919
  %v3921 = vsub.f32 %v3907, %v3917
  %v3922 = vsub.f32 %v3912, %v3920
  %v3923 = vmul.f32 %v3921, 1.442695
  %v3924 = vpow.pop %v3923
  %v3925 = vmul.f32 %v3922, 1.442695
  %v3926 = vpow.pop %v3925
  %v3927 = vsel %vm520, %v3924, 0.0
  %3928 = vadd.xlane.f32.xlu0 %v3927
  %v3929 = vpop.xlane.xlu0 %3928
  %v3930 = vsel %vm520, %v3926, 0.0
  %3931 = vadd.xlane.f32.xlu0 %v3930
  %v3932 = vpop.xlane.xlu0 %3931
  %v3933 = vrcp.pop %v3929
  %v3934 = vmul.f32 %v3924, %v3933
  %v3935 = vrcp.pop %v3932
  %v3936 = vmul.f32 %v3926, %v3935
  %v3937 = vmul.f32 %v3252, %v79
  %v3938 = vmul.f32 %v3257, %v79
  %v3940 = vsel %vm520, %v3934, 0
  %v3943 = vsel %vm520, %v3936, 0
  %3945 = vmatprep.subr.mxu0 0.0
  %3946 = vmatpush1.msra.mxu0 0.0
  %3947 = vmatprep.subr.mxu0 0.0
  %3948 = vmatpush1.msra.mxu0 0.0
  %3949 = vmatprep.subr.mxu0 0.0
  %3950 = vmatpush1.msra.mxu0 0.0
  %3951 = vmatprep.subr.mxu0 0.0
  %3952 = vmatpush1.msra.mxu0 0.0
  %3953 = vmatprep.subr.mxu0 0.0
  %3954 = vmatpush1.msra.mxu0 0.0
  %3955 = vmatprep.subr.mxu0 0.0
  %3956 = vmatpush1.msra.mxu0 0.0
  %3957 = vmatprep.subr.mxu0 0.0
  %3958 = vmatpush1.msra.mxu0 0.0
  %3959 = vmatprep.subr.mxu0 0.0
  %3960 = vmatpush1.msra.mxu0 0.0
  %3961 = vmatprep.subr.mxu0 0.0
  %3962 = vmatpush1.msra.mxu0 0.0
  %3963 = vmatprep.subr.mxu0 0.0
  %3964 = vmatpush1.msra.mxu0 0.0
  %3965 = vmatprep.subr.mxu0 0.0
  %3966 = vmatpush1.msra.mxu0 0.0
  %3967 = vmatprep.subr.mxu0 0.0
  %3968 = vmatpush1.msra.mxu0 0.0
  %3969 = vmatprep.subr.mxu0 0.0
  %3970 = vmatpush1.msra.mxu0 0.0
  %3971 = vmatprep.subr.mxu0 0.0
  %3972 = vmatpush1.msra.mxu0 0.0
  %3973 = vmatprep.subr.mxu0 0.0
  %3974 = vmatpush1.msra.mxu0 %v3938
  %3975 = vmatprep.subr.mxu0 0.0
  %3976 = vmatpush1.msra.mxu0 %v3937
  %3977 = vmatprep.subr.mxu0 0.0
  %3978 = vmatpush2.msra.mxu0 0.0
  %3979 = vmatprep.subr.mxu0 0.0
  %3980 = vmatpush2.msra.mxu0 0.0
  %3981 = vmatprep.subr.mxu0 0.0
  %3982 = vmatpush2.msra.mxu0 0.0
  %3983 = vmatprep.subr.mxu0 0.0
  %3984 = vmatpush2.msra.mxu0 0.0
  %3985 = vmatprep.subr.mxu0 0.0
  %3986 = vmatpush2.msra.mxu0 0.0
  %3987 = vmatprep.subr.mxu0 0.0
  %3988 = vmatpush2.msra.mxu0 0.0
  %3989 = vmatprep.subr.mxu0 0.0
  %3990 = vmatpush2.msra.mxu0 0.0
  %3991 = vmatprep.subr.mxu0 0.0
  %3992 = vmatpush2.msra.mxu0 0.0
  %3993 = vmatprep.subr.mxu0 0.0
  %3994 = vmatpush2.msra.mxu0 0.0
  %3995 = vmatprep.subr.mxu0 0.0
  %3996 = vmatpush2.msra.mxu0 0.0
  %3997 = vmatprep.subr.mxu0 0.0
  %3998 = vmatpush2.msra.mxu0 0.0
  %3999 = vmatprep.subr.mxu0 0.0
  %4000 = vmatpush2.msra.mxu0 0.0
  %4001 = vmatprep.subr.mxu0 0.0
  %4002 = vmatpush2.msra.mxu0 0.0
  %4003 = vmatprep.subr.mxu0 0.0
  %4004 = vmatpush2.msra.mxu0 0.0
  %4005 = vmatprep.subr.mxu0 0.0
  %4006 = vmatpush2.msra.mxu0 0.0
  %4007 = vmatprep.subr.mxu0 0.0
  %4008 = vmatpush2.msra.mxu0 0.0
  %4009 = vmatprep.mubr.f32.mxu0 0.0
  %4010 = vmatmul.mubr.f32.gmra.mxu0 %v3940
  %v4011 = vpop.f32.mrf.mxu0
  %v4012 = vadd.f32 0.0, %v4011
  %v4013 = vpop.f32.mrf.mxu0
  %4014 = vmatprep.mubr.f32.mxu0 0.0
  %4015 = vmatmul.mubr.f32.gmra.mxu0 %v3943
  %v4016 = vpop.f32.mrf.mxu0
  %v4017 = vadd.f32 0.0, %v4016
  %v4018 = vpop.f32.mrf.mxu0
  %4019 = vdwg.mxu0
  %v4020 = vadd.f32 %v3830, %v4012
  %v4021 = vadd.f32 %v3831, %v4017
  %s4022 = scalar_lea.vmem %s9, 64
  %v4023 = vld [vmem:[%s4022] sm:$0xff]
  %v4024 = vld [vmem:[%s4022 + $0x8] sm:$0xff]
  %v4025 = vld [vmem:[%s4022 + $0x10] sm:$0xff]
  %v4026 = vld [vmem:[%s4022 + $0x18] sm:$0xff]
  %s4027 = scalar_lea.vmem %s10, 2
  %v4028 = vld [vmem:[%s4027] sm:$0x1]
  %v4030 = vlaneseq
  %v4031 = vshrl.u32 %v4030, 7
  %v4032 = vsub.s32 0, %v4031
  %v4033 = vrot.slane %v4028, %v4032
  %v4036 = vsel %vm173, %v4020, 0
  %v4039 = vsel %vm173, %v4021, 0
  %4041 = vmatprep.subr.mxu0 0.0
  %4042 = vmatpush1.msra.mxu0 0.0
  %4043 = vmatprep.subr.mxu0 0.0
  %4044 = vmatpush1.msra.mxu0 0.0
  %4045 = vmatprep.subr.mxu0 0.0
  %4046 = vmatpush1.msra.mxu0 0.0
  %4047 = vmatprep.subr.mxu0 0.0
  %4048 = vmatpush1.msra.mxu0 0.0
  %4049 = vmatprep.subr.mxu0 0.0
  %4050 = vmatpush1.msra.mxu0 0.0
  %4051 = vmatprep.subr.mxu0 0.0
  %4052 = vmatpush1.msra.mxu0 0.0
  %4053 = vmatprep.subr.mxu0 0.0
  %4054 = vmatpush1.msra.mxu0 0.0
  %4055 = vmatprep.subr.mxu0 0.0
  %4056 = vmatpush1.msra.mxu0 0.0
  %4057 = vmatprep.subr.mxu0 0.0
  %4058 = vmatpush1.msra.mxu0 0.0
  %4059 = vmatprep.subr.mxu0 0.0
  %4060 = vmatpush1.msra.mxu0 0.0
  %4061 = vmatprep.subr.mxu0 0.0
  %4062 = vmatpush1.msra.mxu0 0.0
  %4063 = vmatprep.subr.mxu0 0.0
  %4064 = vmatpush1.msra.mxu0 0.0
  %4065 = vmatprep.subr.mxu0 0.0
  %4066 = vmatpush1.msra.mxu0 %v4026
  %4067 = vmatprep.subr.mxu0 0.0
  %4068 = vmatpush1.msra.mxu0 %v4025
  %4069 = vmatprep.subr.mxu0 0.0
  %4070 = vmatpush1.msra.mxu0 %v4024
  %4071 = vmatprep.subr.mxu0 0.0
  %4072 = vmatpush1.msra.mxu0 %v4023
  %4073 = vmatprep.subr.mxu0 0.0
  %4074 = vmatpush2.msra.mxu0 0.0
  %4075 = vmatprep.subr.mxu0 0.0
  %4076 = vmatpush2.msra.mxu0 0.0
  %4077 = vmatprep.subr.mxu0 0.0
  %4078 = vmatpush2.msra.mxu0 0.0
  %4079 = vmatprep.subr.mxu0 0.0
  %4080 = vmatpush2.msra.mxu0 0.0
  %4081 = vmatprep.subr.mxu0 0.0
  %4082 = vmatpush2.msra.mxu0 0.0
  %4083 = vmatprep.subr.mxu0 0.0
  %4084 = vmatpush2.msra.mxu0 0.0
  %4085 = vmatprep.subr.mxu0 0.0
  %4086 = vmatpush2.msra.mxu0 0.0
  %4087 = vmatprep.subr.mxu0 0.0
  %4088 = vmatpush2.msra.mxu0 0.0
  %4089 = vmatprep.subr.mxu0 0.0
  %4090 = vmatpush2.msra.mxu0 0.0
  %4091 = vmatprep.subr.mxu0 0.0
  %4092 = vmatpush2.msra.mxu0 0.0
  %4093 = vmatprep.subr.mxu0 0.0
  %4094 = vmatpush2.msra.mxu0 0.0
  %4095 = vmatprep.subr.mxu0 0.0
  %4096 = vmatpush2.msra.mxu0 0.0
  %4097 = vmatprep.subr.mxu0 0.0
  %4098 = vmatpush2.msra.mxu0 0.0
  %4099 = vmatprep.subr.mxu0 0.0
  %4100 = vmatpush2.msra.mxu0 0.0
  %4101 = vmatprep.subr.mxu0 0.0
  %4102 = vmatpush2.msra.mxu0 0.0
  %4103 = vmatprep.subr.mxu0 0.0
  %4104 = vmatpush2.msra.mxu0 0.0
  %4105 = vmatprep.mubr.f32.mxu0 0.0
  %4106 = vmatmul.mubr.f32.gmra.mxu0 %v4036
  %v4107 = vpop.f32.mrf.mxu0
  %v4108 = vadd.f32 %v4033, %v4107
  %v4109 = vpop.f32.mrf.mxu0
  %4110 = vmatprep.mubr.f32.mxu0 0.0
  %4111 = vmatmul.mubr.f32.gmra.mxu0 %v4039
  %v4112 = vpop.f32.mrf.mxu0
  %v4113 = vadd.f32 %v4033, %v4112
  %v4114 = vpop.f32.mrf.mxu0
  %4115 = vdwg.mxu0
  %v4116 = vadd.f32 %v2988, %v4108
  %v4117 = vadd.f32 %v2989, %v4113
  %s4118 = scalar_lea.vmem %s15, 4
  %v4119 = vld [vmem:[%s4118] sm:$0x1]
  %s4120 = scalar_lea.vmem %s16, 4
  %v4121 = vld [vmem:[%s4120] sm:$0x1]
  %v4122 = vsel %vm173, %v4116, 0.0
  %4123 = vadd.xlane.f32.xlu0 %v4122
  %v4124 = vpop.xlane.xlu0 %4123
  %v4125 = vsel %vm173, %v4117, 0.0
  %4126 = vadd.xlane.f32.xlu0 %v4125
  %v4127 = vpop.xlane.xlu0 %4126
  %v4128 = vmul.f32 %v4124, %v1296
  %v4129 = vmul.f32 %v4127, %v1296
  %v4130 = vsub.f32 %v4116, %v4128
  %v4131 = vsub.f32 %v4117, %v4129
  %v4132 = vmul.f32 %v4130, %v4130
  %v4133 = vmul.f32 %v4131, %v4131
  %v4134 = vsel %vm173, %v4132, 0.0
  %4135 = vadd.xlane.f32.xlu0 %v4134
  %v4136 = vpop.xlane.xlu0 %4135
  %v4137 = vsel %vm173, %v4133, 0.0
  %4138 = vadd.xlane.f32.xlu0 %v4137
  %v4139 = vpop.xlane.xlu0 %4138
  %v4140 = vmul.f32 %v4136, %v1296
  %v4141 = vmul.f32 %v4139, %v1296
  %v4142 = vadd.f32 %v4140, 1e-05
  %v4143 = vadd.f32 %v4141, 1e-05
  %v4144 = vrsqrt.pop %v4142
  %v4145 = vrsqrt.pop %v4143
  %v4146 = vmul.f32 %v4130, %v4144
  %v4147 = vmul.f32 %v4131, %v4145
  %v4149 = vlaneseq
  %v4150 = vshrl.u32 %v4149, 7
  %v4151 = vsub.s32 0, %v4150
  %v4152 = vrot.slane %v4119, %v4151
  %v4154 = vmul.f32 %v4146, %v4152
  %v4155 = vmul.f32 %v4147, %v4152
  %v4157 = vlaneseq
  %v4158 = vshrl.u32 %v4157, 7
  %v4159 = vsub.s32 0, %v4158
  %v4160 = vrot.slane %v4121, %v4159
  %v4162 = vadd.f32 %v4154, %v4160
  %v4163 = vadd.f32 %v4155, %v4160
  %s4164 = scalar_lea.vmem %s7, 288
  %v4165 = vld [vmem:[%s4164] sm:$0xff]
  %v4166 = vld [vmem:[%s4164 + $0x8] sm:$0xff]
  %v4167 = vld [vmem:[%s4164 + $0x10] sm:$0xff]
  %v4168 = vld [vmem:[%s4164 + $0x18] sm:$0xff]
  %s4169 = scalar_lea.vmem %s8, 9
  %v4170 = vld [vmem:[%s4169] sm:$0x1]
  %v4172 = vlaneseq
  %v4173 = vshrl.u32 %v4172, 7
  %v4174 = vsub.s32 0, %v4173
  %v4175 = vrot.slane %v4170, %v4174
  %v4178 = vsel %vm173, %v4162, 0
  %v4181 = vsel %vm173, %v4163, 0
  %4183 = vmatprep.subr.mxu0 0.0
  %4184 = vmatpush1.msra.mxu0 0.0
  %4185 = vmatprep.subr.mxu0 0.0
  %4186 = vmatpush1.msra.mxu0 0.0
  %4187 = vmatprep.subr.mxu0 0.0
  %4188 = vmatpush1.msra.mxu0 0.0
  %4189 = vmatprep.subr.mxu0 0.0
  %4190 = vmatpush1.msra.mxu0 0.0
  %4191 = vmatprep.subr.mxu0 0.0
  %4192 = vmatpush1.msra.mxu0 0.0
  %4193 = vmatprep.subr.mxu0 0.0
  %4194 = vmatpush1.msra.mxu0 0.0
  %4195 = vmatprep.subr.mxu0 0.0
  %4196 = vmatpush1.msra.mxu0 0.0
  %4197 = vmatprep.subr.mxu0 0.0
  %4198 = vmatpush1.msra.mxu0 0.0
  %4199 = vmatprep.subr.mxu0 0.0
  %4200 = vmatpush1.msra.mxu0 0.0
  %4201 = vmatprep.subr.mxu0 0.0
  %4202 = vmatpush1.msra.mxu0 0.0
  %4203 = vmatprep.subr.mxu0 0.0
  %4204 = vmatpush1.msra.mxu0 0.0
  %4205 = vmatprep.subr.mxu0 0.0
  %4206 = vmatpush1.msra.mxu0 0.0
  %4207 = vmatprep.subr.mxu0 0.0
  %4208 = vmatpush1.msra.mxu0 %v4168
  %4209 = vmatprep.subr.mxu0 0.0
  %4210 = vmatpush1.msra.mxu0 %v4167
  %4211 = vmatprep.subr.mxu0 0.0
  %4212 = vmatpush1.msra.mxu0 %v4166
  %4213 = vmatprep.subr.mxu0 0.0
  %4214 = vmatpush1.msra.mxu0 %v4165
  %4215 = vmatprep.subr.mxu0 0.0
  %4216 = vmatpush2.msra.mxu0 0.0
  %4217 = vmatprep.subr.mxu0 0.0
  %4218 = vmatpush2.msra.mxu0 0.0
  %4219 = vmatprep.subr.mxu0 0.0
  %4220 = vmatpush2.msra.mxu0 0.0
  %4221 = vmatprep.subr.mxu0 0.0
  %4222 = vmatpush2.msra.mxu0 0.0
  %4223 = vmatprep.subr.mxu0 0.0
  %4224 = vmatpush2.msra.mxu0 0.0
  %4225 = vmatprep.subr.mxu0 0.0
  %4226 = vmatpush2.msra.mxu0 0.0
  %4227 = vmatprep.subr.mxu0 0.0
  %4228 = vmatpush2.msra.mxu0 0.0
  %4229 = vmatprep.subr.mxu0 0.0
  %4230 = vmatpush2.msra.mxu0 0.0
  %4231 = vmatprep.subr.mxu0 0.0
  %4232 = vmatpush2.msra.mxu0 0.0
  %4233 = vmatprep.subr.mxu0 0.0
  %4234 = vmatpush2.msra.mxu0 0.0
  %4235 = vmatprep.subr.mxu0 0.0
  %4236 = vmatpush2.msra.mxu0 0.0
  %4237 = vmatprep.subr.mxu0 0.0
  %4238 = vmatpush2.msra.mxu0 0.0
  %4239 = vmatprep.subr.mxu0 0.0
  %4240 = vmatpush2.msra.mxu0 0.0
  %4241 = vmatprep.subr.mxu0 0.0
  %4242 = vmatpush2.msra.mxu0 0.0
  %4243 = vmatprep.subr.mxu0 0.0
  %4244 = vmatpush2.msra.mxu0 0.0
  %4245 = vmatprep.subr.mxu0 0.0
  %4246 = vmatpush2.msra.mxu0 0.0
  %4247 = vmatprep.mubr.f32.mxu0 0.0
  %4248 = vmatmul.mubr.f32.gmra.mxu0 %v4178
  %v4249 = vpop.f32.mrf.mxu0
  %v4250 = vadd.f32 %v4175, %v4249
  %v4251 = vpop.f32.mrf.mxu0
  %4252 = vmatprep.mubr.f32.mxu0 0.0
  %4253 = vmatmul.mubr.f32.gmra.mxu0 %v4181
  %v4254 = vpop.f32.mrf.mxu0
  %v4255 = vadd.f32 %v4175, %v4254
  %v4256 = vpop.f32.mrf.mxu0
  %4257 = vdwg.mxu0
  %s4258 = scalar_lea.vmem %s7, 320
  %v4259 = vld [vmem:[%s4258] sm:$0xff]
  %v4260 = vld [vmem:[%s4258 + $0x8] sm:$0xff]
  %v4261 = vld [vmem:[%s4258 + $0x10] sm:$0xff]
  %v4262 = vld [vmem:[%s4258 + $0x18] sm:$0xff]
  %s4263 = scalar_lea.vmem %s8, 10
  %v4264 = vld [vmem:[%s4263] sm:$0x1]
  %v4266 = vlaneseq
  %v4267 = vshrl.u32 %v4266, 7
  %v4268 = vsub.s32 0, %v4267
  %v4269 = vrot.slane %v4264, %v4268
  %v4272 = vsel %vm173, %v2986, 0
  %v4275 = vsel %vm173, %v2987, 0
  %4277 = vmatprep.subr.mxu0 0.0
  %4278 = vmatpush1.msra.mxu0 0.0
  %4279 = vmatprep.subr.mxu0 0.0
  %4280 = vmatpush1.msra.mxu0 0.0
  %4281 = vmatprep.subr.mxu0 0.0
  %4282 = vmatpush1.msra.mxu0 0.0
  %4283 = vmatprep.subr.mxu0 0.0
  %4284 = vmatpush1.msra.mxu0 0.0
  %4285 = vmatprep.subr.mxu0 0.0
  %4286 = vmatpush1.msra.mxu0 0.0
  %4287 = vmatprep.subr.mxu0 0.0
  %4288 = vmatpush1.msra.mxu0 0.0
  %4289 = vmatprep.subr.mxu0 0.0
  %4290 = vmatpush1.msra.mxu0 0.0
  %4291 = vmatprep.subr.mxu0 0.0
  %4292 = vmatpush1.msra.mxu0 0.0
  %4293 = vmatprep.subr.mxu0 0.0
  %4294 = vmatpush1.msra.mxu0 0.0
  %4295 = vmatprep.subr.mxu0 0.0
  %4296 = vmatpush1.msra.mxu0 0.0
  %4297 = vmatprep.subr.mxu0 0.0
  %4298 = vmatpush1.msra.mxu0 0.0
  %4299 = vmatprep.subr.mxu0 0.0
  %4300 = vmatpush1.msra.mxu0 0.0
  %4301 = vmatprep.subr.mxu0 0.0
  %4302 = vmatpush1.msra.mxu0 %v4262
  %4303 = vmatprep.subr.mxu0 0.0
  %4304 = vmatpush1.msra.mxu0 %v4261
  %4305 = vmatprep.subr.mxu0 0.0
  %4306 = vmatpush1.msra.mxu0 %v4260
  %4307 = vmatprep.subr.mxu0 0.0
  %4308 = vmatpush1.msra.mxu0 %v4259
  %4309 = vmatprep.subr.mxu0 0.0
  %4310 = vmatpush2.msra.mxu0 0.0
  %4311 = vmatprep.subr.mxu0 0.0
  %4312 = vmatpush2.msra.mxu0 0.0
  %4313 = vmatprep.subr.mxu0 0.0
  %4314 = vmatpush2.msra.mxu0 0.0
  %4315 = vmatprep.subr.mxu0 0.0
  %4316 = vmatpush2.msra.mxu0 0.0
  %4317 = vmatprep.subr.mxu0 0.0
  %4318 = vmatpush2.msra.mxu0 0.0
  %4319 = vmatprep.subr.mxu0 0.0
  %4320 = vmatpush2.msra.mxu0 0.0
  %4321 = vmatprep.subr.mxu0 0.0
  %4322 = vmatpush2.msra.mxu0 0.0
  %4323 = vmatprep.subr.mxu0 0.0
  %4324 = vmatpush2.msra.mxu0 0.0
  %4325 = vmatprep.subr.mxu0 0.0
  %4326 = vmatpush2.msra.mxu0 0.0
  %4327 = vmatprep.subr.mxu0 0.0
  %4328 = vmatpush2.msra.mxu0 0.0
  %4329 = vmatprep.subr.mxu0 0.0
  %4330 = vmatpush2.msra.mxu0 0.0
  %4331 = vmatprep.subr.mxu0 0.0
  %4332 = vmatpush2.msra.mxu0 0.0
  %4333 = vmatprep.subr.mxu0 0.0
  %4334 = vmatpush2.msra.mxu0 0.0
  %4335 = vmatprep.subr.mxu0 0.0
  %4336 = vmatpush2.msra.mxu0 0.0
  %4337 = vmatprep.subr.mxu0 0.0
  %4338 = vmatpush2.msra.mxu0 0.0
  %4339 = vmatprep.subr.mxu0 0.0
  %4340 = vmatpush2.msra.mxu0 0.0
  %4341 = vmatprep.mubr.f32.mxu0 0.0
  %4342 = vmatmul.mubr.f32.gmra.mxu0 %v4272
  %v4343 = vpop.f32.mrf.mxu0
  %v4344 = vadd.f32 %v4269, %v4343
  %v4345 = vpop.f32.mrf.mxu0
  %4346 = vmatprep.mubr.f32.mxu0 0.0
  %4347 = vmatmul.mubr.f32.gmra.mxu0 %v4275
  %v4348 = vpop.f32.mrf.mxu0
  %v4349 = vadd.f32 %v4269, %v4348
  %v4350 = vpop.f32.mrf.mxu0
  %4351 = vdwg.mxu0
  %s4352 = scalar_lea.vmem %s7, 352
  %v4353 = vld [vmem:[%s4352] sm:$0xff]
  %v4354 = vld [vmem:[%s4352 + $0x8] sm:$0xff]
  %v4355 = vld [vmem:[%s4352 + $0x10] sm:$0xff]
  %v4356 = vld [vmem:[%s4352 + $0x18] sm:$0xff]
  %s4357 = scalar_lea.vmem %s8, 11
  %v4358 = vld [vmem:[%s4357] sm:$0x1]
  %v4360 = vlaneseq
  %v4361 = vshrl.u32 %v4360, 7
  %v4362 = vsub.s32 0, %v4361
  %v4363 = vrot.slane %v4358, %v4362
  %4365 = vmatprep.subr.mxu0 0.0
  %4366 = vmatpush1.msra.mxu0 0.0
  %4367 = vmatprep.subr.mxu0 0.0
  %4368 = vmatpush1.msra.mxu0 0.0
  %4369 = vmatprep.subr.mxu0 0.0
  %4370 = vmatpush1.msra.mxu0 0.0
  %4371 = vmatprep.subr.mxu0 0.0
  %4372 = vmatpush1.msra.mxu0 0.0
  %4373 = vmatprep.subr.mxu0 0.0
  %4374 = vmatpush1.msra.mxu0 0.0
  %4375 = vmatprep.subr.mxu0 0.0
  %4376 = vmatpush1.msra.mxu0 0.0
  %4377 = vmatprep.subr.mxu0 0.0
  %4378 = vmatpush1.msra.mxu0 0.0
  %4379 = vmatprep.subr.mxu0 0.0
  %4380 = vmatpush1.msra.mxu0 0.0
  %4381 = vmatprep.subr.mxu0 0.0
  %4382 = vmatpush1.msra.mxu0 0.0
  %4383 = vmatprep.subr.mxu0 0.0
  %4384 = vmatpush1.msra.mxu0 0.0
  %4385 = vmatprep.subr.mxu0 0.0
  %4386 = vmatpush1.msra.mxu0 0.0
  %4387 = vmatprep.subr.mxu0 0.0
  %4388 = vmatpush1.msra.mxu0 0.0
  %4389 = vmatprep.subr.mxu0 0.0
  %4390 = vmatpush1.msra.mxu0 %v4356
  %4391 = vmatprep.subr.mxu0 0.0
  %4392 = vmatpush1.msra.mxu0 %v4355
  %4393 = vmatprep.subr.mxu0 0.0
  %4394 = vmatpush1.msra.mxu0 %v4354
  %4395 = vmatprep.subr.mxu0 0.0
  %4396 = vmatpush1.msra.mxu0 %v4353
  %4397 = vmatprep.subr.mxu0 0.0
  %4398 = vmatpush2.msra.mxu0 0.0
  %4399 = vmatprep.subr.mxu0 0.0
  %4400 = vmatpush2.msra.mxu0 0.0
  %4401 = vmatprep.subr.mxu0 0.0
  %4402 = vmatpush2.msra.mxu0 0.0
  %4403 = vmatprep.subr.mxu0 0.0
  %4404 = vmatpush2.msra.mxu0 0.0
  %4405 = vmatprep.subr.mxu0 0.0
  %4406 = vmatpush2.msra.mxu0 0.0
  %4407 = vmatprep.subr.mxu0 0.0
  %4408 = vmatpush2.msra.mxu0 0.0
  %4409 = vmatprep.subr.mxu0 0.0
  %4410 = vmatpush2.msra.mxu0 0.0
  %4411 = vmatprep.subr.mxu0 0.0
  %4412 = vmatpush2.msra.mxu0 0.0
  %4413 = vmatprep.subr.mxu0 0.0
  %4414 = vmatpush2.msra.mxu0 0.0
  %4415 = vmatprep.subr.mxu0 0.0
  %4416 = vmatpush2.msra.mxu0 0.0
  %4417 = vmatprep.subr.mxu0 0.0
  %4418 = vmatpush2.msra.mxu0 0.0
  %4419 = vmatprep.subr.mxu0 0.0
  %4420 = vmatpush2.msra.mxu0 0.0
  %4421 = vmatprep.subr.mxu0 0.0
  %4422 = vmatpush2.msra.mxu0 0.0
  %4423 = vmatprep.subr.mxu0 0.0
  %4424 = vmatpush2.msra.mxu0 0.0
  %4425 = vmatprep.subr.mxu0 0.0
  %4426 = vmatpush2.msra.mxu0 0.0
  %4427 = vmatprep.subr.mxu0 0.0
  %4428 = vmatpush2.msra.mxu0 0.0
  %4429 = vmatprep.mubr.f32.mxu0 0.0
  %4430 = vmatmul.mubr.f32.gmra.mxu0 %v4272
  %v4431 = vpop.f32.mrf.mxu0
  %v4432 = vadd.f32 %v4363, %v4431
  %v4433 = vpop.f32.mrf.mxu0
  %4434 = vmatprep.mubr.f32.mxu0 0.0
  %4435 = vmatmul.mubr.f32.gmra.mxu0 %v4275
  %v4436 = vpop.f32.mrf.mxu0
  %v4437 = vadd.f32 %v4363, %v4436
  %v4438 = vpop.f32.mrf.mxu0
  %4439 = vdwg.mxu0
  %v4440 = vmul.f32 %v4250, %v67
  %v4441 = vmul.f32 %v4255, %v67
  %v4443 = vsel %vm173, %v4440, 0
  %v4446 = vsel %vm173, %v4441, 0
  %v4449 = vsel %vm173, %v4344, 0
  %v4452 = vsel %vm173, %v4349, 0
  %4454 = vmatprep.subr.mxu0 0.0
  %4455 = vmatpush1.xpose.msra.mxu0 0.0
  %4456 = vmatprep.subr.mxu0 0.0
  %4457 = vmatpush1.xpose.msra.mxu0 0.0
  %4458 = vmatprep.subr.mxu0 0.0
  %4459 = vmatpush1.xpose.msra.mxu0 0.0
  %4460 = vmatprep.subr.mxu0 0.0
  %4461 = vmatpush1.xpose.msra.mxu0 0.0
  %4462 = vmatprep.subr.mxu0 0.0
  %4463 = vmatpush1.xpose.msra.mxu0 0.0
  %4464 = vmatprep.subr.mxu0 0.0
  %4465 = vmatpush1.xpose.msra.mxu0 0.0
  %4466 = vmatprep.subr.mxu0 0.0
  %4467 = vmatpush1.xpose.msra.mxu0 0.0
  %4468 = vmatprep.subr.mxu0 0.0
  %4469 = vmatpush1.xpose.msra.mxu0 0.0
  %4470 = vmatprep.subr.mxu0 0.0
  %4471 = vmatpush1.xpose.msra.mxu0 0.0
  %4472 = vmatprep.subr.mxu0 0.0
  %4473 = vmatpush1.xpose.msra.mxu0 0.0
  %4474 = vmatprep.subr.mxu0 0.0
  %4475 = vmatpush1.xpose.msra.mxu0 0.0
  %4476 = vmatprep.subr.mxu0 0.0
  %4477 = vmatpush1.xpose.msra.mxu0 0.0
  %4478 = vmatprep.subr.mxu0 0.0
  %4479 = vmatpush1.xpose.msra.mxu0 0.0
  %4480 = vmatprep.subr.mxu0 0.0
  %4481 = vmatpush1.xpose.msra.mxu0 0.0
  %4482 = vmatprep.subr.mxu0 0.0
  %4483 = vmatpush1.xpose.msra.mxu0 %v4452
  %4484 = vmatprep.subr.mxu0 0.0
  %4485 = vmatpush1.xpose.msra.mxu0 %v4449
  %4486 = vmatprep.subr.mxu0 0.0
  %4487 = vmatpush2.xpose.msra.mxu0 0.0
  %4488 = vmatprep.subr.mxu0 0.0
  %4489 = vmatpush2.xpose.msra.mxu0 0.0
  %4490 = vmatprep.subr.mxu0 0.0
  %4491 = vmatpush2.xpose.msra.mxu0 0.0
  %4492 = vmatprep.subr.mxu0 0.0
  %4493 = vmatpush2.xpose.msra.mxu0 0.0
  %4494 = vmatprep.subr.mxu0 0.0
  %4495 = vmatpush2.xpose.msra.mxu0 0.0
  %4496 = vmatprep.subr.mxu0 0.0
  %4497 = vmatpush2.xpose.msra.mxu0 0.0
  %4498 = vmatprep.subr.mxu0 0.0
  %4499 = vmatpush2.xpose.msra.mxu0 0.0
  %4500 = vmatprep.subr.mxu0 0.0
  %4501 = vmatpush2.xpose.msra.mxu0 0.0
  %4502 = vmatprep.subr.mxu0 0.0
  %4503 = vmatpush2.xpose.msra.mxu0 0.0
  %4504 = vmatprep.subr.mxu0 0.0
  %4505 = vmatpush2.xpose.msra.mxu0 0.0
  %4506 = vmatprep.subr.mxu0 0.0
  %4507 = vmatpush2.xpose.msra.mxu0 0.0
  %4508 = vmatprep.subr.mxu0 0.0
  %4509 = vmatpush2.xpose.msra.mxu0 0.0
  %4510 = vmatprep.subr.mxu0 0.0
  %4511 = vmatpush2.xpose.msra.mxu0 0.0
  %4512 = vmatprep.subr.mxu0 0.0
  %4513 = vmatpush2.xpose.msra.mxu0 0.0
  %4514 = vmatprep.subr.mxu0 0.0
  %4515 = vmatpush2.xpose.msra.mxu0 0.0
  %4516 = vmatprep.subr.mxu0 0.0
  %4517 = vmatpush2.xpose.msra.mxu0 0.0
  %4518 = vmatprep.mubr.f32.mxu0 0.0
  %4519 = vmatmul.mubr.f32.gmra.mxu0 %v4443
  %v4520 = vpop.f32.mrf.mxu0
  %v4521 = vadd.f32 %v158, %v4520
  %v4522 = vpop.f32.mrf.mxu0
  %4523 = vmatprep.mubr.f32.mxu0 0.0
  %4524 = vmatmul.mubr.f32.gmra.mxu0 %v4446
  %v4525 = vpop.f32.mrf.mxu0
  %v4526 = vadd.f32 %v159, %v4525
  %v4527 = vpop.f32.mrf.mxu0
  %4528 = vdwg.mxu0
  %v4529 = vsel %vm520, %v4521, -inf
  %4530 = vmax.xlane.f32.xlu0 %v4529
  %v4531 = vpop.xlane.xlu0 %4530
  %v4532 = vsel %vm520, %v4526, -inf
  %4533 = vmax.xlane.f32.xlu0 %v4532
  %v4534 = vpop.xlane.xlu0 %4533
  %v4535 = vsub.f32 %v4521, %v4531
  %v4536 = vsub.f32 %v4526, %v4534
  %v4537 = vmul.f32 %v4535, 1.442695
  %v4538 = vpow.pop %v4537
  %v4539 = vmul.f32 %v4536, 1.442695
  %v4540 = vpow.pop %v4539
  %v4541 = vsel %vm520, %v4538, 0.0
  %4542 = vadd.xlane.f32.xlu0 %v4541
  %v4543 = vpop.xlane.xlu0 %4542
  %v4544 = vsel %vm520, %v4540, 0.0
  %4545 = vadd.xlane.f32.xlu0 %v4544
  %v4546 = vpop.xlane.xlu0 %4545
  %v4547 = vrcp.pop %v4543
  %v4548 = vmul.f32 %v4538, %v4547
  %v4549 = vrcp.pop %v4546
  %v4550 = vmul.f32 %v4540, %v4549
  %v4551 = vmul.f32 %v4432, %v67
  %v4552 = vmul.f32 %v4437, %v67
  %v4553 = vmul.f32 %v4250, %v71
  %v4554 = vmul.f32 %v4255, %v71
  %v4556 = vsel %vm173, %v4553, 0
  %v4559 = vsel %vm173, %v4554, 0
  %4561 = vmatprep.subr.mxu0 0.0
  %4562 = vmatpush1.xpose.msra.mxu0 0.0
  %4563 = vmatprep.subr.mxu0 0.0
  %4564 = vmatpush1.xpose.msra.mxu0 0.0
  %4565 = vmatprep.subr.mxu0 0.0
  %4566 = vmatpush1.xpose.msra.mxu0 0.0
  %4567 = vmatprep.subr.mxu0 0.0
  %4568 = vmatpush1.xpose.msra.mxu0 0.0
  %4569 = vmatprep.subr.mxu0 0.0
  %4570 = vmatpush1.xpose.msra.mxu0 0.0
  %4571 = vmatprep.subr.mxu0 0.0
  %4572 = vmatpush1.xpose.msra.mxu0 0.0
  %4573 = vmatprep.subr.mxu0 0.0
  %4574 = vmatpush1.xpose.msra.mxu0 0.0
  %4575 = vmatprep.subr.mxu0 0.0
  %4576 = vmatpush1.xpose.msra.mxu0 0.0
  %4577 = vmatprep.subr.mxu0 0.0
  %4578 = vmatpush1.xpose.msra.mxu0 0.0
  %4579 = vmatprep.subr.mxu0 0.0
  %4580 = vmatpush1.xpose.msra.mxu0 0.0
  %4581 = vmatprep.subr.mxu0 0.0
  %4582 = vmatpush1.xpose.msra.mxu0 0.0
  %4583 = vmatprep.subr.mxu0 0.0
  %4584 = vmatpush1.xpose.msra.mxu0 0.0
  %4585 = vmatprep.subr.mxu0 0.0
  %4586 = vmatpush1.xpose.msra.mxu0 0.0
  %4587 = vmatprep.subr.mxu0 0.0
  %4588 = vmatpush1.xpose.msra.mxu0 0.0
  %4589 = vmatprep.subr.mxu0 0.0
  %4590 = vmatpush1.xpose.msra.mxu0 %v4452
  %4591 = vmatprep.subr.mxu0 0.0
  %4592 = vmatpush1.xpose.msra.mxu0 %v4449
  %4593 = vmatprep.subr.mxu0 0.0
  %4594 = vmatpush2.xpose.msra.mxu0 0.0
  %4595 = vmatprep.subr.mxu0 0.0
  %4596 = vmatpush2.xpose.msra.mxu0 0.0
  %4597 = vmatprep.subr.mxu0 0.0
  %4598 = vmatpush2.xpose.msra.mxu0 0.0
  %4599 = vmatprep.subr.mxu0 0.0
  %4600 = vmatpush2.xpose.msra.mxu0 0.0
  %4601 = vmatprep.subr.mxu0 0.0
  %4602 = vmatpush2.xpose.msra.mxu0 0.0
  %4603 = vmatprep.subr.mxu0 0.0
  %4604 = vmatpush2.xpose.msra.mxu0 0.0
  %4605 = vmatprep.subr.mxu0 0.0
  %4606 = vmatpush2.xpose.msra.mxu0 0.0
  %4607 = vmatprep.subr.mxu0 0.0
  %4608 = vmatpush2.xpose.msra.mxu0 0.0
  %4609 = vmatprep.subr.mxu0 0.0
  %4610 = vmatpush2.xpose.msra.mxu0 0.0
  %4611 = vmatprep.subr.mxu0 0.0
  %4612 = vmatpush2.xpose.msra.mxu0 0.0
  %4613 = vmatprep.subr.mxu0 0.0
  %4614 = vmatpush2.xpose.msra.mxu0 0.0
  %4615 = vmatprep.subr.mxu0 0.0
  %4616 = vmatpush2.xpose.msra.mxu0 0.0
  %4617 = vmatprep.subr.mxu0 0.0
  %4618 = vmatpush2.xpose.msra.mxu0 0.0
  %4619 = vmatprep.subr.mxu0 0.0
  %4620 = vmatpush2.xpose.msra.mxu0 0.0
  %4621 = vmatprep.subr.mxu0 0.0
  %4622 = vmatpush2.xpose.msra.mxu0 0.0
  %4623 = vmatprep.subr.mxu0 0.0
  %4624 = vmatpush2.xpose.msra.mxu0 0.0
  %4625 = vmatprep.mubr.f32.mxu0 0.0
  %4626 = vmatmul.mubr.f32.gmra.mxu0 %v4556
  %v4627 = vpop.f32.mrf.mxu0
  %v4628 = vadd.f32 %v158, %v4627
  %v4629 = vpop.f32.mrf.mxu0
  %4630 = vmatprep.mubr.f32.mxu0 0.0
  %4631 = vmatmul.mubr.f32.gmra.mxu0 %v4559
  %v4632 = vpop.f32.mrf.mxu0
  %v4633 = vadd.f32 %v159, %v4632
  %v4634 = vpop.f32.mrf.mxu0
  %4635 = vdwg.mxu0
  %v4636 = vsel %vm520, %v4628, -inf
  %4637 = vmax.xlane.f32.xlu0 %v4636
  %v4638 = vpop.xlane.xlu0 %4637
  %v4639 = vsel %vm520, %v4633, -inf
  %4640 = vmax.xlane.f32.xlu0 %v4639
  %v4641 = vpop.xlane.xlu0 %4640
  %v4642 = vsub.f32 %v4628, %v4638
  %v4643 = vsub.f32 %v4633, %v4641
  %v4644 = vmul.f32 %v4642, 1.442695
  %v4645 = vpow.pop %v4644
  %v4646 = vmul.f32 %v4643, 1.442695
  %v4647 = vpow.pop %v4646
  %v4648 = vsel %vm520, %v4645, 0.0
  %4649 = vadd.xlane.f32.xlu0 %v4648
  %v4650 = vpop.xlane.xlu0 %4649
  %v4651 = vsel %vm520, %v4647, 0.0
  %4652 = vadd.xlane.f32.xlu0 %v4651
  %v4653 = vpop.xlane.xlu0 %4652
  %v4654 = vrcp.pop %v4650
  %v4655 = vmul.f32 %v4645, %v4654
  %v4656 = vrcp.pop %v4653
  %v4657 = vmul.f32 %v4647, %v4656
  %v4658 = vmul.f32 %v4432, %v71
  %v4659 = vmul.f32 %v4437, %v71
  %v4661 = vsel %vm520, %v4655, 0
  %v4664 = vsel %vm520, %v4657, 0
  %4666 = vmatprep.subr.mxu0 0.0
  %4667 = vmatpush1.msra.mxu0 0.0
  %4668 = vmatprep.subr.mxu0 0.0
  %4669 = vmatpush1.msra.mxu0 0.0
  %4670 = vmatprep.subr.mxu0 0.0
  %4671 = vmatpush1.msra.mxu0 0.0
  %4672 = vmatprep.subr.mxu0 0.0
  %4673 = vmatpush1.msra.mxu0 0.0
  %4674 = vmatprep.subr.mxu0 0.0
  %4675 = vmatpush1.msra.mxu0 0.0
  %4676 = vmatprep.subr.mxu0 0.0
  %4677 = vmatpush1.msra.mxu0 0.0
  %4678 = vmatprep.subr.mxu0 0.0
  %4679 = vmatpush1.msra.mxu0 0.0
  %4680 = vmatprep.subr.mxu0 0.0
  %4681 = vmatpush1.msra.mxu0 0.0
  %4682 = vmatprep.subr.mxu0 0.0
  %4683 = vmatpush1.msra.mxu0 0.0
  %4684 = vmatprep.subr.mxu0 0.0
  %4685 = vmatpush1.msra.mxu0 0.0
  %4686 = vmatprep.subr.mxu0 0.0
  %4687 = vmatpush1.msra.mxu0 0.0
  %4688 = vmatprep.subr.mxu0 0.0
  %4689 = vmatpush1.msra.mxu0 0.0
  %4690 = vmatprep.subr.mxu0 0.0
  %4691 = vmatpush1.msra.mxu0 0.0
  %4692 = vmatprep.subr.mxu0 0.0
  %4693 = vmatpush1.msra.mxu0 0.0
  %4694 = vmatprep.subr.mxu0 0.0
  %4695 = vmatpush1.msra.mxu0 %v4659
  %4696 = vmatprep.subr.mxu0 0.0
  %4697 = vmatpush1.msra.mxu0 %v4658
  %4698 = vmatprep.subr.mxu0 0.0
  %4699 = vmatpush2.msra.mxu0 0.0
  %4700 = vmatprep.subr.mxu0 0.0
  %4701 = vmatpush2.msra.mxu0 0.0
  %4702 = vmatprep.subr.mxu0 0.0
  %4703 = vmatpush2.msra.mxu0 0.0
  %4704 = vmatprep.subr.mxu0 0.0
  %4705 = vmatpush2.msra.mxu0 0.0
  %4706 = vmatprep.subr.mxu0 0.0
  %4707 = vmatpush2.msra.mxu0 0.0
  %4708 = vmatprep.subr.mxu0 0.0
  %4709 = vmatpush2.msra.mxu0 0.0
  %4710 = vmatprep.subr.mxu0 0.0
  %4711 = vmatpush2.msra.mxu0 0.0
  %4712 = vmatprep.subr.mxu0 0.0
  %4713 = vmatpush2.msra.mxu0 0.0
  %4714 = vmatprep.subr.mxu0 0.0
  %4715 = vmatpush2.msra.mxu0 0.0
  %4716 = vmatprep.subr.mxu0 0.0
  %4717 = vmatpush2.msra.mxu0 0.0
  %4718 = vmatprep.subr.mxu0 0.0
  %4719 = vmatpush2.msra.mxu0 0.0
  %4720 = vmatprep.subr.mxu0 0.0
  %4721 = vmatpush2.msra.mxu0 0.0
  %4722 = vmatprep.subr.mxu0 0.0
  %4723 = vmatpush2.msra.mxu0 0.0
  %4724 = vmatprep.subr.mxu0 0.0
  %4725 = vmatpush2.msra.mxu0 0.0
  %4726 = vmatprep.subr.mxu0 0.0
  %4727 = vmatpush2.msra.mxu0 0.0
  %4728 = vmatprep.subr.mxu0 0.0
  %4729 = vmatpush2.msra.mxu0 0.0
  %4730 = vmatprep.mubr.f32.mxu0 0.0
  %4731 = vmatmul.mubr.f32.gmra.mxu0 %v4661
  %v4732 = vpop.f32.mrf.mxu0
  %v4733 = vadd.f32 0.0, %v4732
  %v4734 = vpop.f32.mrf.mxu0
  %4735 = vmatprep.mubr.f32.mxu0 0.0
  %4736 = vmatmul.mubr.f32.gmra.mxu0 %v4664
  %v4737 = vpop.f32.mrf.mxu0
  %v4738 = vadd.f32 0.0, %v4737
  %v4739 = vpop.f32.mrf.mxu0
  %4740 = vdwg.mxu0
  %v4742 = vsel %vm520, %v4548, 0
  %v4745 = vsel %vm520, %v4550, 0
  %4747 = vmatprep.subr.mxu0 0.0
  %4748 = vmatpush1.msra.mxu0 0.0
  %4749 = vmatprep.subr.mxu0 0.0
  %4750 = vmatpush1.msra.mxu0 0.0
  %4751 = vmatprep.subr.mxu0 0.0
  %4752 = vmatpush1.msra.mxu0 0.0
  %4753 = vmatprep.subr.mxu0 0.0
  %4754 = vmatpush1.msra.mxu0 0.0
  %4755 = vmatprep.subr.mxu0 0.0
  %4756 = vmatpush1.msra.mxu0 0.0
  %4757 = vmatprep.subr.mxu0 0.0
  %4758 = vmatpush1.msra.mxu0 0.0
  %4759 = vmatprep.subr.mxu0 0.0
  %4760 = vmatpush1.msra.mxu0 0.0
  %4761 = vmatprep.subr.mxu0 0.0
  %4762 = vmatpush1.msra.mxu0 0.0
  %4763 = vmatprep.subr.mxu0 0.0
  %4764 = vmatpush1.msra.mxu0 0.0
  %4765 = vmatprep.subr.mxu0 0.0
  %4766 = vmatpush1.msra.mxu0 0.0
  %4767 = vmatprep.subr.mxu0 0.0
  %4768 = vmatpush1.msra.mxu0 0.0
  %4769 = vmatprep.subr.mxu0 0.0
  %4770 = vmatpush1.msra.mxu0 0.0
  %4771 = vmatprep.subr.mxu0 0.0
  %4772 = vmatpush1.msra.mxu0 0.0
  %4773 = vmatprep.subr.mxu0 0.0
  %4774 = vmatpush1.msra.mxu0 0.0
  %4775 = vmatprep.subr.mxu0 0.0
  %4776 = vmatpush1.msra.mxu0 %v4552
  %4777 = vmatprep.subr.mxu0 0.0
  %4778 = vmatpush1.msra.mxu0 %v4551
  %4779 = vmatprep.subr.mxu0 0.0
  %4780 = vmatpush2.msra.mxu0 0.0
  %4781 = vmatprep.subr.mxu0 0.0
  %4782 = vmatpush2.msra.mxu0 0.0
  %4783 = vmatprep.subr.mxu0 0.0
  %4784 = vmatpush2.msra.mxu0 0.0
  %4785 = vmatprep.subr.mxu0 0.0
  %4786 = vmatpush2.msra.mxu0 0.0
  %4787 = vmatprep.subr.mxu0 0.0
  %4788 = vmatpush2.msra.mxu0 0.0
  %4789 = vmatprep.subr.mxu0 0.0
  %4790 = vmatpush2.msra.mxu0 0.0
  %4791 = vmatprep.subr.mxu0 0.0
  %4792 = vmatpush2.msra.mxu0 0.0
  %4793 = vmatprep.subr.mxu0 0.0
  %4794 = vmatpush2.msra.mxu0 0.0
  %4795 = vmatprep.subr.mxu0 0.0
  %4796 = vmatpush2.msra.mxu0 0.0
  %4797 = vmatprep.subr.mxu0 0.0
  %4798 = vmatpush2.msra.mxu0 0.0
  %4799 = vmatprep.subr.mxu0 0.0
  %4800 = vmatpush2.msra.mxu0 0.0
  %4801 = vmatprep.subr.mxu0 0.0
  %4802 = vmatpush2.msra.mxu0 0.0
  %4803 = vmatprep.subr.mxu0 0.0
  %4804 = vmatpush2.msra.mxu0 0.0
  %4805 = vmatprep.subr.mxu0 0.0
  %4806 = vmatpush2.msra.mxu0 0.0
  %4807 = vmatprep.subr.mxu0 0.0
  %4808 = vmatpush2.msra.mxu0 0.0
  %4809 = vmatprep.subr.mxu0 0.0
  %4810 = vmatpush2.msra.mxu0 0.0
  %4811 = vmatprep.mubr.f32.mxu0 0.0
  %4812 = vmatmul.mubr.f32.gmra.mxu0 %v4742
  %v4813 = vpop.f32.mrf.mxu0
  %v4814 = vadd.f32 %v4733, %v4813
  %v4815 = vpop.f32.mrf.mxu0
  %4816 = vmatprep.mubr.f32.mxu0 0.0
  %4817 = vmatmul.mubr.f32.gmra.mxu0 %v4745
  %v4818 = vpop.f32.mrf.mxu0
  %v4819 = vadd.f32 %v4738, %v4818
  %v4820 = vpop.f32.mrf.mxu0
  %4821 = vdwg.mxu0
  %v4822 = vmul.f32 %v4250, %v75
  %v4823 = vmul.f32 %v4255, %v75
  %v4825 = vsel %vm173, %v4822, 0
  %v4828 = vsel %vm173, %v4823, 0
  %4830 = vmatprep.subr.mxu0 0.0
  %4831 = vmatpush1.xpose.msra.mxu0 0.0
  %4832 = vmatprep.subr.mxu0 0.0
  %4833 = vmatpush1.xpose.msra.mxu0 0.0
  %4834 = vmatprep.subr.mxu0 0.0
  %4835 = vmatpush1.xpose.msra.mxu0 0.0
  %4836 = vmatprep.subr.mxu0 0.0
  %4837 = vmatpush1.xpose.msra.mxu0 0.0
  %4838 = vmatprep.subr.mxu0 0.0
  %4839 = vmatpush1.xpose.msra.mxu0 0.0
  %4840 = vmatprep.subr.mxu0 0.0
  %4841 = vmatpush1.xpose.msra.mxu0 0.0
  %4842 = vmatprep.subr.mxu0 0.0
  %4843 = vmatpush1.xpose.msra.mxu0 0.0
  %4844 = vmatprep.subr.mxu0 0.0
  %4845 = vmatpush1.xpose.msra.mxu0 0.0
  %4846 = vmatprep.subr.mxu0 0.0
  %4847 = vmatpush1.xpose.msra.mxu0 0.0
  %4848 = vmatprep.subr.mxu0 0.0
  %4849 = vmatpush1.xpose.msra.mxu0 0.0
  %4850 = vmatprep.subr.mxu0 0.0
  %4851 = vmatpush1.xpose.msra.mxu0 0.0
  %4852 = vmatprep.subr.mxu0 0.0
  %4853 = vmatpush1.xpose.msra.mxu0 0.0
  %4854 = vmatprep.subr.mxu0 0.0
  %4855 = vmatpush1.xpose.msra.mxu0 0.0
  %4856 = vmatprep.subr.mxu0 0.0
  %4857 = vmatpush1.xpose.msra.mxu0 0.0
  %4858 = vmatprep.subr.mxu0 0.0
  %4859 = vmatpush1.xpose.msra.mxu0 %v4452
  %4860 = vmatprep.subr.mxu0 0.0
  %4861 = vmatpush1.xpose.msra.mxu0 %v4449
  %4862 = vmatprep.subr.mxu0 0.0
  %4863 = vmatpush2.xpose.msra.mxu0 0.0
  %4864 = vmatprep.subr.mxu0 0.0
  %4865 = vmatpush2.xpose.msra.mxu0 0.0
  %4866 = vmatprep.subr.mxu0 0.0
  %4867 = vmatpush2.xpose.msra.mxu0 0.0
  %4868 = vmatprep.subr.mxu0 0.0
  %4869 = vmatpush2.xpose.msra.mxu0 0.0
  %4870 = vmatprep.subr.mxu0 0.0
  %4871 = vmatpush2.xpose.msra.mxu0 0.0
  %4872 = vmatprep.subr.mxu0 0.0
  %4873 = vmatpush2.xpose.msra.mxu0 0.0
  %4874 = vmatprep.subr.mxu0 0.0
  %4875 = vmatpush2.xpose.msra.mxu0 0.0
  %4876 = vmatprep.subr.mxu0 0.0
  %4877 = vmatpush2.xpose.msra.mxu0 0.0
  %4878 = vmatprep.subr.mxu0 0.0
  %4879 = vmatpush2.xpose.msra.mxu0 0.0
  %4880 = vmatprep.subr.mxu0 0.0
  %4881 = vmatpush2.xpose.msra.mxu0 0.0
  %4882 = vmatprep.subr.mxu0 0.0
  %4883 = vmatpush2.xpose.msra.mxu0 0.0
  %4884 = vmatprep.subr.mxu0 0.0
  %4885 = vmatpush2.xpose.msra.mxu0 0.0
  %4886 = vmatprep.subr.mxu0 0.0
  %4887 = vmatpush2.xpose.msra.mxu0 0.0
  %4888 = vmatprep.subr.mxu0 0.0
  %4889 = vmatpush2.xpose.msra.mxu0 0.0
  %4890 = vmatprep.subr.mxu0 0.0
  %4891 = vmatpush2.xpose.msra.mxu0 0.0
  %4892 = vmatprep.subr.mxu0 0.0
  %4893 = vmatpush2.xpose.msra.mxu0 0.0
  %4894 = vmatprep.mubr.f32.mxu0 0.0
  %4895 = vmatmul.mubr.f32.gmra.mxu0 %v4825
  %v4896 = vpop.f32.mrf.mxu0
  %v4897 = vadd.f32 %v158, %v4896
  %v4898 = vpop.f32.mrf.mxu0
  %4899 = vmatprep.mubr.f32.mxu0 0.0
  %4900 = vmatmul.mubr.f32.gmra.mxu0 %v4828
  %v4901 = vpop.f32.mrf.mxu0
  %v4902 = vadd.f32 %v159, %v4901
  %v4903 = vpop.f32.mrf.mxu0
  %4904 = vdwg.mxu0
  %v4905 = vsel %vm520, %v4897, -inf
  %4906 = vmax.xlane.f32.xlu0 %v4905
  %v4907 = vpop.xlane.xlu0 %4906
  %v4908 = vsel %vm520, %v4902, -inf
  %4909 = vmax.xlane.f32.xlu0 %v4908
  %v4910 = vpop.xlane.xlu0 %4909
  %v4911 = vsub.f32 %v4897, %v4907
  %v4912 = vsub.f32 %v4902, %v4910
  %v4913 = vmul.f32 %v4911, 1.442695
  %v4914 = vpow.pop %v4913
  %v4915 = vmul.f32 %v4912, 1.442695
  %v4916 = vpow.pop %v4915
  %v4917 = vsel %vm520, %v4914, 0.0
  %4918 = vadd.xlane.f32.xlu0 %v4917
  %v4919 = vpop.xlane.xlu0 %4918
  %v4920 = vsel %vm520, %v4916, 0.0
  %4921 = vadd.xlane.f32.xlu0 %v4920
  %v4922 = vpop.xlane.xlu0 %4921
  %v4923 = vrcp.pop %v4919
  %v4924 = vmul.f32 %v4914, %v4923
  %v4925 = vrcp.pop %v4922
  %v4926 = vmul.f32 %v4916, %v4925
  %v4927 = vmul.f32 %v4432, %v75
  %v4928 = vmul.f32 %v4437, %v75
  %v4930 = vsel %vm520, %v4924, 0
  %v4933 = vsel %vm520, %v4926, 0
  %4935 = vmatprep.subr.mxu0 0.0
  %4936 = vmatpush1.msra.mxu0 0.0
  %4937 = vmatprep.subr.mxu0 0.0
  %4938 = vmatpush1.msra.mxu0 0.0
  %4939 = vmatprep.subr.mxu0 0.0
  %4940 = vmatpush1.msra.mxu0 0.0
  %4941 = vmatprep.subr.mxu0 0.0
  %4942 = vmatpush1.msra.mxu0 0.0
  %4943 = vmatprep.subr.mxu0 0.0
  %4944 = vmatpush1.msra.mxu0 0.0
  %4945 = vmatprep.subr.mxu0 0.0
  %4946 = vmatpush1.msra.mxu0 0.0
  %4947 = vmatprep.subr.mxu0 0.0
  %4948 = vmatpush1.msra.mxu0 0.0
  %4949 = vmatprep.subr.mxu0 0.0
  %4950 = vmatpush1.msra.mxu0 0.0
  %4951 = vmatprep.subr.mxu0 0.0
  %4952 = vmatpush1.msra.mxu0 0.0
  %4953 = vmatprep.subr.mxu0 0.0
  %4954 = vmatpush1.msra.mxu0 0.0
  %4955 = vmatprep.subr.mxu0 0.0
  %4956 = vmatpush1.msra.mxu0 0.0
  %4957 = vmatprep.subr.mxu0 0.0
  %4958 = vmatpush1.msra.mxu0 0.0
  %4959 = vmatprep.subr.mxu0 0.0
  %4960 = vmatpush1.msra.mxu0 0.0
  %4961 = vmatprep.subr.mxu0 0.0
  %4962 = vmatpush1.msra.mxu0 0.0
  %4963 = vmatprep.subr.mxu0 0.0
  %4964 = vmatpush1.msra.mxu0 %v4928
  %4965 = vmatprep.subr.mxu0 0.0
  %4966 = vmatpush1.msra.mxu0 %v4927
  %4967 = vmatprep.subr.mxu0 0.0
  %4968 = vmatpush2.msra.mxu0 0.0
  %4969 = vmatprep.subr.mxu0 0.0
  %4970 = vmatpush2.msra.mxu0 0.0
  %4971 = vmatprep.subr.mxu0 0.0
  %4972 = vmatpush2.msra.mxu0 0.0
  %4973 = vmatprep.subr.mxu0 0.0
  %4974 = vmatpush2.msra.mxu0 0.0
  %4975 = vmatprep.subr.mxu0 0.0
  %4976 = vmatpush2.msra.mxu0 0.0
  %4977 = vmatprep.subr.mxu0 0.0
  %4978 = vmatpush2.msra.mxu0 0.0
  %4979 = vmatprep.subr.mxu0 0.0
  %4980 = vmatpush2.msra.mxu0 0.0
  %4981 = vmatprep.subr.mxu0 0.0
  %4982 = vmatpush2.msra.mxu0 0.0
  %4983 = vmatprep.subr.mxu0 0.0
  %4984 = vmatpush2.msra.mxu0 0.0
  %4985 = vmatprep.subr.mxu0 0.0
  %4986 = vmatpush2.msra.mxu0 0.0
  %4987 = vmatprep.subr.mxu0 0.0
  %4988 = vmatpush2.msra.mxu0 0.0
  %4989 = vmatprep.subr.mxu0 0.0
  %4990 = vmatpush2.msra.mxu0 0.0
  %4991 = vmatprep.subr.mxu0 0.0
  %4992 = vmatpush2.msra.mxu0 0.0
  %4993 = vmatprep.subr.mxu0 0.0
  %4994 = vmatpush2.msra.mxu0 0.0
  %4995 = vmatprep.subr.mxu0 0.0
  %4996 = vmatpush2.msra.mxu0 0.0
  %4997 = vmatprep.subr.mxu0 0.0
  %4998 = vmatpush2.msra.mxu0 0.0
  %4999 = vmatprep.mubr.f32.mxu0 0.0
  %5000 = vmatmul.mubr.f32.gmra.mxu0 %v4930
  %v5001 = vpop.f32.mrf.mxu0
  %v5002 = vadd.f32 0.0, %v5001
  %v5003 = vpop.f32.mrf.mxu0
  %5004 = vmatprep.mubr.f32.mxu0 0.0
  %5005 = vmatmul.mubr.f32.gmra.mxu0 %v4933
  %v5006 = vpop.f32.mrf.mxu0
  %v5007 = vadd.f32 0.0, %v5006
  %v5008 = vpop.f32.mrf.mxu0
  %5009 = vdwg.mxu0
  %v5010 = vadd.f32 %v4814, %v5002
  %v5011 = vadd.f32 %v4819, %v5007
  %v5012 = vmul.f32 %v4250, %v79
  %v5013 = vmul.f32 %v4255, %v79
  %v5015 = vsel %vm173, %v5012, 0
  %v5018 = vsel %vm173, %v5013, 0
  %5020 = vmatprep.subr.mxu0 0.0
  %5021 = vmatpush1.xpose.msra.mxu0 0.0
  %5022 = vmatprep.subr.mxu0 0.0
  %5023 = vmatpush1.xpose.msra.mxu0 0.0
  %5024 = vmatprep.subr.mxu0 0.0
  %5025 = vmatpush1.xpose.msra.mxu0 0.0
  %5026 = vmatprep.subr.mxu0 0.0
  %5027 = vmatpush1.xpose.msra.mxu0 0.0
  %5028 = vmatprep.subr.mxu0 0.0
  %5029 = vmatpush1.xpose.msra.mxu0 0.0
  %5030 = vmatprep.subr.mxu0 0.0
  %5031 = vmatpush1.xpose.msra.mxu0 0.0
  %5032 = vmatprep.subr.mxu0 0.0
  %5033 = vmatpush1.xpose.msra.mxu0 0.0
  %5034 = vmatprep.subr.mxu0 0.0
  %5035 = vmatpush1.xpose.msra.mxu0 0.0
  %5036 = vmatprep.subr.mxu0 0.0
  %5037 = vmatpush1.xpose.msra.mxu0 0.0
  %5038 = vmatprep.subr.mxu0 0.0
  %5039 = vmatpush1.xpose.msra.mxu0 0.0
  %5040 = vmatprep.subr.mxu0 0.0
  %5041 = vmatpush1.xpose.msra.mxu0 0.0
  %5042 = vmatprep.subr.mxu0 0.0
  %5043 = vmatpush1.xpose.msra.mxu0 0.0
  %5044 = vmatprep.subr.mxu0 0.0
  %5045 = vmatpush1.xpose.msra.mxu0 0.0
  %5046 = vmatprep.subr.mxu0 0.0
  %5047 = vmatpush1.xpose.msra.mxu0 0.0
  %5048 = vmatprep.subr.mxu0 0.0
  %5049 = vmatpush1.xpose.msra.mxu0 %v4452
  %5050 = vmatprep.subr.mxu0 0.0
  %5051 = vmatpush1.xpose.msra.mxu0 %v4449
  %5052 = vmatprep.subr.mxu0 0.0
  %5053 = vmatpush2.xpose.msra.mxu0 0.0
  %5054 = vmatprep.subr.mxu0 0.0
  %5055 = vmatpush2.xpose.msra.mxu0 0.0
  %5056 = vmatprep.subr.mxu0 0.0
  %5057 = vmatpush2.xpose.msra.mxu0 0.0
  %5058 = vmatprep.subr.mxu0 0.0
  %5059 = vmatpush2.xpose.msra.mxu0 0.0
  %5060 = vmatprep.subr.mxu0 0.0
  %5061 = vmatpush2.xpose.msra.mxu0 0.0
  %5062 = vmatprep.subr.mxu0 0.0
  %5063 = vmatpush2.xpose.msra.mxu0 0.0
  %5064 = vmatprep.subr.mxu0 0.0
  %5065 = vmatpush2.xpose.msra.mxu0 0.0
  %5066 = vmatprep.subr.mxu0 0.0
  %5067 = vmatpush2.xpose.msra.mxu0 0.0
  %5068 = vmatprep.subr.mxu0 0.0
  %5069 = vmatpush2.xpose.msra.mxu0 0.0
  %5070 = vmatprep.subr.mxu0 0.0
  %5071 = vmatpush2.xpose.msra.mxu0 0.0
  %5072 = vmatprep.subr.mxu0 0.0
  %5073 = vmatpush2.xpose.msra.mxu0 0.0
  %5074 = vmatprep.subr.mxu0 0.0
  %5075 = vmatpush2.xpose.msra.mxu0 0.0
  %5076 = vmatprep.subr.mxu0 0.0
  %5077 = vmatpush2.xpose.msra.mxu0 0.0
  %5078 = vmatprep.subr.mxu0 0.0
  %5079 = vmatpush2.xpose.msra.mxu0 0.0
  %5080 = vmatprep.subr.mxu0 0.0
  %5081 = vmatpush2.xpose.msra.mxu0 0.0
  %5082 = vmatprep.subr.mxu0 0.0
  %5083 = vmatpush2.xpose.msra.mxu0 0.0
  %5084 = vmatprep.mubr.f32.mxu0 0.0
  %5085 = vmatmul.mubr.f32.gmra.mxu0 %v5015
  %v5086 = vpop.f32.mrf.mxu0
  %v5087 = vadd.f32 %v158, %v5086
  %v5088 = vpop.f32.mrf.mxu0
  %5089 = vmatprep.mubr.f32.mxu0 0.0
  %5090 = vmatmul.mubr.f32.gmra.mxu0 %v5018
  %v5091 = vpop.f32.mrf.mxu0
  %v5092 = vadd.f32 %v159, %v5091
  %v5093 = vpop.f32.mrf.mxu0
  %5094 = vdwg.mxu0
  %v5095 = vsel %vm520, %v5087, -inf
  %5096 = vmax.xlane.f32.xlu0 %v5095
  %v5097 = vpop.xlane.xlu0 %5096
  %v5098 = vsel %vm520, %v5092, -inf
  %5099 = vmax.xlane.f32.xlu0 %v5098
  %v5100 = vpop.xlane.xlu0 %5099
  %v5101 = vsub.f32 %v5087, %v5097
  %v5102 = vsub.f32 %v5092, %v5100
  %v5103 = vmul.f32 %v5101, 1.442695
  %v5104 = vpow.pop %v5103
  %v5105 = vmul.f32 %v5102, 1.442695
  %v5106 = vpow.pop %v5105
  %v5107 = vsel %vm520, %v5104, 0.0
  %5108 = vadd.xlane.f32.xlu0 %v5107
  %v5109 = vpop.xlane.xlu0 %5108
  %v5110 = vsel %vm520, %v5106, 0.0
  %5111 = vadd.xlane.f32.xlu0 %v5110
  %v5112 = vpop.xlane.xlu0 %5111
  %v5113 = vrcp.pop %v5109
  %v5114 = vmul.f32 %v5104, %v5113
  %v5115 = vrcp.pop %v5112
  %v5116 = vmul.f32 %v5106, %v5115
  %v5117 = vmul.f32 %v4432, %v79
  %v5118 = vmul.f32 %v4437, %v79
  %v5120 = vsel %vm520, %v5114, 0
  %v5123 = vsel %vm520, %v5116, 0
  %5125 = vmatprep.subr.mxu0 0.0
  %5126 = vmatpush1.msra.mxu0 0.0
  %5127 = vmatprep.subr.mxu0 0.0
  %5128 = vmatpush1.msra.mxu0 0.0
  %5129 = vmatprep.subr.mxu0 0.0
  %5130 = vmatpush1.msra.mxu0 0.0
  %5131 = vmatprep.subr.mxu0 0.0
  %5132 = vmatpush1.msra.mxu0 0.0
  %5133 = vmatprep.subr.mxu0 0.0
  %5134 = vmatpush1.msra.mxu0 0.0
  %5135 = vmatprep.subr.mxu0 0.0
  %5136 = vmatpush1.msra.mxu0 0.0
  %5137 = vmatprep.subr.mxu0 0.0
  %5138 = vmatpush1.msra.mxu0 0.0
  %5139 = vmatprep.subr.mxu0 0.0
  %5140 = vmatpush1.msra.mxu0 0.0
  %5141 = vmatprep.subr.mxu0 0.0
  %5142 = vmatpush1.msra.mxu0 0.0
  %5143 = vmatprep.subr.mxu0 0.0
  %5144 = vmatpush1.msra.mxu0 0.0
  %5145 = vmatprep.subr.mxu0 0.0
  %5146 = vmatpush1.msra.mxu0 0.0
  %5147 = vmatprep.subr.mxu0 0.0
  %5148 = vmatpush1.msra.mxu0 0.0
  %5149 = vmatprep.subr.mxu0 0.0
  %5150 = vmatpush1.msra.mxu0 0.0
  %5151 = vmatprep.subr.mxu0 0.0
  %5152 = vmatpush1.msra.mxu0 0.0
  %5153 = vmatprep.subr.mxu0 0.0
  %5154 = vmatpush1.msra.mxu0 %v5118
  %5155 = vmatprep.subr.mxu0 0.0
  %5156 = vmatpush1.msra.mxu0 %v5117
  %5157 = vmatprep.subr.mxu0 0.0
  %5158 = vmatpush2.msra.mxu0 0.0
  %5159 = vmatprep.subr.mxu0 0.0
  %5160 = vmatpush2.msra.mxu0 0.0
  %5161 = vmatprep.subr.mxu0 0.0
  %5162 = vmatpush2.msra.mxu0 0.0
  %5163 = vmatprep.subr.mxu0 0.0
  %5164 = vmatpush2.msra.mxu0 0.0
  %5165 = vmatprep.subr.mxu0 0.0
  %5166 = vmatpush2.msra.mxu0 0.0
  %5167 = vmatprep.subr.mxu0 0.0
  %5168 = vmatpush2.msra.mxu0 0.0
  %5169 = vmatprep.subr.mxu0 0.0
  %5170 = vmatpush2.msra.mxu0 0.0
  %5171 = vmatprep.subr.mxu0 0.0
  %5172 = vmatpush2.msra.mxu0 0.0
  %5173 = vmatprep.subr.mxu0 0.0
  %5174 = vmatpush2.msra.mxu0 0.0
  %5175 = vmatprep.subr.mxu0 0.0
  %5176 = vmatpush2.msra.mxu0 0.0
  %5177 = vmatprep.subr.mxu0 0.0
  %5178 = vmatpush2.msra.mxu0 0.0
  %5179 = vmatprep.subr.mxu0 0.0
  %5180 = vmatpush2.msra.mxu0 0.0
  %5181 = vmatprep.subr.mxu0 0.0
  %5182 = vmatpush2.msra.mxu0 0.0
  %5183 = vmatprep.subr.mxu0 0.0
  %5184 = vmatpush2.msra.mxu0 0.0
  %5185 = vmatprep.subr.mxu0 0.0
  %5186 = vmatpush2.msra.mxu0 0.0
  %5187 = vmatprep.subr.mxu0 0.0
  %5188 = vmatpush2.msra.mxu0 0.0
  %5189 = vmatprep.mubr.f32.mxu0 0.0
  %5190 = vmatmul.mubr.f32.gmra.mxu0 %v5120
  %v5191 = vpop.f32.mrf.mxu0
  %v5192 = vadd.f32 0.0, %v5191
  %v5193 = vpop.f32.mrf.mxu0
  %5194 = vmatprep.mubr.f32.mxu0 0.0
  %5195 = vmatmul.mubr.f32.gmra.mxu0 %v5123
  %v5196 = vpop.f32.mrf.mxu0
  %v5197 = vadd.f32 0.0, %v5196
  %v5198 = vpop.f32.mrf.mxu0
  %5199 = vdwg.mxu0
  %v5200 = vadd.f32 %v5010, %v5192
  %v5201 = vadd.f32 %v5011, %v5197
  %s5202 = scalar_lea.vmem %s9, 96
  %v5203 = vld [vmem:[%s5202] sm:$0xff]
  %v5204 = vld [vmem:[%s5202 + $0x8] sm:$0xff]
  %v5205 = vld [vmem:[%s5202 + $0x10] sm:$0xff]
  %v5206 = vld [vmem:[%s5202 + $0x18] sm:$0xff]
  %s5207 = scalar_lea.vmem %s10, 3
  %v5208 = vld [vmem:[%s5207] sm:$0x1]
  %v5210 = vlaneseq
  %v5211 = vshrl.u32 %v5210, 7
  %v5212 = vsub.s32 0, %v5211
  %v5213 = vrot.slane %v5208, %v5212
  %v5216 = vsel %vm173, %v5200, 0
  %v5219 = vsel %vm173, %v5201, 0
  %5221 = vmatprep.subr.mxu0 0.0
  %5222 = vmatpush1.msra.mxu0 0.0
  %5223 = vmatprep.subr.mxu0 0.0
  %5224 = vmatpush1.msra.mxu0 0.0
  %5225 = vmatprep.subr.mxu0 0.0
  %5226 = vmatpush1.msra.mxu0 0.0
  %5227 = vmatprep.subr.mxu0 0.0
  %5228 = vmatpush1.msra.mxu0 0.0
  %5229 = vmatprep.subr.mxu0 0.0
  %5230 = vmatpush1.msra.mxu0 0.0
  %5231 = vmatprep.subr.mxu0 0.0
  %5232 = vmatpush1.msra.mxu0 0.0
  %5233 = vmatprep.subr.mxu0 0.0
  %5234 = vmatpush1.msra.mxu0 0.0
  %5235 = vmatprep.subr.mxu0 0.0
  %5236 = vmatpush1.msra.mxu0 0.0
  %5237 = vmatprep.subr.mxu0 0.0
  %5238 = vmatpush1.msra.mxu0 0.0
  %5239 = vmatprep.subr.mxu0 0.0
  %5240 = vmatpush1.msra.mxu0 0.0
  %5241 = vmatprep.subr.mxu0 0.0
  %5242 = vmatpush1.msra.mxu0 0.0
  %5243 = vmatprep.subr.mxu0 0.0
  %5244 = vmatpush1.msra.mxu0 0.0
  %5245 = vmatprep.subr.mxu0 0.0
  %5246 = vmatpush1.msra.mxu0 %v5206
  %5247 = vmatprep.subr.mxu0 0.0
  %5248 = vmatpush1.msra.mxu0 %v5205
  %5249 = vmatprep.subr.mxu0 0.0
  %5250 = vmatpush1.msra.mxu0 %v5204
  %5251 = vmatprep.subr.mxu0 0.0
  %5252 = vmatpush1.msra.mxu0 %v5203
  %5253 = vmatprep.subr.mxu0 0.0
  %5254 = vmatpush2.msra.mxu0 0.0
  %5255 = vmatprep.subr.mxu0 0.0
  %5256 = vmatpush2.msra.mxu0 0.0
  %5257 = vmatprep.subr.mxu0 0.0
  %5258 = vmatpush2.msra.mxu0 0.0
  %5259 = vmatprep.subr.mxu0 0.0
  %5260 = vmatpush2.msra.mxu0 0.0
  %5261 = vmatprep.subr.mxu0 0.0
  %5262 = vmatpush2.msra.mxu0 0.0
  %5263 = vmatprep.subr.mxu0 0.0
  %5264 = vmatpush2.msra.mxu0 0.0
  %5265 = vmatprep.subr.mxu0 0.0
  %5266 = vmatpush2.msra.mxu0 0.0
  %5267 = vmatprep.subr.mxu0 0.0
  %5268 = vmatpush2.msra.mxu0 0.0
  %5269 = vmatprep.subr.mxu0 0.0
  %5270 = vmatpush2.msra.mxu0 0.0
  %5271 = vmatprep.subr.mxu0 0.0
  %5272 = vmatpush2.msra.mxu0 0.0
  %5273 = vmatprep.subr.mxu0 0.0
  %5274 = vmatpush2.msra.mxu0 0.0
  %5275 = vmatprep.subr.mxu0 0.0
  %5276 = vmatpush2.msra.mxu0 0.0
  %5277 = vmatprep.subr.mxu0 0.0
  %5278 = vmatpush2.msra.mxu0 0.0
  %5279 = vmatprep.subr.mxu0 0.0
  %5280 = vmatpush2.msra.mxu0 0.0
  %5281 = vmatprep.subr.mxu0 0.0
  %5282 = vmatpush2.msra.mxu0 0.0
  %5283 = vmatprep.subr.mxu0 0.0
  %5284 = vmatpush2.msra.mxu0 0.0
  %5285 = vmatprep.mubr.f32.mxu0 0.0
  %5286 = vmatmul.mubr.f32.gmra.mxu0 %v5216
  %v5287 = vpop.f32.mrf.mxu0
  %v5288 = vadd.f32 %v5213, %v5287
  %v5289 = vpop.f32.mrf.mxu0
  %5290 = vmatprep.mubr.f32.mxu0 0.0
  %5291 = vmatmul.mubr.f32.gmra.mxu0 %v5219
  %v5292 = vpop.f32.mrf.mxu0
  %v5293 = vadd.f32 %v5213, %v5292
  %v5294 = vpop.f32.mrf.mxu0
  %5295 = vdwg.mxu0
  %v5296 = vadd.f32 %v4162, %v5288
  %v5297 = vadd.f32 %v4163, %v5293
  %s5298 = scalar_lea.vmem %s15, 5
  %v5299 = vld [vmem:[%s5298] sm:$0x1]
  %s5300 = scalar_lea.vmem %s16, 5
  %v5301 = vld [vmem:[%s5300] sm:$0x1]
  %v5302 = vsel %vm173, %v5296, 0.0
  %5303 = vadd.xlane.f32.xlu0 %v5302
  %v5304 = vpop.xlane.xlu0 %5303
  %v5305 = vsel %vm173, %v5297, 0.0
  %5306 = vadd.xlane.f32.xlu0 %v5305
  %v5307 = vpop.xlane.xlu0 %5306
  %v5308 = vmul.f32 %v5304, %v1296
  %v5309 = vmul.f32 %v5307, %v1296
  %v5310 = vsub.f32 %v5296, %v5308
  %v5311 = vsub.f32 %v5297, %v5309
  %v5312 = vmul.f32 %v5310, %v5310
  %v5313 = vmul.f32 %v5311, %v5311
  %v5314 = vsel %vm173, %v5312, 0.0
  %5315 = vadd.xlane.f32.xlu0 %v5314
  %v5316 = vpop.xlane.xlu0 %5315
  %v5317 = vsel %vm173, %v5313, 0.0
  %5318 = vadd.xlane.f32.xlu0 %v5317
  %v5319 = vpop.xlane.xlu0 %5318
  %v5320 = vmul.f32 %v5316, %v1296
  %v5321 = vmul.f32 %v5319, %v1296
  %v5322 = vadd.f32 %v5320, 1e-05
  %v5323 = vadd.f32 %v5321, 1e-05
  %v5324 = vrsqrt.pop %v5322
  %v5325 = vrsqrt.pop %v5323
  %v5326 = vmul.f32 %v5310, %v5324
  %v5327 = vmul.f32 %v5311, %v5325
  %v5329 = vlaneseq
  %v5330 = vshrl.u32 %v5329, 7
  %v5331 = vsub.s32 0, %v5330
  %v5332 = vrot.slane %v5299, %v5331
  %v5334 = vmul.f32 %v5326, %v5332
  %v5335 = vmul.f32 %v5327, %v5332
  %v5337 = vlaneseq
  %v5338 = vshrl.u32 %v5337, 7
  %v5339 = vsub.s32 0, %v5338
  %v5340 = vrot.slane %v5301, %v5339
  %v5342 = vadd.f32 %v5334, %v5340
  %v5343 = vadd.f32 %v5335, %v5340
  %s5344 = scalar_lea.vmem %s11, 64
  %v5345 = vld [vmem:[%s5344] sm:$0xff]
  %v5346 = vld [vmem:[%s5344 + $0x8] sm:$0xff]
  %v5347 = vld [vmem:[%s5344 + $0x10] sm:$0xff]
  %v5348 = vld [vmem:[%s5344 + $0x18] sm:$0xff]
  %s5349 = scalar_lea.vmem %s12, 2
  %v5350 = vld [vmem:[%s5349] sm:$0x1]
  %v5352 = vlaneseq
  %v5353 = vshrl.u32 %v5352, 7
  %v5354 = vsub.s32 0, %v5353
  %v5355 = vrot.slane %v5350, %v5354
  %v5358 = vsel %vm173, %v5342, 0
  %v5361 = vsel %vm173, %v5343, 0
  %5363 = vmatprep.subr.mxu0 0.0
  %5364 = vmatpush1.msra.mxu0 0.0
  %5365 = vmatprep.subr.mxu0 0.0
  %5366 = vmatpush1.msra.mxu0 0.0
  %5367 = vmatprep.subr.mxu0 0.0
  %5368 = vmatpush1.msra.mxu0 0.0
  %5369 = vmatprep.subr.mxu0 0.0
  %5370 = vmatpush1.msra.mxu0 0.0
  %5371 = vmatprep.subr.mxu0 0.0
  %5372 = vmatpush1.msra.mxu0 0.0
  %5373 = vmatprep.subr.mxu0 0.0
  %5374 = vmatpush1.msra.mxu0 0.0
  %5375 = vmatprep.subr.mxu0 0.0
  %5376 = vmatpush1.msra.mxu0 0.0
  %5377 = vmatprep.subr.mxu0 0.0
  %5378 = vmatpush1.msra.mxu0 0.0
  %5379 = vmatprep.subr.mxu0 0.0
  %5380 = vmatpush1.msra.mxu0 0.0
  %5381 = vmatprep.subr.mxu0 0.0
  %5382 = vmatpush1.msra.mxu0 0.0
  %5383 = vmatprep.subr.mxu0 0.0
  %5384 = vmatpush1.msra.mxu0 0.0
  %5385 = vmatprep.subr.mxu0 0.0
  %5386 = vmatpush1.msra.mxu0 0.0
  %5387 = vmatprep.subr.mxu0 0.0
  %5388 = vmatpush1.msra.mxu0 %v5348
  %5389 = vmatprep.subr.mxu0 0.0
  %5390 = vmatpush1.msra.mxu0 %v5347
  %5391 = vmatprep.subr.mxu0 0.0
  %5392 = vmatpush1.msra.mxu0 %v5346
  %5393 = vmatprep.subr.mxu0 0.0
  %5394 = vmatpush1.msra.mxu0 %v5345
  %5395 = vmatprep.subr.mxu0 0.0
  %5396 = vmatpush2.msra.mxu0 0.0
  %5397 = vmatprep.subr.mxu0 0.0
  %5398 = vmatpush2.msra.mxu0 0.0
  %5399 = vmatprep.subr.mxu0 0.0
  %5400 = vmatpush2.msra.mxu0 0.0
  %5401 = vmatprep.subr.mxu0 0.0
  %5402 = vmatpush2.msra.mxu0 0.0
  %5403 = vmatprep.subr.mxu0 0.0
  %5404 = vmatpush2.msra.mxu0 0.0
  %5405 = vmatprep.subr.mxu0 0.0
  %5406 = vmatpush2.msra.mxu0 0.0
  %5407 = vmatprep.subr.mxu0 0.0
  %5408 = vmatpush2.msra.mxu0 0.0
  %5409 = vmatprep.subr.mxu0 0.0
  %5410 = vmatpush2.msra.mxu0 0.0
  %5411 = vmatprep.subr.mxu0 0.0
  %5412 = vmatpush2.msra.mxu0 0.0
  %5413 = vmatprep.subr.mxu0 0.0
  %5414 = vmatpush2.msra.mxu0 0.0
  %5415 = vmatprep.subr.mxu0 0.0
  %5416 = vmatpush2.msra.mxu0 0.0
  %5417 = vmatprep.subr.mxu0 0.0
  %5418 = vmatpush2.msra.mxu0 0.0
  %5419 = vmatprep.subr.mxu0 0.0
  %5420 = vmatpush2.msra.mxu0 0.0
  %5421 = vmatprep.subr.mxu0 0.0
  %5422 = vmatpush2.msra.mxu0 0.0
  %5423 = vmatprep.subr.mxu0 0.0
  %5424 = vmatpush2.msra.mxu0 0.0
  %5425 = vmatprep.subr.mxu0 0.0
  %5426 = vmatpush2.msra.mxu0 0.0
  %5427 = vmatprep.mubr.f32.mxu0 0.0
  %5428 = vmatmul.mubr.f32.gmra.mxu0 %v5358
  %v5429 = vpop.f32.mrf.mxu0
  %v5430 = vadd.f32 %v5355, %v5429
  %v5431 = vpop.f32.mrf.mxu0
  %5432 = vmatprep.mubr.f32.mxu0 0.0
  %5433 = vmatmul.mubr.f32.gmra.mxu0 %v5361
  %v5434 = vpop.f32.mrf.mxu0
  %v5435 = vadd.f32 %v5355, %v5434
  %v5436 = vpop.f32.mrf.mxu0
  %5437 = vdwg.mxu0
  %v5438 = vmax.f32 %v5430, 0.0
  %v5439 = vmax.f32 %v5435, 0.0
  %s5440 = scalar_lea.vmem %s13, 128
  %v5441 = vld [vmem:[%s5440] sm:$0xff]
  %v5442 = vld [vmem:[%s5440 + $0x8] sm:$0xff]
  %v5443 = vld [vmem:[%s5440 + $0x10] sm:$0xff]
  %v5444 = vld [vmem:[%s5440 + $0x18] sm:$0xff]
  %v5445 = vld [vmem:[%s5440 + $0x20] sm:$0xff]
  %v5446 = vld [vmem:[%s5440 + $0x28] sm:$0xff]
  %v5447 = vld [vmem:[%s5440 + $0x30] sm:$0xff]
  %v5448 = vld [vmem:[%s5440 + $0x38] sm:$0xff]
  %s5449 = scalar_lea.vmem %s14, 2
  %v5450 = vld [vmem:[%s5449] sm:$0x1]
  %v5452 = vlaneseq
  %v5453 = vshrl.u32 %v5452, 7
  %v5454 = vsub.s32 0, %v5453
  %v5455 = vrot.slane %v5450, %v5454
  %v5458 = vsel %vm1442, %v5438, 0
  %v5461 = vsel %vm1442, %v5439, 0
  %5463 = vmatprep.subr.mxu0 0.0
  %5464 = vmatpush1.msra.mxu0 0.0
  %5465 = vmatprep.subr.mxu0 0.0
  %5466 = vmatpush1.msra.mxu0 0.0
  %5467 = vmatprep.subr.mxu0 0.0
  %5468 = vmatpush1.msra.mxu0 0.0
  %5469 = vmatprep.subr.mxu0 0.0
  %5470 = vmatpush1.msra.mxu0 0.0
  %5471 = vmatprep.subr.mxu0 0.0
  %5472 = vmatpush1.msra.mxu0 0.0
  %5473 = vmatprep.subr.mxu0 0.0
  %5474 = vmatpush1.msra.mxu0 0.0
  %5475 = vmatprep.subr.mxu0 0.0
  %5476 = vmatpush1.msra.mxu0 0.0
  %5477 = vmatprep.subr.mxu0 0.0
  %5478 = vmatpush1.msra.mxu0 0.0
  %5479 = vmatprep.subr.mxu0 0.0
  %5480 = vmatpush1.msra.mxu0 %v5448
  %5481 = vmatprep.subr.mxu0 0.0
  %5482 = vmatpush1.msra.mxu0 %v5447
  %5483 = vmatprep.subr.mxu0 0.0
  %5484 = vmatpush1.msra.mxu0 %v5446
  %5485 = vmatprep.subr.mxu0 0.0
  %5486 = vmatpush1.msra.mxu0 %v5445
  %5487 = vmatprep.subr.mxu0 0.0
  %5488 = vmatpush1.msra.mxu0 %v5444
  %5489 = vmatprep.subr.mxu0 0.0
  %5490 = vmatpush1.msra.mxu0 %v5443
  %5491 = vmatprep.subr.mxu0 0.0
  %5492 = vmatpush1.msra.mxu0 %v5442
  %5493 = vmatprep.subr.mxu0 0.0
  %5494 = vmatpush1.msra.mxu0 %v5441
  %5495 = vmatprep.subr.mxu0 0.0
  %5496 = vmatpush2.msra.mxu0 0.0
  %5497 = vmatprep.subr.mxu0 0.0
  %5498 = vmatpush2.msra.mxu0 0.0
  %5499 = vmatprep.subr.mxu0 0.0
  %5500 = vmatpush2.msra.mxu0 0.0
  %5501 = vmatprep.subr.mxu0 0.0
  %5502 = vmatpush2.msra.mxu0 0.0
  %5503 = vmatprep.subr.mxu0 0.0
  %5504 = vmatpush2.msra.mxu0 0.0
  %5505 = vmatprep.subr.mxu0 0.0
  %5506 = vmatpush2.msra.mxu0 0.0
  %5507 = vmatprep.subr.mxu0 0.0
  %5508 = vmatpush2.msra.mxu0 0.0
  %5509 = vmatprep.subr.mxu0 0.0
  %5510 = vmatpush2.msra.mxu0 0.0
  %5511 = vmatprep.subr.mxu0 0.0
  %5512 = vmatpush2.msra.mxu0 0.0
  %5513 = vmatprep.subr.mxu0 0.0
  %5514 = vmatpush2.msra.mxu0 0.0
  %5515 = vmatprep.subr.mxu0 0.0
  %5516 = vmatpush2.msra.mxu0 0.0
  %5517 = vmatprep.subr.mxu0 0.0
  %5518 = vmatpush2.msra.mxu0 0.0
  %5519 = vmatprep.subr.mxu0 0.0
  %5520 = vmatpush2.msra.mxu0 0.0
  %5521 = vmatprep.subr.mxu0 0.0
  %5522 = vmatpush2.msra.mxu0 0.0
  %5523 = vmatprep.subr.mxu0 0.0
  %5524 = vmatpush2.msra.mxu0 0.0
  %5525 = vmatprep.subr.mxu0 0.0
  %5526 = vmatpush2.msra.mxu0 0.0
  %5527 = vmatprep.mubr.f32.mxu0 0.0
  %5528 = vmatmul.mubr.f32.gmra.mxu0 %v5458
  %v5529 = vpop.f32.mrf.mxu0
  %v5530 = vadd.f32 %v5455, %v5529
  %v5531 = vpop.f32.mrf.mxu0
  %5532 = vmatprep.mubr.f32.mxu0 0.0
  %5533 = vmatmul.mubr.f32.gmra.mxu0 %v5461
  %v5534 = vpop.f32.mrf.mxu0
  %v5535 = vadd.f32 %v5455, %v5534
  %v5536 = vpop.f32.mrf.mxu0
  %5537 = vdwg.mxu0
  %v5538 = vadd.f32 %v5342, %v5530
  %v5539 = vadd.f32 %v5343, %v5535
  %s5540 = scalar_lea.vmem %s15, 6
  %v5541 = vld [vmem:[%s5540] sm:$0x1]
  %s5542 = scalar_lea.vmem %s16, 6
  %v5543 = vld [vmem:[%s5542] sm:$0x1]
  %v5544 = vsel %vm173, %v5538, 0.0
  %5545 = vadd.xlane.f32.xlu0 %v5544
  %v5546 = vpop.xlane.xlu0 %5545
  %v5547 = vsel %vm173, %v5539, 0.0
  %5548 = vadd.xlane.f32.xlu0 %v5547
  %v5549 = vpop.xlane.xlu0 %5548
  %v5550 = vmul.f32 %v5546, %v1296
  %v5551 = vmul.f32 %v5549, %v1296
  %v5552 = vsub.f32 %v5538, %v5550
  %v5553 = vsub.f32 %v5539, %v5551
  %v5554 = vmul.f32 %v5552, %v5552
  %v5555 = vmul.f32 %v5553, %v5553
  %v5556 = vsel %vm173, %v5554, 0.0
  %5557 = vadd.xlane.f32.xlu0 %v5556
  %v5558 = vpop.xlane.xlu0 %5557
  %v5559 = vsel %vm173, %v5555, 0.0
  %5560 = vadd.xlane.f32.xlu0 %v5559
  %v5561 = vpop.xlane.xlu0 %5560
  %v5562 = vmul.f32 %v5558, %v1296
  %v5563 = vmul.f32 %v5561, %v1296
  %v5564 = vadd.f32 %v5562, 1e-05
  %v5565 = vadd.f32 %v5563, 1e-05
  %v5566 = vrsqrt.pop %v5564
  %v5567 = vrsqrt.pop %v5565
  %v5568 = vmul.f32 %v5552, %v5566
  %v5569 = vmul.f32 %v5553, %v5567
  %v5571 = vlaneseq
  %v5572 = vshrl.u32 %v5571, 7
  %v5573 = vsub.s32 0, %v5572
  %v5574 = vrot.slane %v5541, %v5573
  %v5576 = vmul.f32 %v5568, %v5574
  %v5577 = vmul.f32 %v5569, %v5574
  %v5579 = vlaneseq
  %v5580 = vshrl.u32 %v5579, 7
  %v5581 = vsub.s32 0, %v5580
  %v5582 = vrot.slane %v5543, %v5581
  %v5584 = vadd.f32 %v5576, %v5582
  %v5585 = vadd.f32 %v5577, %v5582
  %s5586 = scalar_lea.vmem %s7, 384
  %v5587 = vld [vmem:[%s5586] sm:$0xff]
  %v5588 = vld [vmem:[%s5586 + $0x8] sm:$0xff]
  %v5589 = vld [vmem:[%s5586 + $0x10] sm:$0xff]
  %v5590 = vld [vmem:[%s5586 + $0x18] sm:$0xff]
  %s5591 = scalar_lea.vmem %s8, 12
  %v5592 = vld [vmem:[%s5591] sm:$0x1]
  %v5594 = vlaneseq
  %v5595 = vshrl.u32 %v5594, 7
  %v5596 = vsub.s32 0, %v5595
  %v5597 = vrot.slane %v5592, %v5596
  %v5600 = vsel %vm173, %v5584, 0
  %v5603 = vsel %vm173, %v5585, 0
  %5605 = vmatprep.subr.mxu0 0.0
  %5606 = vmatpush1.msra.mxu0 0.0
  %5607 = vmatprep.subr.mxu0 0.0
  %5608 = vmatpush1.msra.mxu0 0.0
  %5609 = vmatprep.subr.mxu0 0.0
  %5610 = vmatpush1.msra.mxu0 0.0
  %5611 = vmatprep.subr.mxu0 0.0
  %5612 = vmatpush1.msra.mxu0 0.0
  %5613 = vmatprep.subr.mxu0 0.0
  %5614 = vmatpush1.msra.mxu0 0.0
  %5615 = vmatprep.subr.mxu0 0.0
  %5616 = vmatpush1.msra.mxu0 0.0
  %5617 = vmatprep.subr.mxu0 0.0
  %5618 = vmatpush1.msra.mxu0 0.0
  %5619 = vmatprep.subr.mxu0 0.0
  %5620 = vmatpush1.msra.mxu0 0.0
  %5621 = vmatprep.subr.mxu0 0.0
  %5622 = vmatpush1.msra.mxu0 0.0
  %5623 = vmatprep.subr.mxu0 0.0
  %5624 = vmatpush1.msra.mxu0 0.0
  %5625 = vmatprep.subr.mxu0 0.0
  %5626 = vmatpush1.msra.mxu0 0.0
  %5627 = vmatprep.subr.mxu0 0.0
  %5628 = vmatpush1.msra.mxu0 0.0
  %5629 = vmatprep.subr.mxu0 0.0
  %5630 = vmatpush1.msra.mxu0 %v5590
  %5631 = vmatprep.subr.mxu0 0.0
  %5632 = vmatpush1.msra.mxu0 %v5589
  %5633 = vmatprep.subr.mxu0 0.0
  %5634 = vmatpush1.msra.mxu0 %v5588
  %5635 = vmatprep.subr.mxu0 0.0
  %5636 = vmatpush1.msra.mxu0 %v5587
  %5637 = vmatprep.subr.mxu0 0.0
  %5638 = vmatpush2.msra.mxu0 0.0
  %5639 = vmatprep.subr.mxu0 0.0
  %5640 = vmatpush2.msra.mxu0 0.0
  %5641 = vmatprep.subr.mxu0 0.0
  %5642 = vmatpush2.msra.mxu0 0.0
  %5643 = vmatprep.subr.mxu0 0.0
  %5644 = vmatpush2.msra.mxu0 0.0
  %5645 = vmatprep.subr.mxu0 0.0
  %5646 = vmatpush2.msra.mxu0 0.0
  %5647 = vmatprep.subr.mxu0 0.0
  %5648 = vmatpush2.msra.mxu0 0.0
  %5649 = vmatprep.subr.mxu0 0.0
  %5650 = vmatpush2.msra.mxu0 0.0
  %5651 = vmatprep.subr.mxu0 0.0
  %5652 = vmatpush2.msra.mxu0 0.0
  %5653 = vmatprep.subr.mxu0 0.0
  %5654 = vmatpush2.msra.mxu0 0.0
  %5655 = vmatprep.subr.mxu0 0.0
  %5656 = vmatpush2.msra.mxu0 0.0
  %5657 = vmatprep.subr.mxu0 0.0
  %5658 = vmatpush2.msra.mxu0 0.0
  %5659 = vmatprep.subr.mxu0 0.0
  %5660 = vmatpush2.msra.mxu0 0.0
  %5661 = vmatprep.subr.mxu0 0.0
  %5662 = vmatpush2.msra.mxu0 0.0
  %5663 = vmatprep.subr.mxu0 0.0
  %5664 = vmatpush2.msra.mxu0 0.0
  %5665 = vmatprep.subr.mxu0 0.0
  %5666 = vmatpush2.msra.mxu0 0.0
  %5667 = vmatprep.subr.mxu0 0.0
  %5668 = vmatpush2.msra.mxu0 0.0
  %5669 = vmatprep.mubr.f32.mxu0 0.0
  %5670 = vmatmul.mubr.f32.gmra.mxu0 %v5600
  %v5671 = vpop.f32.mrf.mxu0
  %v5672 = vadd.f32 %v5597, %v5671
  %v5673 = vpop.f32.mrf.mxu0
  %5674 = vmatprep.mubr.f32.mxu0 0.0
  %5675 = vmatmul.mubr.f32.gmra.mxu0 %v5603
  %v5676 = vpop.f32.mrf.mxu0
  %v5677 = vadd.f32 %v5597, %v5676
  %v5678 = vpop.f32.mrf.mxu0
  %5679 = vdwg.mxu0
  %s5680 = scalar_lea.vmem %s7, 416
  %v5681 = vld [vmem:[%s5680] sm:$0xff]
  %v5682 = vld [vmem:[%s5680 + $0x8] sm:$0xff]
  %v5683 = vld [vmem:[%s5680 + $0x10] sm:$0xff]
  %v5684 = vld [vmem:[%s5680 + $0x18] sm:$0xff]
  %s5685 = scalar_lea.vmem %s8, 13
  %v5686 = vld [vmem:[%s5685] sm:$0x1]
  %v5688 = vlaneseq
  %v5689 = vshrl.u32 %v5688, 7
  %v5690 = vsub.s32 0, %v5689
  %v5691 = vrot.slane %v5686, %v5690
  %5693 = vmatprep.subr.mxu0 0.0
  %5694 = vmatpush1.msra.mxu0 0.0
  %5695 = vmatprep.subr.mxu0 0.0
  %5696 = vmatpush1.msra.mxu0 0.0
  %5697 = vmatprep.subr.mxu0 0.0
  %5698 = vmatpush1.msra.mxu0 0.0
  %5699 = vmatprep.subr.mxu0 0.0
  %5700 = vmatpush1.msra.mxu0 0.0
  %5701 = vmatprep.subr.mxu0 0.0
  %5702 = vmatpush1.msra.mxu0 0.0
  %5703 = vmatprep.subr.mxu0 0.0
  %5704 = vmatpush1.msra.mxu0 0.0
  %5705 = vmatprep.subr.mxu0 0.0
  %5706 = vmatpush1.msra.mxu0 0.0
  %5707 = vmatprep.subr.mxu0 0.0
  %5708 = vmatpush1.msra.mxu0 0.0
  %5709 = vmatprep.subr.mxu0 0.0
  %5710 = vmatpush1.msra.mxu0 0.0
  %5711 = vmatprep.subr.mxu0 0.0
  %5712 = vmatpush1.msra.mxu0 0.0
  %5713 = vmatprep.subr.mxu0 0.0
  %5714 = vmatpush1.msra.mxu0 0.0
  %5715 = vmatprep.subr.mxu0 0.0
  %5716 = vmatpush1.msra.mxu0 0.0
  %5717 = vmatprep.subr.mxu0 0.0
  %5718 = vmatpush1.msra.mxu0 %v5684
  %5719 = vmatprep.subr.mxu0 0.0
  %5720 = vmatpush1.msra.mxu0 %v5683
  %5721 = vmatprep.subr.mxu0 0.0
  %5722 = vmatpush1.msra.mxu0 %v5682
  %5723 = vmatprep.subr.mxu0 0.0
  %5724 = vmatpush1.msra.mxu0 %v5681
  %5725 = vmatprep.subr.mxu0 0.0
  %5726 = vmatpush2.msra.mxu0 0.0
  %5727 = vmatprep.subr.mxu0 0.0
  %5728 = vmatpush2.msra.mxu0 0.0
  %5729 = vmatprep.subr.mxu0 0.0
  %5730 = vmatpush2.msra.mxu0 0.0
  %5731 = vmatprep.subr.mxu0 0.0
  %5732 = vmatpush2.msra.mxu0 0.0
  %5733 = vmatprep.subr.mxu0 0.0
  %5734 = vmatpush2.msra.mxu0 0.0
  %5735 = vmatprep.subr.mxu0 0.0
  %5736 = vmatpush2.msra.mxu0 0.0
  %5737 = vmatprep.subr.mxu0 0.0
  %5738 = vmatpush2.msra.mxu0 0.0
  %5739 = vmatprep.subr.mxu0 0.0
  %5740 = vmatpush2.msra.mxu0 0.0
  %5741 = vmatprep.subr.mxu0 0.0
  %5742 = vmatpush2.msra.mxu0 0.0
  %5743 = vmatprep.subr.mxu0 0.0
  %5744 = vmatpush2.msra.mxu0 0.0
  %5745 = vmatprep.subr.mxu0 0.0
  %5746 = vmatpush2.msra.mxu0 0.0
  %5747 = vmatprep.subr.mxu0 0.0
  %5748 = vmatpush2.msra.mxu0 0.0
  %5749 = vmatprep.subr.mxu0 0.0
  %5750 = vmatpush2.msra.mxu0 0.0
  %5751 = vmatprep.subr.mxu0 0.0
  %5752 = vmatpush2.msra.mxu0 0.0
  %5753 = vmatprep.subr.mxu0 0.0
  %5754 = vmatpush2.msra.mxu0 0.0
  %5755 = vmatprep.subr.mxu0 0.0
  %5756 = vmatpush2.msra.mxu0 0.0
  %5757 = vmatprep.mubr.f32.mxu0 0.0
  %5758 = vmatmul.mubr.f32.gmra.mxu0 %v5600
  %v5759 = vpop.f32.mrf.mxu0
  %v5760 = vadd.f32 %v5691, %v5759
  %v5761 = vpop.f32.mrf.mxu0
  %5762 = vmatprep.mubr.f32.mxu0 0.0
  %5763 = vmatmul.mubr.f32.gmra.mxu0 %v5603
  %v5764 = vpop.f32.mrf.mxu0
  %v5765 = vadd.f32 %v5691, %v5764
  %v5766 = vpop.f32.mrf.mxu0
  %5767 = vdwg.mxu0
  %s5768 = scalar_lea.vmem %s7, 448
  %v5769 = vld [vmem:[%s5768] sm:$0xff]
  %v5770 = vld [vmem:[%s5768 + $0x8] sm:$0xff]
  %v5771 = vld [vmem:[%s5768 + $0x10] sm:$0xff]
  %v5772 = vld [vmem:[%s5768 + $0x18] sm:$0xff]
  %s5773 = scalar_lea.vmem %s8, 14
  %v5774 = vld [vmem:[%s5773] sm:$0x1]
  %v5776 = vlaneseq
  %v5777 = vshrl.u32 %v5776, 7
  %v5778 = vsub.s32 0, %v5777
  %v5779 = vrot.slane %v5774, %v5778
  %5781 = vmatprep.subr.mxu0 0.0
  %5782 = vmatpush1.msra.mxu0 0.0
  %5783 = vmatprep.subr.mxu0 0.0
  %5784 = vmatpush1.msra.mxu0 0.0
  %5785 = vmatprep.subr.mxu0 0.0
  %5786 = vmatpush1.msra.mxu0 0.0
  %5787 = vmatprep.subr.mxu0 0.0
  %5788 = vmatpush1.msra.mxu0 0.0
  %5789 = vmatprep.subr.mxu0 0.0
  %5790 = vmatpush1.msra.mxu0 0.0
  %5791 = vmatprep.subr.mxu0 0.0
  %5792 = vmatpush1.msra.mxu0 0.0
  %5793 = vmatprep.subr.mxu0 0.0
  %5794 = vmatpush1.msra.mxu0 0.0
  %5795 = vmatprep.subr.mxu0 0.0
  %5796 = vmatpush1.msra.mxu0 0.0
  %5797 = vmatprep.subr.mxu0 0.0
  %5798 = vmatpush1.msra.mxu0 0.0
  %5799 = vmatprep.subr.mxu0 0.0
  %5800 = vmatpush1.msra.mxu0 0.0
  %5801 = vmatprep.subr.mxu0 0.0
  %5802 = vmatpush1.msra.mxu0 0.0
  %5803 = vmatprep.subr.mxu0 0.0
  %5804 = vmatpush1.msra.mxu0 0.0
  %5805 = vmatprep.subr.mxu0 0.0
  %5806 = vmatpush1.msra.mxu0 %v5772
  %5807 = vmatprep.subr.mxu0 0.0
  %5808 = vmatpush1.msra.mxu0 %v5771
  %5809 = vmatprep.subr.mxu0 0.0
  %5810 = vmatpush1.msra.mxu0 %v5770
  %5811 = vmatprep.subr.mxu0 0.0
  %5812 = vmatpush1.msra.mxu0 %v5769
  %5813 = vmatprep.subr.mxu0 0.0
  %5814 = vmatpush2.msra.mxu0 0.0
  %5815 = vmatprep.subr.mxu0 0.0
  %5816 = vmatpush2.msra.mxu0 0.0
  %5817 = vmatprep.subr.mxu0 0.0
  %5818 = vmatpush2.msra.mxu0 0.0
  %5819 = vmatprep.subr.mxu0 0.0
  %5820 = vmatpush2.msra.mxu0 0.0
  %5821 = vmatprep.subr.mxu0 0.0
  %5822 = vmatpush2.msra.mxu0 0.0
  %5823 = vmatprep.subr.mxu0 0.0
  %5824 = vmatpush2.msra.mxu0 0.0
  %5825 = vmatprep.subr.mxu0 0.0
  %5826 = vmatpush2.msra.mxu0 0.0
  %5827 = vmatprep.subr.mxu0 0.0
  %5828 = vmatpush2.msra.mxu0 0.0
  %5829 = vmatprep.subr.mxu0 0.0
  %5830 = vmatpush2.msra.mxu0 0.0
  %5831 = vmatprep.subr.mxu0 0.0
  %5832 = vmatpush2.msra.mxu0 0.0
  %5833 = vmatprep.subr.mxu0 0.0
  %5834 = vmatpush2.msra.mxu0 0.0
  %5835 = vmatprep.subr.mxu0 0.0
  %5836 = vmatpush2.msra.mxu0 0.0
  %5837 = vmatprep.subr.mxu0 0.0
  %5838 = vmatpush2.msra.mxu0 0.0
  %5839 = vmatprep.subr.mxu0 0.0
  %5840 = vmatpush2.msra.mxu0 0.0
  %5841 = vmatprep.subr.mxu0 0.0
  %5842 = vmatpush2.msra.mxu0 0.0
  %5843 = vmatprep.subr.mxu0 0.0
  %5844 = vmatpush2.msra.mxu0 0.0
  %5845 = vmatprep.mubr.f32.mxu0 0.0
  %5846 = vmatmul.mubr.f32.gmra.mxu0 %v5600
  %v5847 = vpop.f32.mrf.mxu0
  %v5848 = vadd.f32 %v5779, %v5847
  %v5849 = vpop.f32.mrf.mxu0
  %5850 = vmatprep.mubr.f32.mxu0 0.0
  %5851 = vmatmul.mubr.f32.gmra.mxu0 %v5603
  %v5852 = vpop.f32.mrf.mxu0
  %v5853 = vadd.f32 %v5779, %v5852
  %v5854 = vpop.f32.mrf.mxu0
  %5855 = vdwg.mxu0
  %v5856 = vmul.f32 %v5672, %v67
  %v5857 = vmul.f32 %v5677, %v67
  %v5859 = vsel %vm173, %v5856, 0
  %v5862 = vsel %vm173, %v5857, 0
  %v5865 = vsel %vm173, %v5760, 0
  %v5868 = vsel %vm173, %v5765, 0
  %5870 = vmatprep.subr.mxu0 0.0
  %5871 = vmatpush1.xpose.msra.mxu0 0.0
  %5872 = vmatprep.subr.mxu0 0.0
  %5873 = vmatpush1.xpose.msra.mxu0 0.0
  %5874 = vmatprep.subr.mxu0 0.0
  %5875 = vmatpush1.xpose.msra.mxu0 0.0
  %5876 = vmatprep.subr.mxu0 0.0
  %5877 = vmatpush1.xpose.msra.mxu0 0.0
  %5878 = vmatprep.subr.mxu0 0.0
  %5879 = vmatpush1.xpose.msra.mxu0 0.0
  %5880 = vmatprep.subr.mxu0 0.0
  %5881 = vmatpush1.xpose.msra.mxu0 0.0
  %5882 = vmatprep.subr.mxu0 0.0
  %5883 = vmatpush1.xpose.msra.mxu0 0.0
  %5884 = vmatprep.subr.mxu0 0.0
  %5885 = vmatpush1.xpose.msra.mxu0 0.0
  %5886 = vmatprep.subr.mxu0 0.0
  %5887 = vmatpush1.xpose.msra.mxu0 0.0
  %5888 = vmatprep.subr.mxu0 0.0
  %5889 = vmatpush1.xpose.msra.mxu0 0.0
  %5890 = vmatprep.subr.mxu0 0.0
  %5891 = vmatpush1.xpose.msra.mxu0 0.0
  %5892 = vmatprep.subr.mxu0 0.0
  %5893 = vmatpush1.xpose.msra.mxu0 0.0
  %5894 = vmatprep.subr.mxu0 0.0
  %5895 = vmatpush1.xpose.msra.mxu0 0.0
  %5896 = vmatprep.subr.mxu0 0.0
  %5897 = vmatpush1.xpose.msra.mxu0 0.0
  %5898 = vmatprep.subr.mxu0 0.0
  %5899 = vmatpush1.xpose.msra.mxu0 %v5868
  %5900 = vmatprep.subr.mxu0 0.0
  %5901 = vmatpush1.xpose.msra.mxu0 %v5865
  %5902 = vmatprep.subr.mxu0 0.0
  %5903 = vmatpush2.xpose.msra.mxu0 0.0
  %5904 = vmatprep.subr.mxu0 0.0
  %5905 = vmatpush2.xpose.msra.mxu0 0.0
  %5906 = vmatprep.subr.mxu0 0.0
  %5907 = vmatpush2.xpose.msra.mxu0 0.0
  %5908 = vmatprep.subr.mxu0 0.0
  %5909 = vmatpush2.xpose.msra.mxu0 0.0
  %5910 = vmatprep.subr.mxu0 0.0
  %5911 = vmatpush2.xpose.msra.mxu0 0.0
  %5912 = vmatprep.subr.mxu0 0.0
  %5913 = vmatpush2.xpose.msra.mxu0 0.0
  %5914 = vmatprep.subr.mxu0 0.0
  %5915 = vmatpush2.xpose.msra.mxu0 0.0
  %5916 = vmatprep.subr.mxu0 0.0
  %5917 = vmatpush2.xpose.msra.mxu0 0.0
  %5918 = vmatprep.subr.mxu0 0.0
  %5919 = vmatpush2.xpose.msra.mxu0 0.0
  %5920 = vmatprep.subr.mxu0 0.0
  %5921 = vmatpush2.xpose.msra.mxu0 0.0
  %5922 = vmatprep.subr.mxu0 0.0
  %5923 = vmatpush2.xpose.msra.mxu0 0.0
  %5924 = vmatprep.subr.mxu0 0.0
  %5925 = vmatpush2.xpose.msra.mxu0 0.0
  %5926 = vmatprep.subr.mxu0 0.0
  %5927 = vmatpush2.xpose.msra.mxu0 0.0
  %5928 = vmatprep.subr.mxu0 0.0
  %5929 = vmatpush2.xpose.msra.mxu0 0.0
  %5930 = vmatprep.subr.mxu0 0.0
  %5931 = vmatpush2.xpose.msra.mxu0 0.0
  %5932 = vmatprep.subr.mxu0 0.0
  %5933 = vmatpush2.xpose.msra.mxu0 0.0
  %5934 = vmatprep.mubr.f32.mxu0 0.0
  %5935 = vmatmul.mubr.f32.gmra.mxu0 %v5859
  %v5936 = vpop.f32.mrf.mxu0
  %v5937 = vadd.f32 %v154, %v5936
  %v5938 = vpop.f32.mrf.mxu0
  %5939 = vmatprep.mubr.f32.mxu0 0.0
  %5940 = vmatmul.mubr.f32.gmra.mxu0 %v5862
  %v5941 = vpop.f32.mrf.mxu0
  %v5942 = vadd.f32 %v155, %v5941
  %v5943 = vpop.f32.mrf.mxu0
  %5944 = vdwg.mxu0
  %v5945 = vsel %vm520, %v5937, -inf
  %5946 = vmax.xlane.f32.xlu0 %v5945
  %v5947 = vpop.xlane.xlu0 %5946
  %v5948 = vsel %vm520, %v5942, -inf
  %5949 = vmax.xlane.f32.xlu0 %v5948
  %v5950 = vpop.xlane.xlu0 %5949
  %v5951 = vsub.f32 %v5937, %v5947
  %v5952 = vsub.f32 %v5942, %v5950
  %v5953 = vmul.f32 %v5951, 1.442695
  %v5954 = vpow.pop %v5953
  %v5955 = vmul.f32 %v5952, 1.442695
  %v5956 = vpow.pop %v5955
  %v5957 = vsel %vm520, %v5954, 0.0
  %5958 = vadd.xlane.f32.xlu0 %v5957
  %v5959 = vpop.xlane.xlu0 %5958
  %v5960 = vsel %vm520, %v5956, 0.0
  %5961 = vadd.xlane.f32.xlu0 %v5960
  %v5962 = vpop.xlane.xlu0 %5961
  %v5963 = vrcp.pop %v5959
  %v5964 = vmul.f32 %v5954, %v5963
  %v5965 = vrcp.pop %v5962
  %v5966 = vmul.f32 %v5956, %v5965
  %v5967 = vmul.f32 %v5848, %v67
  %v5968 = vmul.f32 %v5853, %v67
  %v5969 = vmul.f32 %v5672, %v71
  %v5970 = vmul.f32 %v5677, %v71
  %v5972 = vsel %vm173, %v5969, 0
  %v5975 = vsel %vm173, %v5970, 0
  %5977 = vmatprep.subr.mxu0 0.0
  %5978 = vmatpush1.xpose.msra.mxu0 0.0
  %5979 = vmatprep.subr.mxu0 0.0
  %5980 = vmatpush1.xpose.msra.mxu0 0.0
  %5981 = vmatprep.subr.mxu0 0.0
  %5982 = vmatpush1.xpose.msra.mxu0 0.0
  %5983 = vmatprep.subr.mxu0 0.0
  %5984 = vmatpush1.xpose.msra.mxu0 0.0
  %5985 = vmatprep.subr.mxu0 0.0
  %5986 = vmatpush1.xpose.msra.mxu0 0.0
  %5987 = vmatprep.subr.mxu0 0.0
  %5988 = vmatpush1.xpose.msra.mxu0 0.0
  %5989 = vmatprep.subr.mxu0 0.0
  %5990 = vmatpush1.xpose.msra.mxu0 0.0
  %5991 = vmatprep.subr.mxu0 0.0
  %5992 = vmatpush1.xpose.msra.mxu0 0.0
  %5993 = vmatprep.subr.mxu0 0.0
  %5994 = vmatpush1.xpose.msra.mxu0 0.0
  %5995 = vmatprep.subr.mxu0 0.0
  %5996 = vmatpush1.xpose.msra.mxu0 0.0
  %5997 = vmatprep.subr.mxu0 0.0
  %5998 = vmatpush1.xpose.msra.mxu0 0.0
  %5999 = vmatprep.subr.mxu0 0.0
  %6000 = vmatpush1.xpose.msra.mxu0 0.0
  %6001 = vmatprep.subr.mxu0 0.0
  %6002 = vmatpush1.xpose.msra.mxu0 0.0
  %6003 = vmatprep.subr.mxu0 0.0
  %6004 = vmatpush1.xpose.msra.mxu0 0.0
  %6005 = vmatprep.subr.mxu0 0.0
  %6006 = vmatpush1.xpose.msra.mxu0 %v5868
  %6007 = vmatprep.subr.mxu0 0.0
  %6008 = vmatpush1.xpose.msra.mxu0 %v5865
  %6009 = vmatprep.subr.mxu0 0.0
  %6010 = vmatpush2.xpose.msra.mxu0 0.0
  %6011 = vmatprep.subr.mxu0 0.0
  %6012 = vmatpush2.xpose.msra.mxu0 0.0
  %6013 = vmatprep.subr.mxu0 0.0
  %6014 = vmatpush2.xpose.msra.mxu0 0.0
  %6015 = vmatprep.subr.mxu0 0.0
  %6016 = vmatpush2.xpose.msra.mxu0 0.0
  %6017 = vmatprep.subr.mxu0 0.0
  %6018 = vmatpush2.xpose.msra.mxu0 0.0
  %6019 = vmatprep.subr.mxu0 0.0
  %6020 = vmatpush2.xpose.msra.mxu0 0.0
  %6021 = vmatprep.subr.mxu0 0.0
  %6022 = vmatpush2.xpose.msra.mxu0 0.0
  %6023 = vmatprep.subr.mxu0 0.0
  %6024 = vmatpush2.xpose.msra.mxu0 0.0
  %6025 = vmatprep.subr.mxu0 0.0
  %6026 = vmatpush2.xpose.msra.mxu0 0.0
  %6027 = vmatprep.subr.mxu0 0.0
  %6028 = vmatpush2.xpose.msra.mxu0 0.0
  %6029 = vmatprep.subr.mxu0 0.0
  %6030 = vmatpush2.xpose.msra.mxu0 0.0
  %6031 = vmatprep.subr.mxu0 0.0
  %6032 = vmatpush2.xpose.msra.mxu0 0.0
  %6033 = vmatprep.subr.mxu0 0.0
  %6034 = vmatpush2.xpose.msra.mxu0 0.0
  %6035 = vmatprep.subr.mxu0 0.0
  %6036 = vmatpush2.xpose.msra.mxu0 0.0
  %6037 = vmatprep.subr.mxu0 0.0
  %6038 = vmatpush2.xpose.msra.mxu0 0.0
  %6039 = vmatprep.subr.mxu0 0.0
  %6040 = vmatpush2.xpose.msra.mxu0 0.0
  %6041 = vmatprep.mubr.f32.mxu0 0.0
  %6042 = vmatmul.mubr.f32.gmra.mxu0 %v5972
  %v6043 = vpop.f32.mrf.mxu0
  %v6044 = vadd.f32 %v154, %v6043
  %v6045 = vpop.f32.mrf.mxu0
  %6046 = vmatprep.mubr.f32.mxu0 0.0
  %6047 = vmatmul.mubr.f32.gmra.mxu0 %v5975
  %v6048 = vpop.f32.mrf.mxu0
  %v6049 = vadd.f32 %v155, %v6048
  %v6050 = vpop.f32.mrf.mxu0
  %6051 = vdwg.mxu0
  %v6052 = vsel %vm520, %v6044, -inf
  %6053 = vmax.xlane.f32.xlu0 %v6052
  %v6054 = vpop.xlane.xlu0 %6053
  %v6055 = vsel %vm520, %v6049, -inf
  %6056 = vmax.xlane.f32.xlu0 %v6055
  %v6057 = vpop.xlane.xlu0 %6056
  %v6058 = vsub.f32 %v6044, %v6054
  %v6059 = vsub.f32 %v6049, %v6057
  %v6060 = vmul.f32 %v6058, 1.442695
  %v6061 = vpow.pop %v6060
  %v6062 = vmul.f32 %v6059, 1.442695
  %v6063 = vpow.pop %v6062
  %v6064 = vsel %vm520, %v6061, 0.0
  %6065 = vadd.xlane.f32.xlu0 %v6064
  %v6066 = vpop.xlane.xlu0 %6065
  %v6067 = vsel %vm520, %v6063, 0.0
  %6068 = vadd.xlane.f32.xlu0 %v6067
  %v6069 = vpop.xlane.xlu0 %6068
  %v6070 = vrcp.pop %v6066
  %v6071 = vmul.f32 %v6061, %v6070
  %v6072 = vrcp.pop %v6069
  %v6073 = vmul.f32 %v6063, %v6072
  %v6074 = vmul.f32 %v5848, %v71
  %v6075 = vmul.f32 %v5853, %v71
  %v6077 = vsel %vm520, %v6071, 0
  %v6080 = vsel %vm520, %v6073, 0
  %6082 = vmatprep.subr.mxu0 0.0
  %6083 = vmatpush1.msra.mxu0 0.0
  %6084 = vmatprep.subr.mxu0 0.0
  %6085 = vmatpush1.msra.mxu0 0.0
  %6086 = vmatprep.subr.mxu0 0.0
  %6087 = vmatpush1.msra.mxu0 0.0
  %6088 = vmatprep.subr.mxu0 0.0
  %6089 = vmatpush1.msra.mxu0 0.0
  %6090 = vmatprep.subr.mxu0 0.0
  %6091 = vmatpush1.msra.mxu0 0.0
  %6092 = vmatprep.subr.mxu0 0.0
  %6093 = vmatpush1.msra.mxu0 0.0
  %6094 = vmatprep.subr.mxu0 0.0
  %6095 = vmatpush1.msra.mxu0 0.0
  %6096 = vmatprep.subr.mxu0 0.0
  %6097 = vmatpush1.msra.mxu0 0.0
  %6098 = vmatprep.subr.mxu0 0.0
  %6099 = vmatpush1.msra.mxu0 0.0
  %6100 = vmatprep.subr.mxu0 0.0
  %6101 = vmatpush1.msra.mxu0 0.0
  %6102 = vmatprep.subr.mxu0 0.0
  %6103 = vmatpush1.msra.mxu0 0.0
  %6104 = vmatprep.subr.mxu0 0.0
  %6105 = vmatpush1.msra.mxu0 0.0
  %6106 = vmatprep.subr.mxu0 0.0
  %6107 = vmatpush1.msra.mxu0 0.0
  %6108 = vmatprep.subr.mxu0 0.0
  %6109 = vmatpush1.msra.mxu0 0.0
  %6110 = vmatprep.subr.mxu0 0.0
  %6111 = vmatpush1.msra.mxu0 %v6075
  %6112 = vmatprep.subr.mxu0 0.0
  %6113 = vmatpush1.msra.mxu0 %v6074
  %6114 = vmatprep.subr.mxu0 0.0
  %6115 = vmatpush2.msra.mxu0 0.0
  %6116 = vmatprep.subr.mxu0 0.0
  %6117 = vmatpush2.msra.mxu0 0.0
  %6118 = vmatprep.subr.mxu0 0.0
  %6119 = vmatpush2.msra.mxu0 0.0
  %6120 = vmatprep.subr.mxu0 0.0
  %6121 = vmatpush2.msra.mxu0 0.0
  %6122 = vmatprep.subr.mxu0 0.0
  %6123 = vmatpush2.msra.mxu0 0.0
  %6124 = vmatprep.subr.mxu0 0.0
  %6125 = vmatpush2.msra.mxu0 0.0
  %6126 = vmatprep.subr.mxu0 0.0
  %6127 = vmatpush2.msra.mxu0 0.0
  %6128 = vmatprep.subr.mxu0 0.0
  %6129 = vmatpush2.msra.mxu0 0.0
  %6130 = vmatprep.subr.mxu0 0.0
  %6131 = vmatpush2.msra.mxu0 0.0
  %6132 = vmatprep.subr.mxu0 0.0
  %6133 = vmatpush2.msra.mxu0 0.0
  %6134 = vmatprep.subr.mxu0 0.0
  %6135 = vmatpush2.msra.mxu0 0.0
  %6136 = vmatprep.subr.mxu0 0.0
  %6137 = vmatpush2.msra.mxu0 0.0
  %6138 = vmatprep.subr.mxu0 0.0
  %6139 = vmatpush2.msra.mxu0 0.0
  %6140 = vmatprep.subr.mxu0 0.0
  %6141 = vmatpush2.msra.mxu0 0.0
  %6142 = vmatprep.subr.mxu0 0.0
  %6143 = vmatpush2.msra.mxu0 0.0
  %6144 = vmatprep.subr.mxu0 0.0
  %6145 = vmatpush2.msra.mxu0 0.0
  %6146 = vmatprep.mubr.f32.mxu0 0.0
  %6147 = vmatmul.mubr.f32.gmra.mxu0 %v6077
  %v6148 = vpop.f32.mrf.mxu0
  %v6149 = vadd.f32 0.0, %v6148
  %v6150 = vpop.f32.mrf.mxu0
  %6151 = vmatprep.mubr.f32.mxu0 0.0
  %6152 = vmatmul.mubr.f32.gmra.mxu0 %v6080
  %v6153 = vpop.f32.mrf.mxu0
  %v6154 = vadd.f32 0.0, %v6153
  %v6155 = vpop.f32.mrf.mxu0
  %6156 = vdwg.mxu0
  %v6158 = vsel %vm520, %v5964, 0
  %v6161 = vsel %vm520, %v5966, 0
  %6163 = vmatprep.subr.mxu0 0.0
  %6164 = vmatpush1.msra.mxu0 0.0
  %6165 = vmatprep.subr.mxu0 0.0
  %6166 = vmatpush1.msra.mxu0 0.0
  %6167 = vmatprep.subr.mxu0 0.0
  %6168 = vmatpush1.msra.mxu0 0.0
  %6169 = vmatprep.subr.mxu0 0.0
  %6170 = vmatpush1.msra.mxu0 0.0
  %6171 = vmatprep.subr.mxu0 0.0
  %6172 = vmatpush1.msra.mxu0 0.0
  %6173 = vmatprep.subr.mxu0 0.0
  %6174 = vmatpush1.msra.mxu0 0.0
  %6175 = vmatprep.subr.mxu0 0.0
  %6176 = vmatpush1.msra.mxu0 0.0
  %6177 = vmatprep.subr.mxu0 0.0
  %6178 = vmatpush1.msra.mxu0 0.0
  %6179 = vmatprep.subr.mxu0 0.0
  %6180 = vmatpush1.msra.mxu0 0.0
  %6181 = vmatprep.subr.mxu0 0.0
  %6182 = vmatpush1.msra.mxu0 0.0
  %6183 = vmatprep.subr.mxu0 0.0
  %6184 = vmatpush1.msra.mxu0 0.0
  %6185 = vmatprep.subr.mxu0 0.0
  %6186 = vmatpush1.msra.mxu0 0.0
  %6187 = vmatprep.subr.mxu0 0.0
  %6188 = vmatpush1.msra.mxu0 0.0
  %6189 = vmatprep.subr.mxu0 0.0
  %6190 = vmatpush1.msra.mxu0 0.0
  %6191 = vmatprep.subr.mxu0 0.0
  %6192 = vmatpush1.msra.mxu0 %v5968
  %6193 = vmatprep.subr.mxu0 0.0
  %6194 = vmatpush1.msra.mxu0 %v5967
  %6195 = vmatprep.subr.mxu0 0.0
  %6196 = vmatpush2.msra.mxu0 0.0
  %6197 = vmatprep.subr.mxu0 0.0
  %6198 = vmatpush2.msra.mxu0 0.0
  %6199 = vmatprep.subr.mxu0 0.0
  %6200 = vmatpush2.msra.mxu0 0.0
  %6201 = vmatprep.subr.mxu0 0.0
  %6202 = vmatpush2.msra.mxu0 0.0
  %6203 = vmatprep.subr.mxu0 0.0
  %6204 = vmatpush2.msra.mxu0 0.0
  %6205 = vmatprep.subr.mxu0 0.0
  %6206 = vmatpush2.msra.mxu0 0.0
  %6207 = vmatprep.subr.mxu0 0.0
  %6208 = vmatpush2.msra.mxu0 0.0
  %6209 = vmatprep.subr.mxu0 0.0
  %6210 = vmatpush2.msra.mxu0 0.0
  %6211 = vmatprep.subr.mxu0 0.0
  %6212 = vmatpush2.msra.mxu0 0.0
  %6213 = vmatprep.subr.mxu0 0.0
  %6214 = vmatpush2.msra.mxu0 0.0
  %6215 = vmatprep.subr.mxu0 0.0
  %6216 = vmatpush2.msra.mxu0 0.0
  %6217 = vmatprep.subr.mxu0 0.0
  %6218 = vmatpush2.msra.mxu0 0.0
  %6219 = vmatprep.subr.mxu0 0.0
  %6220 = vmatpush2.msra.mxu0 0.0
  %6221 = vmatprep.subr.mxu0 0.0
  %6222 = vmatpush2.msra.mxu0 0.0
  %6223 = vmatprep.subr.mxu0 0.0
  %6224 = vmatpush2.msra.mxu0 0.0
  %6225 = vmatprep.subr.mxu0 0.0
  %6226 = vmatpush2.msra.mxu0 0.0
  %6227 = vmatprep.mubr.f32.mxu0 0.0
  %6228 = vmatmul.mubr.f32.gmra.mxu0 %v6158
  %v6229 = vpop.f32.mrf.mxu0
  %v6230 = vadd.f32 %v6149, %v6229
  %v6231 = vpop.f32.mrf.mxu0
  %6232 = vmatprep.mubr.f32.mxu0 0.0
  %6233 = vmatmul.mubr.f32.gmra.mxu0 %v6161
  %v6234 = vpop.f32.mrf.mxu0
  %v6235 = vadd.f32 %v6154, %v6234
  %v6236 = vpop.f32.mrf.mxu0
  %6237 = vdwg.mxu0
  %v6238 = vmul.f32 %v5672, %v75
  %v6239 = vmul.f32 %v5677, %v75
  %v6241 = vsel %vm173, %v6238, 0
  %v6244 = vsel %vm173, %v6239, 0
  %6246 = vmatprep.subr.mxu0 0.0
  %6247 = vmatpush1.xpose.msra.mxu0 0.0
  %6248 = vmatprep.subr.mxu0 0.0
  %6249 = vmatpush1.xpose.msra.mxu0 0.0
  %6250 = vmatprep.subr.mxu0 0.0
  %6251 = vmatpush1.xpose.msra.mxu0 0.0
  %6252 = vmatprep.subr.mxu0 0.0
  %6253 = vmatpush1.xpose.msra.mxu0 0.0
  %6254 = vmatprep.subr.mxu0 0.0
  %6255 = vmatpush1.xpose.msra.mxu0 0.0
  %6256 = vmatprep.subr.mxu0 0.0
  %6257 = vmatpush1.xpose.msra.mxu0 0.0
  %6258 = vmatprep.subr.mxu0 0.0
  %6259 = vmatpush1.xpose.msra.mxu0 0.0
  %6260 = vmatprep.subr.mxu0 0.0
  %6261 = vmatpush1.xpose.msra.mxu0 0.0
  %6262 = vmatprep.subr.mxu0 0.0
  %6263 = vmatpush1.xpose.msra.mxu0 0.0
  %6264 = vmatprep.subr.mxu0 0.0
  %6265 = vmatpush1.xpose.msra.mxu0 0.0
  %6266 = vmatprep.subr.mxu0 0.0
  %6267 = vmatpush1.xpose.msra.mxu0 0.0
  %6268 = vmatprep.subr.mxu0 0.0
  %6269 = vmatpush1.xpose.msra.mxu0 0.0
  %6270 = vmatprep.subr.mxu0 0.0
  %6271 = vmatpush1.xpose.msra.mxu0 0.0
  %6272 = vmatprep.subr.mxu0 0.0
  %6273 = vmatpush1.xpose.msra.mxu0 0.0
  %6274 = vmatprep.subr.mxu0 0.0
  %6275 = vmatpush1.xpose.msra.mxu0 %v5868
  %6276 = vmatprep.subr.mxu0 0.0
  %6277 = vmatpush1.xpose.msra.mxu0 %v5865
  %6278 = vmatprep.subr.mxu0 0.0
  %6279 = vmatpush2.xpose.msra.mxu0 0.0
  %6280 = vmatprep.subr.mxu0 0.0
  %6281 = vmatpush2.xpose.msra.mxu0 0.0
  %6282 = vmatprep.subr.mxu0 0.0
  %6283 = vmatpush2.xpose.msra.mxu0 0.0
  %6284 = vmatprep.subr.mxu0 0.0
  %6285 = vmatpush2.xpose.msra.mxu0 0.0
  %6286 = vmatprep.subr.mxu0 0.0
  %6287 = vmatpush2.xpose.msra.mxu0 0.0
  %6288 = vmatprep.subr.mxu0 0.0
  %6289 = vmatpush2.xpose.msra.mxu0 0.0
  %6290 = vmatprep.subr.mxu0 0.0
  %6291 = vmatpush2.xpose.msra.mxu0 0.0
  %6292 = vmatprep.subr.mxu0 0.0
  %6293 = vmatpush2.xpose.msra.mxu0 0.0
  %6294 = vmatprep.subr.mxu0 0.0
  %6295 = vmatpush2.xpose.msra.mxu0 0.0
  %6296 = vmatprep.subr.mxu0 0.0
  %6297 = vmatpush2.xpose.msra.mxu0 0.0
  %6298 = vmatprep.subr.mxu0 0.0
  %6299 = vmatpush2.xpose.msra.mxu0 0.0
  %6300 = vmatprep.subr.mxu0 0.0
  %6301 = vmatpush2.xpose.msra.mxu0 0.0
  %6302 = vmatprep.subr.mxu0 0.0
  %6303 = vmatpush2.xpose.msra.mxu0 0.0
  %6304 = vmatprep.subr.mxu0 0.0
  %6305 = vmatpush2.xpose.msra.mxu0 0.0
  %6306 = vmatprep.subr.mxu0 0.0
  %6307 = vmatpush2.xpose.msra.mxu0 0.0
  %6308 = vmatprep.subr.mxu0 0.0
  %6309 = vmatpush2.xpose.msra.mxu0 0.0
  %6310 = vmatprep.mubr.f32.mxu0 0.0
  %6311 = vmatmul.mubr.f32.gmra.mxu0 %v6241
  %v6312 = vpop.f32.mrf.mxu0
  %v6313 = vadd.f32 %v154, %v6312
  %v6314 = vpop.f32.mrf.mxu0
  %6315 = vmatprep.mubr.f32.mxu0 0.0
  %6316 = vmatmul.mubr.f32.gmra.mxu0 %v6244
  %v6317 = vpop.f32.mrf.mxu0
  %v6318 = vadd.f32 %v155, %v6317
  %v6319 = vpop.f32.mrf.mxu0
  %6320 = vdwg.mxu0
  %v6321 = vsel %vm520, %v6313, -inf
  %6322 = vmax.xlane.f32.xlu0 %v6321
  %v6323 = vpop.xlane.xlu0 %6322
  %v6324 = vsel %vm520, %v6318, -inf
  %6325 = vmax.xlane.f32.xlu0 %v6324
  %v6326 = vpop.xlane.xlu0 %6325
  %v6327 = vsub.f32 %v6313, %v6323
  %v6328 = vsub.f32 %v6318, %v6326
  %v6329 = vmul.f32 %v6327, 1.442695
  %v6330 = vpow.pop %v6329
  %v6331 = vmul.f32 %v6328, 1.442695
  %v6332 = vpow.pop %v6331
  %v6333 = vsel %vm520, %v6330, 0.0
  %6334 = vadd.xlane.f32.xlu0 %v6333
  %v6335 = vpop.xlane.xlu0 %6334
  %v6336 = vsel %vm520, %v6332, 0.0
  %6337 = vadd.xlane.f32.xlu0 %v6336
  %v6338 = vpop.xlane.xlu0 %6337
  %v6339 = vrcp.pop %v6335
  %v6340 = vmul.f32 %v6330, %v6339
  %v6341 = vrcp.pop %v6338
  %v6342 = vmul.f32 %v6332, %v6341
  %v6343 = vmul.f32 %v5848, %v75
  %v6344 = vmul.f32 %v5853, %v75
  %v6346 = vsel %vm520, %v6340, 0
  %v6349 = vsel %vm520, %v6342, 0
  %6351 = vmatprep.subr.mxu0 0.0
  %6352 = vmatpush1.msra.mxu0 0.0
  %6353 = vmatprep.subr.mxu0 0.0
  %6354 = vmatpush1.msra.mxu0 0.0
  %6355 = vmatprep.subr.mxu0 0.0
  %6356 = vmatpush1.msra.mxu0 0.0
  %6357 = vmatprep.subr.mxu0 0.0
  %6358 = vmatpush1.msra.mxu0 0.0
  %6359 = vmatprep.subr.mxu0 0.0
  %6360 = vmatpush1.msra.mxu0 0.0
  %6361 = vmatprep.subr.mxu0 0.0
  %6362 = vmatpush1.msra.mxu0 0.0
  %6363 = vmatprep.subr.mxu0 0.0
  %6364 = vmatpush1.msra.mxu0 0.0
  %6365 = vmatprep.subr.mxu0 0.0
  %6366 = vmatpush1.msra.mxu0 0.0
  %6367 = vmatprep.subr.mxu0 0.0
  %6368 = vmatpush1.msra.mxu0 0.0
  %6369 = vmatprep.subr.mxu0 0.0
  %6370 = vmatpush1.msra.mxu0 0.0
  %6371 = vmatprep.subr.mxu0 0.0
  %6372 = vmatpush1.msra.mxu0 0.0
  %6373 = vmatprep.subr.mxu0 0.0
  %6374 = vmatpush1.msra.mxu0 0.0
  %6375 = vmatprep.subr.mxu0 0.0
  %6376 = vmatpush1.msra.mxu0 0.0
  %6377 = vmatprep.subr.mxu0 0.0
  %6378 = vmatpush1.msra.mxu0 0.0
  %6379 = vmatprep.subr.mxu0 0.0
  %6380 = vmatpush1.msra.mxu0 %v6344
  %6381 = vmatprep.subr.mxu0 0.0
  %6382 = vmatpush1.msra.mxu0 %v6343
  %6383 = vmatprep.subr.mxu0 0.0
  %6384 = vmatpush2.msra.mxu0 0.0
  %6385 = vmatprep.subr.mxu0 0.0
  %6386 = vmatpush2.msra.mxu0 0.0
  %6387 = vmatprep.subr.mxu0 0.0
  %6388 = vmatpush2.msra.mxu0 0.0
  %6389 = vmatprep.subr.mxu0 0.0
  %6390 = vmatpush2.msra.mxu0 0.0
  %6391 = vmatprep.subr.mxu0 0.0
  %6392 = vmatpush2.msra.mxu0 0.0
  %6393 = vmatprep.subr.mxu0 0.0
  %6394 = vmatpush2.msra.mxu0 0.0
  %6395 = vmatprep.subr.mxu0 0.0
  %6396 = vmatpush2.msra.mxu0 0.0
  %6397 = vmatprep.subr.mxu0 0.0
  %6398 = vmatpush2.msra.mxu0 0.0
  %6399 = vmatprep.subr.mxu0 0.0
  %6400 = vmatpush2.msra.mxu0 0.0
  %6401 = vmatprep.subr.mxu0 0.0
  %6402 = vmatpush2.msra.mxu0 0.0
  %6403 = vmatprep.subr.mxu0 0.0
  %6404 = vmatpush2.msra.mxu0 0.0
  %6405 = vmatprep.subr.mxu0 0.0
  %6406 = vmatpush2.msra.mxu0 0.0
  %6407 = vmatprep.subr.mxu0 0.0
  %6408 = vmatpush2.msra.mxu0 0.0
  %6409 = vmatprep.subr.mxu0 0.0
  %6410 = vmatpush2.msra.mxu0 0.0
  %6411 = vmatprep.subr.mxu0 0.0
  %6412 = vmatpush2.msra.mxu0 0.0
  %6413 = vmatprep.subr.mxu0 0.0
  %6414 = vmatpush2.msra.mxu0 0.0
  %6415 = vmatprep.mubr.f32.mxu0 0.0
  %6416 = vmatmul.mubr.f32.gmra.mxu0 %v6346
  %v6417 = vpop.f32.mrf.mxu0
  %v6418 = vadd.f32 0.0, %v6417
  %v6419 = vpop.f32.mrf.mxu0
  %6420 = vmatprep.mubr.f32.mxu0 0.0
  %6421 = vmatmul.mubr.f32.gmra.mxu0 %v6349
  %v6422 = vpop.f32.mrf.mxu0
  %v6423 = vadd.f32 0.0, %v6422
  %v6424 = vpop.f32.mrf.mxu0
  %6425 = vdwg.mxu0
  %v6426 = vadd.f32 %v6230, %v6418
  %v6427 = vadd.f32 %v6235, %v6423
  %v6428 = vmul.f32 %v5672, %v79
  %v6429 = vmul.f32 %v5677, %v79
  %v6431 = vsel %vm173, %v6428, 0
  %v6434 = vsel %vm173, %v6429, 0
  %6436 = vmatprep.subr.mxu0 0.0
  %6437 = vmatpush1.xpose.msra.mxu0 0.0
  %6438 = vmatprep.subr.mxu0 0.0
  %6439 = vmatpush1.xpose.msra.mxu0 0.0
  %6440 = vmatprep.subr.mxu0 0.0
  %6441 = vmatpush1.xpose.msra.mxu0 0.0
  %6442 = vmatprep.subr.mxu0 0.0
  %6443 = vmatpush1.xpose.msra.mxu0 0.0
  %6444 = vmatprep.subr.mxu0 0.0
  %6445 = vmatpush1.xpose.msra.mxu0 0.0
  %6446 = vmatprep.subr.mxu0 0.0
  %6447 = vmatpush1.xpose.msra.mxu0 0.0
  %6448 = vmatprep.subr.mxu0 0.0
  %6449 = vmatpush1.xpose.msra.mxu0 0.0
  %6450 = vmatprep.subr.mxu0 0.0
  %6451 = vmatpush1.xpose.msra.mxu0 0.0
  %6452 = vmatprep.subr.mxu0 0.0
  %6453 = vmatpush1.xpose.msra.mxu0 0.0
  %6454 = vmatprep.subr.mxu0 0.0
  %6455 = vmatpush1.xpose.msra.mxu0 0.0
  %6456 = vmatprep.subr.mxu0 0.0
  %6457 = vmatpush1.xpose.msra.mxu0 0.0
  %6458 = vmatprep.subr.mxu0 0.0
  %6459 = vmatpush1.xpose.msra.mxu0 0.0
  %6460 = vmatprep.subr.mxu0 0.0
  %6461 = vmatpush1.xpose.msra.mxu0 0.0
  %6462 = vmatprep.subr.mxu0 0.0
  %6463 = vmatpush1.xpose.msra.mxu0 0.0
  %6464 = vmatprep.subr.mxu0 0.0
  %6465 = vmatpush1.xpose.msra.mxu0 %v5868
  %6466 = vmatprep.subr.mxu0 0.0
  %6467 = vmatpush1.xpose.msra.mxu0 %v5865
  %6468 = vmatprep.subr.mxu0 0.0
  %6469 = vmatpush2.xpose.msra.mxu0 0.0
  %6470 = vmatprep.subr.mxu0 0.0
  %6471 = vmatpush2.xpose.msra.mxu0 0.0
  %6472 = vmatprep.subr.mxu0 0.0
  %6473 = vmatpush2.xpose.msra.mxu0 0.0
  %6474 = vmatprep.subr.mxu0 0.0
  %6475 = vmatpush2.xpose.msra.mxu0 0.0
  %6476 = vmatprep.subr.mxu0 0.0
  %6477 = vmatpush2.xpose.msra.mxu0 0.0
  %6478 = vmatprep.subr.mxu0 0.0
  %6479 = vmatpush2.xpose.msra.mxu0 0.0
  %6480 = vmatprep.subr.mxu0 0.0
  %6481 = vmatpush2.xpose.msra.mxu0 0.0
  %6482 = vmatprep.subr.mxu0 0.0
  %6483 = vmatpush2.xpose.msra.mxu0 0.0
  %6484 = vmatprep.subr.mxu0 0.0
  %6485 = vmatpush2.xpose.msra.mxu0 0.0
  %6486 = vmatprep.subr.mxu0 0.0
  %6487 = vmatpush2.xpose.msra.mxu0 0.0
  %6488 = vmatprep.subr.mxu0 0.0
  %6489 = vmatpush2.xpose.msra.mxu0 0.0
  %6490 = vmatprep.subr.mxu0 0.0
  %6491 = vmatpush2.xpose.msra.mxu0 0.0
  %6492 = vmatprep.subr.mxu0 0.0
  %6493 = vmatpush2.xpose.msra.mxu0 0.0
  %6494 = vmatprep.subr.mxu0 0.0
  %6495 = vmatpush2.xpose.msra.mxu0 0.0
  %6496 = vmatprep.subr.mxu0 0.0
  %6497 = vmatpush2.xpose.msra.mxu0 0.0
  %6498 = vmatprep.subr.mxu0 0.0
  %6499 = vmatpush2.xpose.msra.mxu0 0.0
  %6500 = vmatprep.mubr.f32.mxu0 0.0
  %6501 = vmatmul.mubr.f32.gmra.mxu0 %v6431
  %v6502 = vpop.f32.mrf.mxu0
  %v6503 = vadd.f32 %v154, %v6502
  %v6504 = vpop.f32.mrf.mxu0
  %6505 = vmatprep.mubr.f32.mxu0 0.0
  %6506 = vmatmul.mubr.f32.gmra.mxu0 %v6434
  %v6507 = vpop.f32.mrf.mxu0
  %v6508 = vadd.f32 %v155, %v6507
  %v6509 = vpop.f32.mrf.mxu0
  %6510 = vdwg.mxu0
  %v6511 = vsel %vm520, %v6503, -inf
  %6512 = vmax.xlane.f32.xlu0 %v6511
  %v6513 = vpop.xlane.xlu0 %6512
  %v6514 = vsel %vm520, %v6508, -inf
  %6515 = vmax.xlane.f32.xlu0 %v6514
  %v6516 = vpop.xlane.xlu0 %6515
  %v6517 = vsub.f32 %v6503, %v6513
  %v6518 = vsub.f32 %v6508, %v6516
  %v6519 = vmul.f32 %v6517, 1.442695
  %v6520 = vpow.pop %v6519
  %v6521 = vmul.f32 %v6518, 1.442695
  %v6522 = vpow.pop %v6521
  %v6523 = vsel %vm520, %v6520, 0.0
  %6524 = vadd.xlane.f32.xlu0 %v6523
  %v6525 = vpop.xlane.xlu0 %6524
  %v6526 = vsel %vm520, %v6522, 0.0
  %6527 = vadd.xlane.f32.xlu0 %v6526
  %v6528 = vpop.xlane.xlu0 %6527
  %v6529 = vrcp.pop %v6525
  %v6530 = vmul.f32 %v6520, %v6529
  %v6531 = vrcp.pop %v6528
  %v6532 = vmul.f32 %v6522, %v6531
  %v6533 = vmul.f32 %v5848, %v79
  %v6534 = vmul.f32 %v5853, %v79
  %v6536 = vsel %vm520, %v6530, 0
  %v6539 = vsel %vm520, %v6532, 0
  %6541 = vmatprep.subr.mxu0 0.0
  %6542 = vmatpush1.msra.mxu0 0.0
  %6543 = vmatprep.subr.mxu0 0.0
  %6544 = vmatpush1.msra.mxu0 0.0
  %6545 = vmatprep.subr.mxu0 0.0
  %6546 = vmatpush1.msra.mxu0 0.0
  %6547 = vmatprep.subr.mxu0 0.0
  %6548 = vmatpush1.msra.mxu0 0.0
  %6549 = vmatprep.subr.mxu0 0.0
  %6550 = vmatpush1.msra.mxu0 0.0
  %6551 = vmatprep.subr.mxu0 0.0
  %6552 = vmatpush1.msra.mxu0 0.0
  %6553 = vmatprep.subr.mxu0 0.0
  %6554 = vmatpush1.msra.mxu0 0.0
  %6555 = vmatprep.subr.mxu0 0.0
  %6556 = vmatpush1.msra.mxu0 0.0
  %6557 = vmatprep.subr.mxu0 0.0
  %6558 = vmatpush1.msra.mxu0 0.0
  %6559 = vmatprep.subr.mxu0 0.0
  %6560 = vmatpush1.msra.mxu0 0.0
  %6561 = vmatprep.subr.mxu0 0.0
  %6562 = vmatpush1.msra.mxu0 0.0
  %6563 = vmatprep.subr.mxu0 0.0
  %6564 = vmatpush1.msra.mxu0 0.0
  %6565 = vmatprep.subr.mxu0 0.0
  %6566 = vmatpush1.msra.mxu0 0.0
  %6567 = vmatprep.subr.mxu0 0.0
  %6568 = vmatpush1.msra.mxu0 0.0
  %6569 = vmatprep.subr.mxu0 0.0
  %6570 = vmatpush1.msra.mxu0 %v6534
  %6571 = vmatprep.subr.mxu0 0.0
  %6572 = vmatpush1.msra.mxu0 %v6533
  %6573 = vmatprep.subr.mxu0 0.0
  %6574 = vmatpush2.msra.mxu0 0.0
  %6575 = vmatprep.subr.mxu0 0.0
  %6576 = vmatpush2.msra.mxu0 0.0
  %6577 = vmatprep.subr.mxu0 0.0
  %6578 = vmatpush2.msra.mxu0 0.0
  %6579 = vmatprep.subr.mxu0 0.0
  %6580 = vmatpush2.msra.mxu0 0.0
  %6581 = vmatprep.subr.mxu0 0.0
  %6582 = vmatpush2.msra.mxu0 0.0
  %6583 = vmatprep.subr.mxu0 0.0
  %6584 = vmatpush2.msra.mxu0 0.0
  %6585 = vmatprep.subr.mxu0 0.0
  %6586 = vmatpush2.msra.mxu0 0.0
  %6587 = vmatprep.subr.mxu0 0.0
  %6588 = vmatpush2.msra.mxu0 0.0
  %6589 = vmatprep.subr.mxu0 0.0
  %6590 = vmatpush2.msra.mxu0 0.0
  %6591 = vmatprep.subr.mxu0 0.0
  %6592 = vmatpush2.msra.mxu0 0.0
  %6593 = vmatprep.subr.mxu0 0.0
  %6594 = vmatpush2.msra.mxu0 0.0
  %6595 = vmatprep.subr.mxu0 0.0
  %6596 = vmatpush2.msra.mxu0 0.0
  %6597 = vmatprep.subr.mxu0 0.0
  %6598 = vmatpush2.msra.mxu0 0.0
  %6599 = vmatprep.subr.mxu0 0.0
  %6600 = vmatpush2.msra.mxu0 0.0
  %6601 = vmatprep.subr.mxu0 0.0
  %6602 = vmatpush2.msra.mxu0 0.0
  %6603 = vmatprep.subr.mxu0 0.0
  %6604 = vmatpush2.msra.mxu0 0.0
  %6605 = vmatprep.mubr.f32.mxu0 0.0
  %6606 = vmatmul.mubr.f32.gmra.mxu0 %v6536
  %v6607 = vpop.f32.mrf.mxu0
  %v6608 = vadd.f32 0.0, %v6607
  %v6609 = vpop.f32.mrf.mxu0
  %6610 = vmatprep.mubr.f32.mxu0 0.0
  %6611 = vmatmul.mubr.f32.gmra.mxu0 %v6539
  %v6612 = vpop.f32.mrf.mxu0
  %v6613 = vadd.f32 0.0, %v6612
  %v6614 = vpop.f32.mrf.mxu0
  %6615 = vdwg.mxu0
  %v6616 = vadd.f32 %v6426, %v6608
  %v6617 = vadd.f32 %v6427, %v6613
  %s6618 = scalar_lea.vmem %s9, 128
  %v6619 = vld [vmem:[%s6618] sm:$0xff]
  %v6620 = vld [vmem:[%s6618 + $0x8] sm:$0xff]
  %v6621 = vld [vmem:[%s6618 + $0x10] sm:$0xff]
  %v6622 = vld [vmem:[%s6618 + $0x18] sm:$0xff]
  %s6623 = scalar_lea.vmem %s10, 4
  %v6624 = vld [vmem:[%s6623] sm:$0x1]
  %v6626 = vlaneseq
  %v6627 = vshrl.u32 %v6626, 7
  %v6628 = vsub.s32 0, %v6627
  %v6629 = vrot.slane %v6624, %v6628
  %v6632 = vsel %vm173, %v6616, 0
  %v6635 = vsel %vm173, %v6617, 0
  %6637 = vmatprep.subr.mxu0 0.0
  %6638 = vmatpush1.msra.mxu0 0.0
  %6639 = vmatprep.subr.mxu0 0.0
  %6640 = vmatpush1.msra.mxu0 0.0
  %6641 = vmatprep.subr.mxu0 0.0
  %6642 = vmatpush1.msra.mxu0 0.0
  %6643 = vmatprep.subr.mxu0 0.0
  %6644 = vmatpush1.msra.mxu0 0.0
  %6645 = vmatprep.subr.mxu0 0.0
  %6646 = vmatpush1.msra.mxu0 0.0
  %6647 = vmatprep.subr.mxu0 0.0
  %6648 = vmatpush1.msra.mxu0 0.0
  %6649 = vmatprep.subr.mxu0 0.0
  %6650 = vmatpush1.msra.mxu0 0.0
  %6651 = vmatprep.subr.mxu0 0.0
  %6652 = vmatpush1.msra.mxu0 0.0
  %6653 = vmatprep.subr.mxu0 0.0
  %6654 = vmatpush1.msra.mxu0 0.0
  %6655 = vmatprep.subr.mxu0 0.0
  %6656 = vmatpush1.msra.mxu0 0.0
  %6657 = vmatprep.subr.mxu0 0.0
  %6658 = vmatpush1.msra.mxu0 0.0
  %6659 = vmatprep.subr.mxu0 0.0
  %6660 = vmatpush1.msra.mxu0 0.0
  %6661 = vmatprep.subr.mxu0 0.0
  %6662 = vmatpush1.msra.mxu0 %v6622
  %6663 = vmatprep.subr.mxu0 0.0
  %6664 = vmatpush1.msra.mxu0 %v6621
  %6665 = vmatprep.subr.mxu0 0.0
  %6666 = vmatpush1.msra.mxu0 %v6620
  %6667 = vmatprep.subr.mxu0 0.0
  %6668 = vmatpush1.msra.mxu0 %v6619
  %6669 = vmatprep.subr.mxu0 0.0
  %6670 = vmatpush2.msra.mxu0 0.0
  %6671 = vmatprep.subr.mxu0 0.0
  %6672 = vmatpush2.msra.mxu0 0.0
  %6673 = vmatprep.subr.mxu0 0.0
  %6674 = vmatpush2.msra.mxu0 0.0
  %6675 = vmatprep.subr.mxu0 0.0
  %6676 = vmatpush2.msra.mxu0 0.0
  %6677 = vmatprep.subr.mxu0 0.0
  %6678 = vmatpush2.msra.mxu0 0.0
  %6679 = vmatprep.subr.mxu0 0.0
  %6680 = vmatpush2.msra.mxu0 0.0
  %6681 = vmatprep.subr.mxu0 0.0
  %6682 = vmatpush2.msra.mxu0 0.0
  %6683 = vmatprep.subr.mxu0 0.0
  %6684 = vmatpush2.msra.mxu0 0.0
  %6685 = vmatprep.subr.mxu0 0.0
  %6686 = vmatpush2.msra.mxu0 0.0
  %6687 = vmatprep.subr.mxu0 0.0
  %6688 = vmatpush2.msra.mxu0 0.0
  %6689 = vmatprep.subr.mxu0 0.0
  %6690 = vmatpush2.msra.mxu0 0.0
  %6691 = vmatprep.subr.mxu0 0.0
  %6692 = vmatpush2.msra.mxu0 0.0
  %6693 = vmatprep.subr.mxu0 0.0
  %6694 = vmatpush2.msra.mxu0 0.0
  %6695 = vmatprep.subr.mxu0 0.0
  %6696 = vmatpush2.msra.mxu0 0.0
  %6697 = vmatprep.subr.mxu0 0.0
  %6698 = vmatpush2.msra.mxu0 0.0
  %6699 = vmatprep.subr.mxu0 0.0
  %6700 = vmatpush2.msra.mxu0 0.0
  %6701 = vmatprep.mubr.f32.mxu0 0.0
  %6702 = vmatmul.mubr.f32.gmra.mxu0 %v6632
  %v6703 = vpop.f32.mrf.mxu0
  %v6704 = vadd.f32 %v6629, %v6703
  %v6705 = vpop.f32.mrf.mxu0
  %6706 = vmatprep.mubr.f32.mxu0 0.0
  %6707 = vmatmul.mubr.f32.gmra.mxu0 %v6635
  %v6708 = vpop.f32.mrf.mxu0
  %v6709 = vadd.f32 %v6629, %v6708
  %v6710 = vpop.f32.mrf.mxu0
  %6711 = vdwg.mxu0
  %v6712 = vadd.f32 %v5584, %v6704
  %v6713 = vadd.f32 %v5585, %v6709
  %s6714 = scalar_lea.vmem %s15, 7
  %v6715 = vld [vmem:[%s6714] sm:$0x1]
  %s6716 = scalar_lea.vmem %s16, 7
  %v6717 = vld [vmem:[%s6716] sm:$0x1]
  %v6718 = vsel %vm173, %v6712, 0.0
  %6719 = vadd.xlane.f32.xlu0 %v6718
  %v6720 = vpop.xlane.xlu0 %6719
  %v6721 = vsel %vm173, %v6713, 0.0
  %6722 = vadd.xlane.f32.xlu0 %v6721
  %v6723 = vpop.xlane.xlu0 %6722
  %v6724 = vmul.f32 %v6720, %v1296
  %v6725 = vmul.f32 %v6723, %v1296
  %v6726 = vsub.f32 %v6712, %v6724
  %v6727 = vsub.f32 %v6713, %v6725
  %v6728 = vmul.f32 %v6726, %v6726
  %v6729 = vmul.f32 %v6727, %v6727
  %v6730 = vsel %vm173, %v6728, 0.0
  %6731 = vadd.xlane.f32.xlu0 %v6730
  %v6732 = vpop.xlane.xlu0 %6731
  %v6733 = vsel %vm173, %v6729, 0.0
  %6734 = vadd.xlane.f32.xlu0 %v6733
  %v6735 = vpop.xlane.xlu0 %6734
  %v6736 = vmul.f32 %v6732, %v1296
  %v6737 = vmul.f32 %v6735, %v1296
  %v6738 = vadd.f32 %v6736, 1e-05
  %v6739 = vadd.f32 %v6737, 1e-05
  %v6740 = vrsqrt.pop %v6738
  %v6741 = vrsqrt.pop %v6739
  %v6742 = vmul.f32 %v6726, %v6740
  %v6743 = vmul.f32 %v6727, %v6741
  %v6745 = vlaneseq
  %v6746 = vshrl.u32 %v6745, 7
  %v6747 = vsub.s32 0, %v6746
  %v6748 = vrot.slane %v6715, %v6747
  %v6750 = vmul.f32 %v6742, %v6748
  %v6751 = vmul.f32 %v6743, %v6748
  %v6753 = vlaneseq
  %v6754 = vshrl.u32 %v6753, 7
  %v6755 = vsub.s32 0, %v6754
  %v6756 = vrot.slane %v6717, %v6755
  %v6758 = vadd.f32 %v6750, %v6756
  %v6759 = vadd.f32 %v6751, %v6756
  %s6760 = scalar_lea.vmem %s7, 480
  %v6761 = vld [vmem:[%s6760] sm:$0xff]
  %v6762 = vld [vmem:[%s6760 + $0x8] sm:$0xff]
  %v6763 = vld [vmem:[%s6760 + $0x10] sm:$0xff]
  %v6764 = vld [vmem:[%s6760 + $0x18] sm:$0xff]
  %s6765 = scalar_lea.vmem %s8, 15
  %v6766 = vld [vmem:[%s6765] sm:$0x1]
  %v6768 = vlaneseq
  %v6769 = vshrl.u32 %v6768, 7
  %v6770 = vsub.s32 0, %v6769
  %v6771 = vrot.slane %v6766, %v6770
  %v6774 = vsel %vm173, %v6758, 0
  %v6777 = vsel %vm173, %v6759, 0
  %6779 = vmatprep.subr.mxu0 0.0
  %6780 = vmatpush1.msra.mxu0 0.0
  %6781 = vmatprep.subr.mxu0 0.0
  %6782 = vmatpush1.msra.mxu0 0.0
  %6783 = vmatprep.subr.mxu0 0.0
  %6784 = vmatpush1.msra.mxu0 0.0
  %6785 = vmatprep.subr.mxu0 0.0
  %6786 = vmatpush1.msra.mxu0 0.0
  %6787 = vmatprep.subr.mxu0 0.0
  %6788 = vmatpush1.msra.mxu0 0.0
  %6789 = vmatprep.subr.mxu0 0.0
  %6790 = vmatpush1.msra.mxu0 0.0
  %6791 = vmatprep.subr.mxu0 0.0
  %6792 = vmatpush1.msra.mxu0 0.0
  %6793 = vmatprep.subr.mxu0 0.0
  %6794 = vmatpush1.msra.mxu0 0.0
  %6795 = vmatprep.subr.mxu0 0.0
  %6796 = vmatpush1.msra.mxu0 0.0
  %6797 = vmatprep.subr.mxu0 0.0
  %6798 = vmatpush1.msra.mxu0 0.0
  %6799 = vmatprep.subr.mxu0 0.0
  %6800 = vmatpush1.msra.mxu0 0.0
  %6801 = vmatprep.subr.mxu0 0.0
  %6802 = vmatpush1.msra.mxu0 0.0
  %6803 = vmatprep.subr.mxu0 0.0
  %6804 = vmatpush1.msra.mxu0 %v6764
  %6805 = vmatprep.subr.mxu0 0.0
  %6806 = vmatpush1.msra.mxu0 %v6763
  %6807 = vmatprep.subr.mxu0 0.0
  %6808 = vmatpush1.msra.mxu0 %v6762
  %6809 = vmatprep.subr.mxu0 0.0
  %6810 = vmatpush1.msra.mxu0 %v6761
  %6811 = vmatprep.subr.mxu0 0.0
  %6812 = vmatpush2.msra.mxu0 0.0
  %6813 = vmatprep.subr.mxu0 0.0
  %6814 = vmatpush2.msra.mxu0 0.0
  %6815 = vmatprep.subr.mxu0 0.0
  %6816 = vmatpush2.msra.mxu0 0.0
  %6817 = vmatprep.subr.mxu0 0.0
  %6818 = vmatpush2.msra.mxu0 0.0
  %6819 = vmatprep.subr.mxu0 0.0
  %6820 = vmatpush2.msra.mxu0 0.0
  %6821 = vmatprep.subr.mxu0 0.0
  %6822 = vmatpush2.msra.mxu0 0.0
  %6823 = vmatprep.subr.mxu0 0.0
  %6824 = vmatpush2.msra.mxu0 0.0
  %6825 = vmatprep.subr.mxu0 0.0
  %6826 = vmatpush2.msra.mxu0 0.0
  %6827 = vmatprep.subr.mxu0 0.0
  %6828 = vmatpush2.msra.mxu0 0.0
  %6829 = vmatprep.subr.mxu0 0.0
  %6830 = vmatpush2.msra.mxu0 0.0
  %6831 = vmatprep.subr.mxu0 0.0
  %6832 = vmatpush2.msra.mxu0 0.0
  %6833 = vmatprep.subr.mxu0 0.0
  %6834 = vmatpush2.msra.mxu0 0.0
  %6835 = vmatprep.subr.mxu0 0.0
  %6836 = vmatpush2.msra.mxu0 0.0
  %6837 = vmatprep.subr.mxu0 0.0
  %6838 = vmatpush2.msra.mxu0 0.0
  %6839 = vmatprep.subr.mxu0 0.0
  %6840 = vmatpush2.msra.mxu0 0.0
  %6841 = vmatprep.subr.mxu0 0.0
  %6842 = vmatpush2.msra.mxu0 0.0
  %6843 = vmatprep.mubr.f32.mxu0 0.0
  %6844 = vmatmul.mubr.f32.gmra.mxu0 %v6774
  %v6845 = vpop.f32.mrf.mxu0
  %v6846 = vadd.f32 %v6771, %v6845
  %v6847 = vpop.f32.mrf.mxu0
  %6848 = vmatprep.mubr.f32.mxu0 0.0
  %6849 = vmatmul.mubr.f32.gmra.mxu0 %v6777
  %v6850 = vpop.f32.mrf.mxu0
  %v6851 = vadd.f32 %v6771, %v6850
  %v6852 = vpop.f32.mrf.mxu0
  %6853 = vdwg.mxu0
  %s6854 = scalar_lea.vmem %s7, 512
  %v6855 = vld [vmem:[%s6854] sm:$0xff]
  %v6856 = vld [vmem:[%s6854 + $0x8] sm:$0xff]
  %v6857 = vld [vmem:[%s6854 + $0x10] sm:$0xff]
  %v6858 = vld [vmem:[%s6854 + $0x18] sm:$0xff]
  %s6859 = scalar_lea.vmem %s8, 16
  %v6860 = vld [vmem:[%s6859] sm:$0x1]
  %v6862 = vlaneseq
  %v6863 = vshrl.u32 %v6862, 7
  %v6864 = vsub.s32 0, %v6863
  %v6865 = vrot.slane %v6860, %v6864
  %6867 = vmatprep.subr.mxu0 0.0
  %6868 = vmatpush1.msra.mxu0 0.0
  %6869 = vmatprep.subr.mxu0 0.0
  %6870 = vmatpush1.msra.mxu0 0.0
  %6871 = vmatprep.subr.mxu0 0.0
  %6872 = vmatpush1.msra.mxu0 0.0
  %6873 = vmatprep.subr.mxu0 0.0
  %6874 = vmatpush1.msra.mxu0 0.0
  %6875 = vmatprep.subr.mxu0 0.0
  %6876 = vmatpush1.msra.mxu0 0.0
  %6877 = vmatprep.subr.mxu0 0.0
  %6878 = vmatpush1.msra.mxu0 0.0
  %6879 = vmatprep.subr.mxu0 0.0
  %6880 = vmatpush1.msra.mxu0 0.0
  %6881 = vmatprep.subr.mxu0 0.0
  %6882 = vmatpush1.msra.mxu0 0.0
  %6883 = vmatprep.subr.mxu0 0.0
  %6884 = vmatpush1.msra.mxu0 0.0
  %6885 = vmatprep.subr.mxu0 0.0
  %6886 = vmatpush1.msra.mxu0 0.0
  %6887 = vmatprep.subr.mxu0 0.0
  %6888 = vmatpush1.msra.mxu0 0.0
  %6889 = vmatprep.subr.mxu0 0.0
  %6890 = vmatpush1.msra.mxu0 0.0
  %6891 = vmatprep.subr.mxu0 0.0
  %6892 = vmatpush1.msra.mxu0 %v6858
  %6893 = vmatprep.subr.mxu0 0.0
  %6894 = vmatpush1.msra.mxu0 %v6857
  %6895 = vmatprep.subr.mxu0 0.0
  %6896 = vmatpush1.msra.mxu0 %v6856
  %6897 = vmatprep.subr.mxu0 0.0
  %6898 = vmatpush1.msra.mxu0 %v6855
  %6899 = vmatprep.subr.mxu0 0.0
  %6900 = vmatpush2.msra.mxu0 0.0
  %6901 = vmatprep.subr.mxu0 0.0
  %6902 = vmatpush2.msra.mxu0 0.0
  %6903 = vmatprep.subr.mxu0 0.0
  %6904 = vmatpush2.msra.mxu0 0.0
  %6905 = vmatprep.subr.mxu0 0.0
  %6906 = vmatpush2.msra.mxu0 0.0
  %6907 = vmatprep.subr.mxu0 0.0
  %6908 = vmatpush2.msra.mxu0 0.0
  %6909 = vmatprep.subr.mxu0 0.0
  %6910 = vmatpush2.msra.mxu0 0.0
  %6911 = vmatprep.subr.mxu0 0.0
  %6912 = vmatpush2.msra.mxu0 0.0
  %6913 = vmatprep.subr.mxu0 0.0
  %6914 = vmatpush2.msra.mxu0 0.0
  %6915 = vmatprep.subr.mxu0 0.0
  %6916 = vmatpush2.msra.mxu0 0.0
  %6917 = vmatprep.subr.mxu0 0.0
  %6918 = vmatpush2.msra.mxu0 0.0
  %6919 = vmatprep.subr.mxu0 0.0
  %6920 = vmatpush2.msra.mxu0 0.0
  %6921 = vmatprep.subr.mxu0 0.0
  %6922 = vmatpush2.msra.mxu0 0.0
  %6923 = vmatprep.subr.mxu0 0.0
  %6924 = vmatpush2.msra.mxu0 0.0
  %6925 = vmatprep.subr.mxu0 0.0
  %6926 = vmatpush2.msra.mxu0 0.0
  %6927 = vmatprep.subr.mxu0 0.0
  %6928 = vmatpush2.msra.mxu0 0.0
  %6929 = vmatprep.subr.mxu0 0.0
  %6930 = vmatpush2.msra.mxu0 0.0
  %6931 = vmatprep.mubr.f32.mxu0 0.0
  %6932 = vmatmul.mubr.f32.gmra.mxu0 %v4272
  %v6933 = vpop.f32.mrf.mxu0
  %v6934 = vadd.f32 %v6865, %v6933
  %v6935 = vpop.f32.mrf.mxu0
  %6936 = vmatprep.mubr.f32.mxu0 0.0
  %6937 = vmatmul.mubr.f32.gmra.mxu0 %v4275
  %v6938 = vpop.f32.mrf.mxu0
  %v6939 = vadd.f32 %v6865, %v6938
  %v6940 = vpop.f32.mrf.mxu0
  %6941 = vdwg.mxu0
  %s6942 = scalar_lea.vmem %s7, 544
  %v6943 = vld [vmem:[%s6942] sm:$0xff]
  %v6944 = vld [vmem:[%s6942 + $0x8] sm:$0xff]
  %v6945 = vld [vmem:[%s6942 + $0x10] sm:$0xff]
  %v6946 = vld [vmem:[%s6942 + $0x18] sm:$0xff]
  %s6947 = scalar_lea.vmem %s8, 17
  %v6948 = vld [vmem:[%s6947] sm:$0x1]
  %v6950 = vlaneseq
  %v6951 = vshrl.u32 %v6950, 7
  %v6952 = vsub.s32 0, %v6951
  %v6953 = vrot.slane %v6948, %v6952
  %6955 = vmatprep.subr.mxu0 0.0
  %6956 = vmatpush1.msra.mxu0 0.0
  %6957 = vmatprep.subr.mxu0 0.0
  %6958 = vmatpush1.msra.mxu0 0.0
  %6959 = vmatprep.subr.mxu0 0.0
  %6960 = vmatpush1.msra.mxu0 0.0
  %6961 = vmatprep.subr.mxu0 0.0
  %6962 = vmatpush1.msra.mxu0 0.0
  %6963 = vmatprep.subr.mxu0 0.0
  %6964 = vmatpush1.msra.mxu0 0.0
  %6965 = vmatprep.subr.mxu0 0.0
  %6966 = vmatpush1.msra.mxu0 0.0
  %6967 = vmatprep.subr.mxu0 0.0
  %6968 = vmatpush1.msra.mxu0 0.0
  %6969 = vmatprep.subr.mxu0 0.0
  %6970 = vmatpush1.msra.mxu0 0.0
  %6971 = vmatprep.subr.mxu0 0.0
  %6972 = vmatpush1.msra.mxu0 0.0
  %6973 = vmatprep.subr.mxu0 0.0
  %6974 = vmatpush1.msra.mxu0 0.0
  %6975 = vmatprep.subr.mxu0 0.0
  %6976 = vmatpush1.msra.mxu0 0.0
  %6977 = vmatprep.subr.mxu0 0.0
  %6978 = vmatpush1.msra.mxu0 0.0
  %6979 = vmatprep.subr.mxu0 0.0
  %6980 = vmatpush1.msra.mxu0 %v6946
  %6981 = vmatprep.subr.mxu0 0.0
  %6982 = vmatpush1.msra.mxu0 %v6945
  %6983 = vmatprep.subr.mxu0 0.0
  %6984 = vmatpush1.msra.mxu0 %v6944
  %6985 = vmatprep.subr.mxu0 0.0
  %6986 = vmatpush1.msra.mxu0 %v6943
  %6987 = vmatprep.subr.mxu0 0.0
  %6988 = vmatpush2.msra.mxu0 0.0
  %6989 = vmatprep.subr.mxu0 0.0
  %6990 = vmatpush2.msra.mxu0 0.0
  %6991 = vmatprep.subr.mxu0 0.0
  %6992 = vmatpush2.msra.mxu0 0.0
  %6993 = vmatprep.subr.mxu0 0.0
  %6994 = vmatpush2.msra.mxu0 0.0
  %6995 = vmatprep.subr.mxu0 0.0
  %6996 = vmatpush2.msra.mxu0 0.0
  %6997 = vmatprep.subr.mxu0 0.0
  %6998 = vmatpush2.msra.mxu0 0.0
  %6999 = vmatprep.subr.mxu0 0.0
  %7000 = vmatpush2.msra.mxu0 0.0
  %7001 = vmatprep.subr.mxu0 0.0
  %7002 = vmatpush2.msra.mxu0 0.0
  %7003 = vmatprep.subr.mxu0 0.0
  %7004 = vmatpush2.msra.mxu0 0.0
  %7005 = vmatprep.subr.mxu0 0.0
  %7006 = vmatpush2.msra.mxu0 0.0
  %7007 = vmatprep.subr.mxu0 0.0
  %7008 = vmatpush2.msra.mxu0 0.0
  %7009 = vmatprep.subr.mxu0 0.0
  %7010 = vmatpush2.msra.mxu0 0.0
  %7011 = vmatprep.subr.mxu0 0.0
  %7012 = vmatpush2.msra.mxu0 0.0
  %7013 = vmatprep.subr.mxu0 0.0
  %7014 = vmatpush2.msra.mxu0 0.0
  %7015 = vmatprep.subr.mxu0 0.0
  %7016 = vmatpush2.msra.mxu0 0.0
  %7017 = vmatprep.subr.mxu0 0.0
  %7018 = vmatpush2.msra.mxu0 0.0
  %7019 = vmatprep.mubr.f32.mxu0 0.0
  %7020 = vmatmul.mubr.f32.gmra.mxu0 %v4272
  %v7021 = vpop.f32.mrf.mxu0
  %v7022 = vadd.f32 %v6953, %v7021
  %v7023 = vpop.f32.mrf.mxu0
  %7024 = vmatprep.mubr.f32.mxu0 0.0
  %7025 = vmatmul.mubr.f32.gmra.mxu0 %v4275
  %v7026 = vpop.f32.mrf.mxu0
  %v7027 = vadd.f32 %v6953, %v7026
  %v7028 = vpop.f32.mrf.mxu0
  %7029 = vdwg.mxu0
  %v7030 = vmul.f32 %v6846, %v67
  %v7031 = vmul.f32 %v6851, %v67
  %v7033 = vsel %vm173, %v7030, 0
  %v7036 = vsel %vm173, %v7031, 0
  %v7039 = vsel %vm173, %v6934, 0
  %v7042 = vsel %vm173, %v6939, 0
  %7044 = vmatprep.subr.mxu0 0.0
  %7045 = vmatpush1.xpose.msra.mxu0 0.0
  %7046 = vmatprep.subr.mxu0 0.0
  %7047 = vmatpush1.xpose.msra.mxu0 0.0
  %7048 = vmatprep.subr.mxu0 0.0
  %7049 = vmatpush1.xpose.msra.mxu0 0.0
  %7050 = vmatprep.subr.mxu0 0.0
  %7051 = vmatpush1.xpose.msra.mxu0 0.0
  %7052 = vmatprep.subr.mxu0 0.0
  %7053 = vmatpush1.xpose.msra.mxu0 0.0
  %7054 = vmatprep.subr.mxu0 0.0
  %7055 = vmatpush1.xpose.msra.mxu0 0.0
  %7056 = vmatprep.subr.mxu0 0.0
  %7057 = vmatpush1.xpose.msra.mxu0 0.0
  %7058 = vmatprep.subr.mxu0 0.0
  %7059 = vmatpush1.xpose.msra.mxu0 0.0
  %7060 = vmatprep.subr.mxu0 0.0
  %7061 = vmatpush1.xpose.msra.mxu0 0.0
  %7062 = vmatprep.subr.mxu0 0.0
  %7063 = vmatpush1.xpose.msra.mxu0 0.0
  %7064 = vmatprep.subr.mxu0 0.0
  %7065 = vmatpush1.xpose.msra.mxu0 0.0
  %7066 = vmatprep.subr.mxu0 0.0
  %7067 = vmatpush1.xpose.msra.mxu0 0.0
  %7068 = vmatprep.subr.mxu0 0.0
  %7069 = vmatpush1.xpose.msra.mxu0 0.0
  %7070 = vmatprep.subr.mxu0 0.0
  %7071 = vmatpush1.xpose.msra.mxu0 0.0
  %7072 = vmatprep.subr.mxu0 0.0
  %7073 = vmatpush1.xpose.msra.mxu0 %v7042
  %7074 = vmatprep.subr.mxu0 0.0
  %7075 = vmatpush1.xpose.msra.mxu0 %v7039
  %7076 = vmatprep.subr.mxu0 0.0
  %7077 = vmatpush2.xpose.msra.mxu0 0.0
  %7078 = vmatprep.subr.mxu0 0.0
  %7079 = vmatpush2.xpose.msra.mxu0 0.0
  %7080 = vmatprep.subr.mxu0 0.0
  %7081 = vmatpush2.xpose.msra.mxu0 0.0
  %7082 = vmatprep.subr.mxu0 0.0
  %7083 = vmatpush2.xpose.msra.mxu0 0.0
  %7084 = vmatprep.subr.mxu0 0.0
  %7085 = vmatpush2.xpose.msra.mxu0 0.0
  %7086 = vmatprep.subr.mxu0 0.0
  %7087 = vmatpush2.xpose.msra.mxu0 0.0
  %7088 = vmatprep.subr.mxu0 0.0
  %7089 = vmatpush2.xpose.msra.mxu0 0.0
  %7090 = vmatprep.subr.mxu0 0.0
  %7091 = vmatpush2.xpose.msra.mxu0 0.0
  %7092 = vmatprep.subr.mxu0 0.0
  %7093 = vmatpush2.xpose.msra.mxu0 0.0
  %7094 = vmatprep.subr.mxu0 0.0
  %7095 = vmatpush2.xpose.msra.mxu0 0.0
  %7096 = vmatprep.subr.mxu0 0.0
  %7097 = vmatpush2.xpose.msra.mxu0 0.0
  %7098 = vmatprep.subr.mxu0 0.0
  %7099 = vmatpush2.xpose.msra.mxu0 0.0
  %7100 = vmatprep.subr.mxu0 0.0
  %7101 = vmatpush2.xpose.msra.mxu0 0.0
  %7102 = vmatprep.subr.mxu0 0.0
  %7103 = vmatpush2.xpose.msra.mxu0 0.0
  %7104 = vmatprep.subr.mxu0 0.0
  %7105 = vmatpush2.xpose.msra.mxu0 0.0
  %7106 = vmatprep.subr.mxu0 0.0
  %7107 = vmatpush2.xpose.msra.mxu0 0.0
  %7108 = vmatprep.mubr.f32.mxu0 0.0
  %7109 = vmatmul.mubr.f32.gmra.mxu0 %v7033
  %v7110 = vpop.f32.mrf.mxu0
  %v7111 = vadd.f32 %v158, %v7110
  %v7112 = vpop.f32.mrf.mxu0
  %7113 = vmatprep.mubr.f32.mxu0 0.0
  %7114 = vmatmul.mubr.f32.gmra.mxu0 %v7036
  %v7115 = vpop.f32.mrf.mxu0
  %v7116 = vadd.f32 %v159, %v7115
  %v7117 = vpop.f32.mrf.mxu0
  %7118 = vdwg.mxu0
  %v7119 = vsel %vm520, %v7111, -inf
  %7120 = vmax.xlane.f32.xlu0 %v7119
  %v7121 = vpop.xlane.xlu0 %7120
  %v7122 = vsel %vm520, %v7116, -inf
  %7123 = vmax.xlane.f32.xlu0 %v7122
  %v7124 = vpop.xlane.xlu0 %7123
  %v7125 = vsub.f32 %v7111, %v7121
  %v7126 = vsub.f32 %v7116, %v7124
  %v7127 = vmul.f32 %v7125, 1.442695
  %v7128 = vpow.pop %v7127
  %v7129 = vmul.f32 %v7126, 1.442695
  %v7130 = vpow.pop %v7129
  %v7131 = vsel %vm520, %v7128, 0.0
  %7132 = vadd.xlane.f32.xlu0 %v7131
  %v7133 = vpop.xlane.xlu0 %7132
  %v7134 = vsel %vm520, %v7130, 0.0
  %7135 = vadd.xlane.f32.xlu0 %v7134
  %v7136 = vpop.xlane.xlu0 %7135
  %v7137 = vrcp.pop %v7133
  %v7138 = vmul.f32 %v7128, %v7137
  %v7139 = vrcp.pop %v7136
  %v7140 = vmul.f32 %v7130, %v7139
  %v7141 = vmul.f32 %v7022, %v67
  %v7142 = vmul.f32 %v7027, %v67
  %v7143 = vmul.f32 %v6846, %v71
  %v7144 = vmul.f32 %v6851, %v71
  %v7146 = vsel %vm173, %v7143, 0
  %v7149 = vsel %vm173, %v7144, 0
  %7151 = vmatprep.subr.mxu0 0.0
  %7152 = vmatpush1.xpose.msra.mxu0 0.0
  %7153 = vmatprep.subr.mxu0 0.0
  %7154 = vmatpush1.xpose.msra.mxu0 0.0
  %7155 = vmatprep.subr.mxu0 0.0
  %7156 = vmatpush1.xpose.msra.mxu0 0.0
  %7157 = vmatprep.subr.mxu0 0.0
  %7158 = vmatpush1.xpose.msra.mxu0 0.0
  %7159 = vmatprep.subr.mxu0 0.0
  %7160 = vmatpush1.xpose.msra.mxu0 0.0
  %7161 = vmatprep.subr.mxu0 0.0
  %7162 = vmatpush1.xpose.msra.mxu0 0.0
  %7163 = vmatprep.subr.mxu0 0.0
  %7164 = vmatpush1.xpose.msra.mxu0 0.0
  %7165 = vmatprep.subr.mxu0 0.0
  %7166 = vmatpush1.xpose.msra.mxu0 0.0
  %7167 = vmatprep.subr.mxu0 0.0
  %7168 = vmatpush1.xpose.msra.mxu0 0.0
  %7169 = vmatprep.subr.mxu0 0.0
  %7170 = vmatpush1.xpose.msra.mxu0 0.0
  %7171 = vmatprep.subr.mxu0 0.0
  %7172 = vmatpush1.xpose.msra.mxu0 0.0
  %7173 = vmatprep.subr.mxu0 0.0
  %7174 = vmatpush1.xpose.msra.mxu0 0.0
  %7175 = vmatprep.subr.mxu0 0.0
  %7176 = vmatpush1.xpose.msra.mxu0 0.0
  %7177 = vmatprep.subr.mxu0 0.0
  %7178 = vmatpush1.xpose.msra.mxu0 0.0
  %7179 = vmatprep.subr.mxu0 0.0
  %7180 = vmatpush1.xpose.msra.mxu0 %v7042
  %7181 = vmatprep.subr.mxu0 0.0
  %7182 = vmatpush1.xpose.msra.mxu0 %v7039
  %7183 = vmatprep.subr.mxu0 0.0
  %7184 = vmatpush2.xpose.msra.mxu0 0.0
  %7185 = vmatprep.subr.mxu0 0.0
  %7186 = vmatpush2.xpose.msra.mxu0 0.0
  %7187 = vmatprep.subr.mxu0 0.0
  %7188 = vmatpush2.xpose.msra.mxu0 0.0
  %7189 = vmatprep.subr.mxu0 0.0
  %7190 = vmatpush2.xpose.msra.mxu0 0.0
  %7191 = vmatprep.subr.mxu0 0.0
  %7192 = vmatpush2.xpose.msra.mxu0 0.0
  %7193 = vmatprep.subr.mxu0 0.0
  %7194 = vmatpush2.xpose.msra.mxu0 0.0
  %7195 = vmatprep.subr.mxu0 0.0
  %7196 = vmatpush2.xpose.msra.mxu0 0.0
  %7197 = vmatprep.subr.mxu0 0.0
  %7198 = vmatpush2.xpose.msra.mxu0 0.0
  %7199 = vmatprep.subr.mxu0 0.0
  %7200 = vmatpush2.xpose.msra.mxu0 0.0
  %7201 = vmatprep.subr.mxu0 0.0
  %7202 = vmatpush2.xpose.msra.mxu0 0.0
  %7203 = vmatprep.subr.mxu0 0.0
  %7204 = vmatpush2.xpose.msra.mxu0 0.0
  %7205 = vmatprep.subr.mxu0 0.0
  %7206 = vmatpush2.xpose.msra.mxu0 0.0
  %7207 = vmatprep.subr.mxu0 0.0
  %7208 = vmatpush2.xpose.msra.mxu0 0.0
  %7209 = vmatprep.subr.mxu0 0.0
  %7210 = vmatpush2.xpose.msra.mxu0 0.0
  %7211 = vmatprep.subr.mxu0 0.0
  %7212 = vmatpush2.xpose.msra.mxu0 0.0
  %7213 = vmatprep.subr.mxu0 0.0
  %7214 = vmatpush2.xpose.msra.mxu0 0.0
  %7215 = vmatprep.mubr.f32.mxu0 0.0
  %7216 = vmatmul.mubr.f32.gmra.mxu0 %v7146
  %v7217 = vpop.f32.mrf.mxu0
  %v7218 = vadd.f32 %v158, %v7217
  %v7219 = vpop.f32.mrf.mxu0
  %7220 = vmatprep.mubr.f32.mxu0 0.0
  %7221 = vmatmul.mubr.f32.gmra.mxu0 %v7149
  %v7222 = vpop.f32.mrf.mxu0
  %v7223 = vadd.f32 %v159, %v7222
  %v7224 = vpop.f32.mrf.mxu0
  %7225 = vdwg.mxu0
  %v7226 = vsel %vm520, %v7218, -inf
  %7227 = vmax.xlane.f32.xlu0 %v7226
  %v7228 = vpop.xlane.xlu0 %7227
  %v7229 = vsel %vm520, %v7223, -inf
  %7230 = vmax.xlane.f32.xlu0 %v7229
  %v7231 = vpop.xlane.xlu0 %7230
  %v7232 = vsub.f32 %v7218, %v7228
  %v7233 = vsub.f32 %v7223, %v7231
  %v7234 = vmul.f32 %v7232, 1.442695
  %v7235 = vpow.pop %v7234
  %v7236 = vmul.f32 %v7233, 1.442695
  %v7237 = vpow.pop %v7236
  %v7238 = vsel %vm520, %v7235, 0.0
  %7239 = vadd.xlane.f32.xlu0 %v7238
  %v7240 = vpop.xlane.xlu0 %7239
  %v7241 = vsel %vm520, %v7237, 0.0
  %7242 = vadd.xlane.f32.xlu0 %v7241
  %v7243 = vpop.xlane.xlu0 %7242
  %v7244 = vrcp.pop %v7240
  %v7245 = vmul.f32 %v7235, %v7244
  %v7246 = vrcp.pop %v7243
  %v7247 = vmul.f32 %v7237, %v7246
  %v7248 = vmul.f32 %v7022, %v71
  %v7249 = vmul.f32 %v7027, %v71
  %v7251 = vsel %vm520, %v7245, 0
  %v7254 = vsel %vm520, %v7247, 0
  %7256 = vmatprep.subr.mxu0 0.0
  %7257 = vmatpush1.msra.mxu0 0.0
  %7258 = vmatprep.subr.mxu0 0.0
  %7259 = vmatpush1.msra.mxu0 0.0
  %7260 = vmatprep.subr.mxu0 0.0
  %7261 = vmatpush1.msra.mxu0 0.0
  %7262 = vmatprep.subr.mxu0 0.0
  %7263 = vmatpush1.msra.mxu0 0.0
  %7264 = vmatprep.subr.mxu0 0.0
  %7265 = vmatpush1.msra.mxu0 0.0
  %7266 = vmatprep.subr.mxu0 0.0
  %7267 = vmatpush1.msra.mxu0 0.0
  %7268 = vmatprep.subr.mxu0 0.0
  %7269 = vmatpush1.msra.mxu0 0.0
  %7270 = vmatprep.subr.mxu0 0.0
  %7271 = vmatpush1.msra.mxu0 0.0
  %7272 = vmatprep.subr.mxu0 0.0
  %7273 = vmatpush1.msra.mxu0 0.0
  %7274 = vmatprep.subr.mxu0 0.0
  %7275 = vmatpush1.msra.mxu0 0.0
  %7276 = vmatprep.subr.mxu0 0.0
  %7277 = vmatpush1.msra.mxu0 0.0
  %7278 = vmatprep.subr.mxu0 0.0
  %7279 = vmatpush1.msra.mxu0 0.0
  %7280 = vmatprep.subr.mxu0 0.0
  %7281 = vmatpush1.msra.mxu0 0.0
  %7282 = vmatprep.subr.mxu0 0.0
  %7283 = vmatpush1.msra.mxu0 0.0
  %7284 = vmatprep.subr.mxu0 0.0
  %7285 = vmatpush1.msra.mxu0 %v7249
  %7286 = vmatprep.subr.mxu0 0.0
  %7287 = vmatpush1.msra.mxu0 %v7248
  %7288 = vmatprep.subr.mxu0 0.0
  %7289 = vmatpush2.msra.mxu0 0.0
  %7290 = vmatprep.subr.mxu0 0.0
  %7291 = vmatpush2.msra.mxu0 0.0
  %7292 = vmatprep.subr.mxu0 0.0
  %7293 = vmatpush2.msra.mxu0 0.0
  %7294 = vmatprep.subr.mxu0 0.0
  %7295 = vmatpush2.msra.mxu0 0.0
  %7296 = vmatprep.subr.mxu0 0.0
  %7297 = vmatpush2.msra.mxu0 0.0
  %7298 = vmatprep.subr.mxu0 0.0
  %7299 = vmatpush2.msra.mxu0 0.0
  %7300 = vmatprep.subr.mxu0 0.0
  %7301 = vmatpush2.msra.mxu0 0.0
  %7302 = vmatprep.subr.mxu0 0.0
  %7303 = vmatpush2.msra.mxu0 0.0
  %7304 = vmatprep.subr.mxu0 0.0
  %7305 = vmatpush2.msra.mxu0 0.0
  %7306 = vmatprep.subr.mxu0 0.0
  %7307 = vmatpush2.msra.mxu0 0.0
  %7308 = vmatprep.subr.mxu0 0.0
  %7309 = vmatpush2.msra.mxu0 0.0
  %7310 = vmatprep.subr.mxu0 0.0
  %7311 = vmatpush2.msra.mxu0 0.0
  %7312 = vmatprep.subr.mxu0 0.0
  %7313 = vmatpush2.msra.mxu0 0.0
  %7314 = vmatprep.subr.mxu0 0.0
  %7315 = vmatpush2.msra.mxu0 0.0
  %7316 = vmatprep.subr.mxu0 0.0
  %7317 = vmatpush2.msra.mxu0 0.0
  %7318 = vmatprep.subr.mxu0 0.0
  %7319 = vmatpush2.msra.mxu0 0.0
  %7320 = vmatprep.mubr.f32.mxu0 0.0
  %7321 = vmatmul.mubr.f32.gmra.mxu0 %v7251
  %v7322 = vpop.f32.mrf.mxu0
  %v7323 = vadd.f32 0.0, %v7322
  %v7324 = vpop.f32.mrf.mxu0
  %7325 = vmatprep.mubr.f32.mxu0 0.0
  %7326 = vmatmul.mubr.f32.gmra.mxu0 %v7254
  %v7327 = vpop.f32.mrf.mxu0
  %v7328 = vadd.f32 0.0, %v7327
  %v7329 = vpop.f32.mrf.mxu0
  %7330 = vdwg.mxu0
  %v7332 = vsel %vm520, %v7138, 0
  %v7335 = vsel %vm520, %v7140, 0
  %7337 = vmatprep.subr.mxu0 0.0
  %7338 = vmatpush1.msra.mxu0 0.0
  %7339 = vmatprep.subr.mxu0 0.0
  %7340 = vmatpush1.msra.mxu0 0.0
  %7341 = vmatprep.subr.mxu0 0.0
  %7342 = vmatpush1.msra.mxu0 0.0
  %7343 = vmatprep.subr.mxu0 0.0
  %7344 = vmatpush1.msra.mxu0 0.0
  %7345 = vmatprep.subr.mxu0 0.0
  %7346 = vmatpush1.msra.mxu0 0.0
  %7347 = vmatprep.subr.mxu0 0.0
  %7348 = vmatpush1.msra.mxu0 0.0
  %7349 = vmatprep.subr.mxu0 0.0
  %7350 = vmatpush1.msra.mxu0 0.0
  %7351 = vmatprep.subr.mxu0 0.0
  %7352 = vmatpush1.msra.mxu0 0.0
  %7353 = vmatprep.subr.mxu0 0.0
  %7354 = vmatpush1.msra.mxu0 0.0
  %7355 = vmatprep.subr.mxu0 0.0
  %7356 = vmatpush1.msra.mxu0 0.0
  %7357 = vmatprep.subr.mxu0 0.0
  %7358 = vmatpush1.msra.mxu0 0.0
  %7359 = vmatprep.subr.mxu0 0.0
  %7360 = vmatpush1.msra.mxu0 0.0
  %7361 = vmatprep.subr.mxu0 0.0
  %7362 = vmatpush1.msra.mxu0 0.0
  %7363 = vmatprep.subr.mxu0 0.0
  %7364 = vmatpush1.msra.mxu0 0.0
  %7365 = vmatprep.subr.mxu0 0.0
  %7366 = vmatpush1.msra.mxu0 %v7142
  %7367 = vmatprep.subr.mxu0 0.0
  %7368 = vmatpush1.msra.mxu0 %v7141
  %7369 = vmatprep.subr.mxu0 0.0
  %7370 = vmatpush2.msra.mxu0 0.0
  %7371 = vmatprep.subr.mxu0 0.0
  %7372 = vmatpush2.msra.mxu0 0.0
  %7373 = vmatprep.subr.mxu0 0.0
  %7374 = vmatpush2.msra.mxu0 0.0
  %7375 = vmatprep.subr.mxu0 0.0
  %7376 = vmatpush2.msra.mxu0 0.0
  %7377 = vmatprep.subr.mxu0 0.0
  %7378 = vmatpush2.msra.mxu0 0.0
  %7379 = vmatprep.subr.mxu0 0.0
  %7380 = vmatpush2.msra.mxu0 0.0
  %7381 = vmatprep.subr.mxu0 0.0
  %7382 = vmatpush2.msra.mxu0 0.0
  %7383 = vmatprep.subr.mxu0 0.0
  %7384 = vmatpush2.msra.mxu0 0.0
  %7385 = vmatprep.subr.mxu0 0.0
  %7386 = vmatpush2.msra.mxu0 0.0
  %7387 = vmatprep.subr.mxu0 0.0
  %7388 = vmatpush2.msra.mxu0 0.0
  %7389 = vmatprep.subr.mxu0 0.0
  %7390 = vmatpush2.msra.mxu0 0.0
  %7391 = vmatprep.subr.mxu0 0.0
  %7392 = vmatpush2.msra.mxu0 0.0
  %7393 = vmatprep.subr.mxu0 0.0
  %7394 = vmatpush2.msra.mxu0 0.0
  %7395 = vmatprep.subr.mxu0 0.0
  %7396 = vmatpush2.msra.mxu0 0.0
  %7397 = vmatprep.subr.mxu0 0.0
  %7398 = vmatpush2.msra.mxu0 0.0
  %7399 = vmatprep.subr.mxu0 0.0
  %7400 = vmatpush2.msra.mxu0 0.0
  %7401 = vmatprep.mubr.f32.mxu0 0.0
  %7402 = vmatmul.mubr.f32.gmra.mxu0 %v7332
  %v7403 = vpop.f32.mrf.mxu0
  %v7404 = vadd.f32 %v7323, %v7403
  %v7405 = vpop.f32.mrf.mxu0
  %7406 = vmatprep.mubr.f32.mxu0 0.0
  %7407 = vmatmul.mubr.f32.gmra.mxu0 %v7335
  %v7408 = vpop.f32.mrf.mxu0
  %v7409 = vadd.f32 %v7328, %v7408
  %v7410 = vpop.f32.mrf.mxu0
  %7411 = vdwg.mxu0
  %v7412 = vmul.f32 %v6846, %v75
  %v7413 = vmul.f32 %v6851, %v75
  %v7415 = vsel %vm173, %v7412, 0
  %v7418 = vsel %vm173, %v7413, 0
  %7420 = vmatprep.subr.mxu0 0.0
  %7421 = vmatpush1.xpose.msra.mxu0 0.0
  %7422 = vmatprep.subr.mxu0 0.0
  %7423 = vmatpush1.xpose.msra.mxu0 0.0
  %7424 = vmatprep.subr.mxu0 0.0
  %7425 = vmatpush1.xpose.msra.mxu0 0.0
  %7426 = vmatprep.subr.mxu0 0.0
  %7427 = vmatpush1.xpose.msra.mxu0 0.0
  %7428 = vmatprep.subr.mxu0 0.0
  %7429 = vmatpush1.xpose.msra.mxu0 0.0
  %7430 = vmatprep.subr.mxu0 0.0
  %7431 = vmatpush1.xpose.msra.mxu0 0.0
  %7432 = vmatprep.subr.mxu0 0.0
  %7433 = vmatpush1.xpose.msra.mxu0 0.0
  %7434 = vmatprep.subr.mxu0 0.0
  %7435 = vmatpush1.xpose.msra.mxu0 0.0
  %7436 = vmatprep.subr.mxu0 0.0
  %7437 = vmatpush1.xpose.msra.mxu0 0.0
  %7438 = vmatprep.subr.mxu0 0.0
  %7439 = vmatpush1.xpose.msra.mxu0 0.0
  %7440 = vmatprep.subr.mxu0 0.0
  %7441 = vmatpush1.xpose.msra.mxu0 0.0
  %7442 = vmatprep.subr.mxu0 0.0
  %7443 = vmatpush1.xpose.msra.mxu0 0.0
  %7444 = vmatprep.subr.mxu0 0.0
  %7445 = vmatpush1.xpose.msra.mxu0 0.0
  %7446 = vmatprep.subr.mxu0 0.0
  %7447 = vmatpush1.xpose.msra.mxu0 0.0
  %7448 = vmatprep.subr.mxu0 0.0
  %7449 = vmatpush1.xpose.msra.mxu0 %v7042
  %7450 = vmatprep.subr.mxu0 0.0
  %7451 = vmatpush1.xpose.msra.mxu0 %v7039
  %7452 = vmatprep.subr.mxu0 0.0
  %7453 = vmatpush2.xpose.msra.mxu0 0.0
  %7454 = vmatprep.subr.mxu0 0.0
  %7455 = vmatpush2.xpose.msra.mxu0 0.0
  %7456 = vmatprep.subr.mxu0 0.0
  %7457 = vmatpush2.xpose.msra.mxu0 0.0
  %7458 = vmatprep.subr.mxu0 0.0
  %7459 = vmatpush2.xpose.msra.mxu0 0.0
  %7460 = vmatprep.subr.mxu0 0.0
  %7461 = vmatpush2.xpose.msra.mxu0 0.0
  %7462 = vmatprep.subr.mxu0 0.0
  %7463 = vmatpush2.xpose.msra.mxu0 0.0
  %7464 = vmatprep.subr.mxu0 0.0
  %7465 = vmatpush2.xpose.msra.mxu0 0.0
  %7466 = vmatprep.subr.mxu0 0.0
  %7467 = vmatpush2.xpose.msra.mxu0 0.0
  %7468 = vmatprep.subr.mxu0 0.0
  %7469 = vmatpush2.xpose.msra.mxu0 0.0
  %7470 = vmatprep.subr.mxu0 0.0
  %7471 = vmatpush2.xpose.msra.mxu0 0.0
  %7472 = vmatprep.subr.mxu0 0.0
  %7473 = vmatpush2.xpose.msra.mxu0 0.0
  %7474 = vmatprep.subr.mxu0 0.0
  %7475 = vmatpush2.xpose.msra.mxu0 0.0
  %7476 = vmatprep.subr.mxu0 0.0
  %7477 = vmatpush2.xpose.msra.mxu0 0.0
  %7478 = vmatprep.subr.mxu0 0.0
  %7479 = vmatpush2.xpose.msra.mxu0 0.0
  %7480 = vmatprep.subr.mxu0 0.0
  %7481 = vmatpush2.xpose.msra.mxu0 0.0
  %7482 = vmatprep.subr.mxu0 0.0
  %7483 = vmatpush2.xpose.msra.mxu0 0.0
  %7484 = vmatprep.mubr.f32.mxu0 0.0
  %7485 = vmatmul.mubr.f32.gmra.mxu0 %v7415
  %v7486 = vpop.f32.mrf.mxu0
  %v7487 = vadd.f32 %v158, %v7486
  %v7488 = vpop.f32.mrf.mxu0
  %7489 = vmatprep.mubr.f32.mxu0 0.0
  %7490 = vmatmul.mubr.f32.gmra.mxu0 %v7418
  %v7491 = vpop.f32.mrf.mxu0
  %v7492 = vadd.f32 %v159, %v7491
  %v7493 = vpop.f32.mrf.mxu0
  %7494 = vdwg.mxu0
  %v7495 = vsel %vm520, %v7487, -inf
  %7496 = vmax.xlane.f32.xlu0 %v7495
  %v7497 = vpop.xlane.xlu0 %7496
  %v7498 = vsel %vm520, %v7492, -inf
  %7499 = vmax.xlane.f32.xlu0 %v7498
  %v7500 = vpop.xlane.xlu0 %7499
  %v7501 = vsub.f32 %v7487, %v7497
  %v7502 = vsub.f32 %v7492, %v7500
  %v7503 = vmul.f32 %v7501, 1.442695
  %v7504 = vpow.pop %v7503
  %v7505 = vmul.f32 %v7502, 1.442695
  %v7506 = vpow.pop %v7505
  %v7507 = vsel %vm520, %v7504, 0.0
  %7508 = vadd.xlane.f32.xlu0 %v7507
  %v7509 = vpop.xlane.xlu0 %7508
  %v7510 = vsel %vm520, %v7506, 0.0
  %7511 = vadd.xlane.f32.xlu0 %v7510
  %v7512 = vpop.xlane.xlu0 %7511
  %v7513 = vrcp.pop %v7509
  %v7514 = vmul.f32 %v7504, %v7513
  %v7515 = vrcp.pop %v7512
  %v7516 = vmul.f32 %v7506, %v7515
  %v7517 = vmul.f32 %v7022, %v75
  %v7518 = vmul.f32 %v7027, %v75
  %v7520 = vsel %vm520, %v7514, 0
  %v7523 = vsel %vm520, %v7516, 0
  %7525 = vmatprep.subr.mxu0 0.0
  %7526 = vmatpush1.msra.mxu0 0.0
  %7527 = vmatprep.subr.mxu0 0.0
  %7528 = vmatpush1.msra.mxu0 0.0
  %7529 = vmatprep.subr.mxu0 0.0
  %7530 = vmatpush1.msra.mxu0 0.0
  %7531 = vmatprep.subr.mxu0 0.0
  %7532 = vmatpush1.msra.mxu0 0.0
  %7533 = vmatprep.subr.mxu0 0.0
  %7534 = vmatpush1.msra.mxu0 0.0
  %7535 = vmatprep.subr.mxu0 0.0
  %7536 = vmatpush1.msra.mxu0 0.0
  %7537 = vmatprep.subr.mxu0 0.0
  %7538 = vmatpush1.msra.mxu0 0.0
  %7539 = vmatprep.subr.mxu0 0.0
  %7540 = vmatpush1.msra.mxu0 0.0
  %7541 = vmatprep.subr.mxu0 0.0
  %7542 = vmatpush1.msra.mxu0 0.0
  %7543 = vmatprep.subr.mxu0 0.0
  %7544 = vmatpush1.msra.mxu0 0.0
  %7545 = vmatprep.subr.mxu0 0.0
  %7546 = vmatpush1.msra.mxu0 0.0
  %7547 = vmatprep.subr.mxu0 0.0
  %7548 = vmatpush1.msra.mxu0 0.0
  %7549 = vmatprep.subr.mxu0 0.0
  %7550 = vmatpush1.msra.mxu0 0.0
  %7551 = vmatprep.subr.mxu0 0.0
  %7552 = vmatpush1.msra.mxu0 0.0
  %7553 = vmatprep.subr.mxu0 0.0
  %7554 = vmatpush1.msra.mxu0 %v7518
  %7555 = vmatprep.subr.mxu0 0.0
  %7556 = vmatpush1.msra.mxu0 %v7517
  %7557 = vmatprep.subr.mxu0 0.0
  %7558 = vmatpush2.msra.mxu0 0.0
  %7559 = vmatprep.subr.mxu0 0.0
  %7560 = vmatpush2.msra.mxu0 0.0
  %7561 = vmatprep.subr.mxu0 0.0
  %7562 = vmatpush2.msra.mxu0 0.0
  %7563 = vmatprep.subr.mxu0 0.0
  %7564 = vmatpush2.msra.mxu0 0.0
  %7565 = vmatprep.subr.mxu0 0.0
  %7566 = vmatpush2.msra.mxu0 0.0
  %7567 = vmatprep.subr.mxu0 0.0
  %7568 = vmatpush2.msra.mxu0 0.0
  %7569 = vmatprep.subr.mxu0 0.0
  %7570 = vmatpush2.msra.mxu0 0.0
  %7571 = vmatprep.subr.mxu0 0.0
  %7572 = vmatpush2.msra.mxu0 0.0
  %7573 = vmatprep.subr.mxu0 0.0
  %7574 = vmatpush2.msra.mxu0 0.0
  %7575 = vmatprep.subr.mxu0 0.0
  %7576 = vmatpush2.msra.mxu0 0.0
  %7577 = vmatprep.subr.mxu0 0.0
  %7578 = vmatpush2.msra.mxu0 0.0
  %7579 = vmatprep.subr.mxu0 0.0
  %7580 = vmatpush2.msra.mxu0 0.0
  %7581 = vmatprep.subr.mxu0 0.0
  %7582 = vmatpush2.msra.mxu0 0.0
  %7583 = vmatprep.subr.mxu0 0.0
  %7584 = vmatpush2.msra.mxu0 0.0
  %7585 = vmatprep.subr.mxu0 0.0
  %7586 = vmatpush2.msra.mxu0 0.0
  %7587 = vmatprep.subr.mxu0 0.0
  %7588 = vmatpush2.msra.mxu0 0.0
  %7589 = vmatprep.mubr.f32.mxu0 0.0
  %7590 = vmatmul.mubr.f32.gmra.mxu0 %v7520
  %v7591 = vpop.f32.mrf.mxu0
  %v7592 = vadd.f32 0.0, %v7591
  %v7593 = vpop.f32.mrf.mxu0
  %7594 = vmatprep.mubr.f32.mxu0 0.0
  %7595 = vmatmul.mubr.f32.gmra.mxu0 %v7523
  %v7596 = vpop.f32.mrf.mxu0
  %v7597 = vadd.f32 0.0, %v7596
  %v7598 = vpop.f32.mrf.mxu0
  %7599 = vdwg.mxu0
  %v7600 = vadd.f32 %v7404, %v7592
  %v7601 = vadd.f32 %v7409, %v7597
  %v7602 = vmul.f32 %v6846, %v79
  %v7603 = vmul.f32 %v6851, %v79
  %v7605 = vsel %vm173, %v7602, 0
  %v7608 = vsel %vm173, %v7603, 0
  %7610 = vmatprep.subr.mxu0 0.0
  %7611 = vmatpush1.xpose.msra.mxu0 0.0
  %7612 = vmatprep.subr.mxu0 0.0
  %7613 = vmatpush1.xpose.msra.mxu0 0.0
  %7614 = vmatprep.subr.mxu0 0.0
  %7615 = vmatpush1.xpose.msra.mxu0 0.0
  %7616 = vmatprep.subr.mxu0 0.0
  %7617 = vmatpush1.xpose.msra.mxu0 0.0
  %7618 = vmatprep.subr.mxu0 0.0
  %7619 = vmatpush1.xpose.msra.mxu0 0.0
  %7620 = vmatprep.subr.mxu0 0.0
  %7621 = vmatpush1.xpose.msra.mxu0 0.0
  %7622 = vmatprep.subr.mxu0 0.0
  %7623 = vmatpush1.xpose.msra.mxu0 0.0
  %7624 = vmatprep.subr.mxu0 0.0
  %7625 = vmatpush1.xpose.msra.mxu0 0.0
  %7626 = vmatprep.subr.mxu0 0.0
  %7627 = vmatpush1.xpose.msra.mxu0 0.0
  %7628 = vmatprep.subr.mxu0 0.0
  %7629 = vmatpush1.xpose.msra.mxu0 0.0
  %7630 = vmatprep.subr.mxu0 0.0
  %7631 = vmatpush1.xpose.msra.mxu0 0.0
  %7632 = vmatprep.subr.mxu0 0.0
  %7633 = vmatpush1.xpose.msra.mxu0 0.0
  %7634 = vmatprep.subr.mxu0 0.0
  %7635 = vmatpush1.xpose.msra.mxu0 0.0
  %7636 = vmatprep.subr.mxu0 0.0
  %7637 = vmatpush1.xpose.msra.mxu0 0.0
  %7638 = vmatprep.subr.mxu0 0.0
  %7639 = vmatpush1.xpose.msra.mxu0 %v7042
  %7640 = vmatprep.subr.mxu0 0.0
  %7641 = vmatpush1.xpose.msra.mxu0 %v7039
  %7642 = vmatprep.subr.mxu0 0.0
  %7643 = vmatpush2.xpose.msra.mxu0 0.0
  %7644 = vmatprep.subr.mxu0 0.0
  %7645 = vmatpush2.xpose.msra.mxu0 0.0
  %7646 = vmatprep.subr.mxu0 0.0
  %7647 = vmatpush2.xpose.msra.mxu0 0.0
  %7648 = vmatprep.subr.mxu0 0.0
  %7649 = vmatpush2.xpose.msra.mxu0 0.0
  %7650 = vmatprep.subr.mxu0 0.0
  %7651 = vmatpush2.xpose.msra.mxu0 0.0
  %7652 = vmatprep.subr.mxu0 0.0
  %7653 = vmatpush2.xpose.msra.mxu0 0.0
  %7654 = vmatprep.subr.mxu0 0.0
  %7655 = vmatpush2.xpose.msra.mxu0 0.0
  %7656 = vmatprep.subr.mxu0 0.0
  %7657 = vmatpush2.xpose.msra.mxu0 0.0
  %7658 = vmatprep.subr.mxu0 0.0
  %7659 = vmatpush2.xpose.msra.mxu0 0.0
  %7660 = vmatprep.subr.mxu0 0.0
  %7661 = vmatpush2.xpose.msra.mxu0 0.0
  %7662 = vmatprep.subr.mxu0 0.0
  %7663 = vmatpush2.xpose.msra.mxu0 0.0
  %7664 = vmatprep.subr.mxu0 0.0
  %7665 = vmatpush2.xpose.msra.mxu0 0.0
  %7666 = vmatprep.subr.mxu0 0.0
  %7667 = vmatpush2.xpose.msra.mxu0 0.0
  %7668 = vmatprep.subr.mxu0 0.0
  %7669 = vmatpush2.xpose.msra.mxu0 0.0
  %7670 = vmatprep.subr.mxu0 0.0
  %7671 = vmatpush2.xpose.msra.mxu0 0.0
  %7672 = vmatprep.subr.mxu0 0.0
  %7673 = vmatpush2.xpose.msra.mxu0 0.0
  %7674 = vmatprep.mubr.f32.mxu0 0.0
  %7675 = vmatmul.mubr.f32.gmra.mxu0 %v7605
  %v7676 = vpop.f32.mrf.mxu0
  %v7677 = vadd.f32 %v158, %v7676
  %v7678 = vpop.f32.mrf.mxu0
  %7679 = vmatprep.mubr.f32.mxu0 0.0
  %7680 = vmatmul.mubr.f32.gmra.mxu0 %v7608
  %v7681 = vpop.f32.mrf.mxu0
  %v7682 = vadd.f32 %v159, %v7681
  %v7683 = vpop.f32.mrf.mxu0
  %7684 = vdwg.mxu0
  %v7685 = vsel %vm520, %v7677, -inf
  %7686 = vmax.xlane.f32.xlu0 %v7685
  %v7687 = vpop.xlane.xlu0 %7686
  %v7688 = vsel %vm520, %v7682, -inf
  %7689 = vmax.xlane.f32.xlu0 %v7688
  %v7690 = vpop.xlane.xlu0 %7689
  %v7691 = vsub.f32 %v7677, %v7687
  %v7692 = vsub.f32 %v7682, %v7690
  %v7693 = vmul.f32 %v7691, 1.442695
  %v7694 = vpow.pop %v7693
  %v7695 = vmul.f32 %v7692, 1.442695
  %v7696 = vpow.pop %v7695
  %v7697 = vsel %vm520, %v7694, 0.0
  %7698 = vadd.xlane.f32.xlu0 %v7697
  %v7699 = vpop.xlane.xlu0 %7698
  %v7700 = vsel %vm520, %v7696, 0.0
  %7701 = vadd.xlane.f32.xlu0 %v7700
  %v7702 = vpop.xlane.xlu0 %7701
  %v7703 = vrcp.pop %v7699
  %v7704 = vmul.f32 %v7694, %v7703
  %v7705 = vrcp.pop %v7702
  %v7706 = vmul.f32 %v7696, %v7705
  %v7707 = vmul.f32 %v7022, %v79
  %v7708 = vmul.f32 %v7027, %v79
  %v7710 = vsel %vm520, %v7704, 0
  %v7713 = vsel %vm520, %v7706, 0
  %7715 = vmatprep.subr.mxu0 0.0
  %7716 = vmatpush1.msra.mxu0 0.0
  %7717 = vmatprep.subr.mxu0 0.0
  %7718 = vmatpush1.msra.mxu0 0.0
  %7719 = vmatprep.subr.mxu0 0.0
  %7720 = vmatpush1.msra.mxu0 0.0
  %7721 = vmatprep.subr.mxu0 0.0
  %7722 = vmatpush1.msra.mxu0 0.0
  %7723 = vmatprep.subr.mxu0 0.0
  %7724 = vmatpush1.msra.mxu0 0.0
  %7725 = vmatprep.subr.mxu0 0.0
  %7726 = vmatpush1.msra.mxu0 0.0
  %7727 = vmatprep.subr.mxu0 0.0
  %7728 = vmatpush1.msra.mxu0 0.0
  %7729 = vmatprep.subr.mxu0 0.0
  %7730 = vmatpush1.msra.mxu0 0.0
  %7731 = vmatprep.subr.mxu0 0.0
  %7732 = vmatpush1.msra.mxu0 0.0
  %7733 = vmatprep.subr.mxu0 0.0
  %7734 = vmatpush1.msra.mxu0 0.0
  %7735 = vmatprep.subr.mxu0 0.0
  %7736 = vmatpush1.msra.mxu0 0.0
  %7737 = vmatprep.subr.mxu0 0.0
  %7738 = vmatpush1.msra.mxu0 0.0
  %7739 = vmatprep.subr.mxu0 0.0
  %7740 = vmatpush1.msra.mxu0 0.0
  %7741 = vmatprep.subr.mxu0 0.0
  %7742 = vmatpush1.msra.mxu0 0.0
  %7743 = vmatprep.subr.mxu0 0.0
  %7744 = vmatpush1.msra.mxu0 %v7708
  %7745 = vmatprep.subr.mxu0 0.0
  %7746 = vmatpush1.msra.mxu0 %v7707
  %7747 = vmatprep.subr.mxu0 0.0
  %7748 = vmatpush2.msra.mxu0 0.0
  %7749 = vmatprep.subr.mxu0 0.0
  %7750 = vmatpush2.msra.mxu0 0.0
  %7751 = vmatprep.subr.mxu0 0.0
  %7752 = vmatpush2.msra.mxu0 0.0
  %7753 = vmatprep.subr.mxu0 0.0
  %7754 = vmatpush2.msra.mxu0 0.0
  %7755 = vmatprep.subr.mxu0 0.0
  %7756 = vmatpush2.msra.mxu0 0.0
  %7757 = vmatprep.subr.mxu0 0.0
  %7758 = vmatpush2.msra.mxu0 0.0
  %7759 = vmatprep.subr.mxu0 0.0
  %7760 = vmatpush2.msra.mxu0 0.0
  %7761 = vmatprep.subr.mxu0 0.0
  %7762 = vmatpush2.msra.mxu0 0.0
  %7763 = vmatprep.subr.mxu0 0.0
  %7764 = vmatpush2.msra.mxu0 0.0
  %7765 = vmatprep.subr.mxu0 0.0
  %7766 = vmatpush2.msra.mxu0 0.0
  %7767 = vmatprep.subr.mxu0 0.0
  %7768 = vmatpush2.msra.mxu0 0.0
  %7769 = vmatprep.subr.mxu0 0.0
  %7770 = vmatpush2.msra.mxu0 0.0
  %7771 = vmatprep.subr.mxu0 0.0
  %7772 = vmatpush2.msra.mxu0 0.0
  %7773 = vmatprep.subr.mxu0 0.0
  %7774 = vmatpush2.msra.mxu0 0.0
  %7775 = vmatprep.subr.mxu0 0.0
  %7776 = vmatpush2.msra.mxu0 0.0
  %7777 = vmatprep.subr.mxu0 0.0
  %7778 = vmatpush2.msra.mxu0 0.0
  %7779 = vmatprep.mubr.f32.mxu0 0.0
  %7780 = vmatmul.mubr.f32.gmra.mxu0 %v7710
  %v7781 = vpop.f32.mrf.mxu0
  %v7782 = vadd.f32 0.0, %v7781
  %v7783 = vpop.f32.mrf.mxu0
  %7784 = vmatprep.mubr.f32.mxu0 0.0
  %7785 = vmatmul.mubr.f32.gmra.mxu0 %v7713
  %v7786 = vpop.f32.mrf.mxu0
  %v7787 = vadd.f32 0.0, %v7786
  %v7788 = vpop.f32.mrf.mxu0
  %7789 = vdwg.mxu0
  %v7790 = vadd.f32 %v7600, %v7782
  %v7791 = vadd.f32 %v7601, %v7787
  %s7792 = scalar_lea.vmem %s9, 160
  %v7793 = vld [vmem:[%s7792] sm:$0xff]
  %v7794 = vld [vmem:[%s7792 + $0x8] sm:$0xff]
  %v7795 = vld [vmem:[%s7792 + $0x10] sm:$0xff]
  %v7796 = vld [vmem:[%s7792 + $0x18] sm:$0xff]
  %s7797 = scalar_lea.vmem %s10, 5
  %v7798 = vld [vmem:[%s7797] sm:$0x1]
  %v7800 = vlaneseq
  %v7801 = vshrl.u32 %v7800, 7
  %v7802 = vsub.s32 0, %v7801
  %v7803 = vrot.slane %v7798, %v7802
  %v7806 = vsel %vm173, %v7790, 0
  %v7809 = vsel %vm173, %v7791, 0
  %7811 = vmatprep.subr.mxu0 0.0
  %7812 = vmatpush1.msra.mxu0 0.0
  %7813 = vmatprep.subr.mxu0 0.0
  %7814 = vmatpush1.msra.mxu0 0.0
  %7815 = vmatprep.subr.mxu0 0.0
  %7816 = vmatpush1.msra.mxu0 0.0
  %7817 = vmatprep.subr.mxu0 0.0
  %7818 = vmatpush1.msra.mxu0 0.0
  %7819 = vmatprep.subr.mxu0 0.0
  %7820 = vmatpush1.msra.mxu0 0.0
  %7821 = vmatprep.subr.mxu0 0.0
  %7822 = vmatpush1.msra.mxu0 0.0
  %7823 = vmatprep.subr.mxu0 0.0
  %7824 = vmatpush1.msra.mxu0 0.0
  %7825 = vmatprep.subr.mxu0 0.0
  %7826 = vmatpush1.msra.mxu0 0.0
  %7827 = vmatprep.subr.mxu0 0.0
  %7828 = vmatpush1.msra.mxu0 0.0
  %7829 = vmatprep.subr.mxu0 0.0
  %7830 = vmatpush1.msra.mxu0 0.0
  %7831 = vmatprep.subr.mxu0 0.0
  %7832 = vmatpush1.msra.mxu0 0.0
  %7833 = vmatprep.subr.mxu0 0.0
  %7834 = vmatpush1.msra.mxu0 0.0
  %7835 = vmatprep.subr.mxu0 0.0
  %7836 = vmatpush1.msra.mxu0 %v7796
  %7837 = vmatprep.subr.mxu0 0.0
  %7838 = vmatpush1.msra.mxu0 %v7795
  %7839 = vmatprep.subr.mxu0 0.0
  %7840 = vmatpush1.msra.mxu0 %v7794
  %7841 = vmatprep.subr.mxu0 0.0
  %7842 = vmatpush1.msra.mxu0 %v7793
  %7843 = vmatprep.subr.mxu0 0.0
  %7844 = vmatpush2.msra.mxu0 0.0
  %7845 = vmatprep.subr.mxu0 0.0
  %7846 = vmatpush2.msra.mxu0 0.0
  %7847 = vmatprep.subr.mxu0 0.0
  %7848 = vmatpush2.msra.mxu0 0.0
  %7849 = vmatprep.subr.mxu0 0.0
  %7850 = vmatpush2.msra.mxu0 0.0
  %7851 = vmatprep.subr.mxu0 0.0
  %7852 = vmatpush2.msra.mxu0 0.0
  %7853 = vmatprep.subr.mxu0 0.0
  %7854 = vmatpush2.msra.mxu0 0.0
  %7855 = vmatprep.subr.mxu0 0.0
  %7856 = vmatpush2.msra.mxu0 0.0
  %7857 = vmatprep.subr.mxu0 0.0
  %7858 = vmatpush2.msra.mxu0 0.0
  %7859 = vmatprep.subr.mxu0 0.0
  %7860 = vmatpush2.msra.mxu0 0.0
  %7861 = vmatprep.subr.mxu0 0.0
  %7862 = vmatpush2.msra.mxu0 0.0
  %7863 = vmatprep.subr.mxu0 0.0
  %7864 = vmatpush2.msra.mxu0 0.0
  %7865 = vmatprep.subr.mxu0 0.0
  %7866 = vmatpush2.msra.mxu0 0.0
  %7867 = vmatprep.subr.mxu0 0.0
  %7868 = vmatpush2.msra.mxu0 0.0
  %7869 = vmatprep.subr.mxu0 0.0
  %7870 = vmatpush2.msra.mxu0 0.0
  %7871 = vmatprep.subr.mxu0 0.0
  %7872 = vmatpush2.msra.mxu0 0.0
  %7873 = vmatprep.subr.mxu0 0.0
  %7874 = vmatpush2.msra.mxu0 0.0
  %7875 = vmatprep.mubr.f32.mxu0 0.0
  %7876 = vmatmul.mubr.f32.gmra.mxu0 %v7806
  %v7877 = vpop.f32.mrf.mxu0
  %v7878 = vadd.f32 %v7803, %v7877
  %v7879 = vpop.f32.mrf.mxu0
  %7880 = vmatprep.mubr.f32.mxu0 0.0
  %7881 = vmatmul.mubr.f32.gmra.mxu0 %v7809
  %v7882 = vpop.f32.mrf.mxu0
  %v7883 = vadd.f32 %v7803, %v7882
  %v7884 = vpop.f32.mrf.mxu0
  %7885 = vdwg.mxu0
  %v7886 = vadd.f32 %v6758, %v7878
  %v7887 = vadd.f32 %v6759, %v7883
  %s7888 = scalar_lea.vmem %s15, 8
  %v7889 = vld [vmem:[%s7888] sm:$0x1]
  %s7890 = scalar_lea.vmem %s16, 8
  %v7891 = vld [vmem:[%s7890] sm:$0x1]
  %v7892 = vsel %vm173, %v7886, 0.0
  %7893 = vadd.xlane.f32.xlu0 %v7892
  %v7894 = vpop.xlane.xlu0 %7893
  %v7895 = vsel %vm173, %v7887, 0.0
  %7896 = vadd.xlane.f32.xlu0 %v7895
  %v7897 = vpop.xlane.xlu0 %7896
  %v7898 = vmul.f32 %v7894, %v1296
  %v7899 = vmul.f32 %v7897, %v1296
  %v7900 = vsub.f32 %v7886, %v7898
  %v7901 = vsub.f32 %v7887, %v7899
  %v7902 = vmul.f32 %v7900, %v7900
  %v7903 = vmul.f32 %v7901, %v7901
  %v7904 = vsel %vm173, %v7902, 0.0
  %7905 = vadd.xlane.f32.xlu0 %v7904
  %v7906 = vpop.xlane.xlu0 %7905
  %v7907 = vsel %vm173, %v7903, 0.0
  %7908 = vadd.xlane.f32.xlu0 %v7907
  %v7909 = vpop.xlane.xlu0 %7908
  %v7910 = vmul.f32 %v7906, %v1296
  %v7911 = vmul.f32 %v7909, %v1296
  %v7912 = vadd.f32 %v7910, 1e-05
  %v7913 = vadd.f32 %v7911, 1e-05
  %v7914 = vrsqrt.pop %v7912
  %v7915 = vrsqrt.pop %v7913
  %v7916 = vmul.f32 %v7900, %v7914
  %v7917 = vmul.f32 %v7901, %v7915
  %v7919 = vlaneseq
  %v7920 = vshrl.u32 %v7919, 7
  %v7921 = vsub.s32 0, %v7920
  %v7922 = vrot.slane %v7889, %v7921
  %v7924 = vmul.f32 %v7916, %v7922
  %v7925 = vmul.f32 %v7917, %v7922
  %v7927 = vlaneseq
  %v7928 = vshrl.u32 %v7927, 7
  %v7929 = vsub.s32 0, %v7928
  %v7930 = vrot.slane %v7891, %v7929
  %v7932 = vadd.f32 %v7924, %v7930
  %v7933 = vadd.f32 %v7925, %v7930
  %s7934 = scalar_lea.vmem %s11, 96
  %v7935 = vld [vmem:[%s7934] sm:$0xff]
  %v7936 = vld [vmem:[%s7934 + $0x8] sm:$0xff]
  %v7937 = vld [vmem:[%s7934 + $0x10] sm:$0xff]
  %v7938 = vld [vmem:[%s7934 + $0x18] sm:$0xff]
  %s7939 = scalar_lea.vmem %s12, 3
  %v7940 = vld [vmem:[%s7939] sm:$0x1]
  %v7942 = vlaneseq
  %v7943 = vshrl.u32 %v7942, 7
  %v7944 = vsub.s32 0, %v7943
  %v7945 = vrot.slane %v7940, %v7944
  %v7948 = vsel %vm173, %v7932, 0
  %v7951 = vsel %vm173, %v7933, 0
  %7953 = vmatprep.subr.mxu0 0.0
  %7954 = vmatpush1.msra.mxu0 0.0
  %7955 = vmatprep.subr.mxu0 0.0
  %7956 = vmatpush1.msra.mxu0 0.0
  %7957 = vmatprep.subr.mxu0 0.0
  %7958 = vmatpush1.msra.mxu0 0.0
  %7959 = vmatprep.subr.mxu0 0.0
  %7960 = vmatpush1.msra.mxu0 0.0
  %7961 = vmatprep.subr.mxu0 0.0
  %7962 = vmatpush1.msra.mxu0 0.0
  %7963 = vmatprep.subr.mxu0 0.0
  %7964 = vmatpush1.msra.mxu0 0.0
  %7965 = vmatprep.subr.mxu0 0.0
  %7966 = vmatpush1.msra.mxu0 0.0
  %7967 = vmatprep.subr.mxu0 0.0
  %7968 = vmatpush1.msra.mxu0 0.0
  %7969 = vmatprep.subr.mxu0 0.0
  %7970 = vmatpush1.msra.mxu0 0.0
  %7971 = vmatprep.subr.mxu0 0.0
  %7972 = vmatpush1.msra.mxu0 0.0
  %7973 = vmatprep.subr.mxu0 0.0
  %7974 = vmatpush1.msra.mxu0 0.0
  %7975 = vmatprep.subr.mxu0 0.0
  %7976 = vmatpush1.msra.mxu0 0.0
  %7977 = vmatprep.subr.mxu0 0.0
  %7978 = vmatpush1.msra.mxu0 %v7938
  %7979 = vmatprep.subr.mxu0 0.0
  %7980 = vmatpush1.msra.mxu0 %v7937
  %7981 = vmatprep.subr.mxu0 0.0
  %7982 = vmatpush1.msra.mxu0 %v7936
  %7983 = vmatprep.subr.mxu0 0.0
  %7984 = vmatpush1.msra.mxu0 %v7935
  %7985 = vmatprep.subr.mxu0 0.0
  %7986 = vmatpush2.msra.mxu0 0.0
  %7987 = vmatprep.subr.mxu0 0.0
  %7988 = vmatpush2.msra.mxu0 0.0
  %7989 = vmatprep.subr.mxu0 0.0
  %7990 = vmatpush2.msra.mxu0 0.0
  %7991 = vmatprep.subr.mxu0 0.0
  %7992 = vmatpush2.msra.mxu0 0.0
  %7993 = vmatprep.subr.mxu0 0.0
  %7994 = vmatpush2.msra.mxu0 0.0
  %7995 = vmatprep.subr.mxu0 0.0
  %7996 = vmatpush2.msra.mxu0 0.0
  %7997 = vmatprep.subr.mxu0 0.0
  %7998 = vmatpush2.msra.mxu0 0.0
  %7999 = vmatprep.subr.mxu0 0.0
  %8000 = vmatpush2.msra.mxu0 0.0
  %8001 = vmatprep.subr.mxu0 0.0
  %8002 = vmatpush2.msra.mxu0 0.0
  %8003 = vmatprep.subr.mxu0 0.0
  %8004 = vmatpush2.msra.mxu0 0.0
  %8005 = vmatprep.subr.mxu0 0.0
  %8006 = vmatpush2.msra.mxu0 0.0
  %8007 = vmatprep.subr.mxu0 0.0
  %8008 = vmatpush2.msra.mxu0 0.0
  %8009 = vmatprep.subr.mxu0 0.0
  %8010 = vmatpush2.msra.mxu0 0.0
  %8011 = vmatprep.subr.mxu0 0.0
  %8012 = vmatpush2.msra.mxu0 0.0
  %8013 = vmatprep.subr.mxu0 0.0
  %8014 = vmatpush2.msra.mxu0 0.0
  %8015 = vmatprep.subr.mxu0 0.0
  %8016 = vmatpush2.msra.mxu0 0.0
  %8017 = vmatprep.mubr.f32.mxu0 0.0
  %8018 = vmatmul.mubr.f32.gmra.mxu0 %v7948
  %v8019 = vpop.f32.mrf.mxu0
  %v8020 = vadd.f32 %v7945, %v8019
  %v8021 = vpop.f32.mrf.mxu0
  %8022 = vmatprep.mubr.f32.mxu0 0.0
  %8023 = vmatmul.mubr.f32.gmra.mxu0 %v7951
  %v8024 = vpop.f32.mrf.mxu0
  %v8025 = vadd.f32 %v7945, %v8024
  %v8026 = vpop.f32.mrf.mxu0
  %8027 = vdwg.mxu0
  %v8028 = vmax.f32 %v8020, 0.0
  %v8029 = vmax.f32 %v8025, 0.0
  %s8030 = scalar_lea.vmem %s13, 192
  %v8031 = vld [vmem:[%s8030] sm:$0xff]
  %v8032 = vld [vmem:[%s8030 + $0x8] sm:$0xff]
  %v8033 = vld [vmem:[%s8030 + $0x10] sm:$0xff]
  %v8034 = vld [vmem:[%s8030 + $0x18] sm:$0xff]
  %v8035 = vld [vmem:[%s8030 + $0x20] sm:$0xff]
  %v8036 = vld [vmem:[%s8030 + $0x28] sm:$0xff]
  %v8037 = vld [vmem:[%s8030 + $0x30] sm:$0xff]
  %v8038 = vld [vmem:[%s8030 + $0x38] sm:$0xff]
  %s8039 = scalar_lea.vmem %s14, 3
  %v8040 = vld [vmem:[%s8039] sm:$0x1]
  %v8042 = vlaneseq
  %v8043 = vshrl.u32 %v8042, 7
  %v8044 = vsub.s32 0, %v8043
  %v8045 = vrot.slane %v8040, %v8044
  %v8048 = vsel %vm1442, %v8028, 0
  %v8051 = vsel %vm1442, %v8029, 0
  %8053 = vmatprep.subr.mxu0 0.0
  %8054 = vmatpush1.msra.mxu0 0.0
  %8055 = vmatprep.subr.mxu0 0.0
  %8056 = vmatpush1.msra.mxu0 0.0
  %8057 = vmatprep.subr.mxu0 0.0
  %8058 = vmatpush1.msra.mxu0 0.0
  %8059 = vmatprep.subr.mxu0 0.0
  %8060 = vmatpush1.msra.mxu0 0.0
  %8061 = vmatprep.subr.mxu0 0.0
  %8062 = vmatpush1.msra.mxu0 0.0
  %8063 = vmatprep.subr.mxu0 0.0
  %8064 = vmatpush1.msra.mxu0 0.0
  %8065 = vmatprep.subr.mxu0 0.0
  %8066 = vmatpush1.msra.mxu0 0.0
  %8067 = vmatprep.subr.mxu0 0.0
  %8068 = vmatpush1.msra.mxu0 0.0
  %8069 = vmatprep.subr.mxu0 0.0
  %8070 = vmatpush1.msra.mxu0 %v8038
  %8071 = vmatprep.subr.mxu0 0.0
  %8072 = vmatpush1.msra.mxu0 %v8037
  %8073 = vmatprep.subr.mxu0 0.0
  %8074 = vmatpush1.msra.mxu0 %v8036
  %8075 = vmatprep.subr.mxu0 0.0
  %8076 = vmatpush1.msra.mxu0 %v8035
  %8077 = vmatprep.subr.mxu0 0.0
  %8078 = vmatpush1.msra.mxu0 %v8034
  %8079 = vmatprep.subr.mxu0 0.0
  %8080 = vmatpush1.msra.mxu0 %v8033
  %8081 = vmatprep.subr.mxu0 0.0
  %8082 = vmatpush1.msra.mxu0 %v8032
  %8083 = vmatprep.subr.mxu0 0.0
  %8084 = vmatpush1.msra.mxu0 %v8031
  %8085 = vmatprep.subr.mxu0 0.0
  %8086 = vmatpush2.msra.mxu0 0.0
  %8087 = vmatprep.subr.mxu0 0.0
  %8088 = vmatpush2.msra.mxu0 0.0
  %8089 = vmatprep.subr.mxu0 0.0
  %8090 = vmatpush2.msra.mxu0 0.0
  %8091 = vmatprep.subr.mxu0 0.0
  %8092 = vmatpush2.msra.mxu0 0.0
  %8093 = vmatprep.subr.mxu0 0.0
  %8094 = vmatpush2.msra.mxu0 0.0
  %8095 = vmatprep.subr.mxu0 0.0
  %8096 = vmatpush2.msra.mxu0 0.0
  %8097 = vmatprep.subr.mxu0 0.0
  %8098 = vmatpush2.msra.mxu0 0.0
  %8099 = vmatprep.subr.mxu0 0.0
  %8100 = vmatpush2.msra.mxu0 0.0
  %8101 = vmatprep.subr.mxu0 0.0
  %8102 = vmatpush2.msra.mxu0 0.0
  %8103 = vmatprep.subr.mxu0 0.0
  %8104 = vmatpush2.msra.mxu0 0.0
  %8105 = vmatprep.subr.mxu0 0.0
  %8106 = vmatpush2.msra.mxu0 0.0
  %8107 = vmatprep.subr.mxu0 0.0
  %8108 = vmatpush2.msra.mxu0 0.0
  %8109 = vmatprep.subr.mxu0 0.0
  %8110 = vmatpush2.msra.mxu0 0.0
  %8111 = vmatprep.subr.mxu0 0.0
  %8112 = vmatpush2.msra.mxu0 0.0
  %8113 = vmatprep.subr.mxu0 0.0
  %8114 = vmatpush2.msra.mxu0 0.0
  %8115 = vmatprep.subr.mxu0 0.0
  %8116 = vmatpush2.msra.mxu0 0.0
  %8117 = vmatprep.mubr.f32.mxu0 0.0
  %8118 = vmatmul.mubr.f32.gmra.mxu0 %v8048
  %v8119 = vpop.f32.mrf.mxu0
  %v8120 = vadd.f32 %v8045, %v8119
  %v8121 = vpop.f32.mrf.mxu0
  %8122 = vmatprep.mubr.f32.mxu0 0.0
  %8123 = vmatmul.mubr.f32.gmra.mxu0 %v8051
  %v8124 = vpop.f32.mrf.mxu0
  %v8125 = vadd.f32 %v8045, %v8124
  %v8126 = vpop.f32.mrf.mxu0
  %8127 = vdwg.mxu0
  %v8128 = vadd.f32 %v7932, %v8120
  %v8129 = vadd.f32 %v7933, %v8125
  %s8130 = scalar_lea.vmem %s15, 9
  %v8131 = vld [vmem:[%s8130] sm:$0x1]
  %s8132 = scalar_lea.vmem %s16, 9
  %v8133 = vld [vmem:[%s8132] sm:$0x1]
  %v8134 = vsel %vm173, %v8128, 0.0
  %8135 = vadd.xlane.f32.xlu0 %v8134
  %v8136 = vpop.xlane.xlu0 %8135
  %v8137 = vsel %vm173, %v8129, 0.0
  %8138 = vadd.xlane.f32.xlu0 %v8137
  %v8139 = vpop.xlane.xlu0 %8138
  %v8140 = vmul.f32 %v8136, %v1296
  %v8141 = vmul.f32 %v8139, %v1296
  %v8142 = vsub.f32 %v8128, %v8140
  %v8143 = vsub.f32 %v8129, %v8141
  %v8144 = vmul.f32 %v8142, %v8142
  %v8145 = vmul.f32 %v8143, %v8143
  %v8146 = vsel %vm173, %v8144, 0.0
  %8147 = vadd.xlane.f32.xlu0 %v8146
  %v8148 = vpop.xlane.xlu0 %8147
  %v8149 = vsel %vm173, %v8145, 0.0
  %8150 = vadd.xlane.f32.xlu0 %v8149
  %v8151 = vpop.xlane.xlu0 %8150
  %v8152 = vmul.f32 %v8148, %v1296
  %v8153 = vmul.f32 %v8151, %v1296
  %v8154 = vadd.f32 %v8152, 1e-05
  %v8155 = vadd.f32 %v8153, 1e-05
  %v8156 = vrsqrt.pop %v8154
  %v8157 = vrsqrt.pop %v8155
  %v8158 = vmul.f32 %v8142, %v8156
  %v8159 = vmul.f32 %v8143, %v8157
  %v8161 = vlaneseq
  %v8162 = vshrl.u32 %v8161, 7
  %v8163 = vsub.s32 0, %v8162
  %v8164 = vrot.slane %v8131, %v8163
  %v8166 = vmul.f32 %v8158, %v8164
  %v8167 = vmul.f32 %v8159, %v8164
  %v8169 = vlaneseq
  %v8170 = vshrl.u32 %v8169, 7
  %v8171 = vsub.s32 0, %v8170
  %v8172 = vrot.slane %v8133, %v8171
  %v8174 = vadd.f32 %v8166, %v8172
  %v8175 = vadd.f32 %v8167, %v8172
  %v8176 = vld [vmem:[%s17] sm:$0xff]
  %v8177 = vld [vmem:[%s17 + $0x8] sm:$0xff]
  %v8178 = vld [vmem:[%s17 + $0x10] sm:$0xff]
  %v8179 = vld [vmem:[%s17 + $0x18] sm:$0xff]
  %v8180 = vld [vmem:[%s17 + $0x20] sm:$0xff]
  %v8181 = vld [vmem:[%s17 + $0x28] sm:$0xff]
  %v8182 = vld [vmem:[%s17 + $0x30] sm:$0xff]
  %v8183 = vld [vmem:[%s17 + $0x38] sm:$0xff]
  %v8184 = vld [vmem:[%s17 + $0x40] sm:$0xff]
  %v8185 = vld [vmem:[%s17 + $0x48] sm:$0xff]
  %v8186 = vld [vmem:[%s17 + $0x50] sm:$0xff]
  %v8187 = vld [vmem:[%s17 + $0x58] sm:$0xff]
  %v8188 = vld [vmem:[%s17 + $0x60] sm:$0xff]
  %v8189 = vld [vmem:[%s17 + $0x68] sm:$0xff]
  %v8190 = vld [vmem:[%s17 + $0x70] sm:$0xff]
  %v8191 = vld [vmem:[%s17 + $0x78] sm:$0xff]
  %v8192 = vld [vmem:[%s17 + $0x80] sm:$0xff]
  %v8193 = vld [vmem:[%s17 + $0x88] sm:$0xff]
  %v8194 = vld [vmem:[%s17 + $0x90] sm:$0xff]
  %v8195 = vld [vmem:[%s17 + $0x98] sm:$0xff]
  %v8196 = vld [vmem:[%s17 + $0xa0] sm:$0xff]
  %v8197 = vld [vmem:[%s17 + $0xa8] sm:$0xff]
  %v8198 = vld [vmem:[%s17 + $0xb0] sm:$0xff]
  %v8199 = vld [vmem:[%s17 + $0xb8] sm:$0xff]
  %v8200 = vld [vmem:[%s17 + $0xc0] sm:$0xff]
  %v8201 = vld [vmem:[%s17 + $0xc8] sm:$0xff]
  %v8202 = vld [vmem:[%s17 + $0xd0] sm:$0xff]
  %v8203 = vld [vmem:[%s17 + $0xd8] sm:$0xff]
  %v8204 = vld [vmem:[%s17 + $0xe0] sm:$0xff]
  %v8205 = vld [vmem:[%s17 + $0xe8] sm:$0xff]
  %v8206 = vld [vmem:[%s17 + $0xf0] sm:$0xff]
  %v8207 = vld [vmem:[%s17 + $0xf8] sm:$0xff]
  %v8208 = vld [vmem:[%s18] sm:$0xff]
  %v8210 = vlaneseq
  %v8211 = vshrl.u32 %v8210, 7
  %v8212 = vsub.s32 0, %v8211
  %v8213 = vrot.slane %v8208, %v8212
  %v8214 = vlaneseq
  %v8215 = vshrl.u32 %v8214, 7
  %v8216 = vsub.s32 1, %v8215
  %v8217 = vrot.slane %v8208, %v8216
  %v8218 = vlaneseq
  %v8219 = vshrl.u32 %v8218, 7
  %v8220 = vsub.s32 2, %v8219
  %v8221 = vrot.slane %v8208, %v8220
  %v8222 = vlaneseq
  %v8223 = vshrl.u32 %v8222, 7
  %v8224 = vsub.s32 3, %v8223
  %v8225 = vrot.slane %v8208, %v8224
  %v8226 = vlaneseq
  %v8227 = vshrl.u32 %v8226, 7
  %v8228 = vsub.s32 4, %v8227
  %v8229 = vrot.slane %v8208, %v8228
  %v8230 = vlaneseq
  %v8231 = vshrl.u32 %v8230, 7
  %v8232 = vsub.s32 5, %v8231
  %v8233 = vrot.slane %v8208, %v8232
  %v8234 = vlaneseq
  %v8235 = vshrl.u32 %v8234, 7
  %v8236 = vsub.s32 6, %v8235
  %v8237 = vrot.slane %v8208, %v8236
  %v8238 = vlaneseq
  %v8239 = vshrl.u32 %v8238, 7
  %v8240 = vsub.s32 7, %v8239
  %v8241 = vrot.slane %v8208, %v8240
  %v8251 = vsel %vm173, %v8174, 0
  %v8254 = vsel %vm173, %v8175, 0
  %8256 = vmatprep.subr.mxu0 0.0
  %8257 = vmatpush1.msra.mxu0 0.0
  %8258 = vmatprep.subr.mxu0 0.0
  %8259 = vmatpush1.msra.mxu0 0.0
  %8260 = vmatprep.subr.mxu0 0.0
  %8261 = vmatpush1.msra.mxu0 0.0
  %8262 = vmatprep.subr.mxu0 0.0
  %8263 = vmatpush1.msra.mxu0 0.0
  %8264 = vmatprep.subr.mxu0 0.0
  %8265 = vmatpush1.msra.mxu0 0.0
  %8266 = vmatprep.subr.mxu0 0.0
  %8267 = vmatpush1.msra.mxu0 0.0
  %8268 = vmatprep.subr.mxu0 0.0
  %8269 = vmatpush1.msra.mxu0 0.0
  %8270 = vmatprep.subr.mxu0 0.0
  %8271 = vmatpush1.msra.mxu0 0.0
  %8272 = vmatprep.subr.mxu0 0.0
  %8273 = vmatpush1.msra.mxu0 0.0
  %8274 = vmatprep.subr.mxu0 0.0
  %8275 = vmatpush1.msra.mxu0 0.0
  %8276 = vmatprep.subr.mxu0 0.0
  %8277 = vmatpush1.msra.mxu0 0.0
  %8278 = vmatprep.subr.mxu0 0.0
  %8279 = vmatpush1.msra.mxu0 0.0
  %8280 = vmatprep.subr.mxu0 %v8201
  %8281 = vmatpush1.msra.mxu0 %v8200
  %8282 = vmatprep.subr.mxu0 %v8193
  %8283 = vmatpush1.msra.mxu0 %v8192
  %8284 = vmatprep.subr.mxu0 %v8185
  %8285 = vmatpush1.msra.mxu0 %v8184
  %8286 = vmatprep.subr.mxu0 %v8177
  %8287 = vmatpush1.msra.mxu0 %v8176
  %8288 = vmatprep.subr.mxu0 0.0
  %8289 = vmatpush2.msra.mxu0 0.0
  %8290 = vmatprep.subr.mxu0 0.0
  %8291 = vmatpush2.msra.mxu0 0.0
  %8292 = vmatprep.subr.mxu0 0.0
  %8293 = vmatpush2.msra.mxu0 0.0
  %8294 = vmatprep.subr.mxu0 0.0
  %8295 = vmatpush2.msra.mxu0 0.0
  %8296 = vmatprep.subr.mxu0 0.0
  %8297 = vmatpush2.msra.mxu0 0.0
  %8298 = vmatprep.subr.mxu0 0.0
  %8299 = vmatpush2.msra.mxu0 0.0
  %8300 = vmatprep.subr.mxu0 0.0
  %8301 = vmatpush2.msra.mxu0 0.0
  %8302 = vmatprep.subr.mxu0 0.0
  %8303 = vmatpush2.msra.mxu0 0.0
  %8304 = vmatprep.subr.mxu0 0.0
  %8305 = vmatpush2.msra.mxu0 0.0
  %8306 = vmatprep.subr.mxu0 0.0
  %8307 = vmatpush2.msra.mxu0 0.0
  %8308 = vmatprep.subr.mxu0 0.0
  %8309 = vmatpush2.msra.mxu0 0.0
  %8310 = vmatprep.subr.mxu0 0.0
  %8311 = vmatpush2.msra.mxu0 0.0
  %8312 = vmatprep.subr.mxu0 0.0
  %8313 = vmatpush2.msra.mxu0 0.0
  %8314 = vmatprep.subr.mxu0 0.0
  %8315 = vmatpush2.msra.mxu0 0.0
  %8316 = vmatprep.subr.mxu0 0.0
  %8317 = vmatpush2.msra.mxu0 0.0
  %8318 = vmatprep.subr.mxu0 0.0
  %8319 = vmatpush2.msra.mxu0 0.0
  %8320 = vmatprep.mubr.f32.mxu0 0.0
  %8321 = vmatmul.mubr.f32.gmra.mxu0 %v8251
  %v8322 = vpop.f32.mrf.mxu0
  %v8323 = vadd.f32 %v8213, %v8322
  %v8324 = vpop.f32.mrf.mxu0
  %v8325 = vadd.f32 %v8217, %v8324
  %8326 = vmatprep.mubr.f32.mxu0 0.0
  %8327 = vmatmul.mubr.f32.gmra.mxu0 %v8254
  %v8328 = vpop.f32.mrf.mxu0
  %v8329 = vadd.f32 %v8213, %v8328
  %v8330 = vpop.f32.mrf.mxu0
  %v8331 = vadd.f32 %v8217, %v8330
  %8332 = vdwg.mxu0
  %8333 = vmatprep.subr.mxu0 0.0
  %8334 = vmatpush1.msra.mxu0 0.0
  %8335 = vmatprep.subr.mxu0 0.0
  %8336 = vmatpush1.msra.mxu0 0.0
  %8337 = vmatprep.subr.mxu0 0.0
  %8338 = vmatpush1.msra.mxu0 0.0
  %8339 = vmatprep.subr.mxu0 0.0
  %8340 = vmatpush1.msra.mxu0 0.0
  %8341 = vmatprep.subr.mxu0 0.0
  %8342 = vmatpush1.msra.mxu0 0.0
  %8343 = vmatprep.subr.mxu0 0.0
  %8344 = vmatpush1.msra.mxu0 0.0
  %8345 = vmatprep.subr.mxu0 0.0
  %8346 = vmatpush1.msra.mxu0 0.0
  %8347 = vmatprep.subr.mxu0 0.0
  %8348 = vmatpush1.msra.mxu0 0.0
  %8349 = vmatprep.subr.mxu0 0.0
  %8350 = vmatpush1.msra.mxu0 0.0
  %8351 = vmatprep.subr.mxu0 0.0
  %8352 = vmatpush1.msra.mxu0 0.0
  %8353 = vmatprep.subr.mxu0 0.0
  %8354 = vmatpush1.msra.mxu0 0.0
  %8355 = vmatprep.subr.mxu0 0.0
  %8356 = vmatpush1.msra.mxu0 0.0
  %8357 = vmatprep.subr.mxu0 %v8203
  %8358 = vmatpush1.msra.mxu0 %v8202
  %8359 = vmatprep.subr.mxu0 %v8195
  %8360 = vmatpush1.msra.mxu0 %v8194
  %8361 = vmatprep.subr.mxu0 %v8187
  %8362 = vmatpush1.msra.mxu0 %v8186
  %8363 = vmatprep.subr.mxu0 %v8179
  %8364 = vmatpush1.msra.mxu0 %v8178
  %8365 = vmatprep.subr.mxu0 0.0
  %8366 = vmatpush2.msra.mxu0 0.0
  %8367 = vmatprep.subr.mxu0 0.0
  %8368 = vmatpush2.msra.mxu0 0.0
  %8369 = vmatprep.subr.mxu0 0.0
  %8370 = vmatpush2.msra.mxu0 0.0
  %8371 = vmatprep.subr.mxu0 0.0
  %8372 = vmatpush2.msra.mxu0 0.0
  %8373 = vmatprep.subr.mxu0 0.0
  %8374 = vmatpush2.msra.mxu0 0.0
  %8375 = vmatprep.subr.mxu0 0.0
  %8376 = vmatpush2.msra.mxu0 0.0
  %8377 = vmatprep.subr.mxu0 0.0
  %8378 = vmatpush2.msra.mxu0 0.0
  %8379 = vmatprep.subr.mxu0 0.0
  %8380 = vmatpush2.msra.mxu0 0.0
  %8381 = vmatprep.subr.mxu0 0.0
  %8382 = vmatpush2.msra.mxu0 0.0
  %8383 = vmatprep.subr.mxu0 0.0
  %8384 = vmatpush2.msra.mxu0 0.0
  %8385 = vmatprep.subr.mxu0 0.0
  %8386 = vmatpush2.msra.mxu0 0.0
  %8387 = vmatprep.subr.mxu0 0.0
  %8388 = vmatpush2.msra.mxu0 0.0
  %8389 = vmatprep.subr.mxu0 0.0
  %8390 = vmatpush2.msra.mxu0 0.0
  %8391 = vmatprep.subr.mxu0 0.0
  %8392 = vmatpush2.msra.mxu0 0.0
  %8393 = vmatprep.subr.mxu0 0.0
  %8394 = vmatpush2.msra.mxu0 0.0
  %8395 = vmatprep.subr.mxu0 0.0
  %8396 = vmatpush2.msra.mxu0 0.0
  %8397 = vmatprep.mubr.f32.mxu0 0.0
  %8398 = vmatmul.mubr.f32.gmra.mxu0 %v8251
  %v8399 = vpop.f32.mrf.mxu0
  %v8400 = vadd.f32 %v8221, %v8399
  %v8401 = vpop.f32.mrf.mxu0
  %v8402 = vadd.f32 %v8225, %v8401
  %8403 = vmatprep.mubr.f32.mxu0 0.0
  %8404 = vmatmul.mubr.f32.gmra.mxu0 %v8254
  %v8405 = vpop.f32.mrf.mxu0
  %v8406 = vadd.f32 %v8221, %v8405
  %v8407 = vpop.f32.mrf.mxu0
  %v8408 = vadd.f32 %v8225, %v8407
  %8409 = vdwg.mxu0
  %8410 = vmatprep.subr.mxu0 0.0
  %8411 = vmatpush1.msra.mxu0 0.0
  %8412 = vmatprep.subr.mxu0 0.0
  %8413 = vmatpush1.msra.mxu0 0.0
  %8414 = vmatprep.subr.mxu0 0.0
  %8415 = vmatpush1.msra.mxu0 0.0
  %8416 = vmatprep.subr.mxu0 0.0
  %8417 = vmatpush1.msra.mxu0 0.0
  %8418 = vmatprep.subr.mxu0 0.0
  %8419 = vmatpush1.msra.mxu0 0.0
  %8420 = vmatprep.subr.mxu0 0.0
  %8421 = vmatpush1.msra.mxu0 0.0
  %8422 = vmatprep.subr.mxu0 0.0
  %8423 = vmatpush1.msra.mxu0 0.0
  %8424 = vmatprep.subr.mxu0 0.0
  %8425 = vmatpush1.msra.mxu0 0.0
  %8426 = vmatprep.subr.mxu0 0.0
  %8427 = vmatpush1.msra.mxu0 0.0
  %8428 = vmatprep.subr.mxu0 0.0
  %8429 = vmatpush1.msra.mxu0 0.0
  %8430 = vmatprep.subr.mxu0 0.0
  %8431 = vmatpush1.msra.mxu0 0.0
  %8432 = vmatprep.subr.mxu0 0.0
  %8433 = vmatpush1.msra.mxu0 0.0
  %8434 = vmatprep.subr.mxu0 %v8205
  %8435 = vmatpush1.msra.mxu0 %v8204
  %8436 = vmatprep.subr.mxu0 %v8197
  %8437 = vmatpush1.msra.mxu0 %v8196
  %8438 = vmatprep.subr.mxu0 %v8189
  %8439 = vmatpush1.msra.mxu0 %v8188
  %8440 = vmatprep.subr.mxu0 %v8181
  %8441 = vmatpush1.msra.mxu0 %v8180
  %8442 = vmatprep.subr.mxu0 0.0
  %8443 = vmatpush2.msra.mxu0 0.0
  %8444 = vmatprep.subr.mxu0 0.0
  %8445 = vmatpush2.msra.mxu0 0.0
  %8446 = vmatprep.subr.mxu0 0.0
  %8447 = vmatpush2.msra.mxu0 0.0
  %8448 = vmatprep.subr.mxu0 0.0
  %8449 = vmatpush2.msra.mxu0 0.0
  %8450 = vmatprep.subr.mxu0 0.0
  %8451 = vmatpush2.msra.mxu0 0.0
  %8452 = vmatprep.subr.mxu0 0.0
  %8453 = vmatpush2.msra.mxu0 0.0
  %8454 = vmatprep.subr.mxu0 0.0
  %8455 = vmatpush2.msra.mxu0 0.0
  %8456 = vmatprep.subr.mxu0 0.0
  %8457 = vmatpush2.msra.mxu0 0.0
  %8458 = vmatprep.subr.mxu0 0.0
  %8459 = vmatpush2.msra.mxu0 0.0
  %8460 = vmatprep.subr.mxu0 0.0
  %8461 = vmatpush2.msra.mxu0 0.0
  %8462 = vmatprep.subr.mxu0 0.0
  %8463 = vmatpush2.msra.mxu0 0.0
  %8464 = vmatprep.subr.mxu0 0.0
  %8465 = vmatpush2.msra.mxu0 0.0
  %8466 = vmatprep.subr.mxu0 0.0
  %8467 = vmatpush2.msra.mxu0 0.0
  %8468 = vmatprep.subr.mxu0 0.0
  %8469 = vmatpush2.msra.mxu0 0.0
  %8470 = vmatprep.subr.mxu0 0.0
  %8471 = vmatpush2.msra.mxu0 0.0
  %8472 = vmatprep.subr.mxu0 0.0
  %8473 = vmatpush2.msra.mxu0 0.0
  %8474 = vmatprep.mubr.f32.mxu0 0.0
  %8475 = vmatmul.mubr.f32.gmra.mxu0 %v8251
  %v8476 = vpop.f32.mrf.mxu0
  %v8477 = vadd.f32 %v8229, %v8476
  %v8478 = vpop.f32.mrf.mxu0
  %v8479 = vadd.f32 %v8233, %v8478
  %8480 = vmatprep.mubr.f32.mxu0 0.0
  %8481 = vmatmul.mubr.f32.gmra.mxu0 %v8254
  %v8482 = vpop.f32.mrf.mxu0
  %v8483 = vadd.f32 %v8229, %v8482
  %v8484 = vpop.f32.mrf.mxu0
  %v8485 = vadd.f32 %v8233, %v8484
  %8486 = vdwg.mxu0
  %8487 = vmatprep.subr.mxu0 0.0
  %8488 = vmatpush1.msra.mxu0 0.0
  %8489 = vmatprep.subr.mxu0 0.0
  %8490 = vmatpush1.msra.mxu0 0.0
  %8491 = vmatprep.subr.mxu0 0.0
  %8492 = vmatpush1.msra.mxu0 0.0
  %8493 = vmatprep.subr.mxu0 0.0
  %8494 = vmatpush1.msra.mxu0 0.0
  %8495 = vmatprep.subr.mxu0 0.0
  %8496 = vmatpush1.msra.mxu0 0.0
  %8497 = vmatprep.subr.mxu0 0.0
  %8498 = vmatpush1.msra.mxu0 0.0
  %8499 = vmatprep.subr.mxu0 0.0
  %8500 = vmatpush1.msra.mxu0 0.0
  %8501 = vmatprep.subr.mxu0 0.0
  %8502 = vmatpush1.msra.mxu0 0.0
  %8503 = vmatprep.subr.mxu0 0.0
  %8504 = vmatpush1.msra.mxu0 0.0
  %8505 = vmatprep.subr.mxu0 0.0
  %8506 = vmatpush1.msra.mxu0 0.0
  %8507 = vmatprep.subr.mxu0 0.0
  %8508 = vmatpush1.msra.mxu0 0.0
  %8509 = vmatprep.subr.mxu0 0.0
  %8510 = vmatpush1.msra.mxu0 0.0
  %8511 = vmatprep.subr.mxu0 %v8207
  %8512 = vmatpush1.msra.mxu0 %v8206
  %8513 = vmatprep.subr.mxu0 %v8199
  %8514 = vmatpush1.msra.mxu0 %v8198
  %8515 = vmatprep.subr.mxu0 %v8191
  %8516 = vmatpush1.msra.mxu0 %v8190
  %8517 = vmatprep.subr.mxu0 %v8183
  %8518 = vmatpush1.msra.mxu0 %v8182
  %8519 = vmatprep.subr.mxu0 0.0
  %8520 = vmatpush2.msra.mxu0 0.0
  %8521 = vmatprep.subr.mxu0 0.0
  %8522 = vmatpush2.msra.mxu0 0.0
  %8523 = vmatprep.subr.mxu0 0.0
  %8524 = vmatpush2.msra.mxu0 0.0
  %8525 = vmatprep.subr.mxu0 0.0
  %8526 = vmatpush2.msra.mxu0 0.0
  %8527 = vmatprep.subr.mxu0 0.0
  %8528 = vmatpush2.msra.mxu0 0.0
  %8529 = vmatprep.subr.mxu0 0.0
  %8530 = vmatpush2.msra.mxu0 0.0
  %8531 = vmatprep.subr.mxu0 0.0
  %8532 = vmatpush2.msra.mxu0 0.0
  %8533 = vmatprep.subr.mxu0 0.0
  %8534 = vmatpush2.msra.mxu0 0.0
  %8535 = vmatprep.subr.mxu0 0.0
  %8536 = vmatpush2.msra.mxu0 0.0
  %8537 = vmatprep.subr.mxu0 0.0
  %8538 = vmatpush2.msra.mxu0 0.0
  %8539 = vmatprep.subr.mxu0 0.0
  %8540 = vmatpush2.msra.mxu0 0.0
  %8541 = vmatprep.subr.mxu0 0.0
  %8542 = vmatpush2.msra.mxu0 0.0
  %8543 = vmatprep.subr.mxu0 0.0
  %8544 = vmatpush2.msra.mxu0 0.0
  %8545 = vmatprep.subr.mxu0 0.0
  %8546 = vmatpush2.msra.mxu0 0.0
  %8547 = vmatprep.subr.mxu0 0.0
  %8548 = vmatpush2.msra.mxu0 0.0
  %8549 = vmatprep.subr.mxu0 0.0
  %8550 = vmatpush2.msra.mxu0 0.0
  %8551 = vmatprep.mubr.f32.mxu0 0.0
  %8552 = vmatmul.mubr.f32.gmra.mxu0 %v8251
  %v8553 = vpop.f32.mrf.mxu0
  %v8554 = vadd.f32 %v8237, %v8553
  %v8555 = vpop.f32.mrf.mxu0
  %v8556 = vadd.f32 %v8241, %v8555
  %8557 = vmatprep.mubr.f32.mxu0 0.0
  %8558 = vmatmul.mubr.f32.gmra.mxu0 %v8254
  %v8559 = vpop.f32.mrf.mxu0
  %v8560 = vadd.f32 %v8237, %v8559
  %v8561 = vpop.f32.mrf.mxu0
  %v8562 = vadd.f32 %v8241, %v8561
  %8563 = vdwg.mxu0
  %8564 = vst [vmem:[%s19] sm:$0xff] %v8323
  %8565 = vst [vmem:[%s19 + $0x8] sm:$0xff] %v8325
  %8566 = vst [vmem:[%s19 + $0x10] sm:$0xff] %v8400
  %8567 = vst [vmem:[%s19 + $0x18] sm:$0xff] %v8402
  %8568 = vst [vmem:[%s19 + $0x20] sm:$0xff] %v8477
  %8569 = vst [vmem:[%s19 + $0x28] sm:$0xff] %v8479
  %8570 = vst [vmem:[%s19 + $0x30] sm:$0xff] %v8554
  %8571 = vst [vmem:[%s19 + $0x38] sm:$0xff] %v8556
  %8572 = vst [vmem:[%s19 + $0x40] sm:$0xff] %v8329
  %8573 = vst [vmem:[%s19 + $0x48] sm:$0xff] %v8331
  %8574 = vst [vmem:[%s19 + $0x50] sm:$0xff] %v8406
  %8575 = vst [vmem:[%s19 + $0x58] sm:$0xff] %v8408
  %8576 = vst [vmem:[%s19 + $0x60] sm:$0xff] %v8483
  %8577 = vst [vmem:[%s19 + $0x68] sm:$0xff] %v8485
  %8578 = vst [vmem:[%s19 + $0x70] sm:$0xff] %v8560
  %8579 = vst [vmem:[%s19 + $0x78] sm:$0xff] %v8562
  // Predicated region
  $region78: #{sketchformer_forward.1} parent=0 // pred_check
    _
  $region79: #{sketchformer_forward.1} parent=0 // pred_check_branch
    %8581 = sbr.rel (0) target = $region81
  $region80: #{sketchformer_forward.1} parent=0 // pred_region
    _
  $region81: #{sketchformer_forward.1} parent=0 // pred_fallthru
    _
  // Predicated region
  $region82: #{sketchformer_forward.1} parent=0 // pred_check
    _
  $region83: #{sketchformer_forward.1} parent=0 // pred_check_branch
    %8583 = sbr.rel (0) target = $region85
  $region84: #{sketchformer_forward.1} parent=0 // pred_region
    _
  $region85: #{sketchformer_forward.1} parent=0 // pred_fallthru
    _

</llo_original>
